<compile_context>
chip_gen: v7x
topology: tpu7x:2x2x1
jax: 0.10.0
libtpu: 0.0.40
codegen_flags: <defaults>
</compile_context>

<pallas_src>
import functools

import jax
import jax.numpy as jnp
from jax.experimental import pallas as pl
from jax.experimental.pallas import tpu as pltpu

_BN_EPS = 1e-5


# ---------------------------------------------------------------------------
# Pallas kernel: phase-batched matmul with optional fused
#   - prologue: folded BatchNorm (of the producing layer) + ReLU on the A tile
#   - epilogue: per-column sum / sum-of-squares (for the next BN) and/or tanh
# ---------------------------------------------------------------------------
def _conv_mm_kernel(*refs, prologue, with_stats, act):
    if prologue:
        sc_ref, a_ref, b_ref = refs[:3]
        outs = refs[3:]
    else:
        a_ref, b_ref = refs[:2]
        outs = refs[2:]
    y_ref = outs[0]
    st_ref = outs[1] if with_stats else None

    a = a_ref[...]                                        # bf16 (tm, K)
    if prologue:
        # Input was centred by the batch mean in the wrapper (so the padded
        # conv-transpose border stays exactly zero); apply invstd + ReLU here.
        a = jnp.maximum(a.astype(jnp.float32) * sc_ref[...], 0.0)
        a = a.astype(jnp.bfloat16)

    y = jnp.dot(a, b_ref[...], preferred_element_type=jnp.float32)
    if act == "tanh":
        y = jnp.tanh(y)
    y_ref[...] = y.astype(y_ref.dtype)

    if with_stats:
        # Stats from the f32 accumulator (not the bf16-stored values).
        s = jnp.sum(y, axis=0, keepdims=True)             # (1, tn)
        ss = jnp.sum(y * y, axis=0, keepdims=True)        # (1, tn)
        st_ref[...] = jnp.concatenate([s, ss], axis=0)    # (2, tn)


def pallas_conv_matmul(a, b, *, tm, tn, scale=None, act=None,
                       with_stats=False, out_dtype=jnp.bfloat16):
    """y[p] = act( relu(a[p] * scale)? @ b[p] ) with optional BN-stat partials.

    a: (P, M, K) bf16, b: (P, K, Nc) bf16.  Full-K blocks; grid is
    (P, M//tm, Nc//tn), every axis 'parallel'.  `scale` (length K, f32) is
    the previous layer's folded BN invstd tiled across the 4 taps.  If
    with_stats, a (P, M//tm, 2, Nc) f32 side output holds per-tile column
    sums and sums-of-squares.
    """
    P, M, K = a.shape
    Pb, Kb, Nc = b.shape
    assert P == Pb and K == Kb
    assert M % tm == 0 and Nc % tn == 0
    mt, nt = M // tm, Nc // tn
    grid = (P, mt, nt)
    prologue = scale is not None

    in_specs, args = [], []
    if prologue:
        in_specs.append(pl.BlockSpec((1, K), lambda p, i, j: (0, 0)))
        args.append(scale.reshape(1, K).astype(jnp.float32))
    in_specs += [pl.BlockSpec((None, tm, K), lambda p, i, j: (p, i, 0)),
                 pl.BlockSpec((None, K, tn), lambda p, i, j: (p, 0, j))]
    args += [a, b]

    kern = functools.partial(_conv_mm_kernel, prologue=prologue,
                             with_stats=with_stats, act=act)
    if with_stats:
        out_shape = (jax.ShapeDtypeStruct((P, M, Nc), out_dtype),
                     jax.ShapeDtypeStruct((P, mt, 2, Nc), jnp.float32))
        out_specs = (
            pl.BlockSpec((None, tm, tn), lambda p, i, j: (p, i, j)),
            pl.BlockSpec((None, None, 2, tn), lambda p, i, j: (p, i, 0, j)),
        )
    else:
        out_shape = jax.ShapeDtypeStruct((P, M, Nc), out_dtype)
        out_specs = pl.BlockSpec((None, tm, tn), lambda p, i, j: (p, i, j))

    return pl.pallas_call(
        kern,
        out_shape=out_shape,
        grid_spec=pltpu.PrefetchScalarGridSpec(
            num_scalar_prefetch=0,
            grid=grid,
            in_specs=in_specs,
            out_specs=out_specs,
        ),
        compiler_params=pltpu.CompilerParams(
            dimension_semantics=("parallel", "parallel", "parallel")),
    )(*args)


# ---------------------------------------------------------------------------
# Sub-pixel (stride-phase) decomposition of stride-2, k=4, pad=1 ConvTranspose
# ---------------------------------------------------------------------------
# For output row oh = 2q + r (phase r in {0,1}):
#   r=0:  x[q-1]*w[3] + x[q]*w[1]     r=1:  x[q]*w[2] + x[q+1]*w[0]
# With a 1-pixel zero pad, phase r reads padded rows q + off_r + {0,1} with
# kernel rows K_r, where off = (0, 1), K = ([3,1],[2,0]).
_PHASE_OFF = (0, 1)
_PHASE_KIDX = ([3, 1], [2, 0])


def _phase_patches(x_nhwc):
    """x: (N,H,W,Cin) bf16 -> A: (4, N*H*W, 4*Cin) bf16; phase p = rh*2 + rw."""
    N, H, W, Cin = x_nhwc.shape
    xp = jnp.pad(x_nhwc, ((0, 0), (1, 1), (1, 1), (0, 0)))
    mats = []
    for rh in range(2):
        for rw in range(2):
            oh, ow = _PHASE_OFF[rh], _PHASE_OFF[rw]
            parts = []
            for a in range(2):
                for b in range(2):
                    parts.append(xp[:, oh + a:oh + a + H, ow + b:ow + b + W, :])
            A = jnp.concatenate(parts, axis=-1)            # (N, H, W, 4*Cin)
            mats.append(A.reshape(N * H * W, 4 * Cin))
    return jnp.stack(mats, axis=0)                         # (4, N*H*W, 4*Cin)


def _phase_weights(w, pad_cout_to=None):
    """w: (Cin, Cout, 4, 4) f32 -> B: (4, 4*Cin, Cout[_padded]) bf16."""
    w = w.astype(jnp.bfloat16)
    Cin, Cout = w.shape[0], w.shape[1]
    mats = []
    for rh in range(2):
        for rw in range(2):
            wk = w[:, :, _PHASE_KIDX[rh], :][:, :, :, _PHASE_KIDX[rw]]
            # wk[ci, co, a, b] = w[ci, co, K_rh[a], K_rw[b]]
            B = wk.transpose(2, 3, 0, 1).reshape(4 * Cin, Cout)
            mats.append(B)
    Ball = jnp.stack(mats, axis=0)                         # (4, 4*Cin, Cout)
    if pad_cout_to is not None and pad_cout_to > Cout:
        Ball = jnp.pad(Ball, ((0, 0), (0, 0), (0, pad_cout_to - Cout)))
    return Ball


def _interleave_phases(y_phases, N, H, W, C):
    """(4, N*H*W, C) phase outputs -> (N, 2H, 2W, C) NHWC."""
    y = y_phases.reshape(2, 2, N, H, W, C)
    y = y.transpose(2, 3, 0, 4, 1, 5)                      # (N, H, rh, W, rw, C)
    return y.reshape(N, 2 * H, 2 * W, C)


def _bn_mean_invstd(s, ss, count):
    """Training-mode BatchNorm (gamma=1, beta=0) folded to (mean, invstd)."""
    mean = s / count
    var = jnp.maximum(ss / count - mean * mean, 0.0)
    return mean, jax.lax.rsqrt(var + _BN_EPS)


def _pick_tiles(P, M, Nc, *, tn_cap=128, tm_cap=256, min_steps=8):
    """Tiles that respect the (8,128) rule and give >= min_steps grid steps."""
    tn = Nc if Nc <= tn_cap else tn_cap
    assert Nc % tn == 0
    tm = M if M <= tm_cap else tm_cap
    while M % tm:
        tm //= 2
    while (P * (M // tm) * (Nc // tn) < min_steps
           and tm > 8 and (tm // 2) % 8 == 0 and M % (tm // 2) == 0):
        tm //= 2
    return tm, tn


# ---------------------------------------------------------------------------
# Layers (each returns its RAW bf16 output + folded BN (mean, invstd);
# the next layer applies the BN + ReLU in its matmul prologue).
# ---------------------------------------------------------------------------
def _tconv1_raw(x_nchw, w):
    """ConvTranspose2d(128->512, k=4, s=1, p=0) on a 1x1 input == matmul."""
    N, Cin = x_nchw.shape[0], x_nchw.shape[1]
    Cout = w.shape[1]
    a2d = x_nchw.reshape(N, Cin).astype(jnp.bfloat16)
    Mp = ((N + 7) // 8) * 8                                # sublane-align rows
    if Mp != N:
        a2d = jnp.pad(a2d, ((0, Mp - N), (0, 0)))          # zero rows: stats unaffected
    A = a2d[None]                                          # (1, Mp, Cin)
    B = w.astype(jnp.bfloat16).transpose(0, 2, 3, 1).reshape(Cin, 16 * Cout)[None]
    tm, tn = _pick_tiles(1, Mp, 16 * Cout, tn_cap=1024)
    y, st = pallas_conv_matmul(A, B, tm=tm, tn=tn, with_stats=True)
    # columns are ordered (spatial s, channel co)
    stc = st[0].sum(axis=0)                                # (2, 16*Cout) f32
    s = stc[0].reshape(16, Cout).sum(axis=0)
    ss = stc[1].reshape(16, Cout).sum(axis=0)
    mean, invstd = _bn_mean_invstd(s, ss, float(N * 16))
    y_nhwc = y[0, :N].reshape(N, 4, 4, Cout)               # raw bf16 NHWC
    return y_nhwc, mean, invstd


def _tconv_s2_raw(x_raw, w, mean_in, invstd_in, *, pad_cout=None):
    """ConvTranspose2d(k=4, s=2, p=1) with the previous layer's BN + ReLU
    fused into the matmul prologue and this layer's BN stats fused into the
    epilogue.  Returns raw bf16 NHWC output + folded (mean, invstd)."""
    N, H, W, Cin = x_raw.shape
    Cout = w.shape[1]
    # Centre by the batch mean so the zero-padded tconv border stays exact;
    # the kernel prologue then applies max(x * invstd, 0).
    xc = (x_raw - mean_in).astype(jnp.bfloat16)
    A = _phase_patches(xc)                                 # (4, M, 4*Cin) bf16
    B = _phase_weights(w, pad_cout)                        # (4, 4*Cin, Cp) bf16
    M, Cp = N * H * W, B.shape[-1]
    tm, tn = _pick_tiles(4, M, Cp)
    y, st = pallas_conv_matmul(A, B, tm=tm, tn=tn,
                               scale=jnp.tile(invstd_in, 4), with_stats=True)
    s = st[:, :, 0, :].sum(axis=(0, 1))
    ss = st[:, :, 1, :].sum(axis=(0, 1))
    mean, invstd = _bn_mean_invstd(s, ss, float(4 * M))    # count = N*(2H)*(2W)
    if Cp > Cout:                                          # drop lane padding
        y, mean, invstd = y[:, :, :Cout], mean[:Cout], invstd[:Cout]
    return _interleave_phases(y, N, H, W, Cout), mean, invstd


def _tconv_s2_final(x_raw, w, mean_in, invstd_in, *, pad_cout=128):
    """Final ConvTranspose2d(k=4, s=2, p=1): prologue BN+ReLU, fused tanh,
    lane-padded (128) output stores; assembles NCHW in one transpose."""
    N, H, W, Cin = x_raw.shape
    Cout = w.shape[1]                                      # 3
    xc = (x_raw - mean_in).astype(jnp.bfloat16)
    A = _phase_patches(xc)
    B = _phase_weights(w, pad_cout)
    M, Cp = N * H * W, B.shape[-1]
    tm, tn = _pick_tiles(4, M, Cp)
    y = pallas_conv_matmul(A, B, tm=tm, tn=tn,
                           scale=jnp.tile(invstd_in, 4),
                           act="tanh", with_stats=False, out_dtype=jnp.float32)
    # Channel slice + phase interleave + NCHW in a single transpose pass.
    y = y[:, :, :Cout].reshape(2, 2, N, H, W, Cout)
    y = y.transpose(2, 5, 3, 0, 4, 1)                      # (N, C, H, rh, W, rw)
    return y.reshape(N, Cout, 2 * H, 2 * W)


def generator_forward(x, params):
    w1, w2, w3, w4, w5 = params
    h, mu, iv = _tconv1_raw(x, w1)                             # (N,  4,  4, 512)
    h, mu, iv = _tconv_s2_raw(h, w2, mu, iv)                   # (N,  8,  8, 256)
    h, mu, iv = _tconv_s2_raw(h, w3, mu, iv)                   # (N, 16, 16, 128)
    h, mu, iv = _tconv_s2_raw(h, w4, mu, iv, pad_cout=128)     # (N, 32, 32,  64)
    return _tconv_s2_final(h, w5, mu, iv, pad_cout=128)        # (N, 3, 64, 64) NCHW


# ---------------------------------------------------------------------------
if __name__ == "__main__":
    key = jax.random.PRNGKey(0)
    k0, k1, k2, k3, k4, k5 = jax.random.split(key, 6)

    # Latent input, NCHW (in_channels fixed to 128 by trconv1).
    x = jax.random.normal(k0, (2, 128, 1, 1), jnp.float32)

    # ConvTranspose2d weights: (in_channels, out_channels, kH, kW), bias=False.
    params = (
        0.02 * jax.random.normal(k1, (128, 512, 4, 4), jnp.float32),
        0.02 * jax.random.normal(k2, (512, 256, 4, 4), jnp.float32),
        0.02 * jax.random.normal(k3, (256, 128, 4, 4), jnp.float32),
        0.02 * jax.random.normal(k4, (128, 64, 4, 4), jnp.float32),
        0.02 * jax.random.normal(k5, (64, 3, 4, 4), jnp.float32),
    )

    # TODO(synk): BatchNorm uses training-mode batch statistics with default
    # affine init (gamma=1, beta=0), matching a freshly-initialized module.
    out = jax.jit(generator_forward)(x, params)
    out = jax.block_until_ready(out)
    assert out.shape == (2, 3, 64, 64), out.shape
    assert bool(jnp.all(jnp.isfinite(out)))
    print("KERNEL_OK")
</pallas_src>

<mosaic_0001>
module attributes {stable_mosaic.version = 11 : i64} {
  func.func @_conv_mm_kernel(%arg0: i32, %arg1: i32, %arg2: i32, %arg3: memref<1x8x128xbf16, #tpu.memory_space<vmem>>, %arg4: memref<1x128x1024xbf16, #tpu.memory_space<vmem>>, %arg5: memref<1x8x1024xbf16, #tpu.memory_space<vmem>>, %arg6: memref<1x1x2x1024xf32, #tpu.memory_space<vmem>>) attributes {dimension_semantics = [#tpu.dimension_semantics<parallel>, #tpu.dimension_semantics<parallel>, #tpu.dimension_semantics<parallel>], iteration_bounds = array<i64: 1, 1, 8>, scalar_prefetch = 0 : i64, scratch_operands = 0 : i64, tpu.core_type = #tpu.core_type<tc>, window_params = [{transform_indices = @transform_0, window_bounds = array<i64: 1, 8, 128>}, {transform_indices = @transform_1, window_bounds = array<i64: 1, 128, 1024>}, {transform_indices = @transform_2, window_bounds = array<i64: 1, 8, 1024>}, {transform_indices = @transform_3, window_bounds = array<i64: 1, 1, 2, 1024>}]} {
    %c0 = arith.constant 0 : index
    %c0_0 = arith.constant 0 : index
    %c0_1 = arith.constant 0 : index
    %0 = vector.load %arg3[%c0, %c0_0, %c0_1] : memref<1x8x128xbf16, #tpu.memory_space<vmem>>, vector<1x8x128xbf16>
    %1 = vector.shape_cast %0 : vector<1x8x128xbf16> to vector<8x128xbf16>
    %c0_2 = arith.constant 0 : index
    %c0_3 = arith.constant 0 : index
    %c0_4 = arith.constant 0 : index
    %2 = vector.load %arg4[%c0_2, %c0_3, %c0_4] : memref<1x128x1024xbf16, #tpu.memory_space<vmem>>, vector<1x128x1024xbf16>
    %3 = vector.shape_cast %2 : vector<1x128x1024xbf16> to vector<128x1024xbf16>
    %cst = arith.constant dense<0.000000e+00> : vector<8x1024xf32>
    %4 = tpu.matmul %1, %3, %cst {dimension_numbers = #tpu.dot_dimension_numbers<[1], [0], [0], [1], [0, 0, 1, 1], [], []>} : vector<8x128xbf16>, vector<128x1024xbf16>, vector<8x1024xf32> -> vector<8x1024xf32>
    %5 = arith.truncf %4 : vector<8x1024xf32> to vector<8x1024xbf16>
    %c0_5 = arith.constant 0 : index
    %c0_6 = arith.constant 0 : index
    %c0_7 = arith.constant 0 : index
    %6 = vector.load %arg5[%c0_5, %c0_6, %c0_7] : memref<1x8x1024xbf16, #tpu.memory_space<vmem>>, vector<1x8x1024xbf16>
    %7 = vector.shape_cast %6 : vector<1x8x1024xbf16> to vector<8x1024xbf16>
    %8 = vector.shape_cast %5 : vector<8x1024xbf16> to vector<1x8x1024xbf16>
    tpu.vector_store %arg5[%c0_5, %c0_6, %c0_7], %8 {strides = array<i32>} : memref<1x8x1024xbf16, #tpu.memory_space<vmem>>, vector<1x8x1024xbf16>,
    %cst_8 = arith.constant dense<0.000000e+00> : vector<1024xf32>
    %9 = vector.multi_reduction <add>, %4, %cst_8 [0] : vector<8x1024xf32> to vector<1024xf32>
    %10 = vector.shape_cast %9 : vector<1024xf32> to vector<1x1024xf32>
    %11 = arith.mulf %4, %4 : vector<8x1024xf32>
    %cst_9 = arith.constant dense<0.000000e+00> : vector<1024xf32>
    %12 = vector.multi_reduction <add>, %11, %cst_9 [0] : vector<8x1024xf32> to vector<1024xf32>
    %13 = vector.shape_cast %12 : vector<1024xf32> to vector<1x1024xf32>
    %14 = tpu.concatenate %10, %13 in 0 : vector<1x1024xf32>, vector<1x1024xf32> -> vector<2x1024xf32>
    %c0_10 = arith.constant 0 : index
    %c0_11 = arith.constant 0 : index
    %c0_12 = arith.constant 0 : index
    %c0_13 = arith.constant 0 : index
    %15 = vector.load %arg6[%c0_10, %c0_11, %c0_12, %c0_13] : memref<1x1x2x1024xf32, #tpu.memory_space<vmem>>, vector<1x1x2x1024xf32>
    %16 = vector.shape_cast %15 : vector<1x1x2x1024xf32> to vector<2x1024xf32>
    %17 = vector.shape_cast %14 : vector<2x1024xf32> to vector<1x1x2x1024xf32>
    tpu.vector_store %arg6[%c0_10, %c0_11, %c0_12, %c0_13], %17 {strides = array<i32>} : memref<1x1x2x1024xf32, #tpu.memory_space<vmem>>, vector<1x1x2x1024xf32>,
    return
  }
  func.func @transform_0(%arg0: i32, %arg1: i32, %arg2: i32) -> (i32, i32, i32) {
    %c0_i32 = arith.constant 0 : i32
    %c0_i32_0 = arith.constant 0 : i32
    return %arg0, %arg1, %c0_i32 : i32, i32, i32
  }
  func.func @transform_1(%arg0: i32, %arg1: i32, %arg2: i32) -> (i32, i32, i32) {
    %c0_i32 = arith.constant 0 : i32
    %c0_i32_0 = arith.constant 0 : i32
    return %arg0, %c0_i32, %arg2 : i32, i32, i32
  }
  func.func @transform_2(%arg0: i32, %arg1: i32, %arg2: i32) -> (i32, i32, i32) {
    %c0_i32 = arith.constant 0 : i32
    return %arg0, %arg1, %arg2 : i32, i32, i32
  }
  func.func @transform_3(%arg0: i32, %arg1: i32, %arg2: i32) -> (i32, i32, i32, i32) {
    %c0_i32 = arith.constant 0 : i32
    %c0_i32_0 = arith.constant 0 : i32
    return %arg0, %arg1, %c0_i32, %arg2 : i32, i32, i32, i32
  }
}

module attributes {stable_mosaic.version = 11 : i64} {
  func.func @_conv_mm_kernel(%arg0: i32, %arg1: i32, %arg2: i32, %arg3: memref<1x2048xf32, #tpu.memory_space<vmem>>, %arg4: memref<1x32x2048xbf16, #tpu.memory_space<vmem>>, %arg5: memref<1x2048x128xbf16, #tpu.memory_space<vmem>>, %arg6: memref<1x32x128xbf16, #tpu.memory_space<vmem>>, %arg7: memref<1x1x2x128xf32, #tpu.memory_space<vmem>>) attributes {dimension_semantics = [#tpu.dimension_semantics<parallel>, #tpu.dimension_semantics<parallel>, #tpu.dimension_semantics<parallel>], iteration_bounds = array<i64: 4, 1, 2>, scalar_prefetch = 0 : i64, scratch_operands = 0 : i64, tpu.core_type = #tpu.core_type<tc>, window_params = [{pipeline_mode = #tpu.pipeline_mode<synchronous>, transform_indices = @transform_0, window_bounds = array<i64: 1, 2048>}, {transform_indices = @transform_1, window_bounds = array<i64: 1, 32, 2048>}, {transform_indices = @transform_2, window_bounds = array<i64: 1, 2048, 128>}, {transform_indices = @transform_3, window_bounds = array<i64: 1, 32, 128>}, {transform_indices = @transform_4, window_bounds = array<i64: 1, 1, 2, 128>}]} {
    %c0 = arith.constant 0 : index
    %c0_0 = arith.constant 0 : index
    %c0_1 = arith.constant 0 : index
    %0 = vector.load %arg4[%c0, %c0_0, %c0_1] : memref<1x32x2048xbf16, #tpu.memory_space<vmem>>, vector<1x32x2048xbf16>
    %1 = vector.shape_cast %0 : vector<1x32x2048xbf16> to vector<32x2048xbf16>
    %2 = arith.extf %1 : vector<32x2048xbf16> to vector<32x2048xf32>
    %c0_2 = arith.constant 0 : index
    %c0_3 = arith.constant 0 : index
    %3 = vector.load %arg3[%c0_2, %c0_3] : memref<1x2048xf32, #tpu.memory_space<vmem>>, vector<1x2048xf32>
    %4 = vector.broadcast %3 : vector<1x2048xf32> to vector<32x2048xf32>
    %5 = arith.mulf %2, %4 : vector<32x2048xf32>
    %cst = arith.constant 0.000000e+00 : f32
    %6 = vector.broadcast %cst : f32 to vector<32x2048xf32>
    %7 = arith.maximumf %5, %6 : vector<32x2048xf32>
    %8 = arith.truncf %7 : vector<32x2048xf32> to vector<32x2048xbf16>
    %c0_4 = arith.constant 0 : index
    %c0_5 = arith.constant 0 : index
    %c0_6 = arith.constant 0 : index
    %9 = vector.load %arg5[%c0_4, %c0_5, %c0_6] : memref<1x2048x128xbf16, #tpu.memory_space<vmem>>, vector<1x2048x128xbf16>
    %10 = vector.shape_cast %9 : vector<1x2048x128xbf16> to vector<2048x128xbf16>
    %cst_7 = arith.constant dense<0.000000e+00> : vector<32x128xf32>
    %11 = tpu.matmul %8, %10, %cst_7 {dimension_numbers = #tpu.dot_dimension_numbers<[1], [0], [0], [1], [0, 0, 1, 1], [], []>} : vector<32x2048xbf16>, vector<2048x128xbf16>, vector<32x128xf32> -> vector<32x128xf32>
    %12 = arith.truncf %11 : vector<32x128xf32> to vector<32x128xbf16>
    %c0_8 = arith.constant 0 : index
    %c0_9 = arith.constant 0 : index
    %c0_10 = arith.constant 0 : index
    %13 = vector.load %arg6[%c0_8, %c0_9, %c0_10] : memref<1x32x128xbf16, #tpu.memory_space<vmem>>, vector<1x32x128xbf16>
    %14 = vector.shape_cast %13 : vector<1x32x128xbf16> to vector<32x128xbf16>
    %15 = vector.shape_cast %12 : vector<32x128xbf16> to vector<1x32x128xbf16>
    tpu.vector_store %arg6[%c0_8, %c0_9, %c0_10], %15 {strides = array<i32>} : memref<1x32x128xbf16, #tpu.memory_space<vmem>>, vector<1x32x128xbf16>,
    %cst_11 = arith.constant dense<0.000000e+00> : vector<128xf32>
    %16 = vector.multi_reduction <add>, %11, %cst_11 [0] : vector<32x128xf32> to vector<128xf32>
    %17 = vector.shape_cast %16 : vector<128xf32> to vector<1x128xf32>
    %18 = arith.mulf %11, %11 : vector<32x128xf32>
    %cst_12 = arith.constant dense<0.000000e+00> : vector<128xf32>
    %19 = vector.multi_reduction <add>, %18, %cst_12 [0] : vector<32x128xf32> to vector<128xf32>
    %20 = vector.shape_cast %19 : vector<128xf32> to vector<1x128xf32>
    %21 = tpu.concatenate %17, %20 in 0 : vector<1x128xf32>, vector<1x128xf32> -> vector<2x128xf32>
    %c0_13 = arith.constant 0 : index
    %c0_14 = arith.constant 0 : index
    %c0_15 = arith.constant 0 : index
    %c0_16 = arith.constant 0 : index
    %22 = vector.load %arg7[%c0_13, %c0_14, %c0_15, %c0_16] : memref<1x1x2x128xf32, #tpu.memory_space<vmem>>, vector<1x1x2x128xf32>
    %23 = vector.shape_cast %22 : vector<1x1x2x128xf32> to vector<2x128xf32>
    %24 = vector.shape_cast %21 : vector<2x128xf32> to vector<1x1x2x128xf32>
    tpu.vector_store %arg7[%c0_13, %c0_14, %c0_15, %c0_16], %24 {strides = array<i32>} : memref<1x1x2x128xf32, #tpu.memory_space<vmem>>, vector<1x1x2x128xf32>,
    return
  }
  func.func @transform_0(%arg0: i32, %arg1: i32, %arg2: i32) -> (i32, i32) {
    %c0_i32 = arith.constant 0 : i32
    %c0_i32_0 = arith.constant 0 : i32
    %c0_i32_1 = arith.constant 0 : i32
    return %c0_i32, %c0_i32_0 : i32, i32
  }
  func.func @transform_1(%arg0: i32, %arg1: i32, %arg2: i32) -> (i32, i32, i32) {
    %c0_i32 = arith.constant 0 : i32
    %c0_i32_0 = arith.constant 0 : i32
    return %arg0, %arg1, %c0_i32 : i32, i32, i32
  }
  func.func @transform_2(%arg0: i32, %arg1: i32, %arg2: i32) -> (i32, i32, i32) {
    %c0_i32 = arith.constant 0 : i32
    %c0_i32_0 = arith.constant 0 : i32
    return %arg0, %c0_i32, %arg2 : i32, i32, i32
  }
  func.func @transform_3(%arg0: i32, %arg1: i32, %arg2: i32) -> (i32, i32, i32) {
    %c0_i32 = arith.constant 0 : i32
    return %arg0, %arg1, %arg2 : i32, i32, i32
  }
  func.func @transform_4(%arg0: i32, %arg1: i32, %arg2: i32) -> (i32, i32, i32, i32) {
    %c0_i32 = arith.constant 0 : i32
    %c0_i32_0 = arith.constant 0 : i32
    return %arg0, %arg1, %c0_i32, %arg2 : i32, i32, i32, i32
  }
}

module attributes {stable_mosaic.version = 11 : i64} {
  func.func @_conv_mm_kernel(%arg0: i32, %arg1: i32, %arg2: i32, %arg3: memref<1x1024xf32, #tpu.memory_space<vmem>>, %arg4: memref<1x64x1024xbf16, #tpu.memory_space<vmem>>, %arg5: memref<1x1024x128xbf16, #tpu.memory_space<vmem>>, %arg6: memref<1x64x128xbf16, #tpu.memory_space<vmem>>, %arg7: memref<1x1x2x128xf32, #tpu.memory_space<vmem>>) attributes {dimension_semantics = [#tpu.dimension_semantics<parallel>, #tpu.dimension_semantics<parallel>, #tpu.dimension_semantics<parallel>], iteration_bounds = array<i64: 4, 2, 1>, scalar_prefetch = 0 : i64, scratch_operands = 0 : i64, tpu.core_type = #tpu.core_type<tc>, window_params = [{pipeline_mode = #tpu.pipeline_mode<synchronous>, transform_indices = @transform_0, window_bounds = array<i64: 1, 1024>}, {transform_indices = @transform_1, window_bounds = array<i64: 1, 64, 1024>}, {transform_indices = @transform_2, window_bounds = array<i64: 1, 1024, 128>}, {transform_indices = @transform_3, window_bounds = array<i64: 1, 64, 128>}, {transform_indices = @transform_4, window_bounds = array<i64: 1, 1, 2, 128>}]} {
    %c0 = arith.constant 0 : index
    %c0_0 = arith.constant 0 : index
    %c0_1 = arith.constant 0 : index
    %0 = vector.load %arg4[%c0, %c0_0, %c0_1] : memref<1x64x1024xbf16, #tpu.memory_space<vmem>>, vector<1x64x1024xbf16>
    %1 = vector.shape_cast %0 : vector<1x64x1024xbf16> to vector<64x1024xbf16>
    %2 = arith.extf %1 : vector<64x1024xbf16> to vector<64x1024xf32>
    %c0_2 = arith.constant 0 : index
    %c0_3 = arith.constant 0 : index
    %3 = vector.load %arg3[%c0_2, %c0_3] : memref<1x1024xf32, #tpu.memory_space<vmem>>, vector<1x1024xf32>
    %4 = vector.broadcast %3 : vector<1x1024xf32> to vector<64x1024xf32>
    %5 = arith.mulf %2, %4 : vector<64x1024xf32>
    %cst = arith.constant 0.000000e+00 : f32
    %6 = vector.broadcast %cst : f32 to vector<64x1024xf32>
    %7 = arith.maximumf %5, %6 : vector<64x1024xf32>
    %8 = arith.truncf %7 : vector<64x1024xf32> to vector<64x1024xbf16>
    %c0_4 = arith.constant 0 : index
    %c0_5 = arith.constant 0 : index
    %c0_6 = arith.constant 0 : index
    %9 = vector.load %arg5[%c0_4, %c0_5, %c0_6] : memref<1x1024x128xbf16, #tpu.memory_space<vmem>>, vector<1x1024x128xbf16>
    %10 = vector.shape_cast %9 : vector<1x1024x128xbf16> to vector<1024x128xbf16>
    %cst_7 = arith.constant dense<0.000000e+00> : vector<64x128xf32>
    %11 = tpu.matmul %8, %10, %cst_7 {dimension_numbers = #tpu.dot_dimension_numbers<[1], [0], [0], [1], [0, 0, 1, 1], [], []>} : vector<64x1024xbf16>, vector<1024x128xbf16>, vector<64x128xf32> -> vector<64x128xf32>
    %12 = arith.truncf %11 : vector<64x128xf32> to vector<64x128xbf16>
    %c0_8 = arith.constant 0 : index
    %c0_9 = arith.constant 0 : index
    %c0_10 = arith.constant 0 : index
    %13 = vector.load %arg6[%c0_8, %c0_9, %c0_10] : memref<1x64x128xbf16, #tpu.memory_space<vmem>>, vector<1x64x128xbf16>
    %14 = vector.shape_cast %13 : vector<1x64x128xbf16> to vector<64x128xbf16>
    %15 = vector.shape_cast %12 : vector<64x128xbf16> to vector<1x64x128xbf16>
    tpu.vector_store %arg6[%c0_8, %c0_9, %c0_10], %15 {strides = array<i32>} : memref<1x64x128xbf16, #tpu.memory_space<vmem>>, vector<1x64x128xbf16>,
    %cst_11 = arith.constant dense<0.000000e+00> : vector<128xf32>
    %16 = vector.multi_reduction <add>, %11, %cst_11 [0] : vector<64x128xf32> to vector<128xf32>
    %17 = vector.shape_cast %16 : vector<128xf32> to vector<1x128xf32>
    %18 = arith.mulf %11, %11 : vector<64x128xf32>
    %cst_12 = arith.constant dense<0.000000e+00> : vector<128xf32>
    %19 = vector.multi_reduction <add>, %18, %cst_12 [0] : vector<64x128xf32> to vector<128xf32>
    %20 = vector.shape_cast %19 : vector<128xf32> to vector<1x128xf32>
    %21 = tpu.concatenate %17, %20 in 0 : vector<1x128xf32>, vector<1x128xf32> -> vector<2x128xf32>
    %c0_13 = arith.constant 0 : index
    %c0_14 = arith.constant 0 : index
    %c0_15 = arith.constant 0 : index
    %c0_16 = arith.constant 0 : index
    %22 = vector.load %arg7[%c0_13, %c0_14, %c0_15, %c0_16] : memref<1x1x2x128xf32, #tpu.memory_space<vmem>>, vector<1x1x2x128xf32>
    %23 = vector.shape_cast %22 : vector<1x1x2x128xf32> to vector<2x128xf32>
    %24 = vector.shape_cast %21 : vector<2x128xf32> to vector<1x1x2x128xf32>
    tpu.vector_store %arg7[%c0_13, %c0_14, %c0_15, %c0_16], %24 {strides = array<i32>} : memref<1x1x2x128xf32, #tpu.memory_space<vmem>>, vector<1x1x2x128xf32>,
    return
  }
  func.func @transform_0(%arg0: i32, %arg1: i32, %arg2: i32) -> (i32, i32) {
    %c0_i32 = arith.constant 0 : i32
    %c0_i32_0 = arith.constant 0 : i32
    %c0_i32_1 = arith.constant 0 : i32
    return %c0_i32, %c0_i32_0 : i32, i32
  }
  func.func @transform_1(%arg0: i32, %arg1: i32, %arg2: i32) -> (i32, i32, i32) {
    %c0_i32 = arith.constant 0 : i32
    %c0_i32_0 = arith.constant 0 : i32
    return %arg0, %arg1, %c0_i32 : i32, i32, i32
  }
  func.func @transform_2(%arg0: i32, %arg1: i32, %arg2: i32) -> (i32, i32, i32) {
    %c0_i32 = arith.constant 0 : i32
    %c0_i32_0 = arith.constant 0 : i32
    return %arg0, %c0_i32, %arg2 : i32, i32, i32
  }
  func.func @transform_3(%arg0: i32, %arg1: i32, %arg2: i32) -> (i32, i32, i32) {
    %c0_i32 = arith.constant 0 : i32
    return %arg0, %arg1, %arg2 : i32, i32, i32
  }
  func.func @transform_4(%arg0: i32, %arg1: i32, %arg2: i32) -> (i32, i32, i32, i32) {
    %c0_i32 = arith.constant 0 : i32
    %c0_i32_0 = arith.constant 0 : i32
    return %arg0, %arg1, %c0_i32, %arg2 : i32, i32, i32, i32
  }
}

module attributes {stable_mosaic.version = 11 : i64} {
  func.func @_conv_mm_kernel(%arg0: i32, %arg1: i32, %arg2: i32, %arg3: memref<1x512xf32, #tpu.memory_space<vmem>>, %arg4: memref<1x256x512xbf16, #tpu.memory_space<vmem>>, %arg5: memref<1x512x128xbf16, #tpu.memory_space<vmem>>, %arg6: memref<1x256x128xbf16, #tpu.memory_space<vmem>>, %arg7: memref<1x1x2x128xf32, #tpu.memory_space<vmem>>) attributes {dimension_semantics = [#tpu.dimension_semantics<parallel>, #tpu.dimension_semantics<parallel>, #tpu.dimension_semantics<parallel>], iteration_bounds = array<i64: 4, 2, 1>, scalar_prefetch = 0 : i64, scratch_operands = 0 : i64, tpu.core_type = #tpu.core_type<tc>, window_params = [{pipeline_mode = #tpu.pipeline_mode<synchronous>, transform_indices = @transform_0, window_bounds = array<i64: 1, 512>}, {transform_indices = @transform_1, window_bounds = array<i64: 1, 256, 512>}, {transform_indices = @transform_2, window_bounds = array<i64: 1, 512, 128>}, {transform_indices = @transform_3, window_bounds = array<i64: 1, 256, 128>}, {transform_indices = @transform_4, window_bounds = array<i64: 1, 1, 2, 128>}]} {
    %c0 = arith.constant 0 : index
    %c0_0 = arith.constant 0 : index
    %c0_1 = arith.constant 0 : index
    %0 = vector.load %arg4[%c0, %c0_0, %c0_1] : memref<1x256x512xbf16, #tpu.memory_space<vmem>>, vector<1x256x512xbf16>
    %1 = vector.shape_cast %0 : vector<1x256x512xbf16> to vector<256x512xbf16>
    %2 = arith.extf %1 : vector<256x512xbf16> to vector<256x512xf32>
    %c0_2 = arith.constant 0 : index
    %c0_3 = arith.constant 0 : index
    %3 = vector.load %arg3[%c0_2, %c0_3] : memref<1x512xf32, #tpu.memory_space<vmem>>, vector<1x512xf32>
    %4 = vector.broadcast %3 : vector<1x512xf32> to vector<256x512xf32>
    %5 = arith.mulf %2, %4 : vector<256x512xf32>
    %cst = arith.constant 0.000000e+00 : f32
    %6 = vector.broadcast %cst : f32 to vector<256x512xf32>
    %7 = arith.maximumf %5, %6 : vector<256x512xf32>
    %8 = arith.truncf %7 : vector<256x512xf32> to vector<256x512xbf16>
    %c0_4 = arith.constant 0 : index
    %c0_5 = arith.constant 0 : index
    %c0_6 = arith.constant 0 : index
    %9 = vector.load %arg5[%c0_4, %c0_5, %c0_6] : memref<1x512x128xbf16, #tpu.memory_space<vmem>>, vector<1x512x128xbf16>
    %10 = vector.shape_cast %9 : vector<1x512x128xbf16> to vector<512x128xbf16>
    %cst_7 = arith.constant dense<0.000000e+00> : vector<256x128xf32>
    %11 = tpu.matmul %8, %10, %cst_7 {dimension_numbers = #tpu.dot_dimension_numbers<[1], [0], [0], [1], [0, 0, 1, 1], [], []>} : vector<256x512xbf16>, vector<512x128xbf16>, vector<256x128xf32> -> vector<256x128xf32>
    %12 = arith.truncf %11 : vector<256x128xf32> to vector<256x128xbf16>
    %c0_8 = arith.constant 0 : index
    %c0_9 = arith.constant 0 : index
    %c0_10 = arith.constant 0 : index
    %13 = vector.load %arg6[%c0_8, %c0_9, %c0_10] : memref<1x256x128xbf16, #tpu.memory_space<vmem>>, vector<1x256x128xbf16>
    %14 = vector.shape_cast %13 : vector<1x256x128xbf16> to vector<256x128xbf16>
    %15 = vector.shape_cast %12 : vector<256x128xbf16> to vector<1x256x128xbf16>
    tpu.vector_store %arg6[%c0_8, %c0_9, %c0_10], %15 {strides = array<i32>} : memref<1x256x128xbf16, #tpu.memory_space<vmem>>, vector<1x256x128xbf16>,
    %cst_11 = arith.constant dense<0.000000e+00> : vector<128xf32>
    %16 = vector.multi_reduction <add>, %11, %cst_11 [0] : vector<256x128xf32> to vector<128xf32>
    %17 = vector.shape_cast %16 : vector<128xf32> to vector<1x128xf32>
    %18 = arith.mulf %11, %11 : vector<256x128xf32>
    %cst_12 = arith.constant dense<0.000000e+00> : vector<128xf32>
    %19 = vector.multi_reduction <add>, %18, %cst_12 [0] : vector<256x128xf32> to vector<128xf32>
    %20 = vector.shape_cast %19 : vector<128xf32> to vector<1x128xf32>
    %21 = tpu.concatenate %17, %20 in 0 : vector<1x128xf32>, vector<1x128xf32> -> vector<2x128xf32>
    %c0_13 = arith.constant 0 : index
    %c0_14 = arith.constant 0 : index
    %c0_15 = arith.constant 0 : index
    %c0_16 = arith.constant 0 : index
    %22 = vector.load %arg7[%c0_13, %c0_14, %c0_15, %c0_16] : memref<1x1x2x128xf32, #tpu.memory_space<vmem>>, vector<1x1x2x128xf32>
    %23 = vector.shape_cast %22 : vector<1x1x2x128xf32> to vector<2x128xf32>
    %24 = vector.shape_cast %21 : vector<2x128xf32> to vector<1x1x2x128xf32>
    tpu.vector_store %arg7[%c0_13, %c0_14, %c0_15, %c0_16], %24 {strides = array<i32>} : memref<1x1x2x128xf32, #tpu.memory_space<vmem>>, vector<1x1x2x128xf32>,
    return
  }
  func.func @transform_0(%arg0: i32, %arg1: i32, %arg2: i32) -> (i32, i32) {
    %c0_i32 = arith.constant 0 : i32
    %c0_i32_0 = arith.constant 0 : i32
    %c0_i32_1 = arith.constant 0 : i32
    return %c0_i32, %c0_i32_0 : i32, i32
  }
  func.func @transform_1(%arg0: i32, %arg1: i32, %arg2: i32) -> (i32, i32, i32) {
    %c0_i32 = arith.constant 0 : i32
    %c0_i32_0 = arith.constant 0 : i32
    return %arg0, %arg1, %c0_i32 : i32, i32, i32
  }
  func.func @transform_2(%arg0: i32, %arg1: i32, %arg2: i32) -> (i32, i32, i32) {
    %c0_i32 = arith.constant 0 : i32
    %c0_i32_0 = arith.constant 0 : i32
    return %arg0, %c0_i32, %arg2 : i32, i32, i32
  }
  func.func @transform_3(%arg0: i32, %arg1: i32, %arg2: i32) -> (i32, i32, i32) {
    %c0_i32 = arith.constant 0 : i32
    return %arg0, %arg1, %arg2 : i32, i32, i32
  }
  func.func @transform_4(%arg0: i32, %arg1: i32, %arg2: i32) -> (i32, i32, i32, i32) {
    %c0_i32 = arith.constant 0 : i32
    %c0_i32_0 = arith.constant 0 : i32
    return %arg0, %arg1, %c0_i32, %arg2 : i32, i32, i32, i32
  }
}

module attributes {stable_mosaic.version = 11 : i64} {
  func.func @_conv_mm_kernel(%arg0: i32, %arg1: i32, %arg2: i32, %arg3: memref<1x256xf32, #tpu.memory_space<vmem>>, %arg4: memref<1x256x256xbf16, #tpu.memory_space<vmem>>, %arg5: memref<1x256x128xbf16, #tpu.memory_space<vmem>>, %arg6: memref<1x256x128xf32, #tpu.memory_space<vmem>>) attributes {dimension_semantics = [#tpu.dimension_semantics<parallel>, #tpu.dimension_semantics<parallel>, #tpu.dimension_semantics<parallel>], iteration_bounds = array<i64: 4, 8, 1>, scalar_prefetch = 0 : i64, scratch_operands = 0 : i64, tpu.core_type = #tpu.core_type<tc>, window_params = [{pipeline_mode = #tpu.pipeline_mode<synchronous>, transform_indices = @transform_0, window_bounds = array<i64: 1, 256>}, {transform_indices = @transform_1, window_bounds = array<i64: 1, 256, 256>}, {transform_indices = @transform_2, window_bounds = array<i64: 1, 256, 128>}, {transform_indices = @transform_3, window_bounds = array<i64: 1, 256, 128>}]} {
    %c0 = arith.constant 0 : index
    %c0_0 = arith.constant 0 : index
    %c0_1 = arith.constant 0 : index
    %0 = vector.load %arg4[%c0, %c0_0, %c0_1] : memref<1x256x256xbf16, #tpu.memory_space<vmem>>, vector<1x256x256xbf16>
    %1 = vector.shape_cast %0 : vector<1x256x256xbf16> to vector<256x256xbf16>
    %2 = arith.extf %1 : vector<256x256xbf16> to vector<256x256xf32>
    %c0_2 = arith.constant 0 : index
    %c0_3 = arith.constant 0 : index
    %3 = vector.load %arg3[%c0_2, %c0_3] : memref<1x256xf32, #tpu.memory_space<vmem>>, vector<1x256xf32>
    %4 = vector.broadcast %3 : vector<1x256xf32> to vector<256x256xf32>
    %5 = arith.mulf %2, %4 : vector<256x256xf32>
    %cst = arith.constant 0.000000e+00 : f32
    %6 = vector.broadcast %cst : f32 to vector<256x256xf32>
    %7 = arith.maximumf %5, %6 : vector<256x256xf32>
    %8 = arith.truncf %7 : vector<256x256xf32> to vector<256x256xbf16>
    %c0_4 = arith.constant 0 : index
    %c0_5 = arith.constant 0 : index
    %c0_6 = arith.constant 0 : index
    %9 = vector.load %arg5[%c0_4, %c0_5, %c0_6] : memref<1x256x128xbf16, #tpu.memory_space<vmem>>, vector<1x256x128xbf16>
    %10 = vector.shape_cast %9 : vector<1x256x128xbf16> to vector<256x128xbf16>
    %cst_7 = arith.constant dense<0.000000e+00> : vector<256x128xf32>
    %11 = tpu.matmul %8, %10, %cst_7 {dimension_numbers = #tpu.dot_dimension_numbers<[1], [0], [0], [1], [0, 0, 1, 1], [], []>} : vector<256x256xbf16>, vector<256x128xbf16>, vector<256x128xf32> -> vector<256x128xf32>
    %12 = math.tanh %11 : vector<256x128xf32>
    %c0_8 = arith.constant 0 : index
    %c0_9 = arith.constant 0 : index
    %c0_10 = arith.constant 0 : index
    %13 = vector.load %arg6[%c0_8, %c0_9, %c0_10] : memref<1x256x128xf32, #tpu.memory_space<vmem>>, vector<1x256x128xf32>
    %14 = vector.shape_cast %13 : vector<1x256x128xf32> to vector<256x128xf32>
    %15 = vector.shape_cast %12 : vector<256x128xf32> to vector<1x256x128xf32>
    tpu.vector_store %arg6[%c0_8, %c0_9, %c0_10], %15 {strides = array<i32>} : memref<1x256x128xf32, #tpu.memory_space<vmem>>, vector<1x256x128xf32>,
    return
  }
  func.func @transform_0(%arg0: i32, %arg1: i32, %arg2: i32) -> (i32, i32) {
    %c0_i32 = arith.constant 0 : i32
    %c0_i32_0 = arith.constant 0 : i32
    %c0_i32_1 = arith.constant 0 : i32
    return %c0_i32, %c0_i32_0 : i32, i32
  }
  func.func @transform_1(%arg0: i32, %arg1: i32, %arg2: i32) -> (i32, i32, i32) {
    %c0_i32 = arith.constant 0 : i32
    %c0_i32_0 = arith.constant 0 : i32
    return %arg0, %arg1, %c0_i32 : i32, i32, i32
  }
  func.func @transform_2(%arg0: i32, %arg1: i32, %arg2: i32) -> (i32, i32, i32) {
    %c0_i32 = arith.constant 0 : i32
    %c0_i32_0 = arith.constant 0 : i32
    return %arg0, %c0_i32, %arg2 : i32, i32, i32
  }
  func.func @transform_3(%arg0: i32, %arg1: i32, %arg2: i32) -> (i32, i32, i32) {
    %c0_i32 = arith.constant 0 : i32
    return %arg0, %arg1, %arg2 : i32, i32, i32
  }
}

</mosaic_0001>

<llo_original>
// kernel: squeeze.11
$region0: #{squeeze.11}
  %s0 = inlined_call_operand.vmem [shape: f32[8192], index: 0, kind: input, shape index: {}]
  %s1 = inlined_call_operand.vmem [shape: f32[16,512], index: 1, kind: output, shape index: {}]
  %v2 = vld [vmem:[%s0] sm:$0xff]
  %3 = vst [vmem:[%s1] ss:$8 sm:$0xf] %v2
  %s4 = scalar_lea.vmem %s1, 4294967265
  %5 = vst [vmem:[%s4] ss:$8 sm:$0xf0] %v2
  %s6 = scalar_lea.vmem %s0, 8
  %v7 = vld [vmem:[%s6] sm:$0xff]
  %s8 = scalar_lea.vmem %s1, 2
  %9 = vst [vmem:[%s8] ss:$8 sm:$0xf] %v7
  %s10 = scalar_lea.vmem %s1, 4294967267
  %11 = vst [vmem:[%s10] ss:$8 sm:$0xf0] %v7
  %s12 = scalar_lea.vmem %s0, 16
  %v13 = vld [vmem:[%s12] sm:$0xff]
  %s14 = scalar_lea.vmem %s1, 4
  %15 = vst [vmem:[%s14] ss:$8 sm:$0xf] %v13
  %s16 = scalar_lea.vmem %s1, 4294967269
  %17 = vst [vmem:[%s16] ss:$8 sm:$0xf0] %v13
  %s18 = scalar_lea.vmem %s0, 24
  %v19 = vld [vmem:[%s18] sm:$0xff]
  %s20 = scalar_lea.vmem %s1, 6
  %21 = vst [vmem:[%s20] ss:$8 sm:$0xf] %v19
  %s22 = scalar_lea.vmem %s1, 4294967271
  %23 = vst [vmem:[%s22] ss:$8 sm:$0xf0] %v19
  %s24 = scalar_lea.vmem %s0, 32
  %v25 = vld [vmem:[%s24] sm:$0xff]
  %s26 = scalar_lea.vmem %s1, 32
  %27 = vst [vmem:[%s26] ss:$8 sm:$0xf] %v25
  %s28 = scalar_lea.vmem %s1, 1
  %29 = vst [vmem:[%s28] ss:$8 sm:$0xf0] %v25
  %s30 = scalar_lea.vmem %s0, 40
  %v31 = vld [vmem:[%s30] sm:$0xff]
  %s32 = scalar_lea.vmem %s1, 34
  %33 = vst [vmem:[%s32] ss:$8 sm:$0xf] %v31
  %s34 = scalar_lea.vmem %s1, 3
  %35 = vst [vmem:[%s34] ss:$8 sm:$0xf0] %v31
  %s36 = scalar_lea.vmem %s0, 48
  %v37 = vld [vmem:[%s36] sm:$0xff]
  %s38 = scalar_lea.vmem %s1, 36
  %39 = vst [vmem:[%s38] ss:$8 sm:$0xf] %v37
  %s40 = scalar_lea.vmem %s1, 5
  %41 = vst [vmem:[%s40] ss:$8 sm:$0xf0] %v37
  %s42 = scalar_lea.vmem %s0, 56
  %v43 = vld [vmem:[%s42] sm:$0xff]
  %s44 = scalar_lea.vmem %s1, 38
  %45 = vst [vmem:[%s44] ss:$8 sm:$0xf] %v43
  %s46 = scalar_lea.vmem %s1, 7
  %47 = vst [vmem:[%s46] ss:$8 sm:$0xf0] %v43

// kernel: generator_forward.5
$region0: #{generator_forward.5}
  #allocation0 [shape = 'u32[]', space=smem, size = 0x4, offset = 0x4, fixed_abs, tag = 'smem constant byte address 0x4 - core index']
  #allocation1 [shape = 'u32[144,128]{1,0:T(1,128)}', space=vmem, size = 0x12000, scoped, tag = 'internal scratch']
  %s0 = inlined_call_operand.vmem [shape: bf16[1,8,128], index: 0, kind: input, shape index: {}]
  %s1 = inlined_call_operand.vmem [shape: bf16[1,128,8192], index: 1, kind: input, shape index: {}]
  %s2 = inlined_call_operand.vmem [shape: bf16[1,8,8192], index: 2, kind: output, shape index: {0}]
  %s3 = inlined_call_operand.vmem [shape: f32[1,1,2,8192], index: 3, kind: output, shape index: {1}]
  %4 = xla_tuple %s2, %s3
  %s5 = sld [smem:[#allocation0]]
  $region72: #{generator_forward.5} parent=0
    _
  %s7 = ssub.s32 1, %s5
  %s8 = scalar_select 0, %s7, %s5
  $region1: #{generator_forward.5} parent=0
    #allocation2 [shape = 'u8[524288]{0}', space=vmem, size = 0x80000, scoped, tag = 'input window, operand 1']
    loop: start=0, step=1, limit=10
    $region2: #{generator_forward.5} parent=1 // loop_pre_header
      _
    $region3: #{generator_forward.5} parent=1 // loop_header
      %s10 = sphi 0, %s14
      %p11 = scmp.ge.s32.totalorder %s10, 10
      %s17 = sphi 0, %s36
      %s18 = sphi 0, %s32
      %s19 = sphi 0, %s28
      %s20 = sphi 0, %s17
      %s21 = sphi 0, %s18
      %s22 = sphi 0, %s19
      %s23 = sphi 0, %s20
      %s24 = sphi 0, %s21
      %s25 = sphi 0, %s22
      %s41 = sphi 0, %s43
      %s44 = sphi 0, %s41
      %s45 = sphi 0, %s44
      %s61 = sphi 0, %s45
      %s69 = sphi 0, %s71
      %s72 = sphi 0, %s69
      %s73 = sphi 0, %s72
      %s89 = sphi 0, %s73
      %s99 = sphi 0, %s101
      %s102 = sphi 0, %s99
      %s103 = sphi 0, %s102
      %s119 = sphi 0, %s103
      %s129 = sphi 0, %s131
      %s132 = sphi 0, %s129
      %s133 = sphi 0, %s132
      %s149 = sphi 0, %s133
    $region4: #{generator_forward.5} parent=1 // loop_header_branch
      %13 = sbr.rel (%p11) target = $region8
    $region5: #{generator_forward.5} parent=1 // loop_body
      %s15 = ssub.s32 %s10, 1
      %s16 = ssub.s32 %s10, 2
      %s26 = sadd.s32 1, %s19
      %p27 = scmp.ge.s32.totalorder %s26, 8
      %s28 = scalar_select %p27, 0, %s26
      %s29 = sadd.s32 1, %s18
      %s30 = scalar_select %p27, %s29, %s18
      %p31 = scmp.ge.s32.totalorder %s30, 1
      %s32 = scalar_select %p31, 0, %s30
      %s33 = sadd.s32 1, %s17
      %s34 = scalar_select %p31, %s33, %s17
      %p35 = scmp.ge.s32.totalorder %s34, 1
      %s36 = scalar_select %p35, 0, %s34
      %s37 = ssub.s32 %s17, %s36
      %s38 = ssub.s32 %s18, %s32
      %s39 = sor.u32 %s37, %s38
      %p40 = scmp.eq.s32.totalorder %s39, 0
      %s42 = sadd.s32 %s41, 1
      %s43 = scalar_select %p40, %s41, %s42
      %p46 = pneg %p40
      %p47 = scmp.eq.s32.totalorder %s10, 7
      %p48 = por %p46, %p47
      %p49 = scmp.ne.s32.totalorder %s41, %s44
      %p50 = scmp.eq.s32.totalorder %s10, 0
      %p51 = por %p49, %p50
      %p52 = scmp.ne.s32.totalorder %s41, %s44
      %p53 = scmp.eq.s32.totalorder %s15, 7
      %p54 = por %p52, %p53
      %p55 = scmp.ne.s32.totalorder %s44, %s45
      %p56 = scmp.eq.s32.totalorder %s15, 0
      %p57 = por %p55, %p56
      %p58 = scmp.ne.s32.totalorder %s44, %s45
      %p59 = scmp.eq.s32.totalorder %s16, 7
      %p60 = por %p58, %p59
      %p62 = scmp.ne.s32.totalorder %s45, %s61
      %p63 = scmp.eq.s32.totalorder %s16, 0
      %p64 = por %p62, %p63
      %s65 = ssub.s32 %s17, %s36
      %s66 = ssub.s32 %s19, %s28
      %s67 = sor.u32 %s65, %s66
      %p68 = scmp.eq.s32.totalorder %s67, 0
      %s70 = sadd.s32 %s69, 1
      %s71 = scalar_select %p68, %s69, %s70
      %p74 = pneg %p68
      %p75 = scmp.eq.s32.totalorder %s10, 7
      %p76 = por %p74, %p75
      %p77 = scmp.ne.s32.totalorder %s69, %s72
      %p78 = scmp.eq.s32.totalorder %s10, 0
      %p79 = por %p77, %p78
      %p80 = scmp.ne.s32.totalorder %s69, %s72
      %p81 = scmp.eq.s32.totalorder %s15, 7
      %p82 = por %p80, %p81
      %p83 = scmp.ne.s32.totalorder %s72, %s73
      %p84 = scmp.eq.s32.totalorder %s15, 0
      %p85 = por %p83, %p84
      %p86 = scmp.ne.s32.totalorder %s72, %s73
      %p87 = scmp.eq.s32.totalorder %s16, 7
      %p88 = por %p86, %p87
      %p90 = scmp.ne.s32.totalorder %s73, %s89
      %p91 = scmp.eq.s32.totalorder %s16, 0
      %p92 = por %p90, %p91
      %s93 = ssub.s32 %s17, %s36
      %s94 = ssub.s32 %s18, %s32
      %s95 = sor.u32 %s93, %s94
      %s96 = ssub.s32 %s19, %s28
      %s97 = sor.u32 %s95, %s96
      %p98 = scmp.eq.s32.totalorder %s97, 0
      %s100 = sadd.s32 %s99, 1
      %s101 = scalar_select %p98, %s99, %s100
      %p104 = pneg %p98
      %p105 = scmp.eq.s32.totalorder %s10, 7
      %p106 = por %p104, %p105
      %p107 = scmp.ne.s32.totalorder %s99, %s102
      %p108 = scmp.eq.s32.totalorder %s10, 0
      %p109 = por %p107, %p108
      %p110 = scmp.ne.s32.totalorder %s99, %s102
      %p111 = scmp.eq.s32.totalorder %s15, 7
      %p112 = por %p110, %p111
      %p113 = scmp.ne.s32.totalorder %s102, %s103
      %p114 = scmp.eq.s32.totalorder %s15, 0
      %p115 = por %p113, %p114
      %p116 = scmp.ne.s32.totalorder %s102, %s103
      %p117 = scmp.eq.s32.totalorder %s16, 7
      %p118 = por %p116, %p117
      %p120 = scmp.ne.s32.totalorder %s103, %s119
      %p121 = scmp.eq.s32.totalorder %s16, 0
      %p122 = por %p120, %p121
      %s123 = ssub.s32 %s17, %s36
      %s124 = ssub.s32 %s18, %s32
      %s125 = sor.u32 %s123, %s124
      %s126 = ssub.s32 %s19, %s28
      %s127 = sor.u32 %s125, %s126
      %p128 = scmp.eq.s32.totalorder %s127, 0
      %s130 = sadd.s32 %s129, 1
      %s131 = scalar_select %p128, %s129, %s130
      %p134 = pneg %p128
      %p135 = scmp.eq.s32.totalorder %s10, 7
      %p136 = por %p134, %p135
      %p137 = scmp.ne.s32.totalorder %s129, %s132
      %p138 = scmp.eq.s32.totalorder %s10, 0
      %p139 = por %p137, %p138
      %p140 = scmp.ne.s32.totalorder %s129, %s132
      %p141 = scmp.eq.s32.totalorder %s15, 7
      %p142 = por %p140, %p141
      %p143 = scmp.ne.s32.totalorder %s132, %s133
      %p144 = scmp.eq.s32.totalorder %s15, 0
      %p145 = por %p143, %p144
      %p146 = scmp.ne.s32.totalorder %s132, %s133
      %p147 = scmp.eq.s32.totalorder %s16, 7
      %p148 = por %p146, %p147
      %p150 = scmp.ne.s32.totalorder %s133, %s149
      %p151 = scmp.eq.s32.totalorder %s16, 0
      %p152 = por %p150, %p151
      %p153 = scmp.le.s32.totalorder 1, %s10
      %p154 = scmp.lt.s32.totalorder %s10, 9
      %p155 = pnand %p153, %p154
      %p156 = pneg %p155
      // Predicated region
      $region9: #{generator_forward.5} parent=5 // pred_check
        _
      $region10: #{generator_forward.5} parent=5 // pred_check_branch
        %158 = sbr.rel (%p155) target = $region12
      $region11: #{generator_forward.5} parent=5 // pred_region
        %s159 = ssub.s32 %s10, 1
        // Predicated region
        $region13: #{generator_forward.5} parent=11 // pred_check
          %p160 = pneg %p57
        $region14: #{generator_forward.5} parent=11 // pred_check_branch
          %162 = sbr.rel (%p160) target = $region16
        $region15: #{generator_forward.5} parent=11 // pred_region
          %p163 = scmp.lt.s32.totalorder %s20, 0
          %s164 = scalar_select %p163, %s20, 0
          %p165 = scmp.lt.s32.totalorder %s21, 0
          %s166 = scalar_select %p165, %s21, 0
          %s167 = sadd.s32 %s166, %s164
          %s168 = smul.addr %s167, 4
          %s169 = scalar_lea.vmem %s0, %s168
        $region16: #{generator_forward.5} parent=11 // pred_fallthru
          _
      $region12: #{generator_forward.5} parent=5 // pred_fallthru
        _
      %p170 = scmp.lt.s32.totalorder %s10, 8
      // Predicated region
      $region17: #{generator_forward.5} parent=5 // pred_check
        %p171 = pneg %p170
      $region18: #{generator_forward.5} parent=5 // pred_check_branch
        %173 = sbr.rel (%p171) target = $region20
      $region19: #{generator_forward.5} parent=5 // pred_region
        // Predicated region
        $region21: #{generator_forward.5} parent=19 // pred_check
          %p174 = pneg %p79
        $region22: #{generator_forward.5} parent=19 // pred_check_branch
          %176 = sbr.rel (%p174) target = $region24
        $region23: #{generator_forward.5} parent=19 // pred_region
          %s177 = sand.u32 %s69, 1
          %s178 = sand.u32 %s69, 1
          %s179 = smul.addr %s178, 512
          %s180 = scalar_lea.vmem [#allocation2], %s179
          %s181 = smul.u32 8, %s19
          %s182 = smul.addr %s17, 1024
          %s183 = sadd.s32 %s181, %s182
          %s184 = smul.addr %s183, 4
          %s185 = scalar_lea.vmem %s1, %s184
          // Predicated region
          $region25: #{generator_forward.5} parent=23 // pred_check
            _
          $region26: #{generator_forward.5} parent=23 // pred_check_branch
            %187 = sbr.rel (0) target = $region28
          $region27: #{generator_forward.5} parent=23 // pred_region
            // Predicated region
            $region29: #{generator_forward.5} parent=27 // pred_check
              _
            $region30: #{generator_forward.5} parent=27 // pred_check_branch
              %189 = sbr.rel (0) target = $region32
            $region31: #{generator_forward.5} parent=27 // pred_region
              loop: start=0, step=1, limit=1
              $region33: #{generator_forward.5} parent=31 // loop_pre_header
                _
              $region34: #{generator_forward.5} parent=31 // loop_header
                %s191 = sphi 0, %s195
                %p192 = scmp.ge.s32.totalorder %s191, 1
                %s196 = sphi %s185, %s185
                %s197 = sphi %s180, %s180
              $region35: #{generator_forward.5} parent=31 // loop_header_branch
                %194 = sbr.rel (%p192) target = $region39
              $region36: #{generator_forward.5} parent=31 // loop_body
                %v198 = vld [vmem:[%s196] sm:$0xff]
                %199 = vst [vmem:[%s197] sm:$0xff] %v198
                %v200 = vld [vmem:[%s196 + $0x8] sm:$0xff]
                %201 = vst [vmem:[%s197 + $0x8] sm:$0xff] %v200
                %v202 = vld [vmem:[%s196 + $0x10] sm:$0xff]
                %203 = vst [vmem:[%s197 + $0x10] sm:$0xff] %v202
                %v204 = vld [vmem:[%s196 + $0x18] sm:$0xff]
                %205 = vst [vmem:[%s197 + $0x18] sm:$0xff] %v204
                %v206 = vld [vmem:[%s196 + $0x100] sm:$0xff]
                %207 = vst [vmem:[%s197 + $0x20] sm:$0xff] %v206
                %v208 = vld [vmem:[%s196 + $0x108] sm:$0xff]
                %209 = vst [vmem:[%s197 + $0x28] sm:$0xff] %v208
                %v210 = vld [vmem:[%s196 + $0x110] sm:$0xff]
                %211 = vst [vmem:[%s197 + $0x30] sm:$0xff] %v210
                %v212 = vld [vmem:[%s196 + $0x118] sm:$0xff]
                %213 = vst [vmem:[%s197 + $0x38] sm:$0xff] %v212
                %v214 = vld [vmem:[%s196 + $0x200] sm:$0xff]
                %215 = vst [vmem:[%s197 + $0x40] sm:$0xff] %v214
                %v216 = vld [vmem:[%s196 + $0x208] sm:$0xff]
                %217 = vst [vmem:[%s197 + $0x48] sm:$0xff] %v216
                %v218 = vld [vmem:[%s196 + $0x210] sm:$0xff]
                %219 = vst [vmem:[%s197 + $0x50] sm:$0xff] %v218
                %v220 = vld [vmem:[%s196 + $0x218] sm:$0xff]
                %221 = vst [vmem:[%s197 + $0x58] sm:$0xff] %v220
                %v222 = vld [vmem:[%s196 + $0x300] sm:$0xff]
                %223 = vst [vmem:[%s197 + $0x60] sm:$0xff] %v222
                %v224 = vld [vmem:[%s196 + $0x308] sm:$0xff]
                %225 = vst [vmem:[%s197 + $0x68] sm:$0xff] %v224
                %v226 = vld [vmem:[%s196 + $0x310] sm:$0xff]
                %227 = vst [vmem:[%s197 + $0x70] sm:$0xff] %v226
                %v228 = vld [vmem:[%s196 + $0x318] sm:$0xff]
                %229 = vst [vmem:[%s197 + $0x78] sm:$0xff] %v228
                %v230 = vld [vmem:[%s196 + $0x400] sm:$0xff]
                %231 = vst [vmem:[%s197 + $0x80] sm:$0xff] %v230
                %v232 = vld [vmem:[%s196 + $0x408] sm:$0xff]
                %233 = vst [vmem:[%s197 + $0x88] sm:$0xff] %v232
                %v234 = vld [vmem:[%s196 + $0x410] sm:$0xff]
                %235 = vst [vmem:[%s197 + $0x90] sm:$0xff] %v234
                %v236 = vld [vmem:[%s196 + $0x418] sm:$0xff]
                %237 = vst [vmem:[%s197 + $0x98] sm:$0xff] %v236
                %v238 = vld [vmem:[%s196 + $0x500] sm:$0xff]
                %239 = vst [vmem:[%s197 + $0xa0] sm:$0xff] %v238
                %v240 = vld [vmem:[%s196 + $0x508] sm:$0xff]
                %241 = vst [vmem:[%s197 + $0xa8] sm:$0xff] %v240
                %v242 = vld [vmem:[%s196 + $0x510] sm:$0xff]
                %243 = vst [vmem:[%s197 + $0xb0] sm:$0xff] %v242
                %v244 = vld [vmem:[%s196 + $0x518] sm:$0xff]
                %245 = vst [vmem:[%s197 + $0xb8] sm:$0xff] %v244
                %v246 = vld [vmem:[%s196 + $0x600] sm:$0xff]
                %247 = vst [vmem:[%s197 + $0xc0] sm:$0xff] %v246
                %v248 = vld [vmem:[%s196 + $0x608] sm:$0xff]
                %249 = vst [vmem:[%s197 + $0xc8] sm:$0xff] %v248
                %v250 = vld [vmem:[%s196 + $0x610] sm:$0xff]
                %251 = vst [vmem:[%s197 + $0xd0] sm:$0xff] %v250
                %v252 = vld [vmem:[%s196 + $0x618] sm:$0xff]
                %253 = vst [vmem:[%s197 + $0xd8] sm:$0xff] %v252
                %v254 = vld [vmem:[%s196 + $0x700] sm:$0xff]
                %255 = vst [vmem:[%s197 + $0xe0] sm:$0xff] %v254
                %v256 = vld [vmem:[%s196 + $0x708] sm:$0xff]
                %257 = vst [vmem:[%s197 + $0xe8] sm:$0xff] %v256
                %v258 = vld [vmem:[%s196 + $0x710] sm:$0xff]
                %259 = vst [vmem:[%s197 + $0xf0] sm:$0xff] %v258
                %v260 = vld [vmem:[%s196 + $0x718] sm:$0xff]
                %261 = vst [vmem:[%s197 + $0xf8] sm:$0xff] %v260
                %v262 = vld [vmem:[%s196 + $0x800] sm:$0xff]
                %263 = vst [vmem:[%s197 + $0x100] sm:$0xff] %v262
                %v264 = vld [vmem:[%s196 + $0x808] sm:$0xff]
                %265 = vst [vmem:[%s197 + $0x108] sm:$0xff] %v264
                %v266 = vld [vmem:[%s196 + $0x810] sm:$0xff]
                %267 = vst [vmem:[%s197 + $0x110] sm:$0xff] %v266
                %v268 = vld [vmem:[%s196 + $0x818] sm:$0xff]
                %269 = vst [vmem:[%s197 + $0x118] sm:$0xff] %v268
                %v270 = vld [vmem:[%s196 + $0x900] sm:$0xff]
                %271 = vst [vmem:[%s197 + $0x120] sm:$0xff] %v270
                %v272 = vld [vmem:[%s196 + $0x908] sm:$0xff]
                %273 = vst [vmem:[%s197 + $0x128] sm:$0xff] %v272
                %v274 = vld [vmem:[%s196 + $0x910] sm:$0xff]
                %275 = vst [vmem:[%s197 + $0x130] sm:$0xff] %v274
                %v276 = vld [vmem:[%s196 + $0x918] sm:$0xff]
                %277 = vst [vmem:[%s197 + $0x138] sm:$0xff] %v276
                %v278 = vld [vmem:[%s196 + $0xa00] sm:$0xff]
                %279 = vst [vmem:[%s197 + $0x140] sm:$0xff] %v278
                %v280 = vld [vmem:[%s196 + $0xa08] sm:$0xff]
                %281 = vst [vmem:[%s197 + $0x148] sm:$0xff] %v280
                %v282 = vld [vmem:[%s196 + $0xa10] sm:$0xff]
                %283 = vst [vmem:[%s197 + $0x150] sm:$0xff] %v282
                %v284 = vld [vmem:[%s196 + $0xa18] sm:$0xff]
                %285 = vst [vmem:[%s197 + $0x158] sm:$0xff] %v284
                %v286 = vld [vmem:[%s196 + $0xb00] sm:$0xff]
                %287 = vst [vmem:[%s197 + $0x160] sm:$0xff] %v286
                %v288 = vld [vmem:[%s196 + $0xb08] sm:$0xff]
                %289 = vst [vmem:[%s197 + $0x168] sm:$0xff] %v288
                %v290 = vld [vmem:[%s196 + $0xb10] sm:$0xff]
                %291 = vst [vmem:[%s197 + $0x170] sm:$0xff] %v290
                %v292 = vld [vmem:[%s196 + $0xb18] sm:$0xff]
                %293 = vst [vmem:[%s197 + $0x178] sm:$0xff] %v292
                %v294 = vld [vmem:[%s196 + $0xc00] sm:$0xff]
                %295 = vst [vmem:[%s197 + $0x180] sm:$0xff] %v294
                %v296 = vld [vmem:[%s196 + $0xc08] sm:$0xff]
                %297 = vst [vmem:[%s197 + $0x188] sm:$0xff] %v296
                %v298 = vld [vmem:[%s196 + $0xc10] sm:$0xff]
                %299 = vst [vmem:[%s197 + $0x190] sm:$0xff] %v298
                %v300 = vld [vmem:[%s196 + $0xc18] sm:$0xff]
                %301 = vst [vmem:[%s197 + $0x198] sm:$0xff] %v300
                %v302 = vld [vmem:[%s196 + $0xd00] sm:$0xff]
                %303 = vst [vmem:[%s197 + $0x1a0] sm:$0xff] %v302
                %v304 = vld [vmem:[%s196 + $0xd08] sm:$0xff]
                %305 = vst [vmem:[%s197 + $0x1a8] sm:$0xff] %v304
                %v306 = vld [vmem:[%s196 + $0xd10] sm:$0xff]
                %307 = vst [vmem:[%s197 + $0x1b0] sm:$0xff] %v306
                %v308 = vld [vmem:[%s196 + $0xd18] sm:$0xff]
                %309 = vst [vmem:[%s197 + $0x1b8] sm:$0xff] %v308
                %v310 = vld [vmem:[%s196 + $0xe00] sm:$0xff]
                %311 = vst [vmem:[%s197 + $0x1c0] sm:$0xff] %v310
                %v312 = vld [vmem:[%s196 + $0xe08] sm:$0xff]
                %313 = vst [vmem:[%s197 + $0x1c8] sm:$0xff] %v312
                %v314 = vld [vmem:[%s196 + $0xe10] sm:$0xff]
                %315 = vst [vmem:[%s197 + $0x1d0] sm:$0xff] %v314
                %v316 = vld [vmem:[%s196 + $0xe18] sm:$0xff]
                %317 = vst [vmem:[%s197 + $0x1d8] sm:$0xff] %v316
                %v318 = vld [vmem:[%s196 + $0xf00] sm:$0xff]
                %319 = vst [vmem:[%s197 + $0x1e0] sm:$0xff] %v318
                %v320 = vld [vmem:[%s196 + $0xf08] sm:$0xff]
                %321 = vst [vmem:[%s197 + $0x1e8] sm:$0xff] %v320
                %v322 = vld [vmem:[%s196 + $0xf10] sm:$0xff]
                %323 = vst [vmem:[%s197 + $0x1f0] sm:$0xff] %v322
                %v324 = vld [vmem:[%s196 + $0xf18] sm:$0xff]
                %325 = vst [vmem:[%s197 + $0x1f8] sm:$0xff] %v324
              $region37: #{generator_forward.5} parent=31 // loop_footer
                %s195 = sadd.s32 1, %s191
              $region38: #{generator_forward.5} parent=31 // loop_footer_branch
                %190 = sbr.rel target = $region34
              $region39: #{generator_forward.5} parent=31 // loop_exit
                _
            $region32: #{generator_forward.5} parent=27 // pred_fallthru
              _
            // Predicated region
            $region40: #{generator_forward.5} parent=27 // pred_check
              _
            $region41: #{generator_forward.5} parent=27 // pred_check_branch
              %327 = sbr.rel target = $region43
            $region42: #{generator_forward.5} parent=27 // pred_region
              _
            $region43: #{generator_forward.5} parent=27 // pred_fallthru
              _
          $region28: #{generator_forward.5} parent=23 // pred_fallthru
            _
          %328 = vnop
        $region24: #{generator_forward.5} parent=19 // pred_fallthru
          _
      $region20: #{generator_forward.5} parent=5 // pred_fallthru
        _
      %p329 = scmp.le.s32.totalorder 1, %s10
      %p330 = scmp.lt.s32.totalorder %s10, 9
      %p331 = pnand %p329, %p330
      %p332 = pneg %p331
      // Predicated region
      $region44: #{generator_forward.5} parent=5 // pred_check
        _
      $region45: #{generator_forward.5} parent=5 // pred_check_branch
        %334 = sbr.rel (%p331) target = $region47
      $region46: #{generator_forward.5} parent=5 // pred_region
        %s335 = ssub.s32 %s10, 1
        %s336 = sand.u32 %s72, 1
        %s337 = sand.u32 %s72, 1
        %s338 = smul.addr %s337, 512
        %s339 = scalar_lea.vmem [#allocation2], %s338
        // Predicated region
        $region48: #{generator_forward.5} parent=46 // pred_check
          %p340 = pneg %p85
        $region49: #{generator_forward.5} parent=46 // pred_check_branch
          %342 = sbr.rel (%p340) target = $region51
        $region50: #{generator_forward.5} parent=46 // pred_region
          _
        $region51: #{generator_forward.5} parent=46 // pred_fallthru
          _
        %p343 = scmp.lt.s32.totalorder %s20, 0
        %s344 = scalar_select %p343, %s20, 0
        %p345 = scmp.lt.s32.totalorder %s21, 0
        %s346 = scalar_select %p345, %s21, 0
        %s347 = sadd.s32 %s346, %s344
        %s348 = smul.addr %s347, 4
        %s349 = scalar_lea.vmem %s0, %s348
        %p350 = pneg %p57
        %p351 = pneg %p54
        %s352 = sand.u32 %s72, 1
        %s353 = sand.u32 %s72, 1
        %s354 = smul.addr %s353, 512
        %s355 = scalar_lea.vmem [#allocation2], %s354
        %p356 = pneg %p85
        %p357 = pneg %p82
        %p358 = pneg %p115
        %p359 = pneg %p112
        %s360 = smul.u32 8, %s22
        %p361 = scmp.lt.s32.totalorder %s20, 0
        %s362 = scalar_select %p361, %s20, 0
        %p363 = scmp.lt.s32.totalorder %s21, 0
        %s364 = scalar_select %p363, %s21, 0
        %p365 = scmp.lt.s32.totalorder %s360, 63
        %s366 = scalar_select %p365, %s360, 63
        %s367 = smul.addr %s364, 64
        %s368 = sadd.s32 %s366, %s367
        %s369 = smul.addr %s362, 64
        %s370 = sadd.s32 %s368, %s369
        %s371 = smul.addr %s370, 4
        %s372 = scalar_lea.vmem %s2, %s371
        %p373 = pneg %p145
        %p374 = pneg %p142
        %s375 = smul.u32 8, %s22
        %p376 = scmp.lt.s32.totalorder %s20, 0
        %s377 = scalar_select %p376, %s20, 0
        %p378 = scmp.lt.s32.totalorder %s21, 0
        %s379 = scalar_select %p378, %s21, 0
        %p380 = scmp.lt.s32.totalorder %s375, 63
        %s381 = scalar_select %p380, %s375, 63
        %s382 = smul.addr %s379, 64
        %s383 = sadd.s32 %s381, %s382
        %s384 = smul.addr %s377, 64
        %s385 = sadd.s32 %s383, %s384
        %s386 = smul.addr %s385, 2
        %s387 = scalar_lea.vmem %s3, %s386
        %p388 = scmp.lt.s32.totalorder %s20, 0
        %s389 = scalar_select %p388, %s20, 0
        %p390 = scmp.lt.s32.totalorder %s21, 0
        %s391 = scalar_select %p390, %s21, 0
        %s392 = sadd.s32 %s391, %s389
        %s393 = smul.addr %s392, 4
        %s394 = scalar_lea.vmem %s0, %s393
        %s395 = smul.u32 8, %s22
        %s396 = smul.u32 8, %s22
        %p397 = scmp.lt.s32.totalorder %s20, 0
        %s398 = scalar_select %p397, %s20, 0
        %p399 = scmp.lt.s32.totalorder %s21, 0
        %s400 = scalar_select %p399, %s21, 0
        %p401 = scmp.lt.s32.totalorder %s396, 63
        %s402 = scalar_select %p401, %s396, 63
        %s403 = smul.addr %s400, 64
        %s404 = sadd.s32 %s402, %s403
        %s405 = smul.addr %s398, 64
        %s406 = sadd.s32 %s404, %s405
        %s407 = smul.addr %s406, 4
        %s408 = scalar_lea.vmem %s2, %s407
        %s409 = smul.u32 8, %s22
        %s410 = smul.u32 8, %s22
        %p411 = scmp.lt.s32.totalorder %s20, 0
        %s412 = scalar_select %p411, %s20, 0
        %p413 = scmp.lt.s32.totalorder %s21, 0
        %s414 = scalar_select %p413, %s21, 0
        %p415 = scmp.lt.s32.totalorder %s410, 63
        %s416 = scalar_select %p415, %s410, 63
        %s417 = smul.addr %s414, 64
        %s418 = sadd.s32 %s416, %s417
        %s419 = smul.addr %s412, 64
        %s420 = sadd.s32 %s418, %s419
        %s421 = smul.addr %s420, 2
        %s422 = scalar_lea.vmem %s3, %s421
        %s423 = smul.u32 8, %s22
        %v425 = vld [vmem:[%s394] sm:$0xf]
        %v426 = vld [vmem:[%s339] sm:$0xff]
        %v427 = vld [vmem:[%s339 + $0x8] sm:$0xff]
        %v428 = vld [vmem:[%s339 + $0x10] sm:$0xff]
        %v429 = vld [vmem:[%s339 + $0x18] sm:$0xff]
        %v430 = vld [vmem:[%s339 + $0x20] sm:$0xff]
        %v431 = vld [vmem:[%s339 + $0x28] sm:$0xff]
        %v432 = vld [vmem:[%s339 + $0x30] sm:$0xff]
        %v433 = vld [vmem:[%s339 + $0x38] sm:$0xff]
        %v434 = vld [vmem:[%s339 + $0x40] sm:$0xff]
        %v435 = vld [vmem:[%s339 + $0x48] sm:$0xff]
        %v436 = vld [vmem:[%s339 + $0x50] sm:$0xff]
        %v437 = vld [vmem:[%s339 + $0x58] sm:$0xff]
        %v438 = vld [vmem:[%s339 + $0x60] sm:$0xff]
        %v439 = vld [vmem:[%s339 + $0x68] sm:$0xff]
        %v440 = vld [vmem:[%s339 + $0x70] sm:$0xff]
        %v441 = vld [vmem:[%s339 + $0x78] sm:$0xff]
        %v442 = vld [vmem:[%s339 + $0x80] sm:$0xff]
        %v443 = vld [vmem:[%s339 + $0x88] sm:$0xff]
        %v444 = vld [vmem:[%s339 + $0x90] sm:$0xff]
        %v445 = vld [vmem:[%s339 + $0x98] sm:$0xff]
        %v446 = vld [vmem:[%s339 + $0xa0] sm:$0xff]
        %v447 = vld [vmem:[%s339 + $0xa8] sm:$0xff]
        %v448 = vld [vmem:[%s339 + $0xb0] sm:$0xff]
        %v449 = vld [vmem:[%s339 + $0xb8] sm:$0xff]
        %v450 = vld [vmem:[%s339 + $0xc0] sm:$0xff]
        %v451 = vld [vmem:[%s339 + $0xc8] sm:$0xff]
        %v452 = vld [vmem:[%s339 + $0xd0] sm:$0xff]
        %v453 = vld [vmem:[%s339 + $0xd8] sm:$0xff]
        %v454 = vld [vmem:[%s339 + $0xe0] sm:$0xff]
        %v455 = vld [vmem:[%s339 + $0xe8] sm:$0xff]
        %v456 = vld [vmem:[%s339 + $0xf0] sm:$0xff]
        %v457 = vld [vmem:[%s339 + $0xf8] sm:$0xff]
        %v458 = vld [vmem:[%s339 + $0x100] sm:$0xff]
        %v459 = vld [vmem:[%s339 + $0x108] sm:$0xff]
        %v460 = vld [vmem:[%s339 + $0x110] sm:$0xff]
        %v461 = vld [vmem:[%s339 + $0x118] sm:$0xff]
        %v462 = vld [vmem:[%s339 + $0x120] sm:$0xff]
        %v463 = vld [vmem:[%s339 + $0x128] sm:$0xff]
        %v464 = vld [vmem:[%s339 + $0x130] sm:$0xff]
        %v465 = vld [vmem:[%s339 + $0x138] sm:$0xff]
        %v466 = vld [vmem:[%s339 + $0x140] sm:$0xff]
        %v467 = vld [vmem:[%s339 + $0x148] sm:$0xff]
        %v468 = vld [vmem:[%s339 + $0x150] sm:$0xff]
        %v469 = vld [vmem:[%s339 + $0x158] sm:$0xff]
        %v470 = vld [vmem:[%s339 + $0x160] sm:$0xff]
        %v471 = vld [vmem:[%s339 + $0x168] sm:$0xff]
        %v472 = vld [vmem:[%s339 + $0x170] sm:$0xff]
        %v473 = vld [vmem:[%s339 + $0x178] sm:$0xff]
        %v474 = vld [vmem:[%s339 + $0x180] sm:$0xff]
        %v475 = vld [vmem:[%s339 + $0x188] sm:$0xff]
        %v476 = vld [vmem:[%s339 + $0x190] sm:$0xff]
        %v477 = vld [vmem:[%s339 + $0x198] sm:$0xff]
        %v478 = vld [vmem:[%s339 + $0x1a0] sm:$0xff]
        %v479 = vld [vmem:[%s339 + $0x1a8] sm:$0xff]
        %v480 = vld [vmem:[%s339 + $0x1b0] sm:$0xff]
        %v481 = vld [vmem:[%s339 + $0x1b8] sm:$0xff]
        %v482 = vld [vmem:[%s339 + $0x1c0] sm:$0xff]
        %v483 = vld [vmem:[%s339 + $0x1c8] sm:$0xff]
        %v484 = vld [vmem:[%s339 + $0x1d0] sm:$0xff]
        %v485 = vld [vmem:[%s339 + $0x1d8] sm:$0xff]
        %v486 = vld [vmem:[%s339 + $0x1e0] sm:$0xff]
        %v487 = vld [vmem:[%s339 + $0x1e8] sm:$0xff]
        %v488 = vld [vmem:[%s339 + $0x1f0] sm:$0xff]
        %v489 = vld [vmem:[%s339 + $0x1f8] sm:$0xff]
        %v554 = vunpack.c.l.b16 %v426
        %v555 = vunpack.c.h.b16 %v426
        %v556 = vunpack.c.l.b16 %v427
        %v557 = vunpack.c.h.b16 %v427
        %v558 = vunpack.c.l.b16 %v428
        %v559 = vunpack.c.h.b16 %v428
        %v560 = vunpack.c.l.b16 %v429
        %v561 = vunpack.c.h.b16 %v429
        %v562 = vunpack.c.l.b16 %v430
        %v563 = vunpack.c.h.b16 %v430
        %v564 = vunpack.c.l.b16 %v431
        %v565 = vunpack.c.h.b16 %v431
        %v566 = vunpack.c.l.b16 %v432
        %v567 = vunpack.c.h.b16 %v432
        %v568 = vunpack.c.l.b16 %v433
        %v569 = vunpack.c.h.b16 %v433
        %v570 = vunpack.c.l.b16 %v434
        %v571 = vunpack.c.h.b16 %v434
        %v572 = vunpack.c.l.b16 %v435
        %v573 = vunpack.c.h.b16 %v435
        %v574 = vunpack.c.l.b16 %v436
        %v575 = vunpack.c.h.b16 %v436
        %v576 = vunpack.c.l.b16 %v437
        %v577 = vunpack.c.h.b16 %v437
        %v578 = vunpack.c.l.b16 %v438
        %v579 = vunpack.c.h.b16 %v438
        %v580 = vunpack.c.l.b16 %v439
        %v581 = vunpack.c.h.b16 %v439
        %v582 = vunpack.c.l.b16 %v440
        %v583 = vunpack.c.h.b16 %v440
        %v584 = vunpack.c.l.b16 %v441
        %v585 = vunpack.c.h.b16 %v441
        %v586 = vunpack.c.l.b16 %v442
        %v587 = vunpack.c.h.b16 %v442
        %v588 = vunpack.c.l.b16 %v443
        %v589 = vunpack.c.h.b16 %v443
        %v590 = vunpack.c.l.b16 %v444
        %v591 = vunpack.c.h.b16 %v444
        %v592 = vunpack.c.l.b16 %v445
        %v593 = vunpack.c.h.b16 %v445
        %v594 = vunpack.c.l.b16 %v446
        %v595 = vunpack.c.h.b16 %v446
        %v596 = vunpack.c.l.b16 %v447
        %v597 = vunpack.c.h.b16 %v447
        %v598 = vunpack.c.l.b16 %v448
        %v599 = vunpack.c.h.b16 %v448
        %v600 = vunpack.c.l.b16 %v449
        %v601 = vunpack.c.h.b16 %v449
        %v602 = vunpack.c.l.b16 %v450
        %v603 = vunpack.c.h.b16 %v450
        %v604 = vunpack.c.l.b16 %v451
        %v605 = vunpack.c.h.b16 %v451
        %v606 = vunpack.c.l.b16 %v452
        %v607 = vunpack.c.h.b16 %v452
        %v608 = vunpack.c.l.b16 %v453
        %v609 = vunpack.c.h.b16 %v453
        %v610 = vunpack.c.l.b16 %v454
        %v611 = vunpack.c.h.b16 %v454
        %v612 = vunpack.c.l.b16 %v455
        %v613 = vunpack.c.h.b16 %v455
        %v614 = vunpack.c.l.b16 %v456
        %v615 = vunpack.c.h.b16 %v456
        %v616 = vunpack.c.l.b16 %v457
        %v617 = vunpack.c.h.b16 %v457
        %v618 = vunpack.c.l.b16 %v458
        %v619 = vunpack.c.h.b16 %v458
        %v620 = vunpack.c.l.b16 %v459
        %v621 = vunpack.c.h.b16 %v459
        %v622 = vunpack.c.l.b16 %v460
        %v623 = vunpack.c.h.b16 %v460
        %v624 = vunpack.c.l.b16 %v461
        %v625 = vunpack.c.h.b16 %v461
        %v626 = vunpack.c.l.b16 %v462
        %v627 = vunpack.c.h.b16 %v462
        %v628 = vunpack.c.l.b16 %v463
        %v629 = vunpack.c.h.b16 %v463
        %v630 = vunpack.c.l.b16 %v464
        %v631 = vunpack.c.h.b16 %v464
        %v632 = vunpack.c.l.b16 %v465
        %v633 = vunpack.c.h.b16 %v465
        %v634 = vunpack.c.l.b16 %v466
        %v635 = vunpack.c.h.b16 %v466
        %v636 = vunpack.c.l.b16 %v467
        %v637 = vunpack.c.h.b16 %v467
        %v638 = vunpack.c.l.b16 %v468
        %v639 = vunpack.c.h.b16 %v468
        %v640 = vunpack.c.l.b16 %v469
        %v641 = vunpack.c.h.b16 %v469
        %v642 = vunpack.c.l.b16 %v470
        %v643 = vunpack.c.h.b16 %v470
        %v644 = vunpack.c.l.b16 %v471
        %v645 = vunpack.c.h.b16 %v471
        %v646 = vunpack.c.l.b16 %v472
        %v647 = vunpack.c.h.b16 %v472
        %v648 = vunpack.c.l.b16 %v473
        %v649 = vunpack.c.h.b16 %v473
        %v650 = vunpack.c.l.b16 %v474
        %v651 = vunpack.c.h.b16 %v474
        %v652 = vunpack.c.l.b16 %v475
        %v653 = vunpack.c.h.b16 %v475
        %v654 = vunpack.c.l.b16 %v476
        %v655 = vunpack.c.h.b16 %v476
        %v656 = vunpack.c.l.b16 %v477
        %v657 = vunpack.c.h.b16 %v477
        %v658 = vunpack.c.l.b16 %v478
        %v659 = vunpack.c.h.b16 %v478
        %v660 = vunpack.c.l.b16 %v479
        %v661 = vunpack.c.h.b16 %v479
        %v662 = vunpack.c.l.b16 %v480
        %v663 = vunpack.c.h.b16 %v480
        %v664 = vunpack.c.l.b16 %v481
        %v665 = vunpack.c.h.b16 %v481
        %v666 = vunpack.c.l.b16 %v482
        %v667 = vunpack.c.h.b16 %v482
        %v668 = vunpack.c.l.b16 %v483
        %v669 = vunpack.c.h.b16 %v483
        %v670 = vunpack.c.l.b16 %v484
        %v671 = vunpack.c.h.b16 %v484
        %v672 = vunpack.c.l.b16 %v485
        %v673 = vunpack.c.h.b16 %v485
        %v674 = vunpack.c.l.b16 %v486
        %v675 = vunpack.c.h.b16 %v486
        %v676 = vunpack.c.l.b16 %v487
        %v677 = vunpack.c.h.b16 %v487
        %v678 = vunpack.c.l.b16 %v488
        %v679 = vunpack.c.h.b16 %v488
        %v680 = vunpack.c.l.b16 %v489
        %v681 = vunpack.c.h.b16 %v489
        %v682 = vpack.c.b16 %v562, %v554
        %v683 = vpack.c.b16 %v563, %v555
        %v684 = vpack.c.b16 %v564, %v556
        %v685 = vpack.c.b16 %v565, %v557
        %v686 = vpack.c.b16 %v566, %v558
        %v687 = vpack.c.b16 %v567, %v559
        %v688 = vpack.c.b16 %v568, %v560
        %v689 = vpack.c.b16 %v569, %v561
        %v690 = vpack.c.b16 %v578, %v570
        %v691 = vpack.c.b16 %v579, %v571
        %v692 = vpack.c.b16 %v580, %v572
        %v693 = vpack.c.b16 %v581, %v573
        %v694 = vpack.c.b16 %v582, %v574
        %v695 = vpack.c.b16 %v583, %v575
        %v696 = vpack.c.b16 %v584, %v576
        %v697 = vpack.c.b16 %v585, %v577
        %v698 = vpack.c.b16 %v594, %v586
        %v699 = vpack.c.b16 %v595, %v587
        %v700 = vpack.c.b16 %v596, %v588
        %v701 = vpack.c.b16 %v597, %v589
        %v702 = vpack.c.b16 %v598, %v590
        %v703 = vpack.c.b16 %v599, %v591
        %v704 = vpack.c.b16 %v600, %v592
        %v705 = vpack.c.b16 %v601, %v593
        %v706 = vpack.c.b16 %v610, %v602
        %v707 = vpack.c.b16 %v611, %v603
        %v708 = vpack.c.b16 %v612, %v604
        %v709 = vpack.c.b16 %v613, %v605
        %v710 = vpack.c.b16 %v614, %v606
        %v711 = vpack.c.b16 %v615, %v607
        %v712 = vpack.c.b16 %v616, %v608
        %v713 = vpack.c.b16 %v617, %v609
        %v714 = vpack.c.b16 %v626, %v618
        %v715 = vpack.c.b16 %v627, %v619
        %v716 = vpack.c.b16 %v628, %v620
        %v717 = vpack.c.b16 %v629, %v621
        %v718 = vpack.c.b16 %v630, %v622
        %v719 = vpack.c.b16 %v631, %v623
        %v720 = vpack.c.b16 %v632, %v624
        %v721 = vpack.c.b16 %v633, %v625
        %v722 = vpack.c.b16 %v642, %v634
        %v723 = vpack.c.b16 %v643, %v635
        %v724 = vpack.c.b16 %v644, %v636
        %v725 = vpack.c.b16 %v645, %v637
        %v726 = vpack.c.b16 %v646, %v638
        %v727 = vpack.c.b16 %v647, %v639
        %v728 = vpack.c.b16 %v648, %v640
        %v729 = vpack.c.b16 %v649, %v641
        %v730 = vpack.c.b16 %v658, %v650
        %v731 = vpack.c.b16 %v659, %v651
        %v732 = vpack.c.b16 %v660, %v652
        %v733 = vpack.c.b16 %v661, %v653
        %v734 = vpack.c.b16 %v662, %v654
        %v735 = vpack.c.b16 %v663, %v655
        %v736 = vpack.c.b16 %v664, %v656
        %v737 = vpack.c.b16 %v665, %v657
        %v738 = vpack.c.b16 %v674, %v666
        %v739 = vpack.c.b16 %v675, %v667
        %v740 = vpack.c.b16 %v676, %v668
        %v741 = vpack.c.b16 %v677, %v669
        %v742 = vpack.c.b16 %v678, %v670
        %v743 = vpack.c.b16 %v679, %v671
        %v744 = vpack.c.b16 %v680, %v672
        %v745 = vpack.c.b16 %v681, %v673
        %810 = vmatprep.subr.bf16.mxu0 %v683
        %811 = vmatpush1.bf16.msra.mxu0 %v682
        %812 = vmatprep.subr.bf16.mxu0 %v691
        %813 = vmatpush1.bf16.msra.mxu0 %v690
        %814 = vmatprep.subr.bf16.mxu0 %v699
        %815 = vmatpush1.bf16.msra.mxu0 %v698
        %816 = vmatprep.subr.bf16.mxu0 %v707
        %817 = vmatpush1.bf16.msra.mxu0 %v706
        %818 = vmatprep.subr.bf16.mxu0 %v715
        %819 = vmatpush1.bf16.msra.mxu0 %v714
        %820 = vmatprep.subr.bf16.mxu0 %v723
        %821 = vmatpush1.bf16.msra.mxu0 %v722
        %822 = vmatprep.subr.bf16.mxu0 %v731
        %823 = vmatpush1.bf16.msra.mxu0 %v730
        %824 = vmatprep.subr.bf16.mxu0 %v739
        %825 = vmatpush1.bf16.msra.mxu0 %v738
        %826 = vmatprep.subr.bf16.mxu0 0
        %827 = vmatpush1.bf16.msra.mxu0 0
        %828 = vmatprep.subr.bf16.mxu0 0
        %829 = vmatpush1.bf16.msra.mxu0 0
        %830 = vmatprep.subr.bf16.mxu0 0
        %831 = vmatpush1.bf16.msra.mxu0 0
        %832 = vmatprep.subr.bf16.mxu0 0
        %833 = vmatpush1.bf16.msra.mxu0 0
        %834 = vmatprep.subr.bf16.mxu0 0
        %835 = vmatpush1.bf16.msra.mxu0 0
        %836 = vmatprep.subr.bf16.mxu0 0
        %837 = vmatpush1.bf16.msra.mxu0 0
        %838 = vmatprep.subr.bf16.mxu0 0
        %839 = vmatpush1.bf16.msra.mxu0 0
        %840 = vmatprep.subr.bf16.mxu0 0
        %841 = vmatpush1.bf16.msra.mxu0 0
        %842 = vmatprep.mubr.bf16.mxu0 0
        %843 = vmatmul.mubr.bf16.gmra.mrb[0].mxu0 %v425
        %v844 = vpop.f32.mrb[0].mxu0
        %v845 = vadd.f32 0.0, %v844
        %v846 = vpop.f32.mrb[0].mxu0
        %v847 = vadd.f32 0.0, %v846
        %v848 = vpop.f32.mrb[0].mxu0
        %v849 = vpop.f32.mrb[0].mxu0
        %850 = vdwg.mxu0
        %851 = vmatprep.subr.bf16.mxu0 %v685
        %852 = vmatpush1.bf16.msra.mxu0 %v684
        %853 = vmatprep.subr.bf16.mxu0 %v693
        %854 = vmatpush1.bf16.msra.mxu0 %v692
        %855 = vmatprep.subr.bf16.mxu0 %v701
        %856 = vmatpush1.bf16.msra.mxu0 %v700
        %857 = vmatprep.subr.bf16.mxu0 %v709
        %858 = vmatpush1.bf16.msra.mxu0 %v708
        %859 = vmatprep.subr.bf16.mxu0 %v717
        %860 = vmatpush1.bf16.msra.mxu0 %v716
        %861 = vmatprep.subr.bf16.mxu0 %v725
        %862 = vmatpush1.bf16.msra.mxu0 %v724
        %863 = vmatprep.subr.bf16.mxu0 %v733
        %864 = vmatpush1.bf16.msra.mxu0 %v732
        %865 = vmatprep.subr.bf16.mxu0 %v741
        %866 = vmatpush1.bf16.msra.mxu0 %v740
        %867 = vmatprep.subr.bf16.mxu0 0
        %868 = vmatpush1.bf16.msra.mxu0 0
        %869 = vmatprep.subr.bf16.mxu0 0
        %870 = vmatpush1.bf16.msra.mxu0 0
        %871 = vmatprep.subr.bf16.mxu0 0
        %872 = vmatpush1.bf16.msra.mxu0 0
        %873 = vmatprep.subr.bf16.mxu0 0
        %874 = vmatpush1.bf16.msra.mxu0 0
        %875 = vmatprep.subr.bf16.mxu0 0
        %876 = vmatpush1.bf16.msra.mxu0 0
        %877 = vmatprep.subr.bf16.mxu0 0
        %878 = vmatpush1.bf16.msra.mxu0 0
        %879 = vmatprep.subr.bf16.mxu0 0
        %880 = vmatpush1.bf16.msra.mxu0 0
        %881 = vmatprep.subr.bf16.mxu0 0
        %882 = vmatpush1.bf16.msra.mxu0 0
        %883 = vmatprep.mubr.bf16.mxu0 0
        %884 = vmatmul.mubr.bf16.gmra.mrb[0].mxu0 %v425
        %v885 = vpop.f32.mrb[0].mxu0
        %v886 = vadd.f32 0.0, %v885
        %v887 = vpop.f32.mrb[0].mxu0
        %v888 = vadd.f32 0.0, %v887
        %v889 = vpop.f32.mrb[0].mxu0
        %v890 = vpop.f32.mrb[0].mxu0
        %891 = vdwg.mxu0
        %892 = vmatprep.subr.bf16.mxu0 %v687
        %893 = vmatpush1.bf16.msra.mxu0 %v686
        %894 = vmatprep.subr.bf16.mxu0 %v695
        %895 = vmatpush1.bf16.msra.mxu0 %v694
        %896 = vmatprep.subr.bf16.mxu0 %v703
        %897 = vmatpush1.bf16.msra.mxu0 %v702
        %898 = vmatprep.subr.bf16.mxu0 %v711
        %899 = vmatpush1.bf16.msra.mxu0 %v710
        %900 = vmatprep.subr.bf16.mxu0 %v719
        %901 = vmatpush1.bf16.msra.mxu0 %v718
        %902 = vmatprep.subr.bf16.mxu0 %v727
        %903 = vmatpush1.bf16.msra.mxu0 %v726
        %904 = vmatprep.subr.bf16.mxu0 %v735
        %905 = vmatpush1.bf16.msra.mxu0 %v734
        %906 = vmatprep.subr.bf16.mxu0 %v743
        %907 = vmatpush1.bf16.msra.mxu0 %v742
        %908 = vmatprep.subr.bf16.mxu0 0
        %909 = vmatpush1.bf16.msra.mxu0 0
        %910 = vmatprep.subr.bf16.mxu0 0
        %911 = vmatpush1.bf16.msra.mxu0 0
        %912 = vmatprep.subr.bf16.mxu0 0
        %913 = vmatpush1.bf16.msra.mxu0 0
        %914 = vmatprep.subr.bf16.mxu0 0
        %915 = vmatpush1.bf16.msra.mxu0 0
        %916 = vmatprep.subr.bf16.mxu0 0
        %917 = vmatpush1.bf16.msra.mxu0 0
        %918 = vmatprep.subr.bf16.mxu0 0
        %919 = vmatpush1.bf16.msra.mxu0 0
        %920 = vmatprep.subr.bf16.mxu0 0
        %921 = vmatpush1.bf16.msra.mxu0 0
        %922 = vmatprep.subr.bf16.mxu0 0
        %923 = vmatpush1.bf16.msra.mxu0 0
        %924 = vmatprep.mubr.bf16.mxu0 0
        %925 = vmatmul.mubr.bf16.gmra.mrb[0].mxu0 %v425
        %v926 = vpop.f32.mrb[0].mxu0
        %v927 = vadd.f32 0.0, %v926
        %v928 = vpop.f32.mrb[0].mxu0
        %v929 = vadd.f32 0.0, %v928
        %v930 = vpop.f32.mrb[0].mxu0
        %v931 = vpop.f32.mrb[0].mxu0
        %932 = vdwg.mxu0
        %933 = vmatprep.subr.bf16.mxu0 %v689
        %934 = vmatpush1.bf16.msra.mxu0 %v688
        %935 = vmatprep.subr.bf16.mxu0 %v697
        %936 = vmatpush1.bf16.msra.mxu0 %v696
        %937 = vmatprep.subr.bf16.mxu0 %v705
        %938 = vmatpush1.bf16.msra.mxu0 %v704
        %939 = vmatprep.subr.bf16.mxu0 %v713
        %940 = vmatpush1.bf16.msra.mxu0 %v712
        %941 = vmatprep.subr.bf16.mxu0 %v721
        %942 = vmatpush1.bf16.msra.mxu0 %v720
        %943 = vmatprep.subr.bf16.mxu0 %v729
        %944 = vmatpush1.bf16.msra.mxu0 %v728
        %945 = vmatprep.subr.bf16.mxu0 %v737
        %946 = vmatpush1.bf16.msra.mxu0 %v736
        %947 = vmatprep.subr.bf16.mxu0 %v745
        %948 = vmatpush1.bf16.msra.mxu0 %v744
        %949 = vmatprep.subr.bf16.mxu0 0
        %950 = vmatpush1.bf16.msra.mxu0 0
        %951 = vmatprep.subr.bf16.mxu0 0
        %952 = vmatpush1.bf16.msra.mxu0 0
        %953 = vmatprep.subr.bf16.mxu0 0
        %954 = vmatpush1.bf16.msra.mxu0 0
        %955 = vmatprep.subr.bf16.mxu0 0
        %956 = vmatpush1.bf16.msra.mxu0 0
        %957 = vmatprep.subr.bf16.mxu0 0
        %958 = vmatpush1.bf16.msra.mxu0 0
        %959 = vmatprep.subr.bf16.mxu0 0
        %960 = vmatpush1.bf16.msra.mxu0 0
        %961 = vmatprep.subr.bf16.mxu0 0
        %962 = vmatpush1.bf16.msra.mxu0 0
        %963 = vmatprep.subr.bf16.mxu0 0
        %964 = vmatpush1.bf16.msra.mxu0 0
        %965 = vmatprep.mubr.bf16.mxu0 0
        %966 = vmatmul.mubr.bf16.gmra.mrb[0].mxu0 %v425
        %v967 = vpop.f32.mrb[0].mxu0
        %v968 = vadd.f32 0.0, %v967
        %v969 = vpop.f32.mrb[0].mxu0
        %v970 = vadd.f32 0.0, %v969
        %v971 = vpop.f32.mrb[0].mxu0
        %v972 = vpop.f32.mrb[0].mxu0
        %973 = vdwg.mxu0
        %v974 = vpack.c.bf16 %v845, %v845
        %v975 = vpack.c.bf16 %v847, %v847
        %v976 = vpack.c.bf16 %v886, %v886
        %v977 = vpack.c.bf16 %v888, %v888
        %v978 = vpack.c.bf16 %v927, %v927
        %v979 = vpack.c.bf16 %v929, %v929
        %v980 = vpack.c.bf16 %v968, %v968
        %v981 = vpack.c.bf16 %v970, %v970
        %v990 = vunpack.c.l.b16 %v974
        %v991 = vunpack.c.l.b16 %v975
        %v992 = vunpack.c.l.b16 %v976
        %v993 = vunpack.c.l.b16 %v977
        %v994 = vunpack.c.l.b16 %v978
        %v995 = vunpack.c.l.b16 %v979
        %v996 = vunpack.c.l.b16 %v980
        %v997 = vunpack.c.l.b16 %v981
        %v998 = vpack.c.b16 %v991, %v990
        %v999 = vpack.c.b16 %v993, %v992
        %v1000 = vpack.c.b16 %v995, %v994
        %v1001 = vpack.c.b16 %v997, %v996
        %1006 = vst [vmem:[%s408] sm:$0xff] %v998
        %1007 = vst [vmem:[%s408 + $0x8] sm:$0xff] %v999
        %1008 = vst [vmem:[%s408 + $0x10] sm:$0xff] %v1000
        %1009 = vst [vmem:[%s408 + $0x18] sm:$0xff] %v1001
        %v1010 = vrot.slane %v845, 4
        %v1011 = vadd.f32 %v845, %v1010
        %v1012 = vrot.slane %v1011, 2
        %v1013 = vadd.f32 %v1011, %v1012
        %v1014 = vrot.slane %v1013, 1
        %v1015 = vadd.f32 %v1013, %v1014
        %v1016 = vrot.slane %v847, 4
        %v1017 = vadd.f32 %v847, %v1016
        %v1018 = vrot.slane %v1017, 2
        %v1019 = vadd.f32 %v1017, %v1018
        %v1020 = vrot.slane %v1019, 1
        %v1021 = vadd.f32 %v1019, %v1020
        %v1022 = vrot.slane %v886, 4
        %v1023 = vadd.f32 %v886, %v1022
        %v1024 = vrot.slane %v1023, 2
        %v1025 = vadd.f32 %v1023, %v1024
        %v1026 = vrot.slane %v1025, 1
        %v1027 = vadd.f32 %v1025, %v1026
        %v1028 = vrot.slane %v888, 4
        %v1029 = vadd.f32 %v888, %v1028
        %v1030 = vrot.slane %v1029, 2
        %v1031 = vadd.f32 %v1029, %v1030
        %v1032 = vrot.slane %v1031, 1
        %v1033 = vadd.f32 %v1031, %v1032
        %v1034 = vrot.slane %v927, 4
        %v1035 = vadd.f32 %v927, %v1034
        %v1036 = vrot.slane %v1035, 2
        %v1037 = vadd.f32 %v1035, %v1036
        %v1038 = vrot.slane %v1037, 1
        %v1039 = vadd.f32 %v1037, %v1038
        %v1040 = vrot.slane %v929, 4
        %v1041 = vadd.f32 %v929, %v1040
        %v1042 = vrot.slane %v1041, 2
        %v1043 = vadd.f32 %v1041, %v1042
        %v1044 = vrot.slane %v1043, 1
        %v1045 = vadd.f32 %v1043, %v1044
        %v1046 = vrot.slane %v968, 4
        %v1047 = vadd.f32 %v968, %v1046
        %v1048 = vrot.slane %v1047, 2
        %v1049 = vadd.f32 %v1047, %v1048
        %v1050 = vrot.slane %v1049, 1
        %v1051 = vadd.f32 %v1049, %v1050
        %v1052 = vrot.slane %v970, 4
        %v1053 = vadd.f32 %v970, %v1052
        %v1054 = vrot.slane %v1053, 2
        %v1055 = vadd.f32 %v1053, %v1054
        %v1056 = vrot.slane %v1055, 1
        %v1057 = vadd.f32 %v1055, %v1056
        %v1058 = vmul.f32 %v845, %v845
        %v1059 = vmul.f32 %v847, %v847
        %v1060 = vmul.f32 %v886, %v886
        %v1061 = vmul.f32 %v888, %v888
        %v1062 = vmul.f32 %v927, %v927
        %v1063 = vmul.f32 %v929, %v929
        %v1064 = vmul.f32 %v968, %v968
        %v1065 = vmul.f32 %v970, %v970
        %v1066 = vrot.slane %v1058, 4
        %v1067 = vadd.f32 %v1058, %v1066
        %v1068 = vrot.slane %v1067, 2
        %v1069 = vadd.f32 %v1067, %v1068
        %v1070 = vrot.slane %v1069, 1
        %v1071 = vadd.f32 %v1069, %v1070
        %v1072 = vrot.slane %v1059, 4
        %v1073 = vadd.f32 %v1059, %v1072
        %v1074 = vrot.slane %v1073, 2
        %v1075 = vadd.f32 %v1073, %v1074
        %v1076 = vrot.slane %v1075, 1
        %v1077 = vadd.f32 %v1075, %v1076
        %v1078 = vrot.slane %v1060, 4
        %v1079 = vadd.f32 %v1060, %v1078
        %v1080 = vrot.slane %v1079, 2
        %v1081 = vadd.f32 %v1079, %v1080
        %v1082 = vrot.slane %v1081, 1
        %v1083 = vadd.f32 %v1081, %v1082
        %v1084 = vrot.slane %v1061, 4
        %v1085 = vadd.f32 %v1061, %v1084
        %v1086 = vrot.slane %v1085, 2
        %v1087 = vadd.f32 %v1085, %v1086
        %v1088 = vrot.slane %v1087, 1
        %v1089 = vadd.f32 %v1087, %v1088
        %v1090 = vrot.slane %v1062, 4
        %v1091 = vadd.f32 %v1062, %v1090
        %v1092 = vrot.slane %v1091, 2
        %v1093 = vadd.f32 %v1091, %v1092
        %v1094 = vrot.slane %v1093, 1
        %v1095 = vadd.f32 %v1093, %v1094
        %v1096 = vrot.slane %v1063, 4
        %v1097 = vadd.f32 %v1063, %v1096
        %v1098 = vrot.slane %v1097, 2
        %v1099 = vadd.f32 %v1097, %v1098
        %v1100 = vrot.slane %v1099, 1
        %v1101 = vadd.f32 %v1099, %v1100
        %v1102 = vrot.slane %v1064, 4
        %v1103 = vadd.f32 %v1064, %v1102
        %v1104 = vrot.slane %v1103, 2
        %v1105 = vadd.f32 %v1103, %v1104
        %v1106 = vrot.slane %v1105, 1
        %v1107 = vadd.f32 %v1105, %v1106
        %v1108 = vrot.slane %v1065, 4
        %v1109 = vadd.f32 %v1065, %v1108
        %v1110 = vrot.slane %v1109, 2
        %v1111 = vadd.f32 %v1109, %v1110
        %v1112 = vrot.slane %v1111, 1
        %v1113 = vadd.f32 %v1111, %v1112
        %vm1114 = vcmask 1040384
        %v1115 = vsel %vm1114, %v1015, %v1071
        %v1116 = vsel %vm1114, %v1021, %v1077
        %v1117 = vsel %vm1114, %v1027, %v1083
        %v1118 = vsel %vm1114, %v1033, %v1089
        %v1119 = vsel %vm1114, %v1039, %v1095
        %v1120 = vsel %vm1114, %v1045, %v1101
        %v1121 = vsel %vm1114, %v1051, %v1107
        %v1122 = vsel %vm1114, %v1057, %v1113
        %v1131 = vcombine.low %v1115, %v1116
        %v1132 = vcombine.low %v1117, %v1118
        %v1134 = vunpack.c.l.s4 1983009808
        %v1135 = vunpack.c.0.s8 %v1134
        %v1136 = vlaneseq
        %v1137 = vshrl.u32 %v1136, 7
        %v1138 = vsub.s32 %v1135, %v1137
        %v1139 = vrot.slane %v1131, %v1138
        %v1141 = vunpack.c.l.s4 1983009808
        %v1142 = vunpack.c.0.s8 %v1141
        %v1143 = vlaneseq
        %v1144 = vshrl.u32 %v1143, 7
        %v1145 = vsub.s32 %v1142, %v1144
        %v1146 = vrot.slane %v1132, %v1145
        %v1147 = vcombine.low %v1139, %v1146
        %v1148 = vcombine.low %v1119, %v1120
        %v1149 = vcombine.low %v1121, %v1122
        %v1151 = vunpack.c.l.s4 1983009808
        %v1152 = vunpack.c.0.s8 %v1151
        %v1153 = vlaneseq
        %v1154 = vshrl.u32 %v1153, 7
        %v1155 = vsub.s32 %v1152, %v1154
        %v1156 = vrot.slane %v1148, %v1155
        %v1158 = vunpack.c.l.s4 1983009808
        %v1159 = vunpack.c.0.s8 %v1158
        %v1160 = vlaneseq
        %v1161 = vshrl.u32 %v1160, 7
        %v1162 = vsub.s32 %v1159, %v1161
        %v1163 = vrot.slane %v1149, %v1162
        %v1164 = vcombine.low %v1156, %v1163
        %1167 = vst [vmem:[%s422] sm:$0xff] %v1147
        %1168 = vst [vmem:[%s422 + $0x8] sm:$0xff] %v1164
        %s1169 = smul.u32 8, %s22
        %p1170 = scmp.lt.s32.totalorder %s20, 0
        %s1171 = scalar_select %p1170, %s20, 0
        %p1172 = scmp.lt.s32.totalorder %s21, 0
        %s1173 = scalar_select %p1172, %s21, 0
        %p1174 = scmp.lt.s32.totalorder %s1169, 63
        %s1175 = scalar_select %p1174, %s1169, 63
        %s1176 = smul.addr %s1173, 64
        %s1177 = sadd.s32 %s1175, %s1176
        %s1178 = smul.addr %s1171, 64
        %s1179 = sadd.s32 %s1177, %s1178
        %s1180 = smul.addr %s1179, 4
        %s1181 = scalar_lea.vmem %s2, %s1180
        %s1182 = smul.u32 8, %s22
        %p1183 = scmp.lt.s32.totalorder %s20, 0
        %s1184 = scalar_select %p1183, %s20, 0
        %p1185 = scmp.lt.s32.totalorder %s21, 0
        %s1186 = scalar_select %p1185, %s21, 0
        %p1187 = scmp.lt.s32.totalorder %s1182, 63
        %s1188 = scalar_select %p1187, %s1182, 63
        %s1189 = smul.addr %s1186, 64
        %s1190 = sadd.s32 %s1188, %s1189
        %s1191 = smul.addr %s1184, 64
        %s1192 = sadd.s32 %s1190, %s1191
        %s1193 = smul.addr %s1192, 2
        %s1194 = scalar_lea.vmem %s3, %s1193
        // Predicated region
        $region52: #{generator_forward.5} parent=46 // pred_check
          %p1195 = pneg %p112
        $region53: #{generator_forward.5} parent=46 // pred_check_branch
          %1197 = sbr.rel (%p1195) target = $region55
        $region54: #{generator_forward.5} parent=46 // pred_region
          %s1198 = smul.u32 8, %s22
        $region55: #{generator_forward.5} parent=46 // pred_fallthru
          _
        // Predicated region
        $region56: #{generator_forward.5} parent=46 // pred_check
          %p1199 = pneg %p142
        $region57: #{generator_forward.5} parent=46 // pred_check_branch
          %1201 = sbr.rel (%p1199) target = $region59
        $region58: #{generator_forward.5} parent=46 // pred_region
          %s1202 = smul.u32 8, %s22
        $region59: #{generator_forward.5} parent=46 // pred_fallthru
          _
      $region47: #{generator_forward.5} parent=5 // pred_fallthru
        _
      %p1203 = scmp.le.s32.totalorder 2, %s10
      // Predicated region
      $region60: #{generator_forward.5} parent=5 // pred_check
        %p1204 = pneg %p1203
      $region61: #{generator_forward.5} parent=5 // pred_check_branch
        %1206 = sbr.rel (%p1204) target = $region63
      $region62: #{generator_forward.5} parent=5 // pred_region
        %s1207 = ssub.s32 %s10, 2
        // Predicated region
        $region64: #{generator_forward.5} parent=62 // pred_check
          %p1208 = pneg %p118
        $region65: #{generator_forward.5} parent=62 // pred_check_branch
          %1210 = sbr.rel (%p1208) target = $region67
        $region66: #{generator_forward.5} parent=62 // pred_region
          %s1211 = smul.u32 8, %s25
          %p1212 = scmp.lt.s32.totalorder %s23, 0
          %s1213 = scalar_select %p1212, %s23, 0
          %p1214 = scmp.lt.s32.totalorder %s24, 0
          %s1215 = scalar_select %p1214, %s24, 0
          %p1216 = scmp.lt.s32.totalorder %s1211, 63
          %s1217 = scalar_select %p1216, %s1211, 63
          %s1218 = smul.addr %s1215, 64
          %s1219 = sadd.s32 %s1217, %s1218
          %s1220 = smul.addr %s1213, 64
          %s1221 = sadd.s32 %s1219, %s1220
          %s1222 = smul.addr %s1221, 4
          %s1223 = scalar_lea.vmem %s2, %s1222
        $region67: #{generator_forward.5} parent=62 // pred_fallthru
          _
        // Predicated region
        $region68: #{generator_forward.5} parent=62 // pred_check
          %p1224 = pneg %p148
        $region69: #{generator_forward.5} parent=62 // pred_check_branch
          %1226 = sbr.rel (%p1224) target = $region71
        $region70: #{generator_forward.5} parent=62 // pred_region
          %s1227 = smul.u32 8, %s25
          %p1228 = scmp.lt.s32.totalorder %s23, 0
          %s1229 = scalar_select %p1228, %s23, 0
          %p1230 = scmp.lt.s32.totalorder %s24, 0
          %s1231 = scalar_select %p1230, %s24, 0
          %p1232 = scmp.lt.s32.totalorder %s1227, 63
          %s1233 = scalar_select %p1232, %s1227, 63
          %s1234 = smul.addr %s1231, 64
          %s1235 = sadd.s32 %s1233, %s1234
          %s1236 = smul.addr %s1229, 64
          %s1237 = sadd.s32 %s1235, %s1236
          %s1238 = smul.addr %s1237, 2
          %s1239 = scalar_lea.vmem %s3, %s1238
        $region71: #{generator_forward.5} parent=62 // pred_fallthru
          _
      $region63: #{generator_forward.5} parent=5 // pred_fallthru
        _
    $region6: #{generator_forward.5} parent=1 // loop_footer
      %s14 = sadd.s32 1, %s10
    $region7: #{generator_forward.5} parent=1 // loop_footer_branch
      %9 = sbr.rel target = $region3
    $region8: #{generator_forward.5} parent=1 // loop_exit
      _

// kernel: generator_forward.6
$region0: #{generator_forward.6}
  #allocation0 [shape = 'u32[]', space=smem, size = 0x4, offset = 0x4, fixed_abs, tag = 'smem constant byte address 0x4 - core index']
  #allocation1 [shape = 'u32[144,128]{1,0:T(1,128)}', space=vmem, size = 0x12000, scoped, tag = 'internal scratch']
  %s0 = inlined_call_operand.vmem [shape: f32[1,2048], index: 0, kind: input, shape index: {}]
  %s1 = inlined_call_operand.vmem [shape: bf16[4,32,2048], index: 1, kind: input, shape index: {}]
  %s2 = inlined_call_operand.vmem [shape: bf16[4,2048,256], index: 2, kind: input, shape index: {}]
  %s3 = inlined_call_operand.vmem [shape: bf16[4,32,256], index: 3, kind: output, shape index: {0}]
  %s4 = inlined_call_operand.vmem [shape: f32[4,1,2,256], index: 4, kind: output, shape index: {1}]
  %5 = xla_tuple %s3, %s4
  %s6 = sld [smem:[#allocation0]]
  $region131: #{generator_forward.6} parent=0
    _
  %s8 = ssub.s32 1, %s6
  %s9 = scalar_select 0, %s8, %s6
  $region1: #{generator_forward.6} parent=0
    #allocation2 [shape = 'u8[1048576]{0}', space=vmem, size = 0x100000, scoped, tag = 'input window, operand 2']
    #allocation3 [shape = 'u8[16384]{0}', space=vmem, size = 0x4000, scoped, tag = 'output window, operand 0']
    loop: start=0, step=1, limit=10
    $region2: #{generator_forward.6} parent=1 // loop_pre_header
      _
    $region3: #{generator_forward.6} parent=1 // loop_header
      %s11 = sphi 0, %s15
      %p12 = scmp.ge.s32.totalorder %s11, 10
      %s18 = sphi 0, %s37
      %s19 = sphi 0, %s33
      %s20 = sphi 0, %s29
      %s21 = sphi 0, %s18
      %s22 = sphi 0, %s19
      %s23 = sphi 0, %s20
      %s24 = sphi 0, %s21
      %s25 = sphi 0, %s22
      %s26 = sphi 0, %s23
      %s38 = sphi 0, %s38
      %s40 = sphi 0, %s38
      %s41 = sphi 0, %s40
      %s55 = sphi 0, %s41
      %s63 = sphi 0, %s65
      %s66 = sphi 0, %s63
      %s67 = sphi 0, %s66
      %s83 = sphi 0, %s67
      %s91 = sphi 0, %s93
      %s94 = sphi 0, %s91
      %s95 = sphi 0, %s94
      %s111 = sphi 0, %s95
      %s121 = sphi 0, %s123
      %s124 = sphi 0, %s121
      %s125 = sphi 0, %s124
      %s141 = sphi 0, %s125
      %s151 = sphi 0, %s153
      %s154 = sphi 0, %s151
      %s155 = sphi 0, %s154
      %s171 = sphi 0, %s155
    $region4: #{generator_forward.6} parent=1 // loop_header_branch
      %14 = sbr.rel (%p12) target = $region8
    $region5: #{generator_forward.6} parent=1 // loop_body
      %s16 = ssub.s32 %s11, 1
      %s17 = ssub.s32 %s11, 2
      %s27 = sadd.s32 1, %s20
      %p28 = scmp.ge.s32.totalorder %s27, 2
      %s29 = scalar_select %p28, 0, %s27
      %s30 = sadd.s32 1, %s19
      %s31 = scalar_select %p28, %s30, %s19
      %p32 = scmp.ge.s32.totalorder %s31, 1
      %s33 = scalar_select %p32, 0, %s31
      %s34 = sadd.s32 1, %s18
      %s35 = scalar_select %p32, %s34, %s18
      %p36 = scmp.ge.s32.totalorder %s35, 4
      %s37 = scalar_select %p36, 0, %s35
      %s39 = sadd.s32 %s38, 1
      %p42 = scmp.eq.s32.totalorder %s11, 7
      %p43 = scmp.ne.s32.totalorder %s38, %s40
      %p44 = scmp.eq.s32.totalorder %s11, 0
      %p45 = por %p43, %p44
      %p46 = scmp.ne.s32.totalorder %s38, %s40
      %p47 = scmp.eq.s32.totalorder %s16, 7
      %p48 = por %p46, %p47
      %p49 = scmp.ne.s32.totalorder %s40, %s41
      %p50 = scmp.eq.s32.totalorder %s16, 0
      %p51 = por %p49, %p50
      %p52 = scmp.ne.s32.totalorder %s40, %s41
      %p53 = scmp.eq.s32.totalorder %s17, 7
      %p54 = por %p52, %p53
      %p56 = scmp.ne.s32.totalorder %s41, %s55
      %p57 = scmp.eq.s32.totalorder %s17, 0
      %p58 = por %p56, %p57
      %s59 = ssub.s32 %s18, %s37
      %s60 = ssub.s32 %s19, %s33
      %s61 = sor.u32 %s59, %s60
      %p62 = scmp.eq.s32.totalorder %s61, 0
      %s64 = sadd.s32 %s63, 1
      %s65 = scalar_select %p62, %s63, %s64
      %p68 = pneg %p62
      %p69 = scmp.eq.s32.totalorder %s11, 7
      %p70 = por %p68, %p69
      %p71 = scmp.ne.s32.totalorder %s63, %s66
      %p72 = scmp.eq.s32.totalorder %s11, 0
      %p73 = por %p71, %p72
      %p74 = scmp.ne.s32.totalorder %s63, %s66
      %p75 = scmp.eq.s32.totalorder %s16, 7
      %p76 = por %p74, %p75
      %p77 = scmp.ne.s32.totalorder %s66, %s67
      %p78 = scmp.eq.s32.totalorder %s16, 0
      %p79 = por %p77, %p78
      %p80 = scmp.ne.s32.totalorder %s66, %s67
      %p81 = scmp.eq.s32.totalorder %s17, 7
      %p82 = por %p80, %p81
      %p84 = scmp.ne.s32.totalorder %s67, %s83
      %p85 = scmp.eq.s32.totalorder %s17, 0
      %p86 = por %p84, %p85
      %s87 = ssub.s32 %s18, %s37
      %s88 = ssub.s32 %s20, %s29
      %s89 = sor.u32 %s87, %s88
      %p90 = scmp.eq.s32.totalorder %s89, 0
      %s92 = sadd.s32 %s91, 1
      %s93 = scalar_select %p90, %s91, %s92
      %p96 = pneg %p90
      %p97 = scmp.eq.s32.totalorder %s11, 7
      %p98 = por %p96, %p97
      %p99 = scmp.ne.s32.totalorder %s91, %s94
      %p100 = scmp.eq.s32.totalorder %s11, 0
      %p101 = por %p99, %p100
      %p102 = scmp.ne.s32.totalorder %s91, %s94
      %p103 = scmp.eq.s32.totalorder %s16, 7
      %p104 = por %p102, %p103
      %p105 = scmp.ne.s32.totalorder %s94, %s95
      %p106 = scmp.eq.s32.totalorder %s16, 0
      %p107 = por %p105, %p106
      %p108 = scmp.ne.s32.totalorder %s94, %s95
      %p109 = scmp.eq.s32.totalorder %s17, 7
      %p110 = por %p108, %p109
      %p112 = scmp.ne.s32.totalorder %s95, %s111
      %p113 = scmp.eq.s32.totalorder %s17, 0
      %p114 = por %p112, %p113
      %s115 = ssub.s32 %s18, %s37
      %s116 = ssub.s32 %s19, %s33
      %s117 = sor.u32 %s115, %s116
      %s118 = ssub.s32 %s20, %s29
      %s119 = sor.u32 %s117, %s118
      %p120 = scmp.eq.s32.totalorder %s119, 0
      %s122 = sadd.s32 %s121, 1
      %s123 = scalar_select %p120, %s121, %s122
      %p126 = pneg %p120
      %p127 = scmp.eq.s32.totalorder %s11, 7
      %p128 = por %p126, %p127
      %p129 = scmp.ne.s32.totalorder %s121, %s124
      %p130 = scmp.eq.s32.totalorder %s11, 0
      %p131 = por %p129, %p130
      %p132 = scmp.ne.s32.totalorder %s121, %s124
      %p133 = scmp.eq.s32.totalorder %s16, 7
      %p134 = por %p132, %p133
      %p135 = scmp.ne.s32.totalorder %s124, %s125
      %p136 = scmp.eq.s32.totalorder %s16, 0
      %p137 = por %p135, %p136
      %p138 = scmp.ne.s32.totalorder %s124, %s125
      %p139 = scmp.eq.s32.totalorder %s17, 7
      %p140 = por %p138, %p139
      %p142 = scmp.ne.s32.totalorder %s125, %s141
      %p143 = scmp.eq.s32.totalorder %s17, 0
      %p144 = por %p142, %p143
      %s145 = ssub.s32 %s18, %s37
      %s146 = ssub.s32 %s19, %s33
      %s147 = sor.u32 %s145, %s146
      %s148 = ssub.s32 %s20, %s29
      %s149 = sor.u32 %s147, %s148
      %p150 = scmp.eq.s32.totalorder %s149, 0
      %s152 = sadd.s32 %s151, 1
      %s153 = scalar_select %p150, %s151, %s152
      %p156 = pneg %p150
      %p157 = scmp.eq.s32.totalorder %s11, 7
      %p158 = por %p156, %p157
      %p159 = scmp.ne.s32.totalorder %s151, %s154
      %p160 = scmp.eq.s32.totalorder %s11, 0
      %p161 = por %p159, %p160
      %p162 = scmp.ne.s32.totalorder %s151, %s154
      %p163 = scmp.eq.s32.totalorder %s16, 7
      %p164 = por %p162, %p163
      %p165 = scmp.ne.s32.totalorder %s154, %s155
      %p166 = scmp.eq.s32.totalorder %s16, 0
      %p167 = por %p165, %p166
      %p168 = scmp.ne.s32.totalorder %s154, %s155
      %p169 = scmp.eq.s32.totalorder %s17, 7
      %p170 = por %p168, %p169
      %p172 = scmp.ne.s32.totalorder %s155, %s171
      %p173 = scmp.eq.s32.totalorder %s17, 0
      %p174 = por %p172, %p173
      %p175 = scmp.le.s32.totalorder 1, %s11
      %p176 = scmp.lt.s32.totalorder %s11, 9
      %p177 = pnand %p175, %p176
      %p178 = pneg %p177
      // Predicated region
      $region9: #{generator_forward.6} parent=5 // pred_check
        _
      $region10: #{generator_forward.6} parent=5 // pred_check_branch
        %180 = sbr.rel (%p177) target = $region12
      $region11: #{generator_forward.6} parent=5 // pred_region
        %s181 = ssub.s32 %s11, 1
        // Predicated region
        $region13: #{generator_forward.6} parent=11 // pred_check
          %p182 = pneg %p51
        $region14: #{generator_forward.6} parent=11 // pred_check_branch
          %184 = sbr.rel (%p182) target = $region16
        $region15: #{generator_forward.6} parent=11 // pred_region
          _
        $region16: #{generator_forward.6} parent=11 // pred_fallthru
          _
      $region12: #{generator_forward.6} parent=5 // pred_fallthru
        _
      %p185 = scmp.lt.s32.totalorder %s11, 8
      // Predicated region
      $region17: #{generator_forward.6} parent=5 // pred_check
        %p186 = pneg %p185
      $region18: #{generator_forward.6} parent=5 // pred_check_branch
        %188 = sbr.rel (%p186) target = $region20
      $region19: #{generator_forward.6} parent=5 // pred_region
        // Predicated region
        $region21: #{generator_forward.6} parent=19 // pred_check
          %p189 = pneg %p73
        $region22: #{generator_forward.6} parent=19 // pred_check_branch
          %191 = sbr.rel (%p189) target = $region24
        $region23: #{generator_forward.6} parent=19 // pred_region
          %s192 = smul.u32 4, %s19
          %p193 = scmp.lt.s32.totalorder %s18, 3
          %s194 = scalar_select %p193, %s18, 3
          %p195 = scmp.lt.s32.totalorder %s192, 3
          %s196 = scalar_select %p195, %s192, 3
          %s197 = smul.addr %s196, 16
          %s198 = smul.addr %s194, 64
          %s199 = sadd.s32 %s197, %s198
          %s200 = smul.addr %s199, 4
          %s201 = scalar_lea.vmem %s1, %s200
          %s202 = smul.u32 4, %s19
        $region24: #{generator_forward.6} parent=19 // pred_fallthru
          _
        // Predicated region
        $region25: #{generator_forward.6} parent=19 // pred_check
          %p203 = pneg %p101
        $region26: #{generator_forward.6} parent=19 // pred_check_branch
          %205 = sbr.rel (%p203) target = $region28
        $region27: #{generator_forward.6} parent=19 // pred_region
          %s206 = sand.u32 %s91, 1
          %s207 = sand.u32 %s91, 1
          %s208 = smul.addr %s207, 1024
          %s209 = scalar_lea.vmem [#allocation2], %s208
          %s210 = smul.addr %s18, 512
          %s211 = sadd.s32 %s20, %s210
          %s212 = smul.addr %s211, 4
          %s213 = scalar_lea.vmem %s2, %s212
          // Predicated region
          $region29: #{generator_forward.6} parent=27 // pred_check
            _
          $region30: #{generator_forward.6} parent=27 // pred_check_branch
            %215 = sbr.rel (0) target = $region32
          $region31: #{generator_forward.6} parent=27 // pred_region
            // Predicated region
            $region33: #{generator_forward.6} parent=31 // pred_check
              _
            $region34: #{generator_forward.6} parent=31 // pred_check_branch
              %217 = sbr.rel target = $region36
            $region35: #{generator_forward.6} parent=31 // pred_region
              // Predicated region
              $region48: #{generator_forward.6} parent=35 // pred_check
                _
              $region49: #{generator_forward.6} parent=35 // pred_check_branch
                %742 = sbr.rel (0) target = $region51
              $region50: #{generator_forward.6} parent=35 // pred_region
                loop: start=0, step=1, limit=1
                $region52: #{generator_forward.6} parent=50 // loop_pre_header
                  _
                $region53: #{generator_forward.6} parent=50 // loop_header
                  %s744 = sphi 0, %s748
                  %p745 = scmp.ge.s32.totalorder %s744, 1
                  %s749 = sphi %s213, %s213
                  %s750 = sphi %s209, %s209
                $region54: #{generator_forward.6} parent=50 // loop_header_branch
                  %747 = sbr.rel (%p745) target = $region58
                $region55: #{generator_forward.6} parent=50 // loop_body
                  _
                $region56: #{generator_forward.6} parent=50 // loop_footer
                  %s748 = sadd.s32 1, %s744
                $region57: #{generator_forward.6} parent=50 // loop_footer_branch
                  %743 = sbr.rel target = $region53
                $region58: #{generator_forward.6} parent=50 // loop_exit
                  _
                loop: start=0, step=1, limit=1
                $region59: #{generator_forward.6} parent=50 // loop_pre_header
                  _
                $region60: #{generator_forward.6} parent=50 // loop_header
                  %s753 = sphi 0, %s757
                  %p754 = scmp.ge.s32.totalorder %s753, 1
                  %s758 = sphi %s213, %s213
                  %s759 = sphi %s209, %s209
                $region61: #{generator_forward.6} parent=50 // loop_header_branch
                  %756 = sbr.rel (%p754) target = $region65
                $region62: #{generator_forward.6} parent=50 // loop_body
                  %v760 = vld [vmem:[%s758] sm:$0xf]
                  %761 = vst [vmem:[%s759] sm:$0xf] %v760
                  %v762 = vld [vmem:[%s758 + $0x8] sm:$0xf]
                  %763 = vst [vmem:[%s759 + $0x4] sm:$0xf] %v762
                  %v764 = vld [vmem:[%s758 + $0x10] sm:$0xf]
                  %765 = vst [vmem:[%s759 + $0x8] sm:$0xf] %v764
                  %v766 = vld [vmem:[%s758 + $0x18] sm:$0xf]
                  %767 = vst [vmem:[%s759 + $0xc] sm:$0xf] %v766
                  %v768 = vld [vmem:[%s758 + $0x20] sm:$0xf]
                  %769 = vst [vmem:[%s759 + $0x10] sm:$0xf] %v768
                  %v770 = vld [vmem:[%s758 + $0x28] sm:$0xf]
                  %771 = vst [vmem:[%s759 + $0x14] sm:$0xf] %v770
                  %v772 = vld [vmem:[%s758 + $0x30] sm:$0xf]
                  %773 = vst [vmem:[%s759 + $0x18] sm:$0xf] %v772
                  %v774 = vld [vmem:[%s758 + $0x38] sm:$0xf]
                  %775 = vst [vmem:[%s759 + $0x1c] sm:$0xf] %v774
                  %v776 = vld [vmem:[%s758 + $0x40] sm:$0xf]
                  %777 = vst [vmem:[%s759 + $0x20] sm:$0xf] %v776
                  %v778 = vld [vmem:[%s758 + $0x48] sm:$0xf]
                  %779 = vst [vmem:[%s759 + $0x24] sm:$0xf] %v778
                  %v780 = vld [vmem:[%s758 + $0x50] sm:$0xf]
                  %781 = vst [vmem:[%s759 + $0x28] sm:$0xf] %v780
                  %v782 = vld [vmem:[%s758 + $0x58] sm:$0xf]
                  %783 = vst [vmem:[%s759 + $0x2c] sm:$0xf] %v782
                  %v784 = vld [vmem:[%s758 + $0x60] sm:$0xf]
                  %785 = vst [vmem:[%s759 + $0x30] sm:$0xf] %v784
                  %v786 = vld [vmem:[%s758 + $0x68] sm:$0xf]
                  %787 = vst [vmem:[%s759 + $0x34] sm:$0xf] %v786
                  %v788 = vld [vmem:[%s758 + $0x70] sm:$0xf]
                  %789 = vst [vmem:[%s759 + $0x38] sm:$0xf] %v788
                  %v790 = vld [vmem:[%s758 + $0x78] sm:$0xf]
                  %791 = vst [vmem:[%s759 + $0x3c] sm:$0xf] %v790
                  %v792 = vld [vmem:[%s758 + $0x80] sm:$0xf]
                  %793 = vst [vmem:[%s759 + $0x40] sm:$0xf] %v792
                  %v794 = vld [vmem:[%s758 + $0x88] sm:$0xf]
                  %795 = vst [vmem:[%s759 + $0x44] sm:$0xf] %v794
                  %v796 = vld [vmem:[%s758 + $0x90] sm:$0xf]
                  %797 = vst [vmem:[%s759 + $0x48] sm:$0xf] %v796
                  %v798 = vld [vmem:[%s758 + $0x98] sm:$0xf]
                  %799 = vst [vmem:[%s759 + $0x4c] sm:$0xf] %v798
                  %v800 = vld [vmem:[%s758 + $0xa0] sm:$0xf]
                  %801 = vst [vmem:[%s759 + $0x50] sm:$0xf] %v800
                  %v802 = vld [vmem:[%s758 + $0xa8] sm:$0xf]
                  %803 = vst [vmem:[%s759 + $0x54] sm:$0xf] %v802
                  %v804 = vld [vmem:[%s758 + $0xb0] sm:$0xf]
                  %805 = vst [vmem:[%s759 + $0x58] sm:$0xf] %v804
                  %v806 = vld [vmem:[%s758 + $0xb8] sm:$0xf]
                  %807 = vst [vmem:[%s759 + $0x5c] sm:$0xf] %v806
                  %v808 = vld [vmem:[%s758 + $0xc0] sm:$0xf]
                  %809 = vst [vmem:[%s759 + $0x60] sm:$0xf] %v808
                  %v810 = vld [vmem:[%s758 + $0xc8] sm:$0xf]
                  %811 = vst [vmem:[%s759 + $0x64] sm:$0xf] %v810
                  %v812 = vld [vmem:[%s758 + $0xd0] sm:$0xf]
                  %813 = vst [vmem:[%s759 + $0x68] sm:$0xf] %v812
                  %v814 = vld [vmem:[%s758 + $0xd8] sm:$0xf]
                  %815 = vst [vmem:[%s759 + $0x6c] sm:$0xf] %v814
                  %v816 = vld [vmem:[%s758 + $0xe0] sm:$0xf]
                  %817 = vst [vmem:[%s759 + $0x70] sm:$0xf] %v816
                  %v818 = vld [vmem:[%s758 + $0xe8] sm:$0xf]
                  %819 = vst [vmem:[%s759 + $0x74] sm:$0xf] %v818
                  %v820 = vld [vmem:[%s758 + $0xf0] sm:$0xf]
                  %821 = vst [vmem:[%s759 + $0x78] sm:$0xf] %v820
                  %v822 = vld [vmem:[%s758 + $0xf8] sm:$0xf]
                  %823 = vst [vmem:[%s759 + $0x7c] sm:$0xf] %v822
                  %v824 = vld [vmem:[%s758 + $0x100] sm:$0xf]
                  %825 = vst [vmem:[%s759 + $0x80] sm:$0xf] %v824
                  %v826 = vld [vmem:[%s758 + $0x108] sm:$0xf]
                  %827 = vst [vmem:[%s759 + $0x84] sm:$0xf] %v826
                  %v828 = vld [vmem:[%s758 + $0x110] sm:$0xf]
                  %829 = vst [vmem:[%s759 + $0x88] sm:$0xf] %v828
                  %v830 = vld [vmem:[%s758 + $0x118] sm:$0xf]
                  %831 = vst [vmem:[%s759 + $0x8c] sm:$0xf] %v830
                  %v832 = vld [vmem:[%s758 + $0x120] sm:$0xf]
                  %833 = vst [vmem:[%s759 + $0x90] sm:$0xf] %v832
                  %v834 = vld [vmem:[%s758 + $0x128] sm:$0xf]
                  %835 = vst [vmem:[%s759 + $0x94] sm:$0xf] %v834
                  %v836 = vld [vmem:[%s758 + $0x130] sm:$0xf]
                  %837 = vst [vmem:[%s759 + $0x98] sm:$0xf] %v836
                  %v838 = vld [vmem:[%s758 + $0x138] sm:$0xf]
                  %839 = vst [vmem:[%s759 + $0x9c] sm:$0xf] %v838
                  %v840 = vld [vmem:[%s758 + $0x140] sm:$0xf]
                  %841 = vst [vmem:[%s759 + $0xa0] sm:$0xf] %v840
                  %v842 = vld [vmem:[%s758 + $0x148] sm:$0xf]
                  %843 = vst [vmem:[%s759 + $0xa4] sm:$0xf] %v842
                  %v844 = vld [vmem:[%s758 + $0x150] sm:$0xf]
                  %845 = vst [vmem:[%s759 + $0xa8] sm:$0xf] %v844
                  %v846 = vld [vmem:[%s758 + $0x158] sm:$0xf]
                  %847 = vst [vmem:[%s759 + $0xac] sm:$0xf] %v846
                  %v848 = vld [vmem:[%s758 + $0x160] sm:$0xf]
                  %849 = vst [vmem:[%s759 + $0xb0] sm:$0xf] %v848
                  %v850 = vld [vmem:[%s758 + $0x168] sm:$0xf]
                  %851 = vst [vmem:[%s759 + $0xb4] sm:$0xf] %v850
                  %v852 = vld [vmem:[%s758 + $0x170] sm:$0xf]
                  %853 = vst [vmem:[%s759 + $0xb8] sm:$0xf] %v852
                  %v854 = vld [vmem:[%s758 + $0x178] sm:$0xf]
                  %855 = vst [vmem:[%s759 + $0xbc] sm:$0xf] %v854
                  %v856 = vld [vmem:[%s758 + $0x180] sm:$0xf]
                  %857 = vst [vmem:[%s759 + $0xc0] sm:$0xf] %v856
                  %v858 = vld [vmem:[%s758 + $0x188] sm:$0xf]
                  %859 = vst [vmem:[%s759 + $0xc4] sm:$0xf] %v858
                  %v860 = vld [vmem:[%s758 + $0x190] sm:$0xf]
                  %861 = vst [vmem:[%s759 + $0xc8] sm:$0xf] %v860
                  %v862 = vld [vmem:[%s758 + $0x198] sm:$0xf]
                  %863 = vst [vmem:[%s759 + $0xcc] sm:$0xf] %v862
                  %v864 = vld [vmem:[%s758 + $0x1a0] sm:$0xf]
                  %865 = vst [vmem:[%s759 + $0xd0] sm:$0xf] %v864
                  %v866 = vld [vmem:[%s758 + $0x1a8] sm:$0xf]
                  %867 = vst [vmem:[%s759 + $0xd4] sm:$0xf] %v866
                  %v868 = vld [vmem:[%s758 + $0x1b0] sm:$0xf]
                  %869 = vst [vmem:[%s759 + $0xd8] sm:$0xf] %v868
                  %v870 = vld [vmem:[%s758 + $0x1b8] sm:$0xf]
                  %871 = vst [vmem:[%s759 + $0xdc] sm:$0xf] %v870
                  %v872 = vld [vmem:[%s758 + $0x1c0] sm:$0xf]
                  %873 = vst [vmem:[%s759 + $0xe0] sm:$0xf] %v872
                  %v874 = vld [vmem:[%s758 + $0x1c8] sm:$0xf]
                  %875 = vst [vmem:[%s759 + $0xe4] sm:$0xf] %v874
                  %v876 = vld [vmem:[%s758 + $0x1d0] sm:$0xf]
                  %877 = vst [vmem:[%s759 + $0xe8] sm:$0xf] %v876
                  %v878 = vld [vmem:[%s758 + $0x1d8] sm:$0xf]
                  %879 = vst [vmem:[%s759 + $0xec] sm:$0xf] %v878
                  %v880 = vld [vmem:[%s758 + $0x1e0] sm:$0xf]
                  %881 = vst [vmem:[%s759 + $0xf0] sm:$0xf] %v880
                  %v882 = vld [vmem:[%s758 + $0x1e8] sm:$0xf]
                  %883 = vst [vmem:[%s759 + $0xf4] sm:$0xf] %v882
                  %v884 = vld [vmem:[%s758 + $0x1f0] sm:$0xf]
                  %885 = vst [vmem:[%s759 + $0xf8] sm:$0xf] %v884
                  %v886 = vld [vmem:[%s758 + $0x1f8] sm:$0xf]
                  %887 = vst [vmem:[%s759 + $0xfc] sm:$0xf] %v886
                  %v888 = vld [vmem:[%s758 + $0x200] sm:$0xf]
                  %889 = vst [vmem:[%s759 + $0x100] sm:$0xf] %v888
                  %v890 = vld [vmem:[%s758 + $0x208] sm:$0xf]
                  %891 = vst [vmem:[%s759 + $0x104] sm:$0xf] %v890
                  %v892 = vld [vmem:[%s758 + $0x210] sm:$0xf]
                  %893 = vst [vmem:[%s759 + $0x108] sm:$0xf] %v892
                  %v894 = vld [vmem:[%s758 + $0x218] sm:$0xf]
                  %895 = vst [vmem:[%s759 + $0x10c] sm:$0xf] %v894
                  %v896 = vld [vmem:[%s758 + $0x220] sm:$0xf]
                  %897 = vst [vmem:[%s759 + $0x110] sm:$0xf] %v896
                  %v898 = vld [vmem:[%s758 + $0x228] sm:$0xf]
                  %899 = vst [vmem:[%s759 + $0x114] sm:$0xf] %v898
                  %v900 = vld [vmem:[%s758 + $0x230] sm:$0xf]
                  %901 = vst [vmem:[%s759 + $0x118] sm:$0xf] %v900
                  %v902 = vld [vmem:[%s758 + $0x238] sm:$0xf]
                  %903 = vst [vmem:[%s759 + $0x11c] sm:$0xf] %v902
                  %v904 = vld [vmem:[%s758 + $0x240] sm:$0xf]
                  %905 = vst [vmem:[%s759 + $0x120] sm:$0xf] %v904
                  %v906 = vld [vmem:[%s758 + $0x248] sm:$0xf]
                  %907 = vst [vmem:[%s759 + $0x124] sm:$0xf] %v906
                  %v908 = vld [vmem:[%s758 + $0x250] sm:$0xf]
                  %909 = vst [vmem:[%s759 + $0x128] sm:$0xf] %v908
                  %v910 = vld [vmem:[%s758 + $0x258] sm:$0xf]
                  %911 = vst [vmem:[%s759 + $0x12c] sm:$0xf] %v910
                  %v912 = vld [vmem:[%s758 + $0x260] sm:$0xf]
                  %913 = vst [vmem:[%s759 + $0x130] sm:$0xf] %v912
                  %v914 = vld [vmem:[%s758 + $0x268] sm:$0xf]
                  %915 = vst [vmem:[%s759 + $0x134] sm:$0xf] %v914
                  %v916 = vld [vmem:[%s758 + $0x270] sm:$0xf]
                  %917 = vst [vmem:[%s759 + $0x138] sm:$0xf] %v916
                  %v918 = vld [vmem:[%s758 + $0x278] sm:$0xf]
                  %919 = vst [vmem:[%s759 + $0x13c] sm:$0xf] %v918
                  %v920 = vld [vmem:[%s758 + $0x280] sm:$0xf]
                  %921 = vst [vmem:[%s759 + $0x140] sm:$0xf] %v920
                  %v922 = vld [vmem:[%s758 + $0x288] sm:$0xf]
                  %923 = vst [vmem:[%s759 + $0x144] sm:$0xf] %v922
                  %v924 = vld [vmem:[%s758 + $0x290] sm:$0xf]
                  %925 = vst [vmem:[%s759 + $0x148] sm:$0xf] %v924
                  %v926 = vld [vmem:[%s758 + $0x298] sm:$0xf]
                  %927 = vst [vmem:[%s759 + $0x14c] sm:$0xf] %v926
                  %v928 = vld [vmem:[%s758 + $0x2a0] sm:$0xf]
                  %929 = vst [vmem:[%s759 + $0x150] sm:$0xf] %v928
                  %v930 = vld [vmem:[%s758 + $0x2a8] sm:$0xf]
                  %931 = vst [vmem:[%s759 + $0x154] sm:$0xf] %v930
                  %v932 = vld [vmem:[%s758 + $0x2b0] sm:$0xf]
                  %933 = vst [vmem:[%s759 + $0x158] sm:$0xf] %v932
                  %v934 = vld [vmem:[%s758 + $0x2b8] sm:$0xf]
                  %935 = vst [vmem:[%s759 + $0x15c] sm:$0xf] %v934
                  %v936 = vld [vmem:[%s758 + $0x2c0] sm:$0xf]
                  %937 = vst [vmem:[%s759 + $0x160] sm:$0xf] %v936
                  %v938 = vld [vmem:[%s758 + $0x2c8] sm:$0xf]
                  %939 = vst [vmem:[%s759 + $0x164] sm:$0xf] %v938
                  %v940 = vld [vmem:[%s758 + $0x2d0] sm:$0xf]
                  %941 = vst [vmem:[%s759 + $0x168] sm:$0xf] %v940
                  %v942 = vld [vmem:[%s758 + $0x2d8] sm:$0xf]
                  %943 = vst [vmem:[%s759 + $0x16c] sm:$0xf] %v942
                  %v944 = vld [vmem:[%s758 + $0x2e0] sm:$0xf]
                  %945 = vst [vmem:[%s759 + $0x170] sm:$0xf] %v944
                  %v946 = vld [vmem:[%s758 + $0x2e8] sm:$0xf]
                  %947 = vst [vmem:[%s759 + $0x174] sm:$0xf] %v946
                  %v948 = vld [vmem:[%s758 + $0x2f0] sm:$0xf]
                  %949 = vst [vmem:[%s759 + $0x178] sm:$0xf] %v948
                  %v950 = vld [vmem:[%s758 + $0x2f8] sm:$0xf]
                  %951 = vst [vmem:[%s759 + $0x17c] sm:$0xf] %v950
                  %v952 = vld [vmem:[%s758 + $0x300] sm:$0xf]
                  %953 = vst [vmem:[%s759 + $0x180] sm:$0xf] %v952
                  %v954 = vld [vmem:[%s758 + $0x308] sm:$0xf]
                  %955 = vst [vmem:[%s759 + $0x184] sm:$0xf] %v954
                  %v956 = vld [vmem:[%s758 + $0x310] sm:$0xf]
                  %957 = vst [vmem:[%s759 + $0x188] sm:$0xf] %v956
                  %v958 = vld [vmem:[%s758 + $0x318] sm:$0xf]
                  %959 = vst [vmem:[%s759 + $0x18c] sm:$0xf] %v958
                  %v960 = vld [vmem:[%s758 + $0x320] sm:$0xf]
                  %961 = vst [vmem:[%s759 + $0x190] sm:$0xf] %v960
                  %v962 = vld [vmem:[%s758 + $0x328] sm:$0xf]
                  %963 = vst [vmem:[%s759 + $0x194] sm:$0xf] %v962
                  %v964 = vld [vmem:[%s758 + $0x330] sm:$0xf]
                  %965 = vst [vmem:[%s759 + $0x198] sm:$0xf] %v964
                  %v966 = vld [vmem:[%s758 + $0x338] sm:$0xf]
                  %967 = vst [vmem:[%s759 + $0x19c] sm:$0xf] %v966
                  %v968 = vld [vmem:[%s758 + $0x340] sm:$0xf]
                  %969 = vst [vmem:[%s759 + $0x1a0] sm:$0xf] %v968
                  %v970 = vld [vmem:[%s758 + $0x348] sm:$0xf]
                  %971 = vst [vmem:[%s759 + $0x1a4] sm:$0xf] %v970
                  %v972 = vld [vmem:[%s758 + $0x350] sm:$0xf]
                  %973 = vst [vmem:[%s759 + $0x1a8] sm:$0xf] %v972
                  %v974 = vld [vmem:[%s758 + $0x358] sm:$0xf]
                  %975 = vst [vmem:[%s759 + $0x1ac] sm:$0xf] %v974
                  %v976 = vld [vmem:[%s758 + $0x360] sm:$0xf]
                  %977 = vst [vmem:[%s759 + $0x1b0] sm:$0xf] %v976
                  %v978 = vld [vmem:[%s758 + $0x368] sm:$0xf]
                  %979 = vst [vmem:[%s759 + $0x1b4] sm:$0xf] %v978
                  %v980 = vld [vmem:[%s758 + $0x370] sm:$0xf]
                  %981 = vst [vmem:[%s759 + $0x1b8] sm:$0xf] %v980
                  %v982 = vld [vmem:[%s758 + $0x378] sm:$0xf]
                  %983 = vst [vmem:[%s759 + $0x1bc] sm:$0xf] %v982
                  %v984 = vld [vmem:[%s758 + $0x380] sm:$0xf]
                  %985 = vst [vmem:[%s759 + $0x1c0] sm:$0xf] %v984
                  %v986 = vld [vmem:[%s758 + $0x388] sm:$0xf]
                  %987 = vst [vmem:[%s759 + $0x1c4] sm:$0xf] %v986
                  %v988 = vld [vmem:[%s758 + $0x390] sm:$0xf]
                  %989 = vst [vmem:[%s759 + $0x1c8] sm:$0xf] %v988
                  %v990 = vld [vmem:[%s758 + $0x398] sm:$0xf]
                  %991 = vst [vmem:[%s759 + $0x1cc] sm:$0xf] %v990
                  %v992 = vld [vmem:[%s758 + $0x3a0] sm:$0xf]
                  %993 = vst [vmem:[%s759 + $0x1d0] sm:$0xf] %v992
                  %v994 = vld [vmem:[%s758 + $0x3a8] sm:$0xf]
                  %995 = vst [vmem:[%s759 + $0x1d4] sm:$0xf] %v994
                  %v996 = vld [vmem:[%s758 + $0x3b0] sm:$0xf]
                  %997 = vst [vmem:[%s759 + $0x1d8] sm:$0xf] %v996
                  %v998 = vld [vmem:[%s758 + $0x3b8] sm:$0xf]
                  %999 = vst [vmem:[%s759 + $0x1dc] sm:$0xf] %v998
                  %v1000 = vld [vmem:[%s758 + $0x3c0] sm:$0xf]
                  %1001 = vst [vmem:[%s759 + $0x1e0] sm:$0xf] %v1000
                  %v1002 = vld [vmem:[%s758 + $0x3c8] sm:$0xf]
                  %1003 = vst [vmem:[%s759 + $0x1e4] sm:$0xf] %v1002
                  %v1004 = vld [vmem:[%s758 + $0x3d0] sm:$0xf]
                  %1005 = vst [vmem:[%s759 + $0x1e8] sm:$0xf] %v1004
                  %v1006 = vld [vmem:[%s758 + $0x3d8] sm:$0xf]
                  %1007 = vst [vmem:[%s759 + $0x1ec] sm:$0xf] %v1006
                  %v1008 = vld [vmem:[%s758 + $0x3e0] sm:$0xf]
                  %1009 = vst [vmem:[%s759 + $0x1f0] sm:$0xf] %v1008
                  %v1010 = vld [vmem:[%s758 + $0x3e8] sm:$0xf]
                  %1011 = vst [vmem:[%s759 + $0x1f4] sm:$0xf] %v1010
                  %v1012 = vld [vmem:[%s758 + $0x3f0] sm:$0xf]
                  %1013 = vst [vmem:[%s759 + $0x1f8] sm:$0xf] %v1012
                  %v1014 = vld [vmem:[%s758 + $0x3f8] sm:$0xf]
                  %1015 = vst [vmem:[%s759 + $0x1fc] sm:$0xf] %v1014
                  %v1016 = vld [vmem:[%s758 + $0x400] sm:$0xf]
                  %1017 = vst [vmem:[%s759 + $0x200] sm:$0xf] %v1016
                  %v1018 = vld [vmem:[%s758 + $0x408] sm:$0xf]
                  %1019 = vst [vmem:[%s759 + $0x204] sm:$0xf] %v1018
                  %v1020 = vld [vmem:[%s758 + $0x410] sm:$0xf]
                  %1021 = vst [vmem:[%s759 + $0x208] sm:$0xf] %v1020
                  %v1022 = vld [vmem:[%s758 + $0x418] sm:$0xf]
                  %1023 = vst [vmem:[%s759 + $0x20c] sm:$0xf] %v1022
                  %v1024 = vld [vmem:[%s758 + $0x420] sm:$0xf]
                  %1025 = vst [vmem:[%s759 + $0x210] sm:$0xf] %v1024
                  %v1026 = vld [vmem:[%s758 + $0x428] sm:$0xf]
                  %1027 = vst [vmem:[%s759 + $0x214] sm:$0xf] %v1026
                  %v1028 = vld [vmem:[%s758 + $0x430] sm:$0xf]
                  %1029 = vst [vmem:[%s759 + $0x218] sm:$0xf] %v1028
                  %v1030 = vld [vmem:[%s758 + $0x438] sm:$0xf]
                  %1031 = vst [vmem:[%s759 + $0x21c] sm:$0xf] %v1030
                  %v1032 = vld [vmem:[%s758 + $0x440] sm:$0xf]
                  %1033 = vst [vmem:[%s759 + $0x220] sm:$0xf] %v1032
                  %v1034 = vld [vmem:[%s758 + $0x448] sm:$0xf]
                  %1035 = vst [vmem:[%s759 + $0x224] sm:$0xf] %v1034
                  %v1036 = vld [vmem:[%s758 + $0x450] sm:$0xf]
                  %1037 = vst [vmem:[%s759 + $0x228] sm:$0xf] %v1036
                  %v1038 = vld [vmem:[%s758 + $0x458] sm:$0xf]
                  %1039 = vst [vmem:[%s759 + $0x22c] sm:$0xf] %v1038
                  %v1040 = vld [vmem:[%s758 + $0x460] sm:$0xf]
                  %1041 = vst [vmem:[%s759 + $0x230] sm:$0xf] %v1040
                  %v1042 = vld [vmem:[%s758 + $0x468] sm:$0xf]
                  %1043 = vst [vmem:[%s759 + $0x234] sm:$0xf] %v1042
                  %v1044 = vld [vmem:[%s758 + $0x470] sm:$0xf]
                  %1045 = vst [vmem:[%s759 + $0x238] sm:$0xf] %v1044
                  %v1046 = vld [vmem:[%s758 + $0x478] sm:$0xf]
                  %1047 = vst [vmem:[%s759 + $0x23c] sm:$0xf] %v1046
                  %v1048 = vld [vmem:[%s758 + $0x480] sm:$0xf]
                  %1049 = vst [vmem:[%s759 + $0x240] sm:$0xf] %v1048
                  %v1050 = vld [vmem:[%s758 + $0x488] sm:$0xf]
                  %1051 = vst [vmem:[%s759 + $0x244] sm:$0xf] %v1050
                  %v1052 = vld [vmem:[%s758 + $0x490] sm:$0xf]
                  %1053 = vst [vmem:[%s759 + $0x248] sm:$0xf] %v1052
                  %v1054 = vld [vmem:[%s758 + $0x498] sm:$0xf]
                  %1055 = vst [vmem:[%s759 + $0x24c] sm:$0xf] %v1054
                  %v1056 = vld [vmem:[%s758 + $0x4a0] sm:$0xf]
                  %1057 = vst [vmem:[%s759 + $0x250] sm:$0xf] %v1056
                  %v1058 = vld [vmem:[%s758 + $0x4a8] sm:$0xf]
                  %1059 = vst [vmem:[%s759 + $0x254] sm:$0xf] %v1058
                  %v1060 = vld [vmem:[%s758 + $0x4b0] sm:$0xf]
                  %1061 = vst [vmem:[%s759 + $0x258] sm:$0xf] %v1060
                  %v1062 = vld [vmem:[%s758 + $0x4b8] sm:$0xf]
                  %1063 = vst [vmem:[%s759 + $0x25c] sm:$0xf] %v1062
                  %v1064 = vld [vmem:[%s758 + $0x4c0] sm:$0xf]
                  %1065 = vst [vmem:[%s759 + $0x260] sm:$0xf] %v1064
                  %v1066 = vld [vmem:[%s758 + $0x4c8] sm:$0xf]
                  %1067 = vst [vmem:[%s759 + $0x264] sm:$0xf] %v1066
                  %v1068 = vld [vmem:[%s758 + $0x4d0] sm:$0xf]
                  %1069 = vst [vmem:[%s759 + $0x268] sm:$0xf] %v1068
                  %v1070 = vld [vmem:[%s758 + $0x4d8] sm:$0xf]
                  %1071 = vst [vmem:[%s759 + $0x26c] sm:$0xf] %v1070
                  %v1072 = vld [vmem:[%s758 + $0x4e0] sm:$0xf]
                  %1073 = vst [vmem:[%s759 + $0x270] sm:$0xf] %v1072
                  %v1074 = vld [vmem:[%s758 + $0x4e8] sm:$0xf]
                  %1075 = vst [vmem:[%s759 + $0x274] sm:$0xf] %v1074
                  %v1076 = vld [vmem:[%s758 + $0x4f0] sm:$0xf]
                  %1077 = vst [vmem:[%s759 + $0x278] sm:$0xf] %v1076
                  %v1078 = vld [vmem:[%s758 + $0x4f8] sm:$0xf]
                  %1079 = vst [vmem:[%s759 + $0x27c] sm:$0xf] %v1078
                  %v1080 = vld [vmem:[%s758 + $0x500] sm:$0xf]
                  %1081 = vst [vmem:[%s759 + $0x280] sm:$0xf] %v1080
                  %v1082 = vld [vmem:[%s758 + $0x508] sm:$0xf]
                  %1083 = vst [vmem:[%s759 + $0x284] sm:$0xf] %v1082
                  %v1084 = vld [vmem:[%s758 + $0x510] sm:$0xf]
                  %1085 = vst [vmem:[%s759 + $0x288] sm:$0xf] %v1084
                  %v1086 = vld [vmem:[%s758 + $0x518] sm:$0xf]
                  %1087 = vst [vmem:[%s759 + $0x28c] sm:$0xf] %v1086
                  %v1088 = vld [vmem:[%s758 + $0x520] sm:$0xf]
                  %1089 = vst [vmem:[%s759 + $0x290] sm:$0xf] %v1088
                  %v1090 = vld [vmem:[%s758 + $0x528] sm:$0xf]
                  %1091 = vst [vmem:[%s759 + $0x294] sm:$0xf] %v1090
                  %v1092 = vld [vmem:[%s758 + $0x530] sm:$0xf]
                  %1093 = vst [vmem:[%s759 + $0x298] sm:$0xf] %v1092
                  %v1094 = vld [vmem:[%s758 + $0x538] sm:$0xf]
                  %1095 = vst [vmem:[%s759 + $0x29c] sm:$0xf] %v1094
                  %v1096 = vld [vmem:[%s758 + $0x540] sm:$0xf]
                  %1097 = vst [vmem:[%s759 + $0x2a0] sm:$0xf] %v1096
                  %v1098 = vld [vmem:[%s758 + $0x548] sm:$0xf]
                  %1099 = vst [vmem:[%s759 + $0x2a4] sm:$0xf] %v1098
                  %v1100 = vld [vmem:[%s758 + $0x550] sm:$0xf]
                  %1101 = vst [vmem:[%s759 + $0x2a8] sm:$0xf] %v1100
                  %v1102 = vld [vmem:[%s758 + $0x558] sm:$0xf]
                  %1103 = vst [vmem:[%s759 + $0x2ac] sm:$0xf] %v1102
                  %v1104 = vld [vmem:[%s758 + $0x560] sm:$0xf]
                  %1105 = vst [vmem:[%s759 + $0x2b0] sm:$0xf] %v1104
                  %v1106 = vld [vmem:[%s758 + $0x568] sm:$0xf]
                  %1107 = vst [vmem:[%s759 + $0x2b4] sm:$0xf] %v1106
                  %v1108 = vld [vmem:[%s758 + $0x570] sm:$0xf]
                  %1109 = vst [vmem:[%s759 + $0x2b8] sm:$0xf] %v1108
                  %v1110 = vld [vmem:[%s758 + $0x578] sm:$0xf]
                  %1111 = vst [vmem:[%s759 + $0x2bc] sm:$0xf] %v1110
                  %v1112 = vld [vmem:[%s758 + $0x580] sm:$0xf]
                  %1113 = vst [vmem:[%s759 + $0x2c0] sm:$0xf] %v1112
                  %v1114 = vld [vmem:[%s758 + $0x588] sm:$0xf]
                  %1115 = vst [vmem:[%s759 + $0x2c4] sm:$0xf] %v1114
                  %v1116 = vld [vmem:[%s758 + $0x590] sm:$0xf]
                  %1117 = vst [vmem:[%s759 + $0x2c8] sm:$0xf] %v1116
                  %v1118 = vld [vmem:[%s758 + $0x598] sm:$0xf]
                  %1119 = vst [vmem:[%s759 + $0x2cc] sm:$0xf] %v1118
                  %v1120 = vld [vmem:[%s758 + $0x5a0] sm:$0xf]
                  %1121 = vst [vmem:[%s759 + $0x2d0] sm:$0xf] %v1120
                  %v1122 = vld [vmem:[%s758 + $0x5a8] sm:$0xf]
                  %1123 = vst [vmem:[%s759 + $0x2d4] sm:$0xf] %v1122
                  %v1124 = vld [vmem:[%s758 + $0x5b0] sm:$0xf]
                  %1125 = vst [vmem:[%s759 + $0x2d8] sm:$0xf] %v1124
                  %v1126 = vld [vmem:[%s758 + $0x5b8] sm:$0xf]
                  %1127 = vst [vmem:[%s759 + $0x2dc] sm:$0xf] %v1126
                  %v1128 = vld [vmem:[%s758 + $0x5c0] sm:$0xf]
                  %1129 = vst [vmem:[%s759 + $0x2e0] sm:$0xf] %v1128
                  %v1130 = vld [vmem:[%s758 + $0x5c8] sm:$0xf]
                  %1131 = vst [vmem:[%s759 + $0x2e4] sm:$0xf] %v1130
                  %v1132 = vld [vmem:[%s758 + $0x5d0] sm:$0xf]
                  %1133 = vst [vmem:[%s759 + $0x2e8] sm:$0xf] %v1132
                  %v1134 = vld [vmem:[%s758 + $0x5d8] sm:$0xf]
                  %1135 = vst [vmem:[%s759 + $0x2ec] sm:$0xf] %v1134
                  %v1136 = vld [vmem:[%s758 + $0x5e0] sm:$0xf]
                  %1137 = vst [vmem:[%s759 + $0x2f0] sm:$0xf] %v1136
                  %v1138 = vld [vmem:[%s758 + $0x5e8] sm:$0xf]
                  %1139 = vst [vmem:[%s759 + $0x2f4] sm:$0xf] %v1138
                  %v1140 = vld [vmem:[%s758 + $0x5f0] sm:$0xf]
                  %1141 = vst [vmem:[%s759 + $0x2f8] sm:$0xf] %v1140
                  %v1142 = vld [vmem:[%s758 + $0x5f8] sm:$0xf]
                  %1143 = vst [vmem:[%s759 + $0x2fc] sm:$0xf] %v1142
                  %v1144 = vld [vmem:[%s758 + $0x600] sm:$0xf]
                  %1145 = vst [vmem:[%s759 + $0x300] sm:$0xf] %v1144
                  %v1146 = vld [vmem:[%s758 + $0x608] sm:$0xf]
                  %1147 = vst [vmem:[%s759 + $0x304] sm:$0xf] %v1146
                  %v1148 = vld [vmem:[%s758 + $0x610] sm:$0xf]
                  %1149 = vst [vmem:[%s759 + $0x308] sm:$0xf] %v1148
                  %v1150 = vld [vmem:[%s758 + $0x618] sm:$0xf]
                  %1151 = vst [vmem:[%s759 + $0x30c] sm:$0xf] %v1150
                  %v1152 = vld [vmem:[%s758 + $0x620] sm:$0xf]
                  %1153 = vst [vmem:[%s759 + $0x310] sm:$0xf] %v1152
                  %v1154 = vld [vmem:[%s758 + $0x628] sm:$0xf]
                  %1155 = vst [vmem:[%s759 + $0x314] sm:$0xf] %v1154
                  %v1156 = vld [vmem:[%s758 + $0x630] sm:$0xf]
                  %1157 = vst [vmem:[%s759 + $0x318] sm:$0xf] %v1156
                  %v1158 = vld [vmem:[%s758 + $0x638] sm:$0xf]
                  %1159 = vst [vmem:[%s759 + $0x31c] sm:$0xf] %v1158
                  %v1160 = vld [vmem:[%s758 + $0x640] sm:$0xf]
                  %1161 = vst [vmem:[%s759 + $0x320] sm:$0xf] %v1160
                  %v1162 = vld [vmem:[%s758 + $0x648] sm:$0xf]
                  %1163 = vst [vmem:[%s759 + $0x324] sm:$0xf] %v1162
                  %v1164 = vld [vmem:[%s758 + $0x650] sm:$0xf]
                  %1165 = vst [vmem:[%s759 + $0x328] sm:$0xf] %v1164
                  %v1166 = vld [vmem:[%s758 + $0x658] sm:$0xf]
                  %1167 = vst [vmem:[%s759 + $0x32c] sm:$0xf] %v1166
                  %v1168 = vld [vmem:[%s758 + $0x660] sm:$0xf]
                  %1169 = vst [vmem:[%s759 + $0x330] sm:$0xf] %v1168
                  %v1170 = vld [vmem:[%s758 + $0x668] sm:$0xf]
                  %1171 = vst [vmem:[%s759 + $0x334] sm:$0xf] %v1170
                  %v1172 = vld [vmem:[%s758 + $0x670] sm:$0xf]
                  %1173 = vst [vmem:[%s759 + $0x338] sm:$0xf] %v1172
                  %v1174 = vld [vmem:[%s758 + $0x678] sm:$0xf]
                  %1175 = vst [vmem:[%s759 + $0x33c] sm:$0xf] %v1174
                  %v1176 = vld [vmem:[%s758 + $0x680] sm:$0xf]
                  %1177 = vst [vmem:[%s759 + $0x340] sm:$0xf] %v1176
                  %v1178 = vld [vmem:[%s758 + $0x688] sm:$0xf]
                  %1179 = vst [vmem:[%s759 + $0x344] sm:$0xf] %v1178
                  %v1180 = vld [vmem:[%s758 + $0x690] sm:$0xf]
                  %1181 = vst [vmem:[%s759 + $0x348] sm:$0xf] %v1180
                  %v1182 = vld [vmem:[%s758 + $0x698] sm:$0xf]
                  %1183 = vst [vmem:[%s759 + $0x34c] sm:$0xf] %v1182
                  %v1184 = vld [vmem:[%s758 + $0x6a0] sm:$0xf]
                  %1185 = vst [vmem:[%s759 + $0x350] sm:$0xf] %v1184
                  %v1186 = vld [vmem:[%s758 + $0x6a8] sm:$0xf]
                  %1187 = vst [vmem:[%s759 + $0x354] sm:$0xf] %v1186
                  %v1188 = vld [vmem:[%s758 + $0x6b0] sm:$0xf]
                  %1189 = vst [vmem:[%s759 + $0x358] sm:$0xf] %v1188
                  %v1190 = vld [vmem:[%s758 + $0x6b8] sm:$0xf]
                  %1191 = vst [vmem:[%s759 + $0x35c] sm:$0xf] %v1190
                  %v1192 = vld [vmem:[%s758 + $0x6c0] sm:$0xf]
                  %1193 = vst [vmem:[%s759 + $0x360] sm:$0xf] %v1192
                  %v1194 = vld [vmem:[%s758 + $0x6c8] sm:$0xf]
                  %1195 = vst [vmem:[%s759 + $0x364] sm:$0xf] %v1194
                  %v1196 = vld [vmem:[%s758 + $0x6d0] sm:$0xf]
                  %1197 = vst [vmem:[%s759 + $0x368] sm:$0xf] %v1196
                  %v1198 = vld [vmem:[%s758 + $0x6d8] sm:$0xf]
                  %1199 = vst [vmem:[%s759 + $0x36c] sm:$0xf] %v1198
                  %v1200 = vld [vmem:[%s758 + $0x6e0] sm:$0xf]
                  %1201 = vst [vmem:[%s759 + $0x370] sm:$0xf] %v1200
                  %v1202 = vld [vmem:[%s758 + $0x6e8] sm:$0xf]
                  %1203 = vst [vmem:[%s759 + $0x374] sm:$0xf] %v1202
                  %v1204 = vld [vmem:[%s758 + $0x6f0] sm:$0xf]
                  %1205 = vst [vmem:[%s759 + $0x378] sm:$0xf] %v1204
                  %v1206 = vld [vmem:[%s758 + $0x6f8] sm:$0xf]
                  %1207 = vst [vmem:[%s759 + $0x37c] sm:$0xf] %v1206
                  %v1208 = vld [vmem:[%s758 + $0x700] sm:$0xf]
                  %1209 = vst [vmem:[%s759 + $0x380] sm:$0xf] %v1208
                  %v1210 = vld [vmem:[%s758 + $0x708] sm:$0xf]
                  %1211 = vst [vmem:[%s759 + $0x384] sm:$0xf] %v1210
                  %v1212 = vld [vmem:[%s758 + $0x710] sm:$0xf]
                  %1213 = vst [vmem:[%s759 + $0x388] sm:$0xf] %v1212
                  %v1214 = vld [vmem:[%s758 + $0x718] sm:$0xf]
                  %1215 = vst [vmem:[%s759 + $0x38c] sm:$0xf] %v1214
                  %v1216 = vld [vmem:[%s758 + $0x720] sm:$0xf]
                  %1217 = vst [vmem:[%s759 + $0x390] sm:$0xf] %v1216
                  %v1218 = vld [vmem:[%s758 + $0x728] sm:$0xf]
                  %1219 = vst [vmem:[%s759 + $0x394] sm:$0xf] %v1218
                  %v1220 = vld [vmem:[%s758 + $0x730] sm:$0xf]
                  %1221 = vst [vmem:[%s759 + $0x398] sm:$0xf] %v1220
                  %v1222 = vld [vmem:[%s758 + $0x738] sm:$0xf]
                  %1223 = vst [vmem:[%s759 + $0x39c] sm:$0xf] %v1222
                  %v1224 = vld [vmem:[%s758 + $0x740] sm:$0xf]
                  %1225 = vst [vmem:[%s759 + $0x3a0] sm:$0xf] %v1224
                  %v1226 = vld [vmem:[%s758 + $0x748] sm:$0xf]
                  %1227 = vst [vmem:[%s759 + $0x3a4] sm:$0xf] %v1226
                  %v1228 = vld [vmem:[%s758 + $0x750] sm:$0xf]
                  %1229 = vst [vmem:[%s759 + $0x3a8] sm:$0xf] %v1228
                  %v1230 = vld [vmem:[%s758 + $0x758] sm:$0xf]
                  %1231 = vst [vmem:[%s759 + $0x3ac] sm:$0xf] %v1230
                  %v1232 = vld [vmem:[%s758 + $0x760] sm:$0xf]
                  %1233 = vst [vmem:[%s759 + $0x3b0] sm:$0xf] %v1232
                  %v1234 = vld [vmem:[%s758 + $0x768] sm:$0xf]
                  %1235 = vst [vmem:[%s759 + $0x3b4] sm:$0xf] %v1234
                  %v1236 = vld [vmem:[%s758 + $0x770] sm:$0xf]
                  %1237 = vst [vmem:[%s759 + $0x3b8] sm:$0xf] %v1236
                  %v1238 = vld [vmem:[%s758 + $0x778] sm:$0xf]
                  %1239 = vst [vmem:[%s759 + $0x3bc] sm:$0xf] %v1238
                  %v1240 = vld [vmem:[%s758 + $0x780] sm:$0xf]
                  %1241 = vst [vmem:[%s759 + $0x3c0] sm:$0xf] %v1240
                  %v1242 = vld [vmem:[%s758 + $0x788] sm:$0xf]
                  %1243 = vst [vmem:[%s759 + $0x3c4] sm:$0xf] %v1242
                  %v1244 = vld [vmem:[%s758 + $0x790] sm:$0xf]
                  %1245 = vst [vmem:[%s759 + $0x3c8] sm:$0xf] %v1244
                  %v1246 = vld [vmem:[%s758 + $0x798] sm:$0xf]
                  %1247 = vst [vmem:[%s759 + $0x3cc] sm:$0xf] %v1246
                  %v1248 = vld [vmem:[%s758 + $0x7a0] sm:$0xf]
                  %1249 = vst [vmem:[%s759 + $0x3d0] sm:$0xf] %v1248
                  %v1250 = vld [vmem:[%s758 + $0x7a8] sm:$0xf]
                  %1251 = vst [vmem:[%s759 + $0x3d4] sm:$0xf] %v1250
                  %v1252 = vld [vmem:[%s758 + $0x7b0] sm:$0xf]
                  %1253 = vst [vmem:[%s759 + $0x3d8] sm:$0xf] %v1252
                  %v1254 = vld [vmem:[%s758 + $0x7b8] sm:$0xf]
                  %1255 = vst [vmem:[%s759 + $0x3dc] sm:$0xf] %v1254
                  %v1256 = vld [vmem:[%s758 + $0x7c0] sm:$0xf]
                  %1257 = vst [vmem:[%s759 + $0x3e0] sm:$0xf] %v1256
                  %v1258 = vld [vmem:[%s758 + $0x7c8] sm:$0xf]
                  %1259 = vst [vmem:[%s759 + $0x3e4] sm:$0xf] %v1258
                  %v1260 = vld [vmem:[%s758 + $0x7d0] sm:$0xf]
                  %1261 = vst [vmem:[%s759 + $0x3e8] sm:$0xf] %v1260
                  %v1262 = vld [vmem:[%s758 + $0x7d8] sm:$0xf]
                  %1263 = vst [vmem:[%s759 + $0x3ec] sm:$0xf] %v1262
                  %v1264 = vld [vmem:[%s758 + $0x7e0] sm:$0xf]
                  %1265 = vst [vmem:[%s759 + $0x3f0] sm:$0xf] %v1264
                  %v1266 = vld [vmem:[%s758 + $0x7e8] sm:$0xf]
                  %1267 = vst [vmem:[%s759 + $0x3f4] sm:$0xf] %v1266
                  %v1268 = vld [vmem:[%s758 + $0x7f0] sm:$0xf]
                  %1269 = vst [vmem:[%s759 + $0x3f8] sm:$0xf] %v1268
                  %v1270 = vld [vmem:[%s758 + $0x7f8] sm:$0xf]
                  %1271 = vst [vmem:[%s759 + $0x3fc] sm:$0xf] %v1270
                $region63: #{generator_forward.6} parent=50 // loop_footer
                  %s757 = sadd.s32 1, %s753
                $region64: #{generator_forward.6} parent=50 // loop_footer_branch
                  %752 = sbr.rel target = $region60
                $region65: #{generator_forward.6} parent=50 // loop_exit
                  _
              $region51: #{generator_forward.6} parent=35 // pred_fallthru
                _
            $region36: #{generator_forward.6} parent=31 // pred_fallthru
              _
            // Predicated region
            $region37: #{generator_forward.6} parent=31 // pred_check
              _
            $region38: #{generator_forward.6} parent=31 // pred_check_branch
              %219 = sbr.rel (0) target = $region40
            $region39: #{generator_forward.6} parent=31 // pred_region
              loop: start=0, step=1, limit=1
              $region41: #{generator_forward.6} parent=39 // loop_pre_header
                _
              $region42: #{generator_forward.6} parent=39 // loop_header
                %s222 = sphi 0, %s226
                %p223 = scmp.ge.s32.totalorder %s222, 1
                %s227 = sphi %s213, %s213
                %s228 = sphi %s209, %s209
              $region43: #{generator_forward.6} parent=39 // loop_header_branch
                %225 = sbr.rel (%p223) target = $region47
              $region44: #{generator_forward.6} parent=39 // loop_body
                %v229 = vld [vmem:[%s227] sm:$0xf]
                %230 = vst [vmem:[%s228] sm:$0xf] %v229
                %v231 = vld [vmem:[%s227 + $0x8] sm:$0xf]
                %232 = vst [vmem:[%s228 + $0x4] sm:$0xf] %v231
                %v233 = vld [vmem:[%s227 + $0x10] sm:$0xf]
                %234 = vst [vmem:[%s228 + $0x8] sm:$0xf] %v233
                %v235 = vld [vmem:[%s227 + $0x18] sm:$0xf]
                %236 = vst [vmem:[%s228 + $0xc] sm:$0xf] %v235
                %v237 = vld [vmem:[%s227 + $0x20] sm:$0xf]
                %238 = vst [vmem:[%s228 + $0x10] sm:$0xf] %v237
                %v239 = vld [vmem:[%s227 + $0x28] sm:$0xf]
                %240 = vst [vmem:[%s228 + $0x14] sm:$0xf] %v239
                %v241 = vld [vmem:[%s227 + $0x30] sm:$0xf]
                %242 = vst [vmem:[%s228 + $0x18] sm:$0xf] %v241
                %v243 = vld [vmem:[%s227 + $0x38] sm:$0xf]
                %244 = vst [vmem:[%s228 + $0x1c] sm:$0xf] %v243
                %v245 = vld [vmem:[%s227 + $0x40] sm:$0xf]
                %246 = vst [vmem:[%s228 + $0x20] sm:$0xf] %v245
                %v247 = vld [vmem:[%s227 + $0x48] sm:$0xf]
                %248 = vst [vmem:[%s228 + $0x24] sm:$0xf] %v247
                %v249 = vld [vmem:[%s227 + $0x50] sm:$0xf]
                %250 = vst [vmem:[%s228 + $0x28] sm:$0xf] %v249
                %v251 = vld [vmem:[%s227 + $0x58] sm:$0xf]
                %252 = vst [vmem:[%s228 + $0x2c] sm:$0xf] %v251
                %v253 = vld [vmem:[%s227 + $0x60] sm:$0xf]
                %254 = vst [vmem:[%s228 + $0x30] sm:$0xf] %v253
                %v255 = vld [vmem:[%s227 + $0x68] sm:$0xf]
                %256 = vst [vmem:[%s228 + $0x34] sm:$0xf] %v255
                %v257 = vld [vmem:[%s227 + $0x70] sm:$0xf]
                %258 = vst [vmem:[%s228 + $0x38] sm:$0xf] %v257
                %v259 = vld [vmem:[%s227 + $0x78] sm:$0xf]
                %260 = vst [vmem:[%s228 + $0x3c] sm:$0xf] %v259
                %v261 = vld [vmem:[%s227 + $0x80] sm:$0xf]
                %262 = vst [vmem:[%s228 + $0x40] sm:$0xf] %v261
                %v263 = vld [vmem:[%s227 + $0x88] sm:$0xf]
                %264 = vst [vmem:[%s228 + $0x44] sm:$0xf] %v263
                %v265 = vld [vmem:[%s227 + $0x90] sm:$0xf]
                %266 = vst [vmem:[%s228 + $0x48] sm:$0xf] %v265
                %v267 = vld [vmem:[%s227 + $0x98] sm:$0xf]
                %268 = vst [vmem:[%s228 + $0x4c] sm:$0xf] %v267
                %v269 = vld [vmem:[%s227 + $0xa0] sm:$0xf]
                %270 = vst [vmem:[%s228 + $0x50] sm:$0xf] %v269
                %v271 = vld [vmem:[%s227 + $0xa8] sm:$0xf]
                %272 = vst [vmem:[%s228 + $0x54] sm:$0xf] %v271
                %v273 = vld [vmem:[%s227 + $0xb0] sm:$0xf]
                %274 = vst [vmem:[%s228 + $0x58] sm:$0xf] %v273
                %v275 = vld [vmem:[%s227 + $0xb8] sm:$0xf]
                %276 = vst [vmem:[%s228 + $0x5c] sm:$0xf] %v275
                %v277 = vld [vmem:[%s227 + $0xc0] sm:$0xf]
                %278 = vst [vmem:[%s228 + $0x60] sm:$0xf] %v277
                %v279 = vld [vmem:[%s227 + $0xc8] sm:$0xf]
                %280 = vst [vmem:[%s228 + $0x64] sm:$0xf] %v279
                %v281 = vld [vmem:[%s227 + $0xd0] sm:$0xf]
                %282 = vst [vmem:[%s228 + $0x68] sm:$0xf] %v281
                %v283 = vld [vmem:[%s227 + $0xd8] sm:$0xf]
                %284 = vst [vmem:[%s228 + $0x6c] sm:$0xf] %v283
                %v285 = vld [vmem:[%s227 + $0xe0] sm:$0xf]
                %286 = vst [vmem:[%s228 + $0x70] sm:$0xf] %v285
                %v287 = vld [vmem:[%s227 + $0xe8] sm:$0xf]
                %288 = vst [vmem:[%s228 + $0x74] sm:$0xf] %v287
                %v289 = vld [vmem:[%s227 + $0xf0] sm:$0xf]
                %290 = vst [vmem:[%s228 + $0x78] sm:$0xf] %v289
                %v291 = vld [vmem:[%s227 + $0xf8] sm:$0xf]
                %292 = vst [vmem:[%s228 + $0x7c] sm:$0xf] %v291
                %v293 = vld [vmem:[%s227 + $0x100] sm:$0xf]
                %294 = vst [vmem:[%s228 + $0x80] sm:$0xf] %v293
                %v295 = vld [vmem:[%s227 + $0x108] sm:$0xf]
                %296 = vst [vmem:[%s228 + $0x84] sm:$0xf] %v295
                %v297 = vld [vmem:[%s227 + $0x110] sm:$0xf]
                %298 = vst [vmem:[%s228 + $0x88] sm:$0xf] %v297
                %v299 = vld [vmem:[%s227 + $0x118] sm:$0xf]
                %300 = vst [vmem:[%s228 + $0x8c] sm:$0xf] %v299
                %v301 = vld [vmem:[%s227 + $0x120] sm:$0xf]
                %302 = vst [vmem:[%s228 + $0x90] sm:$0xf] %v301
                %v303 = vld [vmem:[%s227 + $0x128] sm:$0xf]
                %304 = vst [vmem:[%s228 + $0x94] sm:$0xf] %v303
                %v305 = vld [vmem:[%s227 + $0x130] sm:$0xf]
                %306 = vst [vmem:[%s228 + $0x98] sm:$0xf] %v305
                %v307 = vld [vmem:[%s227 + $0x138] sm:$0xf]
                %308 = vst [vmem:[%s228 + $0x9c] sm:$0xf] %v307
                %v309 = vld [vmem:[%s227 + $0x140] sm:$0xf]
                %310 = vst [vmem:[%s228 + $0xa0] sm:$0xf] %v309
                %v311 = vld [vmem:[%s227 + $0x148] sm:$0xf]
                %312 = vst [vmem:[%s228 + $0xa4] sm:$0xf] %v311
                %v313 = vld [vmem:[%s227 + $0x150] sm:$0xf]
                %314 = vst [vmem:[%s228 + $0xa8] sm:$0xf] %v313
                %v315 = vld [vmem:[%s227 + $0x158] sm:$0xf]
                %316 = vst [vmem:[%s228 + $0xac] sm:$0xf] %v315
                %v317 = vld [vmem:[%s227 + $0x160] sm:$0xf]
                %318 = vst [vmem:[%s228 + $0xb0] sm:$0xf] %v317
                %v319 = vld [vmem:[%s227 + $0x168] sm:$0xf]
                %320 = vst [vmem:[%s228 + $0xb4] sm:$0xf] %v319
                %v321 = vld [vmem:[%s227 + $0x170] sm:$0xf]
                %322 = vst [vmem:[%s228 + $0xb8] sm:$0xf] %v321
                %v323 = vld [vmem:[%s227 + $0x178] sm:$0xf]
                %324 = vst [vmem:[%s228 + $0xbc] sm:$0xf] %v323
                %v325 = vld [vmem:[%s227 + $0x180] sm:$0xf]
                %326 = vst [vmem:[%s228 + $0xc0] sm:$0xf] %v325
                %v327 = vld [vmem:[%s227 + $0x188] sm:$0xf]
                %328 = vst [vmem:[%s228 + $0xc4] sm:$0xf] %v327
                %v329 = vld [vmem:[%s227 + $0x190] sm:$0xf]
                %330 = vst [vmem:[%s228 + $0xc8] sm:$0xf] %v329
                %v331 = vld [vmem:[%s227 + $0x198] sm:$0xf]
                %332 = vst [vmem:[%s228 + $0xcc] sm:$0xf] %v331
                %v333 = vld [vmem:[%s227 + $0x1a0] sm:$0xf]
                %334 = vst [vmem:[%s228 + $0xd0] sm:$0xf] %v333
                %v335 = vld [vmem:[%s227 + $0x1a8] sm:$0xf]
                %336 = vst [vmem:[%s228 + $0xd4] sm:$0xf] %v335
                %v337 = vld [vmem:[%s227 + $0x1b0] sm:$0xf]
                %338 = vst [vmem:[%s228 + $0xd8] sm:$0xf] %v337
                %v339 = vld [vmem:[%s227 + $0x1b8] sm:$0xf]
                %340 = vst [vmem:[%s228 + $0xdc] sm:$0xf] %v339
                %v341 = vld [vmem:[%s227 + $0x1c0] sm:$0xf]
                %342 = vst [vmem:[%s228 + $0xe0] sm:$0xf] %v341
                %v343 = vld [vmem:[%s227 + $0x1c8] sm:$0xf]
                %344 = vst [vmem:[%s228 + $0xe4] sm:$0xf] %v343
                %v345 = vld [vmem:[%s227 + $0x1d0] sm:$0xf]
                %346 = vst [vmem:[%s228 + $0xe8] sm:$0xf] %v345
                %v347 = vld [vmem:[%s227 + $0x1d8] sm:$0xf]
                %348 = vst [vmem:[%s228 + $0xec] sm:$0xf] %v347
                %v349 = vld [vmem:[%s227 + $0x1e0] sm:$0xf]
                %350 = vst [vmem:[%s228 + $0xf0] sm:$0xf] %v349
                %v351 = vld [vmem:[%s227 + $0x1e8] sm:$0xf]
                %352 = vst [vmem:[%s228 + $0xf4] sm:$0xf] %v351
                %v353 = vld [vmem:[%s227 + $0x1f0] sm:$0xf]
                %354 = vst [vmem:[%s228 + $0xf8] sm:$0xf] %v353
                %v355 = vld [vmem:[%s227 + $0x1f8] sm:$0xf]
                %356 = vst [vmem:[%s228 + $0xfc] sm:$0xf] %v355
                %v357 = vld [vmem:[%s227 + $0x200] sm:$0xf]
                %358 = vst [vmem:[%s228 + $0x100] sm:$0xf] %v357
                %v359 = vld [vmem:[%s227 + $0x208] sm:$0xf]
                %360 = vst [vmem:[%s228 + $0x104] sm:$0xf] %v359
                %v361 = vld [vmem:[%s227 + $0x210] sm:$0xf]
                %362 = vst [vmem:[%s228 + $0x108] sm:$0xf] %v361
                %v363 = vld [vmem:[%s227 + $0x218] sm:$0xf]
                %364 = vst [vmem:[%s228 + $0x10c] sm:$0xf] %v363
                %v365 = vld [vmem:[%s227 + $0x220] sm:$0xf]
                %366 = vst [vmem:[%s228 + $0x110] sm:$0xf] %v365
                %v367 = vld [vmem:[%s227 + $0x228] sm:$0xf]
                %368 = vst [vmem:[%s228 + $0x114] sm:$0xf] %v367
                %v369 = vld [vmem:[%s227 + $0x230] sm:$0xf]
                %370 = vst [vmem:[%s228 + $0x118] sm:$0xf] %v369
                %v371 = vld [vmem:[%s227 + $0x238] sm:$0xf]
                %372 = vst [vmem:[%s228 + $0x11c] sm:$0xf] %v371
                %v373 = vld [vmem:[%s227 + $0x240] sm:$0xf]
                %374 = vst [vmem:[%s228 + $0x120] sm:$0xf] %v373
                %v375 = vld [vmem:[%s227 + $0x248] sm:$0xf]
                %376 = vst [vmem:[%s228 + $0x124] sm:$0xf] %v375
                %v377 = vld [vmem:[%s227 + $0x250] sm:$0xf]
                %378 = vst [vmem:[%s228 + $0x128] sm:$0xf] %v377
                %v379 = vld [vmem:[%s227 + $0x258] sm:$0xf]
                %380 = vst [vmem:[%s228 + $0x12c] sm:$0xf] %v379
                %v381 = vld [vmem:[%s227 + $0x260] sm:$0xf]
                %382 = vst [vmem:[%s228 + $0x130] sm:$0xf] %v381
                %v383 = vld [vmem:[%s227 + $0x268] sm:$0xf]
                %384 = vst [vmem:[%s228 + $0x134] sm:$0xf] %v383
                %v385 = vld [vmem:[%s227 + $0x270] sm:$0xf]
                %386 = vst [vmem:[%s228 + $0x138] sm:$0xf] %v385
                %v387 = vld [vmem:[%s227 + $0x278] sm:$0xf]
                %388 = vst [vmem:[%s228 + $0x13c] sm:$0xf] %v387
                %v389 = vld [vmem:[%s227 + $0x280] sm:$0xf]
                %390 = vst [vmem:[%s228 + $0x140] sm:$0xf] %v389
                %v391 = vld [vmem:[%s227 + $0x288] sm:$0xf]
                %392 = vst [vmem:[%s228 + $0x144] sm:$0xf] %v391
                %v393 = vld [vmem:[%s227 + $0x290] sm:$0xf]
                %394 = vst [vmem:[%s228 + $0x148] sm:$0xf] %v393
                %v395 = vld [vmem:[%s227 + $0x298] sm:$0xf]
                %396 = vst [vmem:[%s228 + $0x14c] sm:$0xf] %v395
                %v397 = vld [vmem:[%s227 + $0x2a0] sm:$0xf]
                %398 = vst [vmem:[%s228 + $0x150] sm:$0xf] %v397
                %v399 = vld [vmem:[%s227 + $0x2a8] sm:$0xf]
                %400 = vst [vmem:[%s228 + $0x154] sm:$0xf] %v399
                %v401 = vld [vmem:[%s227 + $0x2b0] sm:$0xf]
                %402 = vst [vmem:[%s228 + $0x158] sm:$0xf] %v401
                %v403 = vld [vmem:[%s227 + $0x2b8] sm:$0xf]
                %404 = vst [vmem:[%s228 + $0x15c] sm:$0xf] %v403
                %v405 = vld [vmem:[%s227 + $0x2c0] sm:$0xf]
                %406 = vst [vmem:[%s228 + $0x160] sm:$0xf] %v405
                %v407 = vld [vmem:[%s227 + $0x2c8] sm:$0xf]
                %408 = vst [vmem:[%s228 + $0x164] sm:$0xf] %v407
                %v409 = vld [vmem:[%s227 + $0x2d0] sm:$0xf]
                %410 = vst [vmem:[%s228 + $0x168] sm:$0xf] %v409
                %v411 = vld [vmem:[%s227 + $0x2d8] sm:$0xf]
                %412 = vst [vmem:[%s228 + $0x16c] sm:$0xf] %v411
                %v413 = vld [vmem:[%s227 + $0x2e0] sm:$0xf]
                %414 = vst [vmem:[%s228 + $0x170] sm:$0xf] %v413
                %v415 = vld [vmem:[%s227 + $0x2e8] sm:$0xf]
                %416 = vst [vmem:[%s228 + $0x174] sm:$0xf] %v415
                %v417 = vld [vmem:[%s227 + $0x2f0] sm:$0xf]
                %418 = vst [vmem:[%s228 + $0x178] sm:$0xf] %v417
                %v419 = vld [vmem:[%s227 + $0x2f8] sm:$0xf]
                %420 = vst [vmem:[%s228 + $0x17c] sm:$0xf] %v419
                %v421 = vld [vmem:[%s227 + $0x300] sm:$0xf]
                %422 = vst [vmem:[%s228 + $0x180] sm:$0xf] %v421
                %v423 = vld [vmem:[%s227 + $0x308] sm:$0xf]
                %424 = vst [vmem:[%s228 + $0x184] sm:$0xf] %v423
                %v425 = vld [vmem:[%s227 + $0x310] sm:$0xf]
                %426 = vst [vmem:[%s228 + $0x188] sm:$0xf] %v425
                %v427 = vld [vmem:[%s227 + $0x318] sm:$0xf]
                %428 = vst [vmem:[%s228 + $0x18c] sm:$0xf] %v427
                %v429 = vld [vmem:[%s227 + $0x320] sm:$0xf]
                %430 = vst [vmem:[%s228 + $0x190] sm:$0xf] %v429
                %v431 = vld [vmem:[%s227 + $0x328] sm:$0xf]
                %432 = vst [vmem:[%s228 + $0x194] sm:$0xf] %v431
                %v433 = vld [vmem:[%s227 + $0x330] sm:$0xf]
                %434 = vst [vmem:[%s228 + $0x198] sm:$0xf] %v433
                %v435 = vld [vmem:[%s227 + $0x338] sm:$0xf]
                %436 = vst [vmem:[%s228 + $0x19c] sm:$0xf] %v435
                %v437 = vld [vmem:[%s227 + $0x340] sm:$0xf]
                %438 = vst [vmem:[%s228 + $0x1a0] sm:$0xf] %v437
                %v439 = vld [vmem:[%s227 + $0x348] sm:$0xf]
                %440 = vst [vmem:[%s228 + $0x1a4] sm:$0xf] %v439
                %v441 = vld [vmem:[%s227 + $0x350] sm:$0xf]
                %442 = vst [vmem:[%s228 + $0x1a8] sm:$0xf] %v441
                %v443 = vld [vmem:[%s227 + $0x358] sm:$0xf]
                %444 = vst [vmem:[%s228 + $0x1ac] sm:$0xf] %v443
                %v445 = vld [vmem:[%s227 + $0x360] sm:$0xf]
                %446 = vst [vmem:[%s228 + $0x1b0] sm:$0xf] %v445
                %v447 = vld [vmem:[%s227 + $0x368] sm:$0xf]
                %448 = vst [vmem:[%s228 + $0x1b4] sm:$0xf] %v447
                %v449 = vld [vmem:[%s227 + $0x370] sm:$0xf]
                %450 = vst [vmem:[%s228 + $0x1b8] sm:$0xf] %v449
                %v451 = vld [vmem:[%s227 + $0x378] sm:$0xf]
                %452 = vst [vmem:[%s228 + $0x1bc] sm:$0xf] %v451
                %v453 = vld [vmem:[%s227 + $0x380] sm:$0xf]
                %454 = vst [vmem:[%s228 + $0x1c0] sm:$0xf] %v453
                %v455 = vld [vmem:[%s227 + $0x388] sm:$0xf]
                %456 = vst [vmem:[%s228 + $0x1c4] sm:$0xf] %v455
                %v457 = vld [vmem:[%s227 + $0x390] sm:$0xf]
                %458 = vst [vmem:[%s228 + $0x1c8] sm:$0xf] %v457
                %v459 = vld [vmem:[%s227 + $0x398] sm:$0xf]
                %460 = vst [vmem:[%s228 + $0x1cc] sm:$0xf] %v459
                %v461 = vld [vmem:[%s227 + $0x3a0] sm:$0xf]
                %462 = vst [vmem:[%s228 + $0x1d0] sm:$0xf] %v461
                %v463 = vld [vmem:[%s227 + $0x3a8] sm:$0xf]
                %464 = vst [vmem:[%s228 + $0x1d4] sm:$0xf] %v463
                %v465 = vld [vmem:[%s227 + $0x3b0] sm:$0xf]
                %466 = vst [vmem:[%s228 + $0x1d8] sm:$0xf] %v465
                %v467 = vld [vmem:[%s227 + $0x3b8] sm:$0xf]
                %468 = vst [vmem:[%s228 + $0x1dc] sm:$0xf] %v467
                %v469 = vld [vmem:[%s227 + $0x3c0] sm:$0xf]
                %470 = vst [vmem:[%s228 + $0x1e0] sm:$0xf] %v469
                %v471 = vld [vmem:[%s227 + $0x3c8] sm:$0xf]
                %472 = vst [vmem:[%s228 + $0x1e4] sm:$0xf] %v471
                %v473 = vld [vmem:[%s227 + $0x3d0] sm:$0xf]
                %474 = vst [vmem:[%s228 + $0x1e8] sm:$0xf] %v473
                %v475 = vld [vmem:[%s227 + $0x3d8] sm:$0xf]
                %476 = vst [vmem:[%s228 + $0x1ec] sm:$0xf] %v475
                %v477 = vld [vmem:[%s227 + $0x3e0] sm:$0xf]
                %478 = vst [vmem:[%s228 + $0x1f0] sm:$0xf] %v477
                %v479 = vld [vmem:[%s227 + $0x3e8] sm:$0xf]
                %480 = vst [vmem:[%s228 + $0x1f4] sm:$0xf] %v479
                %v481 = vld [vmem:[%s227 + $0x3f0] sm:$0xf]
                %482 = vst [vmem:[%s228 + $0x1f8] sm:$0xf] %v481
                %v483 = vld [vmem:[%s227 + $0x3f8] sm:$0xf]
                %484 = vst [vmem:[%s228 + $0x1fc] sm:$0xf] %v483
                %v485 = vld [vmem:[%s227 + $0x400] sm:$0xf]
                %486 = vst [vmem:[%s228 + $0x200] sm:$0xf] %v485
                %v487 = vld [vmem:[%s227 + $0x408] sm:$0xf]
                %488 = vst [vmem:[%s228 + $0x204] sm:$0xf] %v487
                %v489 = vld [vmem:[%s227 + $0x410] sm:$0xf]
                %490 = vst [vmem:[%s228 + $0x208] sm:$0xf] %v489
                %v491 = vld [vmem:[%s227 + $0x418] sm:$0xf]
                %492 = vst [vmem:[%s228 + $0x20c] sm:$0xf] %v491
                %v493 = vld [vmem:[%s227 + $0x420] sm:$0xf]
                %494 = vst [vmem:[%s228 + $0x210] sm:$0xf] %v493
                %v495 = vld [vmem:[%s227 + $0x428] sm:$0xf]
                %496 = vst [vmem:[%s228 + $0x214] sm:$0xf] %v495
                %v497 = vld [vmem:[%s227 + $0x430] sm:$0xf]
                %498 = vst [vmem:[%s228 + $0x218] sm:$0xf] %v497
                %v499 = vld [vmem:[%s227 + $0x438] sm:$0xf]
                %500 = vst [vmem:[%s228 + $0x21c] sm:$0xf] %v499
                %v501 = vld [vmem:[%s227 + $0x440] sm:$0xf]
                %502 = vst [vmem:[%s228 + $0x220] sm:$0xf] %v501
                %v503 = vld [vmem:[%s227 + $0x448] sm:$0xf]
                %504 = vst [vmem:[%s228 + $0x224] sm:$0xf] %v503
                %v505 = vld [vmem:[%s227 + $0x450] sm:$0xf]
                %506 = vst [vmem:[%s228 + $0x228] sm:$0xf] %v505
                %v507 = vld [vmem:[%s227 + $0x458] sm:$0xf]
                %508 = vst [vmem:[%s228 + $0x22c] sm:$0xf] %v507
                %v509 = vld [vmem:[%s227 + $0x460] sm:$0xf]
                %510 = vst [vmem:[%s228 + $0x230] sm:$0xf] %v509
                %v511 = vld [vmem:[%s227 + $0x468] sm:$0xf]
                %512 = vst [vmem:[%s228 + $0x234] sm:$0xf] %v511
                %v513 = vld [vmem:[%s227 + $0x470] sm:$0xf]
                %514 = vst [vmem:[%s228 + $0x238] sm:$0xf] %v513
                %v515 = vld [vmem:[%s227 + $0x478] sm:$0xf]
                %516 = vst [vmem:[%s228 + $0x23c] sm:$0xf] %v515
                %v517 = vld [vmem:[%s227 + $0x480] sm:$0xf]
                %518 = vst [vmem:[%s228 + $0x240] sm:$0xf] %v517
                %v519 = vld [vmem:[%s227 + $0x488] sm:$0xf]
                %520 = vst [vmem:[%s228 + $0x244] sm:$0xf] %v519
                %v521 = vld [vmem:[%s227 + $0x490] sm:$0xf]
                %522 = vst [vmem:[%s228 + $0x248] sm:$0xf] %v521
                %v523 = vld [vmem:[%s227 + $0x498] sm:$0xf]
                %524 = vst [vmem:[%s228 + $0x24c] sm:$0xf] %v523
                %v525 = vld [vmem:[%s227 + $0x4a0] sm:$0xf]
                %526 = vst [vmem:[%s228 + $0x250] sm:$0xf] %v525
                %v527 = vld [vmem:[%s227 + $0x4a8] sm:$0xf]
                %528 = vst [vmem:[%s228 + $0x254] sm:$0xf] %v527
                %v529 = vld [vmem:[%s227 + $0x4b0] sm:$0xf]
                %530 = vst [vmem:[%s228 + $0x258] sm:$0xf] %v529
                %v531 = vld [vmem:[%s227 + $0x4b8] sm:$0xf]
                %532 = vst [vmem:[%s228 + $0x25c] sm:$0xf] %v531
                %v533 = vld [vmem:[%s227 + $0x4c0] sm:$0xf]
                %534 = vst [vmem:[%s228 + $0x260] sm:$0xf] %v533
                %v535 = vld [vmem:[%s227 + $0x4c8] sm:$0xf]
                %536 = vst [vmem:[%s228 + $0x264] sm:$0xf] %v535
                %v537 = vld [vmem:[%s227 + $0x4d0] sm:$0xf]
                %538 = vst [vmem:[%s228 + $0x268] sm:$0xf] %v537
                %v539 = vld [vmem:[%s227 + $0x4d8] sm:$0xf]
                %540 = vst [vmem:[%s228 + $0x26c] sm:$0xf] %v539
                %v541 = vld [vmem:[%s227 + $0x4e0] sm:$0xf]
                %542 = vst [vmem:[%s228 + $0x270] sm:$0xf] %v541
                %v543 = vld [vmem:[%s227 + $0x4e8] sm:$0xf]
                %544 = vst [vmem:[%s228 + $0x274] sm:$0xf] %v543
                %v545 = vld [vmem:[%s227 + $0x4f0] sm:$0xf]
                %546 = vst [vmem:[%s228 + $0x278] sm:$0xf] %v545
                %v547 = vld [vmem:[%s227 + $0x4f8] sm:$0xf]
                %548 = vst [vmem:[%s228 + $0x27c] sm:$0xf] %v547
                %v549 = vld [vmem:[%s227 + $0x500] sm:$0xf]
                %550 = vst [vmem:[%s228 + $0x280] sm:$0xf] %v549
                %v551 = vld [vmem:[%s227 + $0x508] sm:$0xf]
                %552 = vst [vmem:[%s228 + $0x284] sm:$0xf] %v551
                %v553 = vld [vmem:[%s227 + $0x510] sm:$0xf]
                %554 = vst [vmem:[%s228 + $0x288] sm:$0xf] %v553
                %v555 = vld [vmem:[%s227 + $0x518] sm:$0xf]
                %556 = vst [vmem:[%s228 + $0x28c] sm:$0xf] %v555
                %v557 = vld [vmem:[%s227 + $0x520] sm:$0xf]
                %558 = vst [vmem:[%s228 + $0x290] sm:$0xf] %v557
                %v559 = vld [vmem:[%s227 + $0x528] sm:$0xf]
                %560 = vst [vmem:[%s228 + $0x294] sm:$0xf] %v559
                %v561 = vld [vmem:[%s227 + $0x530] sm:$0xf]
                %562 = vst [vmem:[%s228 + $0x298] sm:$0xf] %v561
                %v563 = vld [vmem:[%s227 + $0x538] sm:$0xf]
                %564 = vst [vmem:[%s228 + $0x29c] sm:$0xf] %v563
                %v565 = vld [vmem:[%s227 + $0x540] sm:$0xf]
                %566 = vst [vmem:[%s228 + $0x2a0] sm:$0xf] %v565
                %v567 = vld [vmem:[%s227 + $0x548] sm:$0xf]
                %568 = vst [vmem:[%s228 + $0x2a4] sm:$0xf] %v567
                %v569 = vld [vmem:[%s227 + $0x550] sm:$0xf]
                %570 = vst [vmem:[%s228 + $0x2a8] sm:$0xf] %v569
                %v571 = vld [vmem:[%s227 + $0x558] sm:$0xf]
                %572 = vst [vmem:[%s228 + $0x2ac] sm:$0xf] %v571
                %v573 = vld [vmem:[%s227 + $0x560] sm:$0xf]
                %574 = vst [vmem:[%s228 + $0x2b0] sm:$0xf] %v573
                %v575 = vld [vmem:[%s227 + $0x568] sm:$0xf]
                %576 = vst [vmem:[%s228 + $0x2b4] sm:$0xf] %v575
                %v577 = vld [vmem:[%s227 + $0x570] sm:$0xf]
                %578 = vst [vmem:[%s228 + $0x2b8] sm:$0xf] %v577
                %v579 = vld [vmem:[%s227 + $0x578] sm:$0xf]
                %580 = vst [vmem:[%s228 + $0x2bc] sm:$0xf] %v579
                %v581 = vld [vmem:[%s227 + $0x580] sm:$0xf]
                %582 = vst [vmem:[%s228 + $0x2c0] sm:$0xf] %v581
                %v583 = vld [vmem:[%s227 + $0x588] sm:$0xf]
                %584 = vst [vmem:[%s228 + $0x2c4] sm:$0xf] %v583
                %v585 = vld [vmem:[%s227 + $0x590] sm:$0xf]
                %586 = vst [vmem:[%s228 + $0x2c8] sm:$0xf] %v585
                %v587 = vld [vmem:[%s227 + $0x598] sm:$0xf]
                %588 = vst [vmem:[%s228 + $0x2cc] sm:$0xf] %v587
                %v589 = vld [vmem:[%s227 + $0x5a0] sm:$0xf]
                %590 = vst [vmem:[%s228 + $0x2d0] sm:$0xf] %v589
                %v591 = vld [vmem:[%s227 + $0x5a8] sm:$0xf]
                %592 = vst [vmem:[%s228 + $0x2d4] sm:$0xf] %v591
                %v593 = vld [vmem:[%s227 + $0x5b0] sm:$0xf]
                %594 = vst [vmem:[%s228 + $0x2d8] sm:$0xf] %v593
                %v595 = vld [vmem:[%s227 + $0x5b8] sm:$0xf]
                %596 = vst [vmem:[%s228 + $0x2dc] sm:$0xf] %v595
                %v597 = vld [vmem:[%s227 + $0x5c0] sm:$0xf]
                %598 = vst [vmem:[%s228 + $0x2e0] sm:$0xf] %v597
                %v599 = vld [vmem:[%s227 + $0x5c8] sm:$0xf]
                %600 = vst [vmem:[%s228 + $0x2e4] sm:$0xf] %v599
                %v601 = vld [vmem:[%s227 + $0x5d0] sm:$0xf]
                %602 = vst [vmem:[%s228 + $0x2e8] sm:$0xf] %v601
                %v603 = vld [vmem:[%s227 + $0x5d8] sm:$0xf]
                %604 = vst [vmem:[%s228 + $0x2ec] sm:$0xf] %v603
                %v605 = vld [vmem:[%s227 + $0x5e0] sm:$0xf]
                %606 = vst [vmem:[%s228 + $0x2f0] sm:$0xf] %v605
                %v607 = vld [vmem:[%s227 + $0x5e8] sm:$0xf]
                %608 = vst [vmem:[%s228 + $0x2f4] sm:$0xf] %v607
                %v609 = vld [vmem:[%s227 + $0x5f0] sm:$0xf]
                %610 = vst [vmem:[%s228 + $0x2f8] sm:$0xf] %v609
                %v611 = vld [vmem:[%s227 + $0x5f8] sm:$0xf]
                %612 = vst [vmem:[%s228 + $0x2fc] sm:$0xf] %v611
                %v613 = vld [vmem:[%s227 + $0x600] sm:$0xf]
                %614 = vst [vmem:[%s228 + $0x300] sm:$0xf] %v613
                %v615 = vld [vmem:[%s227 + $0x608] sm:$0xf]
                %616 = vst [vmem:[%s228 + $0x304] sm:$0xf] %v615
                %v617 = vld [vmem:[%s227 + $0x610] sm:$0xf]
                %618 = vst [vmem:[%s228 + $0x308] sm:$0xf] %v617
                %v619 = vld [vmem:[%s227 + $0x618] sm:$0xf]
                %620 = vst [vmem:[%s228 + $0x30c] sm:$0xf] %v619
                %v621 = vld [vmem:[%s227 + $0x620] sm:$0xf]
                %622 = vst [vmem:[%s228 + $0x310] sm:$0xf] %v621
                %v623 = vld [vmem:[%s227 + $0x628] sm:$0xf]
                %624 = vst [vmem:[%s228 + $0x314] sm:$0xf] %v623
                %v625 = vld [vmem:[%s227 + $0x630] sm:$0xf]
                %626 = vst [vmem:[%s228 + $0x318] sm:$0xf] %v625
                %v627 = vld [vmem:[%s227 + $0x638] sm:$0xf]
                %628 = vst [vmem:[%s228 + $0x31c] sm:$0xf] %v627
                %v629 = vld [vmem:[%s227 + $0x640] sm:$0xf]
                %630 = vst [vmem:[%s228 + $0x320] sm:$0xf] %v629
                %v631 = vld [vmem:[%s227 + $0x648] sm:$0xf]
                %632 = vst [vmem:[%s228 + $0x324] sm:$0xf] %v631
                %v633 = vld [vmem:[%s227 + $0x650] sm:$0xf]
                %634 = vst [vmem:[%s228 + $0x328] sm:$0xf] %v633
                %v635 = vld [vmem:[%s227 + $0x658] sm:$0xf]
                %636 = vst [vmem:[%s228 + $0x32c] sm:$0xf] %v635
                %v637 = vld [vmem:[%s227 + $0x660] sm:$0xf]
                %638 = vst [vmem:[%s228 + $0x330] sm:$0xf] %v637
                %v639 = vld [vmem:[%s227 + $0x668] sm:$0xf]
                %640 = vst [vmem:[%s228 + $0x334] sm:$0xf] %v639
                %v641 = vld [vmem:[%s227 + $0x670] sm:$0xf]
                %642 = vst [vmem:[%s228 + $0x338] sm:$0xf] %v641
                %v643 = vld [vmem:[%s227 + $0x678] sm:$0xf]
                %644 = vst [vmem:[%s228 + $0x33c] sm:$0xf] %v643
                %v645 = vld [vmem:[%s227 + $0x680] sm:$0xf]
                %646 = vst [vmem:[%s228 + $0x340] sm:$0xf] %v645
                %v647 = vld [vmem:[%s227 + $0x688] sm:$0xf]
                %648 = vst [vmem:[%s228 + $0x344] sm:$0xf] %v647
                %v649 = vld [vmem:[%s227 + $0x690] sm:$0xf]
                %650 = vst [vmem:[%s228 + $0x348] sm:$0xf] %v649
                %v651 = vld [vmem:[%s227 + $0x698] sm:$0xf]
                %652 = vst [vmem:[%s228 + $0x34c] sm:$0xf] %v651
                %v653 = vld [vmem:[%s227 + $0x6a0] sm:$0xf]
                %654 = vst [vmem:[%s228 + $0x350] sm:$0xf] %v653
                %v655 = vld [vmem:[%s227 + $0x6a8] sm:$0xf]
                %656 = vst [vmem:[%s228 + $0x354] sm:$0xf] %v655
                %v657 = vld [vmem:[%s227 + $0x6b0] sm:$0xf]
                %658 = vst [vmem:[%s228 + $0x358] sm:$0xf] %v657
                %v659 = vld [vmem:[%s227 + $0x6b8] sm:$0xf]
                %660 = vst [vmem:[%s228 + $0x35c] sm:$0xf] %v659
                %v661 = vld [vmem:[%s227 + $0x6c0] sm:$0xf]
                %662 = vst [vmem:[%s228 + $0x360] sm:$0xf] %v661
                %v663 = vld [vmem:[%s227 + $0x6c8] sm:$0xf]
                %664 = vst [vmem:[%s228 + $0x364] sm:$0xf] %v663
                %v665 = vld [vmem:[%s227 + $0x6d0] sm:$0xf]
                %666 = vst [vmem:[%s228 + $0x368] sm:$0xf] %v665
                %v667 = vld [vmem:[%s227 + $0x6d8] sm:$0xf]
                %668 = vst [vmem:[%s228 + $0x36c] sm:$0xf] %v667
                %v669 = vld [vmem:[%s227 + $0x6e0] sm:$0xf]
                %670 = vst [vmem:[%s228 + $0x370] sm:$0xf] %v669
                %v671 = vld [vmem:[%s227 + $0x6e8] sm:$0xf]
                %672 = vst [vmem:[%s228 + $0x374] sm:$0xf] %v671
                %v673 = vld [vmem:[%s227 + $0x6f0] sm:$0xf]
                %674 = vst [vmem:[%s228 + $0x378] sm:$0xf] %v673
                %v675 = vld [vmem:[%s227 + $0x6f8] sm:$0xf]
                %676 = vst [vmem:[%s228 + $0x37c] sm:$0xf] %v675
                %v677 = vld [vmem:[%s227 + $0x700] sm:$0xf]
                %678 = vst [vmem:[%s228 + $0x380] sm:$0xf] %v677
                %v679 = vld [vmem:[%s227 + $0x708] sm:$0xf]
                %680 = vst [vmem:[%s228 + $0x384] sm:$0xf] %v679
                %v681 = vld [vmem:[%s227 + $0x710] sm:$0xf]
                %682 = vst [vmem:[%s228 + $0x388] sm:$0xf] %v681
                %v683 = vld [vmem:[%s227 + $0x718] sm:$0xf]
                %684 = vst [vmem:[%s228 + $0x38c] sm:$0xf] %v683
                %v685 = vld [vmem:[%s227 + $0x720] sm:$0xf]
                %686 = vst [vmem:[%s228 + $0x390] sm:$0xf] %v685
                %v687 = vld [vmem:[%s227 + $0x728] sm:$0xf]
                %688 = vst [vmem:[%s228 + $0x394] sm:$0xf] %v687
                %v689 = vld [vmem:[%s227 + $0x730] sm:$0xf]
                %690 = vst [vmem:[%s228 + $0x398] sm:$0xf] %v689
                %v691 = vld [vmem:[%s227 + $0x738] sm:$0xf]
                %692 = vst [vmem:[%s228 + $0x39c] sm:$0xf] %v691
                %v693 = vld [vmem:[%s227 + $0x740] sm:$0xf]
                %694 = vst [vmem:[%s228 + $0x3a0] sm:$0xf] %v693
                %v695 = vld [vmem:[%s227 + $0x748] sm:$0xf]
                %696 = vst [vmem:[%s228 + $0x3a4] sm:$0xf] %v695
                %v697 = vld [vmem:[%s227 + $0x750] sm:$0xf]
                %698 = vst [vmem:[%s228 + $0x3a8] sm:$0xf] %v697
                %v699 = vld [vmem:[%s227 + $0x758] sm:$0xf]
                %700 = vst [vmem:[%s228 + $0x3ac] sm:$0xf] %v699
                %v701 = vld [vmem:[%s227 + $0x760] sm:$0xf]
                %702 = vst [vmem:[%s228 + $0x3b0] sm:$0xf] %v701
                %v703 = vld [vmem:[%s227 + $0x768] sm:$0xf]
                %704 = vst [vmem:[%s228 + $0x3b4] sm:$0xf] %v703
                %v705 = vld [vmem:[%s227 + $0x770] sm:$0xf]
                %706 = vst [vmem:[%s228 + $0x3b8] sm:$0xf] %v705
                %v707 = vld [vmem:[%s227 + $0x778] sm:$0xf]
                %708 = vst [vmem:[%s228 + $0x3bc] sm:$0xf] %v707
                %v709 = vld [vmem:[%s227 + $0x780] sm:$0xf]
                %710 = vst [vmem:[%s228 + $0x3c0] sm:$0xf] %v709
                %v711 = vld [vmem:[%s227 + $0x788] sm:$0xf]
                %712 = vst [vmem:[%s228 + $0x3c4] sm:$0xf] %v711
                %v713 = vld [vmem:[%s227 + $0x790] sm:$0xf]
                %714 = vst [vmem:[%s228 + $0x3c8] sm:$0xf] %v713
                %v715 = vld [vmem:[%s227 + $0x798] sm:$0xf]
                %716 = vst [vmem:[%s228 + $0x3cc] sm:$0xf] %v715
                %v717 = vld [vmem:[%s227 + $0x7a0] sm:$0xf]
                %718 = vst [vmem:[%s228 + $0x3d0] sm:$0xf] %v717
                %v719 = vld [vmem:[%s227 + $0x7a8] sm:$0xf]
                %720 = vst [vmem:[%s228 + $0x3d4] sm:$0xf] %v719
                %v721 = vld [vmem:[%s227 + $0x7b0] sm:$0xf]
                %722 = vst [vmem:[%s228 + $0x3d8] sm:$0xf] %v721
                %v723 = vld [vmem:[%s227 + $0x7b8] sm:$0xf]
                %724 = vst [vmem:[%s228 + $0x3dc] sm:$0xf] %v723
                %v725 = vld [vmem:[%s227 + $0x7c0] sm:$0xf]
                %726 = vst [vmem:[%s228 + $0x3e0] sm:$0xf] %v725
                %v727 = vld [vmem:[%s227 + $0x7c8] sm:$0xf]
                %728 = vst [vmem:[%s228 + $0x3e4] sm:$0xf] %v727
                %v729 = vld [vmem:[%s227 + $0x7d0] sm:$0xf]
                %730 = vst [vmem:[%s228 + $0x3e8] sm:$0xf] %v729
                %v731 = vld [vmem:[%s227 + $0x7d8] sm:$0xf]
                %732 = vst [vmem:[%s228 + $0x3ec] sm:$0xf] %v731
                %v733 = vld [vmem:[%s227 + $0x7e0] sm:$0xf]
                %734 = vst [vmem:[%s228 + $0x3f0] sm:$0xf] %v733
                %v735 = vld [vmem:[%s227 + $0x7e8] sm:$0xf]
                %736 = vst [vmem:[%s228 + $0x3f4] sm:$0xf] %v735
                %v737 = vld [vmem:[%s227 + $0x7f0] sm:$0xf]
                %738 = vst [vmem:[%s228 + $0x3f8] sm:$0xf] %v737
                %v739 = vld [vmem:[%s227 + $0x7f8] sm:$0xf]
                %740 = vst [vmem:[%s228 + $0x3fc] sm:$0xf] %v739
              $region45: #{generator_forward.6} parent=39 // loop_footer
                %s226 = sadd.s32 1, %s222
              $region46: #{generator_forward.6} parent=39 // loop_footer_branch
                %221 = sbr.rel target = $region42
              $region47: #{generator_forward.6} parent=39 // loop_exit
                _
            $region40: #{generator_forward.6} parent=31 // pred_fallthru
              _
          $region32: #{generator_forward.6} parent=27 // pred_fallthru
            _
          %1272 = vnop
        $region28: #{generator_forward.6} parent=19 // pred_fallthru
          _
      $region20: #{generator_forward.6} parent=5 // pred_fallthru
        _
      %p1273 = scmp.le.s32.totalorder 1, %s11
      %p1274 = scmp.lt.s32.totalorder %s11, 9
      %p1275 = pnand %p1273, %p1274
      %p1276 = pneg %p1275
      // Predicated region
      $region66: #{generator_forward.6} parent=5 // pred_check
        _
      $region67: #{generator_forward.6} parent=5 // pred_check_branch
        %1278 = sbr.rel (%p1275) target = $region69
      $region68: #{generator_forward.6} parent=5 // pred_region
        %s1279 = ssub.s32 %s11, 1
        %s1280 = sand.u32 %s94, 1
        %s1281 = sand.u32 %s94, 1
        %s1282 = smul.addr %s1281, 1024
        %s1283 = scalar_lea.vmem [#allocation2], %s1282
        // Predicated region
        $region70: #{generator_forward.6} parent=68 // pred_check
          %p1284 = pneg %p107
        $region71: #{generator_forward.6} parent=68 // pred_check_branch
          %1286 = sbr.rel (%p1284) target = $region73
        $region72: #{generator_forward.6} parent=68 // pred_region
          _
        $region73: #{generator_forward.6} parent=68 // pred_fallthru
          _
        %p1287 = pneg %p51
        %p1288 = pneg %p48
        %s1289 = smul.u32 4, %s22
        %p1290 = scmp.lt.s32.totalorder %s21, 3
        %s1291 = scalar_select %p1290, %s21, 3
        %p1292 = scmp.lt.s32.totalorder %s1289, 3
        %s1293 = scalar_select %p1292, %s1289, 3
        %s1294 = smul.addr %s1293, 16
        %s1295 = smul.addr %s1291, 64
        %s1296 = sadd.s32 %s1294, %s1295
        %s1297 = smul.addr %s1296, 4
        %s1298 = scalar_lea.vmem %s1, %s1297
        %p1299 = pneg %p79
        %p1300 = pneg %p76
        %s1301 = sand.u32 %s94, 1
        %s1302 = sand.u32 %s94, 1
        %s1303 = smul.addr %s1302, 1024
        %s1304 = scalar_lea.vmem [#allocation2], %s1303
        %p1305 = pneg %p107
        %p1306 = pneg %p104
        %p1307 = pneg %p137
        %p1308 = pneg %p134
        %s1309 = sand.u32 %s124, 1
        %s1310 = sand.u32 %s124, 1
        %s1311 = smul.addr %s1310, 16
        %s1312 = scalar_lea.vmem [#allocation3], %s1311
        %p1313 = pneg %p167
        %p1314 = pneg %p164
        %p1315 = scmp.lt.s32.totalorder %s21, 3
        %s1316 = scalar_select %p1315, %s21, 3
        %p1317 = scmp.lt.s32.totalorder %s22, 0
        %s1318 = scalar_select %p1317, %s22, 0
        %p1319 = scmp.lt.s32.totalorder %s23, 1
        %s1320 = scalar_select %p1319, %s23, 1
        %s1321 = smul.addr %s1318, 2
        %s1322 = sadd.s32 %s1320, %s1321
        %s1323 = smul.addr %s1316, 2
        %s1324 = sadd.s32 %s1322, %s1323
        %s1325 = smul.addr %s1324, 2
        %s1326 = scalar_lea.vmem %s4, %s1325
        %s1327 = smul.u32 4, %s22
        %p1328 = scmp.lt.s32.totalorder %s21, 3
        %s1329 = scalar_select %p1328, %s21, 3
        %p1330 = scmp.lt.s32.totalorder %s1327, 3
        %s1331 = scalar_select %p1330, %s1327, 3
        %s1332 = smul.addr %s1331, 16
        %s1333 = smul.addr %s1329, 64
        %s1334 = sadd.s32 %s1332, %s1333
        %s1335 = smul.addr %s1334, 4
        %s1336 = scalar_lea.vmem %s1, %s1335
        %s1337 = smul.u32 4, %s22
        %s1338 = smul.u32 4, %s22
        %p1339 = scmp.lt.s32.totalorder %s21, 3
        %s1340 = scalar_select %p1339, %s21, 3
        %p1341 = scmp.lt.s32.totalorder %s22, 0
        %s1342 = scalar_select %p1341, %s22, 0
        %p1343 = scmp.lt.s32.totalorder %s23, 1
        %s1344 = scalar_select %p1343, %s23, 1
        %s1345 = smul.addr %s1342, 2
        %s1346 = sadd.s32 %s1344, %s1345
        %s1347 = smul.addr %s1340, 2
        %s1348 = sadd.s32 %s1346, %s1347
        %s1349 = smul.addr %s1348, 2
        %s1350 = scalar_lea.vmem %s4, %s1349
        %v1352 = vld [vmem:[%s1336] sm:$0xff]
        %v1353 = vld [vmem:[%s1336 + $0x8] sm:$0xff]
        %v1354 = vld [vmem:[%s1336 + $0x10] sm:$0xff]
        %v1355 = vld [vmem:[%s1336 + $0x18] sm:$0xff]
        %v1356 = vld [vmem:[%s1336 + $0x20] sm:$0xff]
        %v1357 = vld [vmem:[%s1336 + $0x28] sm:$0xff]
        %v1358 = vld [vmem:[%s1336 + $0x30] sm:$0xff]
        %v1359 = vld [vmem:[%s1336 + $0x38] sm:$0xff]
        %v1360 = vld [vmem:[%s1336 + $0x40] sm:$0xff]
        %v1361 = vld [vmem:[%s1336 + $0x48] sm:$0xff]
        %v1362 = vld [vmem:[%s1336 + $0x50] sm:$0xff]
        %v1363 = vld [vmem:[%s1336 + $0x58] sm:$0xff]
        %v1364 = vld [vmem:[%s1336 + $0x60] sm:$0xff]
        %v1365 = vld [vmem:[%s1336 + $0x68] sm:$0xff]
        %v1366 = vld [vmem:[%s1336 + $0x70] sm:$0xff]
        %v1367 = vld [vmem:[%s1336 + $0x78] sm:$0xff]
        %v1368 = vld [vmem:[%s1336 + $0x80] sm:$0xff]
        %v1369 = vld [vmem:[%s1336 + $0x88] sm:$0xff]
        %v1370 = vld [vmem:[%s1336 + $0x90] sm:$0xff]
        %v1371 = vld [vmem:[%s1336 + $0x98] sm:$0xff]
        %v1372 = vld [vmem:[%s1336 + $0xa0] sm:$0xff]
        %v1373 = vld [vmem:[%s1336 + $0xa8] sm:$0xff]
        %v1374 = vld [vmem:[%s1336 + $0xb0] sm:$0xff]
        %v1375 = vld [vmem:[%s1336 + $0xb8] sm:$0xff]
        %v1376 = vld [vmem:[%s1336 + $0xc0] sm:$0xff]
        %v1377 = vld [vmem:[%s1336 + $0xc8] sm:$0xff]
        %v1378 = vld [vmem:[%s1336 + $0xd0] sm:$0xff]
        %v1379 = vld [vmem:[%s1336 + $0xd8] sm:$0xff]
        %v1380 = vld [vmem:[%s1336 + $0xe0] sm:$0xff]
        %v1381 = vld [vmem:[%s1336 + $0xe8] sm:$0xff]
        %v1382 = vld [vmem:[%s1336 + $0xf0] sm:$0xff]
        %v1383 = vld [vmem:[%s1336 + $0xf8] sm:$0xff]
        %v1384 = vunpack.c.l.bf16 %v1352
        %v1385 = vunpack.c.h.bf16 %v1352
        %v1386 = vunpack.c.l.bf16 %v1353
        %v1387 = vunpack.c.h.bf16 %v1353
        %v1388 = vunpack.c.l.bf16 %v1354
        %v1389 = vunpack.c.h.bf16 %v1354
        %v1390 = vunpack.c.l.bf16 %v1355
        %v1391 = vunpack.c.h.bf16 %v1355
        %v1392 = vunpack.c.l.bf16 %v1356
        %v1393 = vunpack.c.h.bf16 %v1356
        %v1394 = vunpack.c.l.bf16 %v1357
        %v1395 = vunpack.c.h.bf16 %v1357
        %v1396 = vunpack.c.l.bf16 %v1358
        %v1397 = vunpack.c.h.bf16 %v1358
        %v1398 = vunpack.c.l.bf16 %v1359
        %v1399 = vunpack.c.h.bf16 %v1359
        %v1400 = vunpack.c.l.bf16 %v1360
        %v1401 = vunpack.c.h.bf16 %v1360
        %v1402 = vunpack.c.l.bf16 %v1361
        %v1403 = vunpack.c.h.bf16 %v1361
        %v1404 = vunpack.c.l.bf16 %v1362
        %v1405 = vunpack.c.h.bf16 %v1362
        %v1406 = vunpack.c.l.bf16 %v1363
        %v1407 = vunpack.c.h.bf16 %v1363
        %v1408 = vunpack.c.l.bf16 %v1364
        %v1409 = vunpack.c.h.bf16 %v1364
        %v1410 = vunpack.c.l.bf16 %v1365
        %v1411 = vunpack.c.h.bf16 %v1365
        %v1412 = vunpack.c.l.bf16 %v1366
        %v1413 = vunpack.c.h.bf16 %v1366
        %v1414 = vunpack.c.l.bf16 %v1367
        %v1415 = vunpack.c.h.bf16 %v1367
        %v1416 = vunpack.c.l.bf16 %v1368
        %v1417 = vunpack.c.h.bf16 %v1368
        %v1418 = vunpack.c.l.bf16 %v1369
        %v1419 = vunpack.c.h.bf16 %v1369
        %v1420 = vunpack.c.l.bf16 %v1370
        %v1421 = vunpack.c.h.bf16 %v1370
        %v1422 = vunpack.c.l.bf16 %v1371
        %v1423 = vunpack.c.h.bf16 %v1371
        %v1424 = vunpack.c.l.bf16 %v1372
        %v1425 = vunpack.c.h.bf16 %v1372
        %v1426 = vunpack.c.l.bf16 %v1373
        %v1427 = vunpack.c.h.bf16 %v1373
        %v1428 = vunpack.c.l.bf16 %v1374
        %v1429 = vunpack.c.h.bf16 %v1374
        %v1430 = vunpack.c.l.bf16 %v1375
        %v1431 = vunpack.c.h.bf16 %v1375
        %v1432 = vunpack.c.l.bf16 %v1376
        %v1433 = vunpack.c.h.bf16 %v1376
        %v1434 = vunpack.c.l.bf16 %v1377
        %v1435 = vunpack.c.h.bf16 %v1377
        %v1436 = vunpack.c.l.bf16 %v1378
        %v1437 = vunpack.c.h.bf16 %v1378
        %v1438 = vunpack.c.l.bf16 %v1379
        %v1439 = vunpack.c.h.bf16 %v1379
        %v1440 = vunpack.c.l.bf16 %v1380
        %v1441 = vunpack.c.h.bf16 %v1380
        %v1442 = vunpack.c.l.bf16 %v1381
        %v1443 = vunpack.c.h.bf16 %v1381
        %v1444 = vunpack.c.l.bf16 %v1382
        %v1445 = vunpack.c.h.bf16 %v1382
        %v1446 = vunpack.c.l.bf16 %v1383
        %v1447 = vunpack.c.h.bf16 %v1383
        %v1448 = vld [vmem:[%s0] sm:$0xff]
        %v1449 = vld [vmem:[%s0 + $0x8] sm:$0xff]
        %v1452 = vlaneseq
        %v1453 = vshrl.u32 %v1452, 7
        %v1454 = vsub.s32 0, %v1453
        %v1455 = vrot.slane %v1448, %v1454
        %v1456 = vlaneseq
        %v1457 = vshrl.u32 %v1456, 7
        %v1458 = vsub.s32 1, %v1457
        %v1459 = vrot.slane %v1448, %v1458
        %v1460 = vlaneseq
        %v1461 = vshrl.u32 %v1460, 7
        %v1462 = vsub.s32 2, %v1461
        %v1463 = vrot.slane %v1448, %v1462
        %v1464 = vlaneseq
        %v1465 = vshrl.u32 %v1464, 7
        %v1466 = vsub.s32 3, %v1465
        %v1467 = vrot.slane %v1448, %v1466
        %v1468 = vlaneseq
        %v1469 = vshrl.u32 %v1468, 7
        %v1470 = vsub.s32 4, %v1469
        %v1471 = vrot.slane %v1448, %v1470
        %v1472 = vlaneseq
        %v1473 = vshrl.u32 %v1472, 7
        %v1474 = vsub.s32 5, %v1473
        %v1475 = vrot.slane %v1448, %v1474
        %v1476 = vlaneseq
        %v1477 = vshrl.u32 %v1476, 7
        %v1478 = vsub.s32 6, %v1477
        %v1479 = vrot.slane %v1448, %v1478
        %v1480 = vlaneseq
        %v1481 = vshrl.u32 %v1480, 7
        %v1482 = vsub.s32 7, %v1481
        %v1483 = vrot.slane %v1448, %v1482
        %v1484 = vlaneseq
        %v1485 = vshrl.u32 %v1484, 7
        %v1486 = vsub.s32 0, %v1485
        %v1487 = vrot.slane %v1449, %v1486
        %v1488 = vlaneseq
        %v1489 = vshrl.u32 %v1488, 7
        %v1490 = vsub.s32 1, %v1489
        %v1491 = vrot.slane %v1449, %v1490
        %v1492 = vlaneseq
        %v1493 = vshrl.u32 %v1492, 7
        %v1494 = vsub.s32 2, %v1493
        %v1495 = vrot.slane %v1449, %v1494
        %v1496 = vlaneseq
        %v1497 = vshrl.u32 %v1496, 7
        %v1498 = vsub.s32 3, %v1497
        %v1499 = vrot.slane %v1449, %v1498
        %v1500 = vlaneseq
        %v1501 = vshrl.u32 %v1500, 7
        %v1502 = vsub.s32 4, %v1501
        %v1503 = vrot.slane %v1449, %v1502
        %v1504 = vlaneseq
        %v1505 = vshrl.u32 %v1504, 7
        %v1506 = vsub.s32 5, %v1505
        %v1507 = vrot.slane %v1449, %v1506
        %v1508 = vlaneseq
        %v1509 = vshrl.u32 %v1508, 7
        %v1510 = vsub.s32 6, %v1509
        %v1511 = vrot.slane %v1449, %v1510
        %v1512 = vlaneseq
        %v1513 = vshrl.u32 %v1512, 7
        %v1514 = vsub.s32 7, %v1513
        %v1515 = vrot.slane %v1449, %v1514
        %v1532 = vmul.f32 %v1384, %v1455
        %v1533 = vmul.f32 %v1385, %v1459
        %v1534 = vmul.f32 %v1386, %v1463
        %v1535 = vmul.f32 %v1387, %v1467
        %v1536 = vmul.f32 %v1388, %v1471
        %v1537 = vmul.f32 %v1389, %v1475
        %v1538 = vmul.f32 %v1390, %v1479
        %v1539 = vmul.f32 %v1391, %v1483
        %v1540 = vmul.f32 %v1392, %v1487
        %v1541 = vmul.f32 %v1393, %v1491
        %v1542 = vmul.f32 %v1394, %v1495
        %v1543 = vmul.f32 %v1395, %v1499
        %v1544 = vmul.f32 %v1396, %v1503
        %v1545 = vmul.f32 %v1397, %v1507
        %v1546 = vmul.f32 %v1398, %v1511
        %v1547 = vmul.f32 %v1399, %v1515
        %v1548 = vmul.f32 %v1400, %v1455
        %v1549 = vmul.f32 %v1401, %v1459
        %v1550 = vmul.f32 %v1402, %v1463
        %v1551 = vmul.f32 %v1403, %v1467
        %v1552 = vmul.f32 %v1404, %v1471
        %v1553 = vmul.f32 %v1405, %v1475
        %v1554 = vmul.f32 %v1406, %v1479
        %v1555 = vmul.f32 %v1407, %v1483
        %v1556 = vmul.f32 %v1408, %v1487
        %v1557 = vmul.f32 %v1409, %v1491
        %v1558 = vmul.f32 %v1410, %v1495
        %v1559 = vmul.f32 %v1411, %v1499
        %v1560 = vmul.f32 %v1412, %v1503
        %v1561 = vmul.f32 %v1413, %v1507
        %v1562 = vmul.f32 %v1414, %v1511
        %v1563 = vmul.f32 %v1415, %v1515
        %v1564 = vmul.f32 %v1416, %v1455
        %v1565 = vmul.f32 %v1417, %v1459
        %v1566 = vmul.f32 %v1418, %v1463
        %v1567 = vmul.f32 %v1419, %v1467
        %v1568 = vmul.f32 %v1420, %v1471
        %v1569 = vmul.f32 %v1421, %v1475
        %v1570 = vmul.f32 %v1422, %v1479
        %v1571 = vmul.f32 %v1423, %v1483
        %v1572 = vmul.f32 %v1424, %v1487
        %v1573 = vmul.f32 %v1425, %v1491
        %v1574 = vmul.f32 %v1426, %v1495
        %v1575 = vmul.f32 %v1427, %v1499
        %v1576 = vmul.f32 %v1428, %v1503
        %v1577 = vmul.f32 %v1429, %v1507
        %v1578 = vmul.f32 %v1430, %v1511
        %v1579 = vmul.f32 %v1431, %v1515
        %v1580 = vmul.f32 %v1432, %v1455
        %v1581 = vmul.f32 %v1433, %v1459
        %v1582 = vmul.f32 %v1434, %v1463
        %v1583 = vmul.f32 %v1435, %v1467
        %v1584 = vmul.f32 %v1436, %v1471
        %v1585 = vmul.f32 %v1437, %v1475
        %v1586 = vmul.f32 %v1438, %v1479
        %v1587 = vmul.f32 %v1439, %v1483
        %v1588 = vmul.f32 %v1440, %v1487
        %v1589 = vmul.f32 %v1441, %v1491
        %v1590 = vmul.f32 %v1442, %v1495
        %v1591 = vmul.f32 %v1443, %v1499
        %v1592 = vmul.f32 %v1444, %v1503
        %v1593 = vmul.f32 %v1445, %v1507
        %v1594 = vmul.f32 %v1446, %v1511
        %v1595 = vmul.f32 %v1447, %v1515
        %v1596 = vmax.f32 %v1532, 0.0
        %v1597 = vmax.f32 %v1533, 0.0
        %v1598 = vmax.f32 %v1534, 0.0
        %v1599 = vmax.f32 %v1535, 0.0
        %v1600 = vmax.f32 %v1536, 0.0
        %v1601 = vmax.f32 %v1537, 0.0
        %v1602 = vmax.f32 %v1538, 0.0
        %v1603 = vmax.f32 %v1539, 0.0
        %v1604 = vmax.f32 %v1540, 0.0
        %v1605 = vmax.f32 %v1541, 0.0
        %v1606 = vmax.f32 %v1542, 0.0
        %v1607 = vmax.f32 %v1543, 0.0
        %v1608 = vmax.f32 %v1544, 0.0
        %v1609 = vmax.f32 %v1545, 0.0
        %v1610 = vmax.f32 %v1546, 0.0
        %v1611 = vmax.f32 %v1547, 0.0
        %v1612 = vmax.f32 %v1548, 0.0
        %v1613 = vmax.f32 %v1549, 0.0
        %v1614 = vmax.f32 %v1550, 0.0
        %v1615 = vmax.f32 %v1551, 0.0
        %v1616 = vmax.f32 %v1552, 0.0
        %v1617 = vmax.f32 %v1553, 0.0
        %v1618 = vmax.f32 %v1554, 0.0
        %v1619 = vmax.f32 %v1555, 0.0
        %v1620 = vmax.f32 %v1556, 0.0
        %v1621 = vmax.f32 %v1557, 0.0
        %v1622 = vmax.f32 %v1558, 0.0
        %v1623 = vmax.f32 %v1559, 0.0
        %v1624 = vmax.f32 %v1560, 0.0
        %v1625 = vmax.f32 %v1561, 0.0
        %v1626 = vmax.f32 %v1562, 0.0
        %v1627 = vmax.f32 %v1563, 0.0
        %v1628 = vmax.f32 %v1564, 0.0
        %v1629 = vmax.f32 %v1565, 0.0
        %v1630 = vmax.f32 %v1566, 0.0
        %v1631 = vmax.f32 %v1567, 0.0
        %v1632 = vmax.f32 %v1568, 0.0
        %v1633 = vmax.f32 %v1569, 0.0
        %v1634 = vmax.f32 %v1570, 0.0
        %v1635 = vmax.f32 %v1571, 0.0
        %v1636 = vmax.f32 %v1572, 0.0
        %v1637 = vmax.f32 %v1573, 0.0
        %v1638 = vmax.f32 %v1574, 0.0
        %v1639 = vmax.f32 %v1575, 0.0
        %v1640 = vmax.f32 %v1576, 0.0
        %v1641 = vmax.f32 %v1577, 0.0
        %v1642 = vmax.f32 %v1578, 0.0
        %v1643 = vmax.f32 %v1579, 0.0
        %v1644 = vmax.f32 %v1580, 0.0
        %v1645 = vmax.f32 %v1581, 0.0
        %v1646 = vmax.f32 %v1582, 0.0
        %v1647 = vmax.f32 %v1583, 0.0
        %v1648 = vmax.f32 %v1584, 0.0
        %v1649 = vmax.f32 %v1585, 0.0
        %v1650 = vmax.f32 %v1586, 0.0
        %v1651 = vmax.f32 %v1587, 0.0
        %v1652 = vmax.f32 %v1588, 0.0
        %v1653 = vmax.f32 %v1589, 0.0
        %v1654 = vmax.f32 %v1590, 0.0
        %v1655 = vmax.f32 %v1591, 0.0
        %v1656 = vmax.f32 %v1592, 0.0
        %v1657 = vmax.f32 %v1593, 0.0
        %v1658 = vmax.f32 %v1594, 0.0
        %v1659 = vmax.f32 %v1595, 0.0
        %v1660 = vpack.c.bf16 %v1612, %v1596
        %v1661 = vpack.c.bf16 %v1613, %v1597
        %v1662 = vpack.c.bf16 %v1614, %v1598
        %v1663 = vpack.c.bf16 %v1615, %v1599
        %v1664 = vpack.c.bf16 %v1616, %v1600
        %v1665 = vpack.c.bf16 %v1617, %v1601
        %v1666 = vpack.c.bf16 %v1618, %v1602
        %v1667 = vpack.c.bf16 %v1619, %v1603
        %v1668 = vpack.c.bf16 %v1620, %v1604
        %v1669 = vpack.c.bf16 %v1621, %v1605
        %v1670 = vpack.c.bf16 %v1622, %v1606
        %v1671 = vpack.c.bf16 %v1623, %v1607
        %v1672 = vpack.c.bf16 %v1624, %v1608
        %v1673 = vpack.c.bf16 %v1625, %v1609
        %v1674 = vpack.c.bf16 %v1626, %v1610
        %v1675 = vpack.c.bf16 %v1627, %v1611
        %v1676 = vpack.c.bf16 %v1644, %v1628
        %v1677 = vpack.c.bf16 %v1645, %v1629
        %v1678 = vpack.c.bf16 %v1646, %v1630
        %v1679 = vpack.c.bf16 %v1647, %v1631
        %v1680 = vpack.c.bf16 %v1648, %v1632
        %v1681 = vpack.c.bf16 %v1649, %v1633
        %v1682 = vpack.c.bf16 %v1650, %v1634
        %v1683 = vpack.c.bf16 %v1651, %v1635
        %v1684 = vpack.c.bf16 %v1652, %v1636
        %v1685 = vpack.c.bf16 %v1653, %v1637
        %v1686 = vpack.c.bf16 %v1654, %v1638
        %v1687 = vpack.c.bf16 %v1655, %v1639
        %v1688 = vpack.c.bf16 %v1656, %v1640
        %v1689 = vpack.c.bf16 %v1657, %v1641
        %v1690 = vpack.c.bf16 %v1658, %v1642
        %v1691 = vpack.c.bf16 %v1659, %v1643
        %v1692 = vld [vmem:[%s1283] sm:$0xf]
        %v1693 = vld [vmem:[%s1283 + $0x4] sm:$0xf]
        %v1694 = vld [vmem:[%s1283 + $0x8] sm:$0xf]
        %v1695 = vld [vmem:[%s1283 + $0xc] sm:$0xf]
        %v1696 = vld [vmem:[%s1283 + $0x10] sm:$0xf]
        %v1697 = vld [vmem:[%s1283 + $0x14] sm:$0xf]
        %v1698 = vld [vmem:[%s1283 + $0x18] sm:$0xf]
        %v1699 = vld [vmem:[%s1283 + $0x1c] sm:$0xf]
        %v1700 = vld [vmem:[%s1283 + $0x20] sm:$0xf]
        %v1701 = vld [vmem:[%s1283 + $0x24] sm:$0xf]
        %v1702 = vld [vmem:[%s1283 + $0x28] sm:$0xf]
        %v1703 = vld [vmem:[%s1283 + $0x2c] sm:$0xf]
        %v1704 = vld [vmem:[%s1283 + $0x30] sm:$0xf]
        %v1705 = vld [vmem:[%s1283 + $0x34] sm:$0xf]
        %v1706 = vld [vmem:[%s1283 + $0x38] sm:$0xf]
        %v1707 = vld [vmem:[%s1283 + $0x3c] sm:$0xf]
        %v1708 = vld [vmem:[%s1283 + $0x40] sm:$0xf]
        %v1709 = vld [vmem:[%s1283 + $0x44] sm:$0xf]
        %v1710 = vld [vmem:[%s1283 + $0x48] sm:$0xf]
        %v1711 = vld [vmem:[%s1283 + $0x4c] sm:$0xf]
        %v1712 = vld [vmem:[%s1283 + $0x50] sm:$0xf]
        %v1713 = vld [vmem:[%s1283 + $0x54] sm:$0xf]
        %v1714 = vld [vmem:[%s1283 + $0x58] sm:$0xf]
        %v1715 = vld [vmem:[%s1283 + $0x5c] sm:$0xf]
        %v1716 = vld [vmem:[%s1283 + $0x60] sm:$0xf]
        %v1717 = vld [vmem:[%s1283 + $0x64] sm:$0xf]
        %v1718 = vld [vmem:[%s1283 + $0x68] sm:$0xf]
        %v1719 = vld [vmem:[%s1283 + $0x6c] sm:$0xf]
        %v1720 = vld [vmem:[%s1283 + $0x70] sm:$0xf]
        %v1721 = vld [vmem:[%s1283 + $0x74] sm:$0xf]
        %v1722 = vld [vmem:[%s1283 + $0x78] sm:$0xf]
        %v1723 = vld [vmem:[%s1283 + $0x7c] sm:$0xf]
        %v1724 = vld [vmem:[%s1283 + $0x80] sm:$0xf]
        %v1725 = vld [vmem:[%s1283 + $0x84] sm:$0xf]
        %v1726 = vld [vmem:[%s1283 + $0x88] sm:$0xf]
        %v1727 = vld [vmem:[%s1283 + $0x8c] sm:$0xf]
        %v1728 = vld [vmem:[%s1283 + $0x90] sm:$0xf]
        %v1729 = vld [vmem:[%s1283 + $0x94] sm:$0xf]
        %v1730 = vld [vmem:[%s1283 + $0x98] sm:$0xf]
        %v1731 = vld [vmem:[%s1283 + $0x9c] sm:$0xf]
        %v1732 = vld [vmem:[%s1283 + $0xa0] sm:$0xf]
        %v1733 = vld [vmem:[%s1283 + $0xa4] sm:$0xf]
        %v1734 = vld [vmem:[%s1283 + $0xa8] sm:$0xf]
        %v1735 = vld [vmem:[%s1283 + $0xac] sm:$0xf]
        %v1736 = vld [vmem:[%s1283 + $0xb0] sm:$0xf]
        %v1737 = vld [vmem:[%s1283 + $0xb4] sm:$0xf]
        %v1738 = vld [vmem:[%s1283 + $0xb8] sm:$0xf]
        %v1739 = vld [vmem:[%s1283 + $0xbc] sm:$0xf]
        %v1740 = vld [vmem:[%s1283 + $0xc0] sm:$0xf]
        %v1741 = vld [vmem:[%s1283 + $0xc4] sm:$0xf]
        %v1742 = vld [vmem:[%s1283 + $0xc8] sm:$0xf]
        %v1743 = vld [vmem:[%s1283 + $0xcc] sm:$0xf]
        %v1744 = vld [vmem:[%s1283 + $0xd0] sm:$0xf]
        %v1745 = vld [vmem:[%s1283 + $0xd4] sm:$0xf]
        %v1746 = vld [vmem:[%s1283 + $0xd8] sm:$0xf]
        %v1747 = vld [vmem:[%s1283 + $0xdc] sm:$0xf]
        %v1748 = vld [vmem:[%s1283 + $0xe0] sm:$0xf]
        %v1749 = vld [vmem:[%s1283 + $0xe4] sm:$0xf]
        %v1750 = vld [vmem:[%s1283 + $0xe8] sm:$0xf]
        %v1751 = vld [vmem:[%s1283 + $0xec] sm:$0xf]
        %v1752 = vld [vmem:[%s1283 + $0xf0] sm:$0xf]
        %v1753 = vld [vmem:[%s1283 + $0xf4] sm:$0xf]
        %v1754 = vld [vmem:[%s1283 + $0xf8] sm:$0xf]
        %v1755 = vld [vmem:[%s1283 + $0xfc] sm:$0xf]
        %v1756 = vld [vmem:[%s1283 + $0x100] sm:$0xf]
        %v1757 = vld [vmem:[%s1283 + $0x104] sm:$0xf]
        %v1758 = vld [vmem:[%s1283 + $0x108] sm:$0xf]
        %v1759 = vld [vmem:[%s1283 + $0x10c] sm:$0xf]
        %v1760 = vld [vmem:[%s1283 + $0x110] sm:$0xf]
        %v1761 = vld [vmem:[%s1283 + $0x114] sm:$0xf]
        %v1762 = vld [vmem:[%s1283 + $0x118] sm:$0xf]
        %v1763 = vld [vmem:[%s1283 + $0x11c] sm:$0xf]
        %v1764 = vld [vmem:[%s1283 + $0x120] sm:$0xf]
        %v1765 = vld [vmem:[%s1283 + $0x124] sm:$0xf]
        %v1766 = vld [vmem:[%s1283 + $0x128] sm:$0xf]
        %v1767 = vld [vmem:[%s1283 + $0x12c] sm:$0xf]
        %v1768 = vld [vmem:[%s1283 + $0x130] sm:$0xf]
        %v1769 = vld [vmem:[%s1283 + $0x134] sm:$0xf]
        %v1770 = vld [vmem:[%s1283 + $0x138] sm:$0xf]
        %v1771 = vld [vmem:[%s1283 + $0x13c] sm:$0xf]
        %v1772 = vld [vmem:[%s1283 + $0x140] sm:$0xf]
        %v1773 = vld [vmem:[%s1283 + $0x144] sm:$0xf]
        %v1774 = vld [vmem:[%s1283 + $0x148] sm:$0xf]
        %v1775 = vld [vmem:[%s1283 + $0x14c] sm:$0xf]
        %v1776 = vld [vmem:[%s1283 + $0x150] sm:$0xf]
        %v1777 = vld [vmem:[%s1283 + $0x154] sm:$0xf]
        %v1778 = vld [vmem:[%s1283 + $0x158] sm:$0xf]
        %v1779 = vld [vmem:[%s1283 + $0x15c] sm:$0xf]
        %v1780 = vld [vmem:[%s1283 + $0x160] sm:$0xf]
        %v1781 = vld [vmem:[%s1283 + $0x164] sm:$0xf]
        %v1782 = vld [vmem:[%s1283 + $0x168] sm:$0xf]
        %v1783 = vld [vmem:[%s1283 + $0x16c] sm:$0xf]
        %v1784 = vld [vmem:[%s1283 + $0x170] sm:$0xf]
        %v1785 = vld [vmem:[%s1283 + $0x174] sm:$0xf]
        %v1786 = vld [vmem:[%s1283 + $0x178] sm:$0xf]
        %v1787 = vld [vmem:[%s1283 + $0x17c] sm:$0xf]
        %v1788 = vld [vmem:[%s1283 + $0x180] sm:$0xf]
        %v1789 = vld [vmem:[%s1283 + $0x184] sm:$0xf]
        %v1790 = vld [vmem:[%s1283 + $0x188] sm:$0xf]
        %v1791 = vld [vmem:[%s1283 + $0x18c] sm:$0xf]
        %v1792 = vld [vmem:[%s1283 + $0x190] sm:$0xf]
        %v1793 = vld [vmem:[%s1283 + $0x194] sm:$0xf]
        %v1794 = vld [vmem:[%s1283 + $0x198] sm:$0xf]
        %v1795 = vld [vmem:[%s1283 + $0x19c] sm:$0xf]
        %v1796 = vld [vmem:[%s1283 + $0x1a0] sm:$0xf]
        %v1797 = vld [vmem:[%s1283 + $0x1a4] sm:$0xf]
        %v1798 = vld [vmem:[%s1283 + $0x1a8] sm:$0xf]
        %v1799 = vld [vmem:[%s1283 + $0x1ac] sm:$0xf]
        %v1800 = vld [vmem:[%s1283 + $0x1b0] sm:$0xf]
        %v1801 = vld [vmem:[%s1283 + $0x1b4] sm:$0xf]
        %v1802 = vld [vmem:[%s1283 + $0x1b8] sm:$0xf]
        %v1803 = vld [vmem:[%s1283 + $0x1bc] sm:$0xf]
        %v1804 = vld [vmem:[%s1283 + $0x1c0] sm:$0xf]
        %v1805 = vld [vmem:[%s1283 + $0x1c4] sm:$0xf]
        %v1806 = vld [vmem:[%s1283 + $0x1c8] sm:$0xf]
        %v1807 = vld [vmem:[%s1283 + $0x1cc] sm:$0xf]
        %v1808 = vld [vmem:[%s1283 + $0x1d0] sm:$0xf]
        %v1809 = vld [vmem:[%s1283 + $0x1d4] sm:$0xf]
        %v1810 = vld [vmem:[%s1283 + $0x1d8] sm:$0xf]
        %v1811 = vld [vmem:[%s1283 + $0x1dc] sm:$0xf]
        %v1812 = vld [vmem:[%s1283 + $0x1e0] sm:$0xf]
        %v1813 = vld [vmem:[%s1283 + $0x1e4] sm:$0xf]
        %v1814 = vld [vmem:[%s1283 + $0x1e8] sm:$0xf]
        %v1815 = vld [vmem:[%s1283 + $0x1ec] sm:$0xf]
        %v1816 = vld [vmem:[%s1283 + $0x1f0] sm:$0xf]
        %v1817 = vld [vmem:[%s1283 + $0x1f4] sm:$0xf]
        %v1818 = vld [vmem:[%s1283 + $0x1f8] sm:$0xf]
        %v1819 = vld [vmem:[%s1283 + $0x1fc] sm:$0xf]
        %v1820 = vld [vmem:[%s1283 + $0x200] sm:$0xf]
        %v1821 = vld [vmem:[%s1283 + $0x204] sm:$0xf]
        %v1822 = vld [vmem:[%s1283 + $0x208] sm:$0xf]
        %v1823 = vld [vmem:[%s1283 + $0x20c] sm:$0xf]
        %v1824 = vld [vmem:[%s1283 + $0x210] sm:$0xf]
        %v1825 = vld [vmem:[%s1283 + $0x214] sm:$0xf]
        %v1826 = vld [vmem:[%s1283 + $0x218] sm:$0xf]
        %v1827 = vld [vmem:[%s1283 + $0x21c] sm:$0xf]
        %v1828 = vld [vmem:[%s1283 + $0x220] sm:$0xf]
        %v1829 = vld [vmem:[%s1283 + $0x224] sm:$0xf]
        %v1830 = vld [vmem:[%s1283 + $0x228] sm:$0xf]
        %v1831 = vld [vmem:[%s1283 + $0x22c] sm:$0xf]
        %v1832 = vld [vmem:[%s1283 + $0x230] sm:$0xf]
        %v1833 = vld [vmem:[%s1283 + $0x234] sm:$0xf]
        %v1834 = vld [vmem:[%s1283 + $0x238] sm:$0xf]
        %v1835 = vld [vmem:[%s1283 + $0x23c] sm:$0xf]
        %v1836 = vld [vmem:[%s1283 + $0x240] sm:$0xf]
        %v1837 = vld [vmem:[%s1283 + $0x244] sm:$0xf]
        %v1838 = vld [vmem:[%s1283 + $0x248] sm:$0xf]
        %v1839 = vld [vmem:[%s1283 + $0x24c] sm:$0xf]
        %v1840 = vld [vmem:[%s1283 + $0x250] sm:$0xf]
        %v1841 = vld [vmem:[%s1283 + $0x254] sm:$0xf]
        %v1842 = vld [vmem:[%s1283 + $0x258] sm:$0xf]
        %v1843 = vld [vmem:[%s1283 + $0x25c] sm:$0xf]
        %v1844 = vld [vmem:[%s1283 + $0x260] sm:$0xf]
        %v1845 = vld [vmem:[%s1283 + $0x264] sm:$0xf]
        %v1846 = vld [vmem:[%s1283 + $0x268] sm:$0xf]
        %v1847 = vld [vmem:[%s1283 + $0x26c] sm:$0xf]
        %v1848 = vld [vmem:[%s1283 + $0x270] sm:$0xf]
        %v1849 = vld [vmem:[%s1283 + $0x274] sm:$0xf]
        %v1850 = vld [vmem:[%s1283 + $0x278] sm:$0xf]
        %v1851 = vld [vmem:[%s1283 + $0x27c] sm:$0xf]
        %v1852 = vld [vmem:[%s1283 + $0x280] sm:$0xf]
        %v1853 = vld [vmem:[%s1283 + $0x284] sm:$0xf]
        %v1854 = vld [vmem:[%s1283 + $0x288] sm:$0xf]
        %v1855 = vld [vmem:[%s1283 + $0x28c] sm:$0xf]
        %v1856 = vld [vmem:[%s1283 + $0x290] sm:$0xf]
        %v1857 = vld [vmem:[%s1283 + $0x294] sm:$0xf]
        %v1858 = vld [vmem:[%s1283 + $0x298] sm:$0xf]
        %v1859 = vld [vmem:[%s1283 + $0x29c] sm:$0xf]
        %v1860 = vld [vmem:[%s1283 + $0x2a0] sm:$0xf]
        %v1861 = vld [vmem:[%s1283 + $0x2a4] sm:$0xf]
        %v1862 = vld [vmem:[%s1283 + $0x2a8] sm:$0xf]
        %v1863 = vld [vmem:[%s1283 + $0x2ac] sm:$0xf]
        %v1864 = vld [vmem:[%s1283 + $0x2b0] sm:$0xf]
        %v1865 = vld [vmem:[%s1283 + $0x2b4] sm:$0xf]
        %v1866 = vld [vmem:[%s1283 + $0x2b8] sm:$0xf]
        %v1867 = vld [vmem:[%s1283 + $0x2bc] sm:$0xf]
        %v1868 = vld [vmem:[%s1283 + $0x2c0] sm:$0xf]
        %v1869 = vld [vmem:[%s1283 + $0x2c4] sm:$0xf]
        %v1870 = vld [vmem:[%s1283 + $0x2c8] sm:$0xf]
        %v1871 = vld [vmem:[%s1283 + $0x2cc] sm:$0xf]
        %v1872 = vld [vmem:[%s1283 + $0x2d0] sm:$0xf]
        %v1873 = vld [vmem:[%s1283 + $0x2d4] sm:$0xf]
        %v1874 = vld [vmem:[%s1283 + $0x2d8] sm:$0xf]
        %v1875 = vld [vmem:[%s1283 + $0x2dc] sm:$0xf]
        %v1876 = vld [vmem:[%s1283 + $0x2e0] sm:$0xf]
        %v1877 = vld [vmem:[%s1283 + $0x2e4] sm:$0xf]
        %v1878 = vld [vmem:[%s1283 + $0x2e8] sm:$0xf]
        %v1879 = vld [vmem:[%s1283 + $0x2ec] sm:$0xf]
        %v1880 = vld [vmem:[%s1283 + $0x2f0] sm:$0xf]
        %v1881 = vld [vmem:[%s1283 + $0x2f4] sm:$0xf]
        %v1882 = vld [vmem:[%s1283 + $0x2f8] sm:$0xf]
        %v1883 = vld [vmem:[%s1283 + $0x2fc] sm:$0xf]
        %v1884 = vld [vmem:[%s1283 + $0x300] sm:$0xf]
        %v1885 = vld [vmem:[%s1283 + $0x304] sm:$0xf]
        %v1886 = vld [vmem:[%s1283 + $0x308] sm:$0xf]
        %v1887 = vld [vmem:[%s1283 + $0x30c] sm:$0xf]
        %v1888 = vld [vmem:[%s1283 + $0x310] sm:$0xf]
        %v1889 = vld [vmem:[%s1283 + $0x314] sm:$0xf]
        %v1890 = vld [vmem:[%s1283 + $0x318] sm:$0xf]
        %v1891 = vld [vmem:[%s1283 + $0x31c] sm:$0xf]
        %v1892 = vld [vmem:[%s1283 + $0x320] sm:$0xf]
        %v1893 = vld [vmem:[%s1283 + $0x324] sm:$0xf]
        %v1894 = vld [vmem:[%s1283 + $0x328] sm:$0xf]
        %v1895 = vld [vmem:[%s1283 + $0x32c] sm:$0xf]
        %v1896 = vld [vmem:[%s1283 + $0x330] sm:$0xf]
        %v1897 = vld [vmem:[%s1283 + $0x334] sm:$0xf]
        %v1898 = vld [vmem:[%s1283 + $0x338] sm:$0xf]
        %v1899 = vld [vmem:[%s1283 + $0x33c] sm:$0xf]
        %v1900 = vld [vmem:[%s1283 + $0x340] sm:$0xf]
        %v1901 = vld [vmem:[%s1283 + $0x344] sm:$0xf]
        %v1902 = vld [vmem:[%s1283 + $0x348] sm:$0xf]
        %v1903 = vld [vmem:[%s1283 + $0x34c] sm:$0xf]
        %v1904 = vld [vmem:[%s1283 + $0x350] sm:$0xf]
        %v1905 = vld [vmem:[%s1283 + $0x354] sm:$0xf]
        %v1906 = vld [vmem:[%s1283 + $0x358] sm:$0xf]
        %v1907 = vld [vmem:[%s1283 + $0x35c] sm:$0xf]
        %v1908 = vld [vmem:[%s1283 + $0x360] sm:$0xf]
        %v1909 = vld [vmem:[%s1283 + $0x364] sm:$0xf]
        %v1910 = vld [vmem:[%s1283 + $0x368] sm:$0xf]
        %v1911 = vld [vmem:[%s1283 + $0x36c] sm:$0xf]
        %v1912 = vld [vmem:[%s1283 + $0x370] sm:$0xf]
        %v1913 = vld [vmem:[%s1283 + $0x374] sm:$0xf]
        %v1914 = vld [vmem:[%s1283 + $0x378] sm:$0xf]
        %v1915 = vld [vmem:[%s1283 + $0x37c] sm:$0xf]
        %v1916 = vld [vmem:[%s1283 + $0x380] sm:$0xf]
        %v1917 = vld [vmem:[%s1283 + $0x384] sm:$0xf]
        %v1918 = vld [vmem:[%s1283 + $0x388] sm:$0xf]
        %v1919 = vld [vmem:[%s1283 + $0x38c] sm:$0xf]
        %v1920 = vld [vmem:[%s1283 + $0x390] sm:$0xf]
        %v1921 = vld [vmem:[%s1283 + $0x394] sm:$0xf]
        %v1922 = vld [vmem:[%s1283 + $0x398] sm:$0xf]
        %v1923 = vld [vmem:[%s1283 + $0x39c] sm:$0xf]
        %v1924 = vld [vmem:[%s1283 + $0x3a0] sm:$0xf]
        %v1925 = vld [vmem:[%s1283 + $0x3a4] sm:$0xf]
        %v1926 = vld [vmem:[%s1283 + $0x3a8] sm:$0xf]
        %v1927 = vld [vmem:[%s1283 + $0x3ac] sm:$0xf]
        %v1928 = vld [vmem:[%s1283 + $0x3b0] sm:$0xf]
        %v1929 = vld [vmem:[%s1283 + $0x3b4] sm:$0xf]
        %v1930 = vld [vmem:[%s1283 + $0x3b8] sm:$0xf]
        %v1931 = vld [vmem:[%s1283 + $0x3bc] sm:$0xf]
        %v1932 = vld [vmem:[%s1283 + $0x3c0] sm:$0xf]
        %v1933 = vld [vmem:[%s1283 + $0x3c4] sm:$0xf]
        %v1934 = vld [vmem:[%s1283 + $0x3c8] sm:$0xf]
        %v1935 = vld [vmem:[%s1283 + $0x3cc] sm:$0xf]
        %v1936 = vld [vmem:[%s1283 + $0x3d0] sm:$0xf]
        %v1937 = vld [vmem:[%s1283 + $0x3d4] sm:$0xf]
        %v1938 = vld [vmem:[%s1283 + $0x3d8] sm:$0xf]
        %v1939 = vld [vmem:[%s1283 + $0x3dc] sm:$0xf]
        %v1940 = vld [vmem:[%s1283 + $0x3e0] sm:$0xf]
        %v1941 = vld [vmem:[%s1283 + $0x3e4] sm:$0xf]
        %v1942 = vld [vmem:[%s1283 + $0x3e8] sm:$0xf]
        %v1943 = vld [vmem:[%s1283 + $0x3ec] sm:$0xf]
        %v1944 = vld [vmem:[%s1283 + $0x3f0] sm:$0xf]
        %v1945 = vld [vmem:[%s1283 + $0x3f4] sm:$0xf]
        %v1946 = vld [vmem:[%s1283 + $0x3f8] sm:$0xf]
        %v1947 = vld [vmem:[%s1283 + $0x3fc] sm:$0xf]
        %v2204 = vunpack.c.l.b16 %v1692
        %v2205 = vunpack.c.l.b16 %v1693
        %v2206 = vunpack.c.l.b16 %v1694
        %v2207 = vunpack.c.l.b16 %v1695
        %v2208 = vunpack.c.l.b16 %v1696
        %v2209 = vunpack.c.l.b16 %v1697
        %v2210 = vunpack.c.l.b16 %v1698
        %v2211 = vunpack.c.l.b16 %v1699
        %v2212 = vunpack.c.l.b16 %v1700
        %v2213 = vunpack.c.l.b16 %v1701
        %v2214 = vunpack.c.l.b16 %v1702
        %v2215 = vunpack.c.l.b16 %v1703
        %v2216 = vunpack.c.l.b16 %v1704
        %v2217 = vunpack.c.l.b16 %v1705
        %v2218 = vunpack.c.l.b16 %v1706
        %v2219 = vunpack.c.l.b16 %v1707
        %v2220 = vunpack.c.l.b16 %v1708
        %v2221 = vunpack.c.l.b16 %v1709
        %v2222 = vunpack.c.l.b16 %v1710
        %v2223 = vunpack.c.l.b16 %v1711
        %v2224 = vunpack.c.l.b16 %v1712
        %v2225 = vunpack.c.l.b16 %v1713
        %v2226 = vunpack.c.l.b16 %v1714
        %v2227 = vunpack.c.l.b16 %v1715
        %v2228 = vunpack.c.l.b16 %v1716
        %v2229 = vunpack.c.l.b16 %v1717
        %v2230 = vunpack.c.l.b16 %v1718
        %v2231 = vunpack.c.l.b16 %v1719
        %v2232 = vunpack.c.l.b16 %v1720
        %v2233 = vunpack.c.l.b16 %v1721
        %v2234 = vunpack.c.l.b16 %v1722
        %v2235 = vunpack.c.l.b16 %v1723
        %v2236 = vunpack.c.l.b16 %v1724
        %v2237 = vunpack.c.l.b16 %v1725
        %v2238 = vunpack.c.l.b16 %v1726
        %v2239 = vunpack.c.l.b16 %v1727
        %v2240 = vunpack.c.l.b16 %v1728
        %v2241 = vunpack.c.l.b16 %v1729
        %v2242 = vunpack.c.l.b16 %v1730
        %v2243 = vunpack.c.l.b16 %v1731
        %v2244 = vunpack.c.l.b16 %v1732
        %v2245 = vunpack.c.l.b16 %v1733
        %v2246 = vunpack.c.l.b16 %v1734
        %v2247 = vunpack.c.l.b16 %v1735
        %v2248 = vunpack.c.l.b16 %v1736
        %v2249 = vunpack.c.l.b16 %v1737
        %v2250 = vunpack.c.l.b16 %v1738
        %v2251 = vunpack.c.l.b16 %v1739
        %v2252 = vunpack.c.l.b16 %v1740
        %v2253 = vunpack.c.l.b16 %v1741
        %v2254 = vunpack.c.l.b16 %v1742
        %v2255 = vunpack.c.l.b16 %v1743
        %v2256 = vunpack.c.l.b16 %v1744
        %v2257 = vunpack.c.l.b16 %v1745
        %v2258 = vunpack.c.l.b16 %v1746
        %v2259 = vunpack.c.l.b16 %v1747
        %v2260 = vunpack.c.l.b16 %v1748
        %v2261 = vunpack.c.l.b16 %v1749
        %v2262 = vunpack.c.l.b16 %v1750
        %v2263 = vunpack.c.l.b16 %v1751
        %v2264 = vunpack.c.l.b16 %v1752
        %v2265 = vunpack.c.l.b16 %v1753
        %v2266 = vunpack.c.l.b16 %v1754
        %v2267 = vunpack.c.l.b16 %v1755
        %v2268 = vunpack.c.l.b16 %v1756
        %v2269 = vunpack.c.l.b16 %v1757
        %v2270 = vunpack.c.l.b16 %v1758
        %v2271 = vunpack.c.l.b16 %v1759
        %v2272 = vunpack.c.l.b16 %v1760
        %v2273 = vunpack.c.l.b16 %v1761
        %v2274 = vunpack.c.l.b16 %v1762
        %v2275 = vunpack.c.l.b16 %v1763
        %v2276 = vunpack.c.l.b16 %v1764
        %v2277 = vunpack.c.l.b16 %v1765
        %v2278 = vunpack.c.l.b16 %v1766
        %v2279 = vunpack.c.l.b16 %v1767
        %v2280 = vunpack.c.l.b16 %v1768
        %v2281 = vunpack.c.l.b16 %v1769
        %v2282 = vunpack.c.l.b16 %v1770
        %v2283 = vunpack.c.l.b16 %v1771
        %v2284 = vunpack.c.l.b16 %v1772
        %v2285 = vunpack.c.l.b16 %v1773
        %v2286 = vunpack.c.l.b16 %v1774
        %v2287 = vunpack.c.l.b16 %v1775
        %v2288 = vunpack.c.l.b16 %v1776
        %v2289 = vunpack.c.l.b16 %v1777
        %v2290 = vunpack.c.l.b16 %v1778
        %v2291 = vunpack.c.l.b16 %v1779
        %v2292 = vunpack.c.l.b16 %v1780
        %v2293 = vunpack.c.l.b16 %v1781
        %v2294 = vunpack.c.l.b16 %v1782
        %v2295 = vunpack.c.l.b16 %v1783
        %v2296 = vunpack.c.l.b16 %v1784
        %v2297 = vunpack.c.l.b16 %v1785
        %v2298 = vunpack.c.l.b16 %v1786
        %v2299 = vunpack.c.l.b16 %v1787
        %v2300 = vunpack.c.l.b16 %v1788
        %v2301 = vunpack.c.l.b16 %v1789
        %v2302 = vunpack.c.l.b16 %v1790
        %v2303 = vunpack.c.l.b16 %v1791
        %v2304 = vunpack.c.l.b16 %v1792
        %v2305 = vunpack.c.l.b16 %v1793
        %v2306 = vunpack.c.l.b16 %v1794
        %v2307 = vunpack.c.l.b16 %v1795
        %v2308 = vunpack.c.l.b16 %v1796
        %v2309 = vunpack.c.l.b16 %v1797
        %v2310 = vunpack.c.l.b16 %v1798
        %v2311 = vunpack.c.l.b16 %v1799
        %v2312 = vunpack.c.l.b16 %v1800
        %v2313 = vunpack.c.l.b16 %v1801
        %v2314 = vunpack.c.l.b16 %v1802
        %v2315 = vunpack.c.l.b16 %v1803
        %v2316 = vunpack.c.l.b16 %v1804
        %v2317 = vunpack.c.l.b16 %v1805
        %v2318 = vunpack.c.l.b16 %v1806
        %v2319 = vunpack.c.l.b16 %v1807
        %v2320 = vunpack.c.l.b16 %v1808
        %v2321 = vunpack.c.l.b16 %v1809
        %v2322 = vunpack.c.l.b16 %v1810
        %v2323 = vunpack.c.l.b16 %v1811
        %v2324 = vunpack.c.l.b16 %v1812
        %v2325 = vunpack.c.l.b16 %v1813
        %v2326 = vunpack.c.l.b16 %v1814
        %v2327 = vunpack.c.l.b16 %v1815
        %v2328 = vunpack.c.l.b16 %v1816
        %v2329 = vunpack.c.l.b16 %v1817
        %v2330 = vunpack.c.l.b16 %v1818
        %v2331 = vunpack.c.l.b16 %v1819
        %v2332 = vunpack.c.l.b16 %v1820
        %v2333 = vunpack.c.l.b16 %v1821
        %v2334 = vunpack.c.l.b16 %v1822
        %v2335 = vunpack.c.l.b16 %v1823
        %v2336 = vunpack.c.l.b16 %v1824
        %v2337 = vunpack.c.l.b16 %v1825
        %v2338 = vunpack.c.l.b16 %v1826
        %v2339 = vunpack.c.l.b16 %v1827
        %v2340 = vunpack.c.l.b16 %v1828
        %v2341 = vunpack.c.l.b16 %v1829
        %v2342 = vunpack.c.l.b16 %v1830
        %v2343 = vunpack.c.l.b16 %v1831
        %v2344 = vunpack.c.l.b16 %v1832
        %v2345 = vunpack.c.l.b16 %v1833
        %v2346 = vunpack.c.l.b16 %v1834
        %v2347 = vunpack.c.l.b16 %v1835
        %v2348 = vunpack.c.l.b16 %v1836
        %v2349 = vunpack.c.l.b16 %v1837
        %v2350 = vunpack.c.l.b16 %v1838
        %v2351 = vunpack.c.l.b16 %v1839
        %v2352 = vunpack.c.l.b16 %v1840
        %v2353 = vunpack.c.l.b16 %v1841
        %v2354 = vunpack.c.l.b16 %v1842
        %v2355 = vunpack.c.l.b16 %v1843
        %v2356 = vunpack.c.l.b16 %v1844
        %v2357 = vunpack.c.l.b16 %v1845
        %v2358 = vunpack.c.l.b16 %v1846
        %v2359 = vunpack.c.l.b16 %v1847
        %v2360 = vunpack.c.l.b16 %v1848
        %v2361 = vunpack.c.l.b16 %v1849
        %v2362 = vunpack.c.l.b16 %v1850
        %v2363 = vunpack.c.l.b16 %v1851
        %v2364 = vunpack.c.l.b16 %v1852
        %v2365 = vunpack.c.l.b16 %v1853
        %v2366 = vunpack.c.l.b16 %v1854
        %v2367 = vunpack.c.l.b16 %v1855
        %v2368 = vunpack.c.l.b16 %v1856
        %v2369 = vunpack.c.l.b16 %v1857
        %v2370 = vunpack.c.l.b16 %v1858
        %v2371 = vunpack.c.l.b16 %v1859
        %v2372 = vunpack.c.l.b16 %v1860
        %v2373 = vunpack.c.l.b16 %v1861
        %v2374 = vunpack.c.l.b16 %v1862
        %v2375 = vunpack.c.l.b16 %v1863
        %v2376 = vunpack.c.l.b16 %v1864
        %v2377 = vunpack.c.l.b16 %v1865
        %v2378 = vunpack.c.l.b16 %v1866
        %v2379 = vunpack.c.l.b16 %v1867
        %v2380 = vunpack.c.l.b16 %v1868
        %v2381 = vunpack.c.l.b16 %v1869
        %v2382 = vunpack.c.l.b16 %v1870
        %v2383 = vunpack.c.l.b16 %v1871
        %v2384 = vunpack.c.l.b16 %v1872
        %v2385 = vunpack.c.l.b16 %v1873
        %v2386 = vunpack.c.l.b16 %v1874
        %v2387 = vunpack.c.l.b16 %v1875
        %v2388 = vunpack.c.l.b16 %v1876
        %v2389 = vunpack.c.l.b16 %v1877
        %v2390 = vunpack.c.l.b16 %v1878
        %v2391 = vunpack.c.l.b16 %v1879
        %v2392 = vunpack.c.l.b16 %v1880
        %v2393 = vunpack.c.l.b16 %v1881
        %v2394 = vunpack.c.l.b16 %v1882
        %v2395 = vunpack.c.l.b16 %v1883
        %v2396 = vunpack.c.l.b16 %v1884
        %v2397 = vunpack.c.l.b16 %v1885
        %v2398 = vunpack.c.l.b16 %v1886
        %v2399 = vunpack.c.l.b16 %v1887
        %v2400 = vunpack.c.l.b16 %v1888
        %v2401 = vunpack.c.l.b16 %v1889
        %v2402 = vunpack.c.l.b16 %v1890
        %v2403 = vunpack.c.l.b16 %v1891
        %v2404 = vunpack.c.l.b16 %v1892
        %v2405 = vunpack.c.l.b16 %v1893
        %v2406 = vunpack.c.l.b16 %v1894
        %v2407 = vunpack.c.l.b16 %v1895
        %v2408 = vunpack.c.l.b16 %v1896
        %v2409 = vunpack.c.l.b16 %v1897
        %v2410 = vunpack.c.l.b16 %v1898
        %v2411 = vunpack.c.l.b16 %v1899
        %v2412 = vunpack.c.l.b16 %v1900
        %v2413 = vunpack.c.l.b16 %v1901
        %v2414 = vunpack.c.l.b16 %v1902
        %v2415 = vunpack.c.l.b16 %v1903
        %v2416 = vunpack.c.l.b16 %v1904
        %v2417 = vunpack.c.l.b16 %v1905
        %v2418 = vunpack.c.l.b16 %v1906
        %v2419 = vunpack.c.l.b16 %v1907
        %v2420 = vunpack.c.l.b16 %v1908
        %v2421 = vunpack.c.l.b16 %v1909
        %v2422 = vunpack.c.l.b16 %v1910
        %v2423 = vunpack.c.l.b16 %v1911
        %v2424 = vunpack.c.l.b16 %v1912
        %v2425 = vunpack.c.l.b16 %v1913
        %v2426 = vunpack.c.l.b16 %v1914
        %v2427 = vunpack.c.l.b16 %v1915
        %v2428 = vunpack.c.l.b16 %v1916
        %v2429 = vunpack.c.l.b16 %v1917
        %v2430 = vunpack.c.l.b16 %v1918
        %v2431 = vunpack.c.l.b16 %v1919
        %v2432 = vunpack.c.l.b16 %v1920
        %v2433 = vunpack.c.l.b16 %v1921
        %v2434 = vunpack.c.l.b16 %v1922
        %v2435 = vunpack.c.l.b16 %v1923
        %v2436 = vunpack.c.l.b16 %v1924
        %v2437 = vunpack.c.l.b16 %v1925
        %v2438 = vunpack.c.l.b16 %v1926
        %v2439 = vunpack.c.l.b16 %v1927
        %v2440 = vunpack.c.l.b16 %v1928
        %v2441 = vunpack.c.l.b16 %v1929
        %v2442 = vunpack.c.l.b16 %v1930
        %v2443 = vunpack.c.l.b16 %v1931
        %v2444 = vunpack.c.l.b16 %v1932
        %v2445 = vunpack.c.l.b16 %v1933
        %v2446 = vunpack.c.l.b16 %v1934
        %v2447 = vunpack.c.l.b16 %v1935
        %v2448 = vunpack.c.l.b16 %v1936
        %v2449 = vunpack.c.l.b16 %v1937
        %v2450 = vunpack.c.l.b16 %v1938
        %v2451 = vunpack.c.l.b16 %v1939
        %v2452 = vunpack.c.l.b16 %v1940
        %v2453 = vunpack.c.l.b16 %v1941
        %v2454 = vunpack.c.l.b16 %v1942
        %v2455 = vunpack.c.l.b16 %v1943
        %v2456 = vunpack.c.l.b16 %v1944
        %v2457 = vunpack.c.l.b16 %v1945
        %v2458 = vunpack.c.l.b16 %v1946
        %v2459 = vunpack.c.l.b16 %v1947
        %v2460 = vpack.c.b16 %v2205, %v2204
        %v2461 = vpack.c.b16 %v2207, %v2206
        %v2462 = vpack.c.b16 %v2209, %v2208
        %v2463 = vpack.c.b16 %v2211, %v2210
        %v2464 = vpack.c.b16 %v2213, %v2212
        %v2465 = vpack.c.b16 %v2215, %v2214
        %v2466 = vpack.c.b16 %v2217, %v2216
        %v2467 = vpack.c.b16 %v2219, %v2218
        %v2468 = vpack.c.b16 %v2221, %v2220
        %v2469 = vpack.c.b16 %v2223, %v2222
        %v2470 = vpack.c.b16 %v2225, %v2224
        %v2471 = vpack.c.b16 %v2227, %v2226
        %v2472 = vpack.c.b16 %v2229, %v2228
        %v2473 = vpack.c.b16 %v2231, %v2230
        %v2474 = vpack.c.b16 %v2233, %v2232
        %v2475 = vpack.c.b16 %v2235, %v2234
        %v2476 = vpack.c.b16 %v2237, %v2236
        %v2477 = vpack.c.b16 %v2239, %v2238
        %v2478 = vpack.c.b16 %v2241, %v2240
        %v2479 = vpack.c.b16 %v2243, %v2242
        %v2480 = vpack.c.b16 %v2245, %v2244
        %v2481 = vpack.c.b16 %v2247, %v2246
        %v2482 = vpack.c.b16 %v2249, %v2248
        %v2483 = vpack.c.b16 %v2251, %v2250
        %v2484 = vpack.c.b16 %v2253, %v2252
        %v2485 = vpack.c.b16 %v2255, %v2254
        %v2486 = vpack.c.b16 %v2257, %v2256
        %v2487 = vpack.c.b16 %v2259, %v2258
        %v2488 = vpack.c.b16 %v2261, %v2260
        %v2489 = vpack.c.b16 %v2263, %v2262
        %v2490 = vpack.c.b16 %v2265, %v2264
        %v2491 = vpack.c.b16 %v2267, %v2266
        %v2492 = vpack.c.b16 %v2269, %v2268
        %v2493 = vpack.c.b16 %v2271, %v2270
        %v2494 = vpack.c.b16 %v2273, %v2272
        %v2495 = vpack.c.b16 %v2275, %v2274
        %v2496 = vpack.c.b16 %v2277, %v2276
        %v2497 = vpack.c.b16 %v2279, %v2278
        %v2498 = vpack.c.b16 %v2281, %v2280
        %v2499 = vpack.c.b16 %v2283, %v2282
        %v2500 = vpack.c.b16 %v2285, %v2284
        %v2501 = vpack.c.b16 %v2287, %v2286
        %v2502 = vpack.c.b16 %v2289, %v2288
        %v2503 = vpack.c.b16 %v2291, %v2290
        %v2504 = vpack.c.b16 %v2293, %v2292
        %v2505 = vpack.c.b16 %v2295, %v2294
        %v2506 = vpack.c.b16 %v2297, %v2296
        %v2507 = vpack.c.b16 %v2299, %v2298
        %v2508 = vpack.c.b16 %v2301, %v2300
        %v2509 = vpack.c.b16 %v2303, %v2302
        %v2510 = vpack.c.b16 %v2305, %v2304
        %v2511 = vpack.c.b16 %v2307, %v2306
        %v2512 = vpack.c.b16 %v2309, %v2308
        %v2513 = vpack.c.b16 %v2311, %v2310
        %v2514 = vpack.c.b16 %v2313, %v2312
        %v2515 = vpack.c.b16 %v2315, %v2314
        %v2516 = vpack.c.b16 %v2317, %v2316
        %v2517 = vpack.c.b16 %v2319, %v2318
        %v2518 = vpack.c.b16 %v2321, %v2320
        %v2519 = vpack.c.b16 %v2323, %v2322
        %v2520 = vpack.c.b16 %v2325, %v2324
        %v2521 = vpack.c.b16 %v2327, %v2326
        %v2522 = vpack.c.b16 %v2329, %v2328
        %v2523 = vpack.c.b16 %v2331, %v2330
        %v2524 = vpack.c.b16 %v2333, %v2332
        %v2525 = vpack.c.b16 %v2335, %v2334
        %v2526 = vpack.c.b16 %v2337, %v2336
        %v2527 = vpack.c.b16 %v2339, %v2338
        %v2528 = vpack.c.b16 %v2341, %v2340
        %v2529 = vpack.c.b16 %v2343, %v2342
        %v2530 = vpack.c.b16 %v2345, %v2344
        %v2531 = vpack.c.b16 %v2347, %v2346
        %v2532 = vpack.c.b16 %v2349, %v2348
        %v2533 = vpack.c.b16 %v2351, %v2350
        %v2534 = vpack.c.b16 %v2353, %v2352
        %v2535 = vpack.c.b16 %v2355, %v2354
        %v2536 = vpack.c.b16 %v2357, %v2356
        %v2537 = vpack.c.b16 %v2359, %v2358
        %v2538 = vpack.c.b16 %v2361, %v2360
        %v2539 = vpack.c.b16 %v2363, %v2362
        %v2540 = vpack.c.b16 %v2365, %v2364
        %v2541 = vpack.c.b16 %v2367, %v2366
        %v2542 = vpack.c.b16 %v2369, %v2368
        %v2543 = vpack.c.b16 %v2371, %v2370
        %v2544 = vpack.c.b16 %v2373, %v2372
        %v2545 = vpack.c.b16 %v2375, %v2374
        %v2546 = vpack.c.b16 %v2377, %v2376
        %v2547 = vpack.c.b16 %v2379, %v2378
        %v2548 = vpack.c.b16 %v2381, %v2380
        %v2549 = vpack.c.b16 %v2383, %v2382
        %v2550 = vpack.c.b16 %v2385, %v2384
        %v2551 = vpack.c.b16 %v2387, %v2386
        %v2552 = vpack.c.b16 %v2389, %v2388
        %v2553 = vpack.c.b16 %v2391, %v2390
        %v2554 = vpack.c.b16 %v2393, %v2392
        %v2555 = vpack.c.b16 %v2395, %v2394
        %v2556 = vpack.c.b16 %v2397, %v2396
        %v2557 = vpack.c.b16 %v2399, %v2398
        %v2558 = vpack.c.b16 %v2401, %v2400
        %v2559 = vpack.c.b16 %v2403, %v2402
        %v2560 = vpack.c.b16 %v2405, %v2404
        %v2561 = vpack.c.b16 %v2407, %v2406
        %v2562 = vpack.c.b16 %v2409, %v2408
        %v2563 = vpack.c.b16 %v2411, %v2410
        %v2564 = vpack.c.b16 %v2413, %v2412
        %v2565 = vpack.c.b16 %v2415, %v2414
        %v2566 = vpack.c.b16 %v2417, %v2416
        %v2567 = vpack.c.b16 %v2419, %v2418
        %v2568 = vpack.c.b16 %v2421, %v2420
        %v2569 = vpack.c.b16 %v2423, %v2422
        %v2570 = vpack.c.b16 %v2425, %v2424
        %v2571 = vpack.c.b16 %v2427, %v2426
        %v2572 = vpack.c.b16 %v2429, %v2428
        %v2573 = vpack.c.b16 %v2431, %v2430
        %v2574 = vpack.c.b16 %v2433, %v2432
        %v2575 = vpack.c.b16 %v2435, %v2434
        %v2576 = vpack.c.b16 %v2437, %v2436
        %v2577 = vpack.c.b16 %v2439, %v2438
        %v2578 = vpack.c.b16 %v2441, %v2440
        %v2579 = vpack.c.b16 %v2443, %v2442
        %v2580 = vpack.c.b16 %v2445, %v2444
        %v2581 = vpack.c.b16 %v2447, %v2446
        %v2582 = vpack.c.b16 %v2449, %v2448
        %v2583 = vpack.c.b16 %v2451, %v2450
        %v2584 = vpack.c.b16 %v2453, %v2452
        %v2585 = vpack.c.b16 %v2455, %v2454
        %v2586 = vpack.c.b16 %v2457, %v2456
        %v2587 = vpack.c.b16 %v2459, %v2458
        %2716 = vmatprep.subr.bf16.mxu0 0
        %2717 = vmatpush1.bf16.msra.mxu0 %v2460
        %2718 = vmatprep.subr.bf16.mxu0 0
        %2719 = vmatpush1.bf16.msra.mxu0 %v2461
        %2720 = vmatprep.subr.bf16.mxu0 0
        %2721 = vmatpush1.bf16.msra.mxu0 %v2462
        %2722 = vmatprep.subr.bf16.mxu0 0
        %2723 = vmatpush1.bf16.msra.mxu0 %v2463
        %2724 = vmatprep.subr.bf16.mxu0 0
        %2725 = vmatpush1.bf16.msra.mxu0 %v2464
        %2726 = vmatprep.subr.bf16.mxu0 0
        %2727 = vmatpush1.bf16.msra.mxu0 %v2465
        %2728 = vmatprep.subr.bf16.mxu0 0
        %2729 = vmatpush1.bf16.msra.mxu0 %v2466
        %2730 = vmatprep.subr.bf16.mxu0 0
        %2731 = vmatpush1.bf16.msra.mxu0 %v2467
        %2732 = vmatprep.subr.bf16.mxu0 0
        %2733 = vmatpush1.bf16.msra.mxu0 %v2468
        %2734 = vmatprep.subr.bf16.mxu0 0
        %2735 = vmatpush1.bf16.msra.mxu0 %v2469
        %2736 = vmatprep.subr.bf16.mxu0 0
        %2737 = vmatpush1.bf16.msra.mxu0 %v2470
        %2738 = vmatprep.subr.bf16.mxu0 0
        %2739 = vmatpush1.bf16.msra.mxu0 %v2471
        %2740 = vmatprep.subr.bf16.mxu0 0
        %2741 = vmatpush1.bf16.msra.mxu0 %v2472
        %2742 = vmatprep.subr.bf16.mxu0 0
        %2743 = vmatpush1.bf16.msra.mxu0 %v2473
        %2744 = vmatprep.subr.bf16.mxu0 0
        %2745 = vmatpush1.bf16.msra.mxu0 %v2474
        %2746 = vmatprep.subr.bf16.mxu0 0
        %2747 = vmatpush1.bf16.msra.mxu0 %v2475
        %2748 = vmatprep.mubr.bf16.mxu0 %v1661
        %2749 = vmatmul.mubr.bf16.gmra.mrb[0].mxu0 %v1660
        %v2750 = vpop.f32.mrb[0].mxu0
        %v2751 = vadd.f32 0.0, %v2750
        %v2752 = vpop.f32.mrb[0].mxu0
        %v2753 = vpop.f32.mrb[0].mxu0
        %v2754 = vadd.f32 0.0, %v2753
        %v2755 = vpop.f32.mrb[0].mxu0
        %2756 = vmatprep.mubr.bf16.mxu0 %v1677
        %2757 = vmatmul.mubr.bf16.gmra.mrb[0].mxu0 %v1676
        %v2758 = vpop.f32.mrb[0].mxu0
        %v2759 = vadd.f32 0.0, %v2758
        %v2760 = vpop.f32.mrb[0].mxu0
        %v2761 = vpop.f32.mrb[0].mxu0
        %v2762 = vadd.f32 0.0, %v2761
        %v2763 = vpop.f32.mrb[0].mxu0
        %2764 = vdwg.mxu0
        %2765 = vmatprep.subr.bf16.mxu0 0
        %2766 = vmatpush1.bf16.msra.mxu0 %v2476
        %2767 = vmatprep.subr.bf16.mxu0 0
        %2768 = vmatpush1.bf16.msra.mxu0 %v2477
        %2769 = vmatprep.subr.bf16.mxu0 0
        %2770 = vmatpush1.bf16.msra.mxu0 %v2478
        %2771 = vmatprep.subr.bf16.mxu0 0
        %2772 = vmatpush1.bf16.msra.mxu0 %v2479
        %2773 = vmatprep.subr.bf16.mxu0 0
        %2774 = vmatpush1.bf16.msra.mxu0 %v2480
        %2775 = vmatprep.subr.bf16.mxu0 0
        %2776 = vmatpush1.bf16.msra.mxu0 %v2481
        %2777 = vmatprep.subr.bf16.mxu0 0
        %2778 = vmatpush1.bf16.msra.mxu0 %v2482
        %2779 = vmatprep.subr.bf16.mxu0 0
        %2780 = vmatpush1.bf16.msra.mxu0 %v2483
        %2781 = vmatprep.subr.bf16.mxu0 0
        %2782 = vmatpush1.bf16.msra.mxu0 %v2484
        %2783 = vmatprep.subr.bf16.mxu0 0
        %2784 = vmatpush1.bf16.msra.mxu0 %v2485
        %2785 = vmatprep.subr.bf16.mxu0 0
        %2786 = vmatpush1.bf16.msra.mxu0 %v2486
        %2787 = vmatprep.subr.bf16.mxu0 0
        %2788 = vmatpush1.bf16.msra.mxu0 %v2487
        %2789 = vmatprep.subr.bf16.mxu0 0
        %2790 = vmatpush1.bf16.msra.mxu0 %v2488
        %2791 = vmatprep.subr.bf16.mxu0 0
        %2792 = vmatpush1.bf16.msra.mxu0 %v2489
        %2793 = vmatprep.subr.bf16.mxu0 0
        %2794 = vmatpush1.bf16.msra.mxu0 %v2490
        %2795 = vmatprep.subr.bf16.mxu0 0
        %2796 = vmatpush1.bf16.msra.mxu0 %v2491
        %2797 = vmatprep.mubr.bf16.mxu0 %v1663
        %2798 = vmatmul.mubr.bf16.gmra.mrb[0].mxu0 %v1662
        %v2799 = vpop.f32.mrb[0].mxu0
        %v2800 = vadd.f32 %v2751, %v2799
        %v2801 = vpop.f32.mrb[0].mxu0
        %v2802 = vpop.f32.mrb[0].mxu0
        %v2803 = vadd.f32 %v2754, %v2802
        %v2804 = vpop.f32.mrb[0].mxu0
        %2805 = vmatprep.mubr.bf16.mxu0 %v1679
        %2806 = vmatmul.mubr.bf16.gmra.mrb[0].mxu0 %v1678
        %v2807 = vpop.f32.mrb[0].mxu0
        %v2808 = vadd.f32 %v2759, %v2807
        %v2809 = vpop.f32.mrb[0].mxu0
        %v2810 = vpop.f32.mrb[0].mxu0
        %v2811 = vadd.f32 %v2762, %v2810
        %v2812 = vpop.f32.mrb[0].mxu0
        %2813 = vdwg.mxu0
        %2814 = vmatprep.subr.bf16.mxu0 0
        %2815 = vmatpush1.bf16.msra.mxu0 %v2492
        %2816 = vmatprep.subr.bf16.mxu0 0
        %2817 = vmatpush1.bf16.msra.mxu0 %v2493
        %2818 = vmatprep.subr.bf16.mxu0 0
        %2819 = vmatpush1.bf16.msra.mxu0 %v2494
        %2820 = vmatprep.subr.bf16.mxu0 0
        %2821 = vmatpush1.bf16.msra.mxu0 %v2495
        %2822 = vmatprep.subr.bf16.mxu0 0
        %2823 = vmatpush1.bf16.msra.mxu0 %v2496
        %2824 = vmatprep.subr.bf16.mxu0 0
        %2825 = vmatpush1.bf16.msra.mxu0 %v2497
        %2826 = vmatprep.subr.bf16.mxu0 0
        %2827 = vmatpush1.bf16.msra.mxu0 %v2498
        %2828 = vmatprep.subr.bf16.mxu0 0
        %2829 = vmatpush1.bf16.msra.mxu0 %v2499
        %2830 = vmatprep.subr.bf16.mxu0 0
        %2831 = vmatpush1.bf16.msra.mxu0 %v2500
        %2832 = vmatprep.subr.bf16.mxu0 0
        %2833 = vmatpush1.bf16.msra.mxu0 %v2501
        %2834 = vmatprep.subr.bf16.mxu0 0
        %2835 = vmatpush1.bf16.msra.mxu0 %v2502
        %2836 = vmatprep.subr.bf16.mxu0 0
        %2837 = vmatpush1.bf16.msra.mxu0 %v2503
        %2838 = vmatprep.subr.bf16.mxu0 0
        %2839 = vmatpush1.bf16.msra.mxu0 %v2504
        %2840 = vmatprep.subr.bf16.mxu0 0
        %2841 = vmatpush1.bf16.msra.mxu0 %v2505
        %2842 = vmatprep.subr.bf16.mxu0 0
        %2843 = vmatpush1.bf16.msra.mxu0 %v2506
        %2844 = vmatprep.subr.bf16.mxu0 0
        %2845 = vmatpush1.bf16.msra.mxu0 %v2507
        %2846 = vmatprep.mubr.bf16.mxu0 %v1665
        %2847 = vmatmul.mubr.bf16.gmra.mrb[0].mxu0 %v1664
        %v2848 = vpop.f32.mrb[0].mxu0
        %v2849 = vadd.f32 %v2800, %v2848
        %v2850 = vpop.f32.mrb[0].mxu0
        %v2851 = vpop.f32.mrb[0].mxu0
        %v2852 = vadd.f32 %v2803, %v2851
        %v2853 = vpop.f32.mrb[0].mxu0
        %2854 = vmatprep.mubr.bf16.mxu0 %v1681
        %2855 = vmatmul.mubr.bf16.gmra.mrb[0].mxu0 %v1680
        %v2856 = vpop.f32.mrb[0].mxu0
        %v2857 = vadd.f32 %v2808, %v2856
        %v2858 = vpop.f32.mrb[0].mxu0
        %v2859 = vpop.f32.mrb[0].mxu0
        %v2860 = vadd.f32 %v2811, %v2859
        %v2861 = vpop.f32.mrb[0].mxu0
        %2862 = vdwg.mxu0
        %2863 = vmatprep.subr.bf16.mxu0 0
        %2864 = vmatpush1.bf16.msra.mxu0 %v2508
        %2865 = vmatprep.subr.bf16.mxu0 0
        %2866 = vmatpush1.bf16.msra.mxu0 %v2509
        %2867 = vmatprep.subr.bf16.mxu0 0
        %2868 = vmatpush1.bf16.msra.mxu0 %v2510
        %2869 = vmatprep.subr.bf16.mxu0 0
        %2870 = vmatpush1.bf16.msra.mxu0 %v2511
        %2871 = vmatprep.subr.bf16.mxu0 0
        %2872 = vmatpush1.bf16.msra.mxu0 %v2512
        %2873 = vmatprep.subr.bf16.mxu0 0
        %2874 = vmatpush1.bf16.msra.mxu0 %v2513
        %2875 = vmatprep.subr.bf16.mxu0 0
        %2876 = vmatpush1.bf16.msra.mxu0 %v2514
        %2877 = vmatprep.subr.bf16.mxu0 0
        %2878 = vmatpush1.bf16.msra.mxu0 %v2515
        %2879 = vmatprep.subr.bf16.mxu0 0
        %2880 = vmatpush1.bf16.msra.mxu0 %v2516
        %2881 = vmatprep.subr.bf16.mxu0 0
        %2882 = vmatpush1.bf16.msra.mxu0 %v2517
        %2883 = vmatprep.subr.bf16.mxu0 0
        %2884 = vmatpush1.bf16.msra.mxu0 %v2518
        %2885 = vmatprep.subr.bf16.mxu0 0
        %2886 = vmatpush1.bf16.msra.mxu0 %v2519
        %2887 = vmatprep.subr.bf16.mxu0 0
        %2888 = vmatpush1.bf16.msra.mxu0 %v2520
        %2889 = vmatprep.subr.bf16.mxu0 0
        %2890 = vmatpush1.bf16.msra.mxu0 %v2521
        %2891 = vmatprep.subr.bf16.mxu0 0
        %2892 = vmatpush1.bf16.msra.mxu0 %v2522
        %2893 = vmatprep.subr.bf16.mxu0 0
        %2894 = vmatpush1.bf16.msra.mxu0 %v2523
        %2895 = vmatprep.mubr.bf16.mxu0 %v1667
        %2896 = vmatmul.mubr.bf16.gmra.mrb[0].mxu0 %v1666
        %v2897 = vpop.f32.mrb[0].mxu0
        %v2898 = vadd.f32 %v2849, %v2897
        %v2899 = vpop.f32.mrb[0].mxu0
        %v2900 = vpop.f32.mrb[0].mxu0
        %v2901 = vadd.f32 %v2852, %v2900
        %v2902 = vpop.f32.mrb[0].mxu0
        %2903 = vmatprep.mubr.bf16.mxu0 %v1683
        %2904 = vmatmul.mubr.bf16.gmra.mrb[0].mxu0 %v1682
        %v2905 = vpop.f32.mrb[0].mxu0
        %v2906 = vadd.f32 %v2857, %v2905
        %v2907 = vpop.f32.mrb[0].mxu0
        %v2908 = vpop.f32.mrb[0].mxu0
        %v2909 = vadd.f32 %v2860, %v2908
        %v2910 = vpop.f32.mrb[0].mxu0
        %2911 = vdwg.mxu0
        %2912 = vmatprep.subr.bf16.mxu0 0
        %2913 = vmatpush1.bf16.msra.mxu0 %v2524
        %2914 = vmatprep.subr.bf16.mxu0 0
        %2915 = vmatpush1.bf16.msra.mxu0 %v2525
        %2916 = vmatprep.subr.bf16.mxu0 0
        %2917 = vmatpush1.bf16.msra.mxu0 %v2526
        %2918 = vmatprep.subr.bf16.mxu0 0
        %2919 = vmatpush1.bf16.msra.mxu0 %v2527
        %2920 = vmatprep.subr.bf16.mxu0 0
        %2921 = vmatpush1.bf16.msra.mxu0 %v2528
        %2922 = vmatprep.subr.bf16.mxu0 0
        %2923 = vmatpush1.bf16.msra.mxu0 %v2529
        %2924 = vmatprep.subr.bf16.mxu0 0
        %2925 = vmatpush1.bf16.msra.mxu0 %v2530
        %2926 = vmatprep.subr.bf16.mxu0 0
        %2927 = vmatpush1.bf16.msra.mxu0 %v2531
        %2928 = vmatprep.subr.bf16.mxu0 0
        %2929 = vmatpush1.bf16.msra.mxu0 %v2532
        %2930 = vmatprep.subr.bf16.mxu0 0
        %2931 = vmatpush1.bf16.msra.mxu0 %v2533
        %2932 = vmatprep.subr.bf16.mxu0 0
        %2933 = vmatpush1.bf16.msra.mxu0 %v2534
        %2934 = vmatprep.subr.bf16.mxu0 0
        %2935 = vmatpush1.bf16.msra.mxu0 %v2535
        %2936 = vmatprep.subr.bf16.mxu0 0
        %2937 = vmatpush1.bf16.msra.mxu0 %v2536
        %2938 = vmatprep.subr.bf16.mxu0 0
        %2939 = vmatpush1.bf16.msra.mxu0 %v2537
        %2940 = vmatprep.subr.bf16.mxu0 0
        %2941 = vmatpush1.bf16.msra.mxu0 %v2538
        %2942 = vmatprep.subr.bf16.mxu0 0
        %2943 = vmatpush1.bf16.msra.mxu0 %v2539
        %2944 = vmatprep.mubr.bf16.mxu0 %v1669
        %2945 = vmatmul.mubr.bf16.gmra.mrb[0].mxu0 %v1668
        %v2946 = vpop.f32.mrb[0].mxu0
        %v2947 = vadd.f32 %v2898, %v2946
        %v2948 = vpop.f32.mrb[0].mxu0
        %v2949 = vpop.f32.mrb[0].mxu0
        %v2950 = vadd.f32 %v2901, %v2949
        %v2951 = vpop.f32.mrb[0].mxu0
        %2952 = vmatprep.mubr.bf16.mxu0 %v1685
        %2953 = vmatmul.mubr.bf16.gmra.mrb[0].mxu0 %v1684
        %v2954 = vpop.f32.mrb[0].mxu0
        %v2955 = vadd.f32 %v2906, %v2954
        %v2956 = vpop.f32.mrb[0].mxu0
        %v2957 = vpop.f32.mrb[0].mxu0
        %v2958 = vadd.f32 %v2909, %v2957
        %v2959 = vpop.f32.mrb[0].mxu0
        %2960 = vdwg.mxu0
        %2961 = vmatprep.subr.bf16.mxu0 0
        %2962 = vmatpush1.bf16.msra.mxu0 %v2540
        %2963 = vmatprep.subr.bf16.mxu0 0
        %2964 = vmatpush1.bf16.msra.mxu0 %v2541
        %2965 = vmatprep.subr.bf16.mxu0 0
        %2966 = vmatpush1.bf16.msra.mxu0 %v2542
        %2967 = vmatprep.subr.bf16.mxu0 0
        %2968 = vmatpush1.bf16.msra.mxu0 %v2543
        %2969 = vmatprep.subr.bf16.mxu0 0
        %2970 = vmatpush1.bf16.msra.mxu0 %v2544
        %2971 = vmatprep.subr.bf16.mxu0 0
        %2972 = vmatpush1.bf16.msra.mxu0 %v2545
        %2973 = vmatprep.subr.bf16.mxu0 0
        %2974 = vmatpush1.bf16.msra.mxu0 %v2546
        %2975 = vmatprep.subr.bf16.mxu0 0
        %2976 = vmatpush1.bf16.msra.mxu0 %v2547
        %2977 = vmatprep.subr.bf16.mxu0 0
        %2978 = vmatpush1.bf16.msra.mxu0 %v2548
        %2979 = vmatprep.subr.bf16.mxu0 0
        %2980 = vmatpush1.bf16.msra.mxu0 %v2549
        %2981 = vmatprep.subr.bf16.mxu0 0
        %2982 = vmatpush1.bf16.msra.mxu0 %v2550
        %2983 = vmatprep.subr.bf16.mxu0 0
        %2984 = vmatpush1.bf16.msra.mxu0 %v2551
        %2985 = vmatprep.subr.bf16.mxu0 0
        %2986 = vmatpush1.bf16.msra.mxu0 %v2552
        %2987 = vmatprep.subr.bf16.mxu0 0
        %2988 = vmatpush1.bf16.msra.mxu0 %v2553
        %2989 = vmatprep.subr.bf16.mxu0 0
        %2990 = vmatpush1.bf16.msra.mxu0 %v2554
        %2991 = vmatprep.subr.bf16.mxu0 0
        %2992 = vmatpush1.bf16.msra.mxu0 %v2555
        %2993 = vmatprep.mubr.bf16.mxu0 %v1671
        %2994 = vmatmul.mubr.bf16.gmra.mrb[0].mxu0 %v1670
        %v2995 = vpop.f32.mrb[0].mxu0
        %v2996 = vadd.f32 %v2947, %v2995
        %v2997 = vpop.f32.mrb[0].mxu0
        %v2998 = vpop.f32.mrb[0].mxu0
        %v2999 = vadd.f32 %v2950, %v2998
        %v3000 = vpop.f32.mrb[0].mxu0
        %3001 = vmatprep.mubr.bf16.mxu0 %v1687
        %3002 = vmatmul.mubr.bf16.gmra.mrb[0].mxu0 %v1686
        %v3003 = vpop.f32.mrb[0].mxu0
        %v3004 = vadd.f32 %v2955, %v3003
        %v3005 = vpop.f32.mrb[0].mxu0
        %v3006 = vpop.f32.mrb[0].mxu0
        %v3007 = vadd.f32 %v2958, %v3006
        %v3008 = vpop.f32.mrb[0].mxu0
        %3009 = vdwg.mxu0
        %3010 = vmatprep.subr.bf16.mxu0 0
        %3011 = vmatpush1.bf16.msra.mxu0 %v2556
        %3012 = vmatprep.subr.bf16.mxu0 0
        %3013 = vmatpush1.bf16.msra.mxu0 %v2557
        %3014 = vmatprep.subr.bf16.mxu0 0
        %3015 = vmatpush1.bf16.msra.mxu0 %v2558
        %3016 = vmatprep.subr.bf16.mxu0 0
        %3017 = vmatpush1.bf16.msra.mxu0 %v2559
        %3018 = vmatprep.subr.bf16.mxu0 0
        %3019 = vmatpush1.bf16.msra.mxu0 %v2560
        %3020 = vmatprep.subr.bf16.mxu0 0
        %3021 = vmatpush1.bf16.msra.mxu0 %v2561
        %3022 = vmatprep.subr.bf16.mxu0 0
        %3023 = vmatpush1.bf16.msra.mxu0 %v2562
        %3024 = vmatprep.subr.bf16.mxu0 0
        %3025 = vmatpush1.bf16.msra.mxu0 %v2563
        %3026 = vmatprep.subr.bf16.mxu0 0
        %3027 = vmatpush1.bf16.msra.mxu0 %v2564
        %3028 = vmatprep.subr.bf16.mxu0 0
        %3029 = vmatpush1.bf16.msra.mxu0 %v2565
        %3030 = vmatprep.subr.bf16.mxu0 0
        %3031 = vmatpush1.bf16.msra.mxu0 %v2566
        %3032 = vmatprep.subr.bf16.mxu0 0
        %3033 = vmatpush1.bf16.msra.mxu0 %v2567
        %3034 = vmatprep.subr.bf16.mxu0 0
        %3035 = vmatpush1.bf16.msra.mxu0 %v2568
        %3036 = vmatprep.subr.bf16.mxu0 0
        %3037 = vmatpush1.bf16.msra.mxu0 %v2569
        %3038 = vmatprep.subr.bf16.mxu0 0
        %3039 = vmatpush1.bf16.msra.mxu0 %v2570
        %3040 = vmatprep.subr.bf16.mxu0 0
        %3041 = vmatpush1.bf16.msra.mxu0 %v2571
        %3042 = vmatprep.mubr.bf16.mxu0 %v1673
        %3043 = vmatmul.mubr.bf16.gmra.mrb[0].mxu0 %v1672
        %v3044 = vpop.f32.mrb[0].mxu0
        %v3045 = vadd.f32 %v2996, %v3044
        %v3046 = vpop.f32.mrb[0].mxu0
        %v3047 = vpop.f32.mrb[0].mxu0
        %v3048 = vadd.f32 %v2999, %v3047
        %v3049 = vpop.f32.mrb[0].mxu0
        %3050 = vmatprep.mubr.bf16.mxu0 %v1689
        %3051 = vmatmul.mubr.bf16.gmra.mrb[0].mxu0 %v1688
        %v3052 = vpop.f32.mrb[0].mxu0
        %v3053 = vadd.f32 %v3004, %v3052
        %v3054 = vpop.f32.mrb[0].mxu0
        %v3055 = vpop.f32.mrb[0].mxu0
        %v3056 = vadd.f32 %v3007, %v3055
        %v3057 = vpop.f32.mrb[0].mxu0
        %3058 = vdwg.mxu0
        %3059 = vmatprep.subr.bf16.mxu0 0
        %3060 = vmatpush1.bf16.msra.mxu0 %v2572
        %3061 = vmatprep.subr.bf16.mxu0 0
        %3062 = vmatpush1.bf16.msra.mxu0 %v2573
        %3063 = vmatprep.subr.bf16.mxu0 0
        %3064 = vmatpush1.bf16.msra.mxu0 %v2574
        %3065 = vmatprep.subr.bf16.mxu0 0
        %3066 = vmatpush1.bf16.msra.mxu0 %v2575
        %3067 = vmatprep.subr.bf16.mxu0 0
        %3068 = vmatpush1.bf16.msra.mxu0 %v2576
        %3069 = vmatprep.subr.bf16.mxu0 0
        %3070 = vmatpush1.bf16.msra.mxu0 %v2577
        %3071 = vmatprep.subr.bf16.mxu0 0
        %3072 = vmatpush1.bf16.msra.mxu0 %v2578
        %3073 = vmatprep.subr.bf16.mxu0 0
        %3074 = vmatpush1.bf16.msra.mxu0 %v2579
        %3075 = vmatprep.subr.bf16.mxu0 0
        %3076 = vmatpush1.bf16.msra.mxu0 %v2580
        %3077 = vmatprep.subr.bf16.mxu0 0
        %3078 = vmatpush1.bf16.msra.mxu0 %v2581
        %3079 = vmatprep.subr.bf16.mxu0 0
        %3080 = vmatpush1.bf16.msra.mxu0 %v2582
        %3081 = vmatprep.subr.bf16.mxu0 0
        %3082 = vmatpush1.bf16.msra.mxu0 %v2583
        %3083 = vmatprep.subr.bf16.mxu0 0
        %3084 = vmatpush1.bf16.msra.mxu0 %v2584
        %3085 = vmatprep.subr.bf16.mxu0 0
        %3086 = vmatpush1.bf16.msra.mxu0 %v2585
        %3087 = vmatprep.subr.bf16.mxu0 0
        %3088 = vmatpush1.bf16.msra.mxu0 %v2586
        %3089 = vmatprep.subr.bf16.mxu0 0
        %3090 = vmatpush1.bf16.msra.mxu0 %v2587
        %3091 = vmatprep.mubr.bf16.mxu0 %v1675
        %3092 = vmatmul.mubr.bf16.gmra.mrb[0].mxu0 %v1674
        %v3093 = vpop.f32.mrb[0].mxu0
        %v3094 = vadd.f32 %v3045, %v3093
        %v3095 = vpop.f32.mrb[0].mxu0
        %v3096 = vpop.f32.mrb[0].mxu0
        %v3097 = vadd.f32 %v3048, %v3096
        %v3098 = vpop.f32.mrb[0].mxu0
        %3099 = vmatprep.mubr.bf16.mxu0 %v1691
        %3100 = vmatmul.mubr.bf16.gmra.mrb[0].mxu0 %v1690
        %v3101 = vpop.f32.mrb[0].mxu0
        %v3102 = vadd.f32 %v3053, %v3101
        %v3103 = vpop.f32.mrb[0].mxu0
        %v3104 = vpop.f32.mrb[0].mxu0
        %v3105 = vadd.f32 %v3056, %v3104
        %v3106 = vpop.f32.mrb[0].mxu0
        %3107 = vdwg.mxu0
        %v3108 = vpack.c.bf16 %v3097, %v3094
        %v3109 = vpack.c.bf16 %v3105, %v3102
        %v3112 = vunpack.c.l.b16 %v3108
        %v3113 = vunpack.c.h.b16 %v3108
        %v3114 = vunpack.c.l.b16 %v3109
        %v3115 = vunpack.c.h.b16 %v3109
        %v3116 = vpack.c.b16 %v3112, %v3112
        %v3117 = vpack.c.b16 %v3113, %v3113
        %v3118 = vpack.c.b16 %v3114, %v3114
        %v3119 = vpack.c.b16 %v3115, %v3115
        %3124 = vst [vmem:[%s1312] sm:$0xf] %v3116
        %3125 = vst [vmem:[%s1312 + $0x4] sm:$0xf] %v3117
        %3126 = vst [vmem:[%s1312 + $0x8] sm:$0xf] %v3118
        %3127 = vst [vmem:[%s1312 + $0xc] sm:$0xf] %v3119
        %v3128 = vadd.f32 %v3094, %v3097
        %v3129 = vadd.f32 %v3128, %v3102
        %v3130 = vadd.f32 %v3129, %v3105
        %v3131 = vrot.slane %v3130, 4
        %v3132 = vadd.f32 %v3130, %v3131
        %v3133 = vrot.slane %v3132, 2
        %v3134 = vadd.f32 %v3132, %v3133
        %v3135 = vrot.slane %v3134, 1
        %v3136 = vadd.f32 %v3134, %v3135
        %v3137 = vmul.f32 %v3094, %v3094
        %v3138 = vmul.f32 %v3097, %v3097
        %v3139 = vmul.f32 %v3102, %v3102
        %v3140 = vmul.f32 %v3105, %v3105
        %v3141 = vadd.f32 %v3137, %v3138
        %v3142 = vadd.f32 %v3141, %v3139
        %v3143 = vadd.f32 %v3142, %v3140
        %v3144 = vrot.slane %v3143, 4
        %v3145 = vadd.f32 %v3143, %v3144
        %v3146 = vrot.slane %v3145, 2
        %v3147 = vadd.f32 %v3145, %v3146
        %v3148 = vrot.slane %v3147, 1
        %v3149 = vadd.f32 %v3147, %v3148
        %vm3150 = vcmask 1040384
        %v3151 = vsel %vm3150, %v3136, %v3149
        %3152 = vst [vmem:[%s1350] sm:$0x3] %v3151
        %s3153 = sand.u32 %s124, 1
        %s3154 = sand.u32 %s124, 1
        %s3155 = smul.addr %s3154, 16
        %s3156 = scalar_lea.vmem [#allocation3], %s3155
        %p3157 = scmp.lt.s32.totalorder %s21, 3
        %s3158 = scalar_select %p3157, %s21, 3
        %p3159 = scmp.lt.s32.totalorder %s22, 0
        %s3160 = scalar_select %p3159, %s22, 0
        %p3161 = scmp.lt.s32.totalorder %s23, 1
        %s3162 = scalar_select %p3161, %s23, 1
        %s3163 = smul.addr %s3160, 2
        %s3164 = sadd.s32 %s3162, %s3163
        %s3165 = smul.addr %s3158, 2
        %s3166 = sadd.s32 %s3164, %s3165
        %s3167 = smul.addr %s3166, 2
        %s3168 = scalar_lea.vmem %s4, %s3167
        // Predicated region
        $region74: #{generator_forward.6} parent=68 // pred_check
          %p3169 = pneg %p134
        $region75: #{generator_forward.6} parent=68 // pred_check_branch
          %3171 = sbr.rel (%p3169) target = $region77
        $region76: #{generator_forward.6} parent=68 // pred_region
          %s3172 = smul.u32 4, %s22
          %s3173 = smul.addr %s3172, 2
          %s3174 = sadd.s32 %s23, %s3173
          %s3175 = smul.addr %s21, 8
          %s3176 = sadd.s32 %s3174, %s3175
          %s3177 = smul.addr %s3176, 4
          %s3178 = scalar_lea.vmem %s3, %s3177
          // Predicated region
          $region78: #{generator_forward.6} parent=76 // pred_check
            _
          $region79: #{generator_forward.6} parent=76 // pred_check_branch
            %3180 = sbr.rel (0) target = $region81
          $region80: #{generator_forward.6} parent=76 // pred_region
            // Predicated region
            $region82: #{generator_forward.6} parent=80 // pred_check
              _
            $region83: #{generator_forward.6} parent=80 // pred_check_branch
              %3182 = sbr.rel target = $region85
            $region84: #{generator_forward.6} parent=80 // pred_region
              // Predicated region
              $region97: #{generator_forward.6} parent=84 // pred_check
                _
              $region98: #{generator_forward.6} parent=84 // pred_check_branch
                %3203 = sbr.rel (0) target = $region100
              $region99: #{generator_forward.6} parent=84 // pred_region
                loop: start=0, step=1, limit=1
                $region101: #{generator_forward.6} parent=99 // loop_pre_header
                  _
                $region102: #{generator_forward.6} parent=99 // loop_header
                  %s3205 = sphi 0, %s3209
                  %p3206 = scmp.ge.s32.totalorder %s3205, 1
                  %s3210 = sphi %s3156, %s3156
                  %s3211 = sphi %s3178, %s3178
                $region103: #{generator_forward.6} parent=99 // loop_header_branch
                  %3208 = sbr.rel (%p3206) target = $region107
                $region104: #{generator_forward.6} parent=99 // loop_body
                  _
                $region105: #{generator_forward.6} parent=99 // loop_footer
                  %s3209 = sadd.s32 1, %s3205
                $region106: #{generator_forward.6} parent=99 // loop_footer_branch
                  %3204 = sbr.rel target = $region102
                $region107: #{generator_forward.6} parent=99 // loop_exit
                  _
                loop: start=0, step=1, limit=1
                $region108: #{generator_forward.6} parent=99 // loop_pre_header
                  _
                $region109: #{generator_forward.6} parent=99 // loop_header
                  %s3214 = sphi 0, %s3218
                  %p3215 = scmp.ge.s32.totalorder %s3214, 1
                  %s3219 = sphi %s3156, %s3156
                  %s3220 = sphi %s3178, %s3178
                $region110: #{generator_forward.6} parent=99 // loop_header_branch
                  %3217 = sbr.rel (%p3215) target = $region114
                $region111: #{generator_forward.6} parent=99 // loop_body
                  %v3221 = vld [vmem:[%s3219] sm:$0xf]
                  %3222 = vst [vmem:[%s3220] sm:$0xf] %v3221
                  %v3223 = vld [vmem:[%s3219 + $0x4] sm:$0xf]
                  %3224 = vst [vmem:[%s3220 + $0x8] sm:$0xf] %v3223
                  %v3225 = vld [vmem:[%s3219 + $0x8] sm:$0xf]
                  %3226 = vst [vmem:[%s3220 + $0x10] sm:$0xf] %v3225
                  %v3227 = vld [vmem:[%s3219 + $0xc] sm:$0xf]
                  %3228 = vst [vmem:[%s3220 + $0x18] sm:$0xf] %v3227
                $region112: #{generator_forward.6} parent=99 // loop_footer
                  %s3218 = sadd.s32 1, %s3214
                $region113: #{generator_forward.6} parent=99 // loop_footer_branch
                  %3213 = sbr.rel target = $region109
                $region114: #{generator_forward.6} parent=99 // loop_exit
                  _
              $region100: #{generator_forward.6} parent=84 // pred_fallthru
                _
            $region85: #{generator_forward.6} parent=80 // pred_fallthru
              _
            // Predicated region
            $region86: #{generator_forward.6} parent=80 // pred_check
              _
            $region87: #{generator_forward.6} parent=80 // pred_check_branch
              %3184 = sbr.rel (0) target = $region89
            $region88: #{generator_forward.6} parent=80 // pred_region
              loop: start=0, step=1, limit=1
              $region90: #{generator_forward.6} parent=88 // loop_pre_header
                _
              $region91: #{generator_forward.6} parent=88 // loop_header
                %s3187 = sphi 0, %s3191
                %p3188 = scmp.ge.s32.totalorder %s3187, 1
                %s3192 = sphi %s3156, %s3156
                %s3193 = sphi %s3178, %s3178
              $region92: #{generator_forward.6} parent=88 // loop_header_branch
                %3190 = sbr.rel (%p3188) target = $region96
              $region93: #{generator_forward.6} parent=88 // loop_body
                %v3194 = vld [vmem:[%s3192] sm:$0xf]
                %3195 = vst [vmem:[%s3193] sm:$0xf] %v3194
                %v3196 = vld [vmem:[%s3192 + $0x4] sm:$0xf]
                %3197 = vst [vmem:[%s3193 + $0x8] sm:$0xf] %v3196
                %v3198 = vld [vmem:[%s3192 + $0x8] sm:$0xf]
                %3199 = vst [vmem:[%s3193 + $0x10] sm:$0xf] %v3198
                %v3200 = vld [vmem:[%s3192 + $0xc] sm:$0xf]
                %3201 = vst [vmem:[%s3193 + $0x18] sm:$0xf] %v3200
              $region94: #{generator_forward.6} parent=88 // loop_footer
                %s3191 = sadd.s32 1, %s3187
              $region95: #{generator_forward.6} parent=88 // loop_footer_branch
                %3186 = sbr.rel target = $region91
              $region96: #{generator_forward.6} parent=88 // loop_exit
                _
            $region89: #{generator_forward.6} parent=80 // pred_fallthru
              _
          $region81: #{generator_forward.6} parent=76 // pred_fallthru
            _
          %3229 = vnop
        $region77: #{generator_forward.6} parent=68 // pred_fallthru
          _
        // Predicated region
        $region115: #{generator_forward.6} parent=68 // pred_check
          %p3230 = pneg %p164
        $region116: #{generator_forward.6} parent=68 // pred_check_branch
          %3232 = sbr.rel (%p3230) target = $region118
        $region117: #{generator_forward.6} parent=68 // pred_region
          _
        $region118: #{generator_forward.6} parent=68 // pred_fallthru
          _
      $region69: #{generator_forward.6} parent=5 // pred_fallthru
        _
      %p3233 = scmp.le.s32.totalorder 2, %s11
      // Predicated region
      $region119: #{generator_forward.6} parent=5 // pred_check
        %p3234 = pneg %p3233
      $region120: #{generator_forward.6} parent=5 // pred_check_branch
        %3236 = sbr.rel (%p3234) target = $region122
      $region121: #{generator_forward.6} parent=5 // pred_region
        %s3237 = ssub.s32 %s11, 2
        // Predicated region
        $region123: #{generator_forward.6} parent=121 // pred_check
          %p3238 = pneg %p140
        $region124: #{generator_forward.6} parent=121 // pred_check_branch
          %3240 = sbr.rel (%p3238) target = $region126
        $region125: #{generator_forward.6} parent=121 // pred_region
          %s3241 = sand.u32 %s125, 1
          %s3242 = sand.u32 %s125, 1
          %s3243 = smul.addr %s3242, 16
          %s3244 = scalar_lea.vmem [#allocation3], %s3243
        $region126: #{generator_forward.6} parent=121 // pred_fallthru
          _
        // Predicated region
        $region127: #{generator_forward.6} parent=121 // pred_check
          %p3245 = pneg %p170
        $region128: #{generator_forward.6} parent=121 // pred_check_branch
          %3247 = sbr.rel (%p3245) target = $region130
        $region129: #{generator_forward.6} parent=121 // pred_region
          %p3248 = scmp.lt.s32.totalorder %s24, 3
          %s3249 = scalar_select %p3248, %s24, 3
          %p3250 = scmp.lt.s32.totalorder %s25, 0
          %s3251 = scalar_select %p3250, %s25, 0
          %p3252 = scmp.lt.s32.totalorder %s26, 1
          %s3253 = scalar_select %p3252, %s26, 1
          %s3254 = smul.addr %s3251, 2
          %s3255 = sadd.s32 %s3253, %s3254
          %s3256 = smul.addr %s3249, 2
          %s3257 = sadd.s32 %s3255, %s3256
          %s3258 = smul.addr %s3257, 2
          %s3259 = scalar_lea.vmem %s4, %s3258
        $region130: #{generator_forward.6} parent=121 // pred_fallthru
          _
      $region122: #{generator_forward.6} parent=5 // pred_fallthru
        _
    $region6: #{generator_forward.6} parent=1 // loop_footer
      %s15 = sadd.s32 1, %s11
    $region7: #{generator_forward.6} parent=1 // loop_footer_branch
      %10 = sbr.rel target = $region3
    $region8: #{generator_forward.6} parent=1 // loop_exit
      _

// kernel: generator_forward.7
$region0: #{generator_forward.7}
  #allocation0 [shape = 'u32[]', space=smem, size = 0x4, offset = 0x4, fixed_abs, tag = 'smem constant byte address 0x4 - core index']
  #allocation1 [shape = 'u32[144,128]{1,0:T(1,128)}', space=vmem, size = 0x12000, scoped, tag = 'internal scratch']
  %s0 = inlined_call_operand.vmem [shape: f32[1,1024], index: 0, kind: input, shape index: {}]
  %s1 = inlined_call_operand.vmem [shape: bf16[4,128,1024], index: 1, kind: input, shape index: {}]
  %s2 = inlined_call_operand.vmem [shape: bf16[4,1024,128], index: 2, kind: input, shape index: {}]
  %s3 = inlined_call_operand.vmem [shape: bf16[4,128,128], index: 3, kind: output, shape index: {0}]
  %s4 = inlined_call_operand.vmem [shape: f32[4,2,2,128], index: 4, kind: output, shape index: {1}]
  %5 = xla_tuple %s3, %s4
  %s6 = sld [smem:[#allocation0]]
  $region53: #{generator_forward.7} parent=0
    _
  %s8 = ssub.s32 1, %s6
  %s9 = scalar_select 0, %s8, %s6
  loop: start=0, step=1, limit=10
  $region2: #{generator_forward.7} parent=0 // loop_pre_header
    _
  $region3: #{generator_forward.7} parent=0 // loop_header
    %s11 = sphi 0, %s15
    %p12 = scmp.ge.s32.totalorder %s11, 10
    %s18 = sphi 0, %s37
    %s19 = sphi 0, %s33
    %s20 = sphi 0, %s29
    %s21 = sphi 0, %s18
    %s22 = sphi 0, %s19
    %s23 = sphi 0, %s20
    %s24 = sphi 0, %s21
    %s25 = sphi 0, %s22
    %s26 = sphi 0, %s23
    %s38 = sphi 0, %s38
    %s40 = sphi 0, %s38
    %s41 = sphi 0, %s40
    %s55 = sphi 0, %s41
    %s63 = sphi 0, %s65
    %s66 = sphi 0, %s63
    %s67 = sphi 0, %s66
    %s83 = sphi 0, %s67
    %s91 = sphi 0, %s93
    %s94 = sphi 0, %s91
    %s95 = sphi 0, %s94
    %s111 = sphi 0, %s95
    %s121 = sphi 0, %s123
    %s124 = sphi 0, %s121
    %s125 = sphi 0, %s124
    %s141 = sphi 0, %s125
    %s151 = sphi 0, %s153
    %s154 = sphi 0, %s151
    %s155 = sphi 0, %s154
    %s171 = sphi 0, %s155
  $region4: #{generator_forward.7} parent=0 // loop_header_branch
    %14 = sbr.rel (%p12) target = $region8
  $region5: #{generator_forward.7} parent=0 // loop_body
    %s16 = ssub.s32 %s11, 1
    %s17 = ssub.s32 %s11, 2
    %s27 = sadd.s32 1, %s20
    %p28 = scmp.ge.s32.totalorder %s27, 1
    %s29 = scalar_select %p28, 0, %s27
    %s30 = sadd.s32 1, %s19
    %s31 = scalar_select %p28, %s30, %s19
    %p32 = scmp.ge.s32.totalorder %s31, 2
    %s33 = scalar_select %p32, 0, %s31
    %s34 = sadd.s32 1, %s18
    %s35 = scalar_select %p32, %s34, %s18
    %p36 = scmp.ge.s32.totalorder %s35, 4
    %s37 = scalar_select %p36, 0, %s35
    %s39 = sadd.s32 %s38, 1
    %p42 = scmp.eq.s32.totalorder %s11, 7
    %p43 = scmp.ne.s32.totalorder %s38, %s40
    %p44 = scmp.eq.s32.totalorder %s11, 0
    %p45 = por %p43, %p44
    %p46 = scmp.ne.s32.totalorder %s38, %s40
    %p47 = scmp.eq.s32.totalorder %s16, 7
    %p48 = por %p46, %p47
    %p49 = scmp.ne.s32.totalorder %s40, %s41
    %p50 = scmp.eq.s32.totalorder %s16, 0
    %p51 = por %p49, %p50
    %p52 = scmp.ne.s32.totalorder %s40, %s41
    %p53 = scmp.eq.s32.totalorder %s17, 7
    %p54 = por %p52, %p53
    %p56 = scmp.ne.s32.totalorder %s41, %s55
    %p57 = scmp.eq.s32.totalorder %s17, 0
    %p58 = por %p56, %p57
    %s59 = ssub.s32 %s18, %s37
    %s60 = ssub.s32 %s19, %s33
    %s61 = sor.u32 %s59, %s60
    %p62 = scmp.eq.s32.totalorder %s61, 0
    %s64 = sadd.s32 %s63, 1
    %s65 = scalar_select %p62, %s63, %s64
    %p68 = pneg %p62
    %p69 = scmp.eq.s32.totalorder %s11, 7
    %p70 = por %p68, %p69
    %p71 = scmp.ne.s32.totalorder %s63, %s66
    %p72 = scmp.eq.s32.totalorder %s11, 0
    %p73 = por %p71, %p72
    %p74 = scmp.ne.s32.totalorder %s63, %s66
    %p75 = scmp.eq.s32.totalorder %s16, 7
    %p76 = por %p74, %p75
    %p77 = scmp.ne.s32.totalorder %s66, %s67
    %p78 = scmp.eq.s32.totalorder %s16, 0
    %p79 = por %p77, %p78
    %p80 = scmp.ne.s32.totalorder %s66, %s67
    %p81 = scmp.eq.s32.totalorder %s17, 7
    %p82 = por %p80, %p81
    %p84 = scmp.ne.s32.totalorder %s67, %s83
    %p85 = scmp.eq.s32.totalorder %s17, 0
    %p86 = por %p84, %p85
    %s87 = ssub.s32 %s18, %s37
    %s88 = ssub.s32 %s20, %s29
    %s89 = sor.u32 %s87, %s88
    %p90 = scmp.eq.s32.totalorder %s89, 0
    %s92 = sadd.s32 %s91, 1
    %s93 = scalar_select %p90, %s91, %s92
    %p96 = pneg %p90
    %p97 = scmp.eq.s32.totalorder %s11, 7
    %p98 = por %p96, %p97
    %p99 = scmp.ne.s32.totalorder %s91, %s94
    %p100 = scmp.eq.s32.totalorder %s11, 0
    %p101 = por %p99, %p100
    %p102 = scmp.ne.s32.totalorder %s91, %s94
    %p103 = scmp.eq.s32.totalorder %s16, 7
    %p104 = por %p102, %p103
    %p105 = scmp.ne.s32.totalorder %s94, %s95
    %p106 = scmp.eq.s32.totalorder %s16, 0
    %p107 = por %p105, %p106
    %p108 = scmp.ne.s32.totalorder %s94, %s95
    %p109 = scmp.eq.s32.totalorder %s17, 7
    %p110 = por %p108, %p109
    %p112 = scmp.ne.s32.totalorder %s95, %s111
    %p113 = scmp.eq.s32.totalorder %s17, 0
    %p114 = por %p112, %p113
    %s115 = ssub.s32 %s18, %s37
    %s116 = ssub.s32 %s19, %s33
    %s117 = sor.u32 %s115, %s116
    %s118 = ssub.s32 %s20, %s29
    %s119 = sor.u32 %s117, %s118
    %p120 = scmp.eq.s32.totalorder %s119, 0
    %s122 = sadd.s32 %s121, 1
    %s123 = scalar_select %p120, %s121, %s122
    %p126 = pneg %p120
    %p127 = scmp.eq.s32.totalorder %s11, 7
    %p128 = por %p126, %p127
    %p129 = scmp.ne.s32.totalorder %s121, %s124
    %p130 = scmp.eq.s32.totalorder %s11, 0
    %p131 = por %p129, %p130
    %p132 = scmp.ne.s32.totalorder %s121, %s124
    %p133 = scmp.eq.s32.totalorder %s16, 7
    %p134 = por %p132, %p133
    %p135 = scmp.ne.s32.totalorder %s124, %s125
    %p136 = scmp.eq.s32.totalorder %s16, 0
    %p137 = por %p135, %p136
    %p138 = scmp.ne.s32.totalorder %s124, %s125
    %p139 = scmp.eq.s32.totalorder %s17, 7
    %p140 = por %p138, %p139
    %p142 = scmp.ne.s32.totalorder %s125, %s141
    %p143 = scmp.eq.s32.totalorder %s17, 0
    %p144 = por %p142, %p143
    %s145 = ssub.s32 %s18, %s37
    %s146 = ssub.s32 %s19, %s33
    %s147 = sor.u32 %s145, %s146
    %s148 = ssub.s32 %s20, %s29
    %s149 = sor.u32 %s147, %s148
    %p150 = scmp.eq.s32.totalorder %s149, 0
    %s152 = sadd.s32 %s151, 1
    %s153 = scalar_select %p150, %s151, %s152
    %p156 = pneg %p150
    %p157 = scmp.eq.s32.totalorder %s11, 7
    %p158 = por %p156, %p157
    %p159 = scmp.ne.s32.totalorder %s151, %s154
    %p160 = scmp.eq.s32.totalorder %s11, 0
    %p161 = por %p159, %p160
    %p162 = scmp.ne.s32.totalorder %s151, %s154
    %p163 = scmp.eq.s32.totalorder %s16, 7
    %p164 = por %p162, %p163
    %p165 = scmp.ne.s32.totalorder %s154, %s155
    %p166 = scmp.eq.s32.totalorder %s16, 0
    %p167 = por %p165, %p166
    %p168 = scmp.ne.s32.totalorder %s154, %s155
    %p169 = scmp.eq.s32.totalorder %s17, 7
    %p170 = por %p168, %p169
    %p172 = scmp.ne.s32.totalorder %s155, %s171
    %p173 = scmp.eq.s32.totalorder %s17, 0
    %p174 = por %p172, %p173
    %p175 = scmp.le.s32.totalorder 1, %s11
    %p176 = scmp.lt.s32.totalorder %s11, 9
    %p177 = pnand %p175, %p176
    %p178 = pneg %p177
    // Predicated region
    $region9: #{generator_forward.7} parent=5 // pred_check
      _
    $region10: #{generator_forward.7} parent=5 // pred_check_branch
      %180 = sbr.rel (%p177) target = $region12
    $region11: #{generator_forward.7} parent=5 // pred_region
      %s181 = ssub.s32 %s11, 1
      // Predicated region
      $region13: #{generator_forward.7} parent=11 // pred_check
        %p182 = pneg %p51
      $region14: #{generator_forward.7} parent=11 // pred_check_branch
        %184 = sbr.rel (%p182) target = $region16
      $region15: #{generator_forward.7} parent=11 // pred_region
        _
      $region16: #{generator_forward.7} parent=11 // pred_fallthru
        _
    $region12: #{generator_forward.7} parent=5 // pred_fallthru
      _
    %p185 = scmp.lt.s32.totalorder %s11, 8
    // Predicated region
    $region17: #{generator_forward.7} parent=5 // pred_check
      %p186 = pneg %p185
    $region18: #{generator_forward.7} parent=5 // pred_check_branch
      %188 = sbr.rel (%p186) target = $region20
    $region19: #{generator_forward.7} parent=5 // pred_region
      // Predicated region
      $region21: #{generator_forward.7} parent=19 // pred_check
        %p189 = pneg %p73
      $region22: #{generator_forward.7} parent=19 // pred_check_branch
        %191 = sbr.rel (%p189) target = $region24
      $region23: #{generator_forward.7} parent=19 // pred_region
        %s192 = smul.u32 8, %s19
        %p193 = scmp.lt.s32.totalorder %s18, 3
        %s194 = scalar_select %p193, %s18, 3
        %p195 = scmp.lt.s32.totalorder %s192, 15
        %s196 = scalar_select %p195, %s192, 15
        %s197 = smul.addr %s196, 8
        %s198 = smul.addr %s194, 128
        %s199 = sadd.s32 %s197, %s198
        %s200 = smul.addr %s199, 4
        %s201 = scalar_lea.vmem %s1, %s200
        %s202 = smul.u32 8, %s19
      $region24: #{generator_forward.7} parent=19 // pred_fallthru
        _
      // Predicated region
      $region25: #{generator_forward.7} parent=19 // pred_check
        %p203 = pneg %p101
      $region26: #{generator_forward.7} parent=19 // pred_check_branch
        %205 = sbr.rel (%p203) target = $region28
      $region27: #{generator_forward.7} parent=19 // pred_region
        %p206 = scmp.lt.s32.totalorder %s18, 3
        %s207 = scalar_select %p206, %s18, 3
        %p208 = scmp.lt.s32.totalorder %s20, 0
        %s209 = scalar_select %p208, %s20, 0
        %s210 = smul.addr %s207, 128
        %s211 = sadd.s32 %s209, %s210
        %s212 = smul.addr %s211, 4
        %s213 = scalar_lea.vmem %s2, %s212
      $region28: #{generator_forward.7} parent=19 // pred_fallthru
        _
    $region20: #{generator_forward.7} parent=5 // pred_fallthru
      _
    %p214 = scmp.le.s32.totalorder 1, %s11
    %p215 = scmp.lt.s32.totalorder %s11, 9
    %p216 = pnand %p214, %p215
    %p217 = pneg %p216
    // Predicated region
    $region29: #{generator_forward.7} parent=5 // pred_check
      _
    $region30: #{generator_forward.7} parent=5 // pred_check_branch
      %219 = sbr.rel (%p216) target = $region32
    $region31: #{generator_forward.7} parent=5 // pred_region
      %s220 = ssub.s32 %s11, 1
      %p221 = pneg %p51
      %p222 = pneg %p48
      %s223 = smul.u32 8, %s22
      %p224 = scmp.lt.s32.totalorder %s21, 3
      %s225 = scalar_select %p224, %s21, 3
      %p226 = scmp.lt.s32.totalorder %s223, 15
      %s227 = scalar_select %p226, %s223, 15
      %s228 = smul.addr %s227, 8
      %s229 = smul.addr %s225, 128
      %s230 = sadd.s32 %s228, %s229
      %s231 = smul.addr %s230, 4
      %s232 = scalar_lea.vmem %s1, %s231
      %p233 = pneg %p79
      %p234 = pneg %p76
      %p235 = scmp.lt.s32.totalorder %s21, 3
      %s236 = scalar_select %p235, %s21, 3
      %p237 = scmp.lt.s32.totalorder %s23, 0
      %s238 = scalar_select %p237, %s23, 0
      %s239 = smul.addr %s236, 128
      %s240 = sadd.s32 %s238, %s239
      %s241 = smul.addr %s240, 4
      %s242 = scalar_lea.vmem %s2, %s241
      %p243 = pneg %p107
      %p244 = pneg %p104
      %p245 = pneg %p137
      %p246 = pneg %p134
      %s247 = smul.u32 8, %s22
      %p248 = scmp.lt.s32.totalorder %s21, 3
      %s249 = scalar_select %p248, %s21, 3
      %p250 = scmp.lt.s32.totalorder %s247, 15
      %s251 = scalar_select %p250, %s247, 15
      %p252 = scmp.lt.s32.totalorder %s23, 0
      %s253 = scalar_select %p252, %s23, 0
      %s254 = sadd.s32 %s253, %s251
      %s255 = smul.addr %s249, 16
      %s256 = sadd.s32 %s254, %s255
      %s257 = smul.addr %s256, 4
      %s258 = scalar_lea.vmem %s3, %s257
      %p259 = pneg %p167
      %p260 = pneg %p164
      %p261 = scmp.lt.s32.totalorder %s21, 3
      %s262 = scalar_select %p261, %s21, 3
      %p263 = scmp.lt.s32.totalorder %s22, 1
      %s264 = scalar_select %p263, %s22, 1
      %p265 = scmp.lt.s32.totalorder %s23, 0
      %s266 = scalar_select %p265, %s23, 0
      %s267 = sadd.s32 %s266, %s264
      %s268 = smul.addr %s262, 2
      %s269 = sadd.s32 %s267, %s268
      %s270 = smul.addr %s269, 2
      %s271 = scalar_lea.vmem %s4, %s270
      %s272 = smul.u32 8, %s22
      %p273 = scmp.lt.s32.totalorder %s21, 3
      %s274 = scalar_select %p273, %s21, 3
      %p275 = scmp.lt.s32.totalorder %s272, 15
      %s276 = scalar_select %p275, %s272, 15
      %s277 = smul.addr %s276, 8
      %s278 = smul.addr %s274, 128
      %s279 = sadd.s32 %s277, %s278
      %s280 = smul.addr %s279, 4
      %s281 = scalar_lea.vmem %s1, %s280
      %s282 = smul.u32 8, %s22
      %p283 = scmp.lt.s32.totalorder %s21, 3
      %s284 = scalar_select %p283, %s21, 3
      %p285 = scmp.lt.s32.totalorder %s23, 0
      %s286 = scalar_select %p285, %s23, 0
      %s287 = smul.addr %s284, 128
      %s288 = sadd.s32 %s286, %s287
      %s289 = smul.addr %s288, 4
      %s290 = scalar_lea.vmem %s2, %s289
      %s291 = smul.u32 8, %s22
      %p292 = scmp.lt.s32.totalorder %s21, 3
      %s293 = scalar_select %p292, %s21, 3
      %p294 = scmp.lt.s32.totalorder %s291, 15
      %s295 = scalar_select %p294, %s291, 15
      %p296 = scmp.lt.s32.totalorder %s23, 0
      %s297 = scalar_select %p296, %s23, 0
      %s298 = sadd.s32 %s297, %s295
      %s299 = smul.addr %s293, 16
      %s300 = sadd.s32 %s298, %s299
      %s301 = smul.addr %s300, 4
      %s302 = scalar_lea.vmem %s3, %s301
      %s303 = smul.u32 8, %s22
      %p304 = scmp.lt.s32.totalorder %s21, 3
      %s305 = scalar_select %p304, %s21, 3
      %p306 = scmp.lt.s32.totalorder %s22, 1
      %s307 = scalar_select %p306, %s22, 1
      %p308 = scmp.lt.s32.totalorder %s23, 0
      %s309 = scalar_select %p308, %s23, 0
      %s310 = sadd.s32 %s309, %s307
      %s311 = smul.addr %s305, 2
      %s312 = sadd.s32 %s310, %s311
      %s313 = smul.addr %s312, 2
      %s314 = scalar_lea.vmem %s4, %s313
      %v316 = vld [vmem:[%s281] sm:$0xff]
      %v317 = vld [vmem:[%s281 + $0x8] sm:$0xff]
      %v318 = vld [vmem:[%s281 + $0x10] sm:$0xff]
      %v319 = vld [vmem:[%s281 + $0x18] sm:$0xff]
      %v320 = vld [vmem:[%s281 + $0x20] sm:$0xff]
      %v321 = vld [vmem:[%s281 + $0x28] sm:$0xff]
      %v322 = vld [vmem:[%s281 + $0x30] sm:$0xff]
      %v323 = vld [vmem:[%s281 + $0x38] sm:$0xff]
      %v324 = vld [vmem:[%s281 + $0x40] sm:$0xff]
      %v325 = vld [vmem:[%s281 + $0x48] sm:$0xff]
      %v326 = vld [vmem:[%s281 + $0x50] sm:$0xff]
      %v327 = vld [vmem:[%s281 + $0x58] sm:$0xff]
      %v328 = vld [vmem:[%s281 + $0x60] sm:$0xff]
      %v329 = vld [vmem:[%s281 + $0x68] sm:$0xff]
      %v330 = vld [vmem:[%s281 + $0x70] sm:$0xff]
      %v331 = vld [vmem:[%s281 + $0x78] sm:$0xff]
      %v332 = vld [vmem:[%s281 + $0x80] sm:$0xff]
      %v333 = vld [vmem:[%s281 + $0x88] sm:$0xff]
      %v334 = vld [vmem:[%s281 + $0x90] sm:$0xff]
      %v335 = vld [vmem:[%s281 + $0x98] sm:$0xff]
      %v336 = vld [vmem:[%s281 + $0xa0] sm:$0xff]
      %v337 = vld [vmem:[%s281 + $0xa8] sm:$0xff]
      %v338 = vld [vmem:[%s281 + $0xb0] sm:$0xff]
      %v339 = vld [vmem:[%s281 + $0xb8] sm:$0xff]
      %v340 = vld [vmem:[%s281 + $0xc0] sm:$0xff]
      %v341 = vld [vmem:[%s281 + $0xc8] sm:$0xff]
      %v342 = vld [vmem:[%s281 + $0xd0] sm:$0xff]
      %v343 = vld [vmem:[%s281 + $0xd8] sm:$0xff]
      %v344 = vld [vmem:[%s281 + $0xe0] sm:$0xff]
      %v345 = vld [vmem:[%s281 + $0xe8] sm:$0xff]
      %v346 = vld [vmem:[%s281 + $0xf0] sm:$0xff]
      %v347 = vld [vmem:[%s281 + $0xf8] sm:$0xff]
      %v348 = vunpack.c.l.bf16 %v316
      %v349 = vunpack.c.h.bf16 %v316
      %v350 = vunpack.c.l.bf16 %v317
      %v351 = vunpack.c.h.bf16 %v317
      %v352 = vunpack.c.l.bf16 %v318
      %v353 = vunpack.c.h.bf16 %v318
      %v354 = vunpack.c.l.bf16 %v319
      %v355 = vunpack.c.h.bf16 %v319
      %v356 = vunpack.c.l.bf16 %v320
      %v357 = vunpack.c.h.bf16 %v320
      %v358 = vunpack.c.l.bf16 %v321
      %v359 = vunpack.c.h.bf16 %v321
      %v360 = vunpack.c.l.bf16 %v322
      %v361 = vunpack.c.h.bf16 %v322
      %v362 = vunpack.c.l.bf16 %v323
      %v363 = vunpack.c.h.bf16 %v323
      %v364 = vunpack.c.l.bf16 %v324
      %v365 = vunpack.c.h.bf16 %v324
      %v366 = vunpack.c.l.bf16 %v325
      %v367 = vunpack.c.h.bf16 %v325
      %v368 = vunpack.c.l.bf16 %v326
      %v369 = vunpack.c.h.bf16 %v326
      %v370 = vunpack.c.l.bf16 %v327
      %v371 = vunpack.c.h.bf16 %v327
      %v372 = vunpack.c.l.bf16 %v328
      %v373 = vunpack.c.h.bf16 %v328
      %v374 = vunpack.c.l.bf16 %v329
      %v375 = vunpack.c.h.bf16 %v329
      %v376 = vunpack.c.l.bf16 %v330
      %v377 = vunpack.c.h.bf16 %v330
      %v378 = vunpack.c.l.bf16 %v331
      %v379 = vunpack.c.h.bf16 %v331
      %v380 = vunpack.c.l.bf16 %v332
      %v381 = vunpack.c.h.bf16 %v332
      %v382 = vunpack.c.l.bf16 %v333
      %v383 = vunpack.c.h.bf16 %v333
      %v384 = vunpack.c.l.bf16 %v334
      %v385 = vunpack.c.h.bf16 %v334
      %v386 = vunpack.c.l.bf16 %v335
      %v387 = vunpack.c.h.bf16 %v335
      %v388 = vunpack.c.l.bf16 %v336
      %v389 = vunpack.c.h.bf16 %v336
      %v390 = vunpack.c.l.bf16 %v337
      %v391 = vunpack.c.h.bf16 %v337
      %v392 = vunpack.c.l.bf16 %v338
      %v393 = vunpack.c.h.bf16 %v338
      %v394 = vunpack.c.l.bf16 %v339
      %v395 = vunpack.c.h.bf16 %v339
      %v396 = vunpack.c.l.bf16 %v340
      %v397 = vunpack.c.h.bf16 %v340
      %v398 = vunpack.c.l.bf16 %v341
      %v399 = vunpack.c.h.bf16 %v341
      %v400 = vunpack.c.l.bf16 %v342
      %v401 = vunpack.c.h.bf16 %v342
      %v402 = vunpack.c.l.bf16 %v343
      %v403 = vunpack.c.h.bf16 %v343
      %v404 = vunpack.c.l.bf16 %v344
      %v405 = vunpack.c.h.bf16 %v344
      %v406 = vunpack.c.l.bf16 %v345
      %v407 = vunpack.c.h.bf16 %v345
      %v408 = vunpack.c.l.bf16 %v346
      %v409 = vunpack.c.h.bf16 %v346
      %v410 = vunpack.c.l.bf16 %v347
      %v411 = vunpack.c.h.bf16 %v347
      %v412 = vld [vmem:[%s0] sm:$0xff]
      %v414 = vlaneseq
      %v415 = vshrl.u32 %v414, 7
      %v416 = vsub.s32 0, %v415
      %v417 = vrot.slane %v412, %v416
      %v418 = vlaneseq
      %v419 = vshrl.u32 %v418, 7
      %v420 = vsub.s32 1, %v419
      %v421 = vrot.slane %v412, %v420
      %v422 = vlaneseq
      %v423 = vshrl.u32 %v422, 7
      %v424 = vsub.s32 2, %v423
      %v425 = vrot.slane %v412, %v424
      %v426 = vlaneseq
      %v427 = vshrl.u32 %v426, 7
      %v428 = vsub.s32 3, %v427
      %v429 = vrot.slane %v412, %v428
      %v430 = vlaneseq
      %v431 = vshrl.u32 %v430, 7
      %v432 = vsub.s32 4, %v431
      %v433 = vrot.slane %v412, %v432
      %v434 = vlaneseq
      %v435 = vshrl.u32 %v434, 7
      %v436 = vsub.s32 5, %v435
      %v437 = vrot.slane %v412, %v436
      %v438 = vlaneseq
      %v439 = vshrl.u32 %v438, 7
      %v440 = vsub.s32 6, %v439
      %v441 = vrot.slane %v412, %v440
      %v442 = vlaneseq
      %v443 = vshrl.u32 %v442, 7
      %v444 = vsub.s32 7, %v443
      %v445 = vrot.slane %v412, %v444
      %v454 = vmul.f32 %v348, %v417
      %v455 = vmul.f32 %v349, %v421
      %v456 = vmul.f32 %v350, %v425
      %v457 = vmul.f32 %v351, %v429
      %v458 = vmul.f32 %v352, %v433
      %v459 = vmul.f32 %v353, %v437
      %v460 = vmul.f32 %v354, %v441
      %v461 = vmul.f32 %v355, %v445
      %v462 = vmul.f32 %v356, %v417
      %v463 = vmul.f32 %v357, %v421
      %v464 = vmul.f32 %v358, %v425
      %v465 = vmul.f32 %v359, %v429
      %v466 = vmul.f32 %v360, %v433
      %v467 = vmul.f32 %v361, %v437
      %v468 = vmul.f32 %v362, %v441
      %v469 = vmul.f32 %v363, %v445
      %v470 = vmul.f32 %v364, %v417
      %v471 = vmul.f32 %v365, %v421
      %v472 = vmul.f32 %v366, %v425
      %v473 = vmul.f32 %v367, %v429
      %v474 = vmul.f32 %v368, %v433
      %v475 = vmul.f32 %v369, %v437
      %v476 = vmul.f32 %v370, %v441
      %v477 = vmul.f32 %v371, %v445
      %v478 = vmul.f32 %v372, %v417
      %v479 = vmul.f32 %v373, %v421
      %v480 = vmul.f32 %v374, %v425
      %v481 = vmul.f32 %v375, %v429
      %v482 = vmul.f32 %v376, %v433
      %v483 = vmul.f32 %v377, %v437
      %v484 = vmul.f32 %v378, %v441
      %v485 = vmul.f32 %v379, %v445
      %v486 = vmul.f32 %v380, %v417
      %v487 = vmul.f32 %v381, %v421
      %v488 = vmul.f32 %v382, %v425
      %v489 = vmul.f32 %v383, %v429
      %v490 = vmul.f32 %v384, %v433
      %v491 = vmul.f32 %v385, %v437
      %v492 = vmul.f32 %v386, %v441
      %v493 = vmul.f32 %v387, %v445
      %v494 = vmul.f32 %v388, %v417
      %v495 = vmul.f32 %v389, %v421
      %v496 = vmul.f32 %v390, %v425
      %v497 = vmul.f32 %v391, %v429
      %v498 = vmul.f32 %v392, %v433
      %v499 = vmul.f32 %v393, %v437
      %v500 = vmul.f32 %v394, %v441
      %v501 = vmul.f32 %v395, %v445
      %v502 = vmul.f32 %v396, %v417
      %v503 = vmul.f32 %v397, %v421
      %v504 = vmul.f32 %v398, %v425
      %v505 = vmul.f32 %v399, %v429
      %v506 = vmul.f32 %v400, %v433
      %v507 = vmul.f32 %v401, %v437
      %v508 = vmul.f32 %v402, %v441
      %v509 = vmul.f32 %v403, %v445
      %v510 = vmul.f32 %v404, %v417
      %v511 = vmul.f32 %v405, %v421
      %v512 = vmul.f32 %v406, %v425
      %v513 = vmul.f32 %v407, %v429
      %v514 = vmul.f32 %v408, %v433
      %v515 = vmul.f32 %v409, %v437
      %v516 = vmul.f32 %v410, %v441
      %v517 = vmul.f32 %v411, %v445
      %v518 = vmax.f32 %v454, 0.0
      %v519 = vmax.f32 %v455, 0.0
      %v520 = vmax.f32 %v456, 0.0
      %v521 = vmax.f32 %v457, 0.0
      %v522 = vmax.f32 %v458, 0.0
      %v523 = vmax.f32 %v459, 0.0
      %v524 = vmax.f32 %v460, 0.0
      %v525 = vmax.f32 %v461, 0.0
      %v526 = vmax.f32 %v462, 0.0
      %v527 = vmax.f32 %v463, 0.0
      %v528 = vmax.f32 %v464, 0.0
      %v529 = vmax.f32 %v465, 0.0
      %v530 = vmax.f32 %v466, 0.0
      %v531 = vmax.f32 %v467, 0.0
      %v532 = vmax.f32 %v468, 0.0
      %v533 = vmax.f32 %v469, 0.0
      %v534 = vmax.f32 %v470, 0.0
      %v535 = vmax.f32 %v471, 0.0
      %v536 = vmax.f32 %v472, 0.0
      %v537 = vmax.f32 %v473, 0.0
      %v538 = vmax.f32 %v474, 0.0
      %v539 = vmax.f32 %v475, 0.0
      %v540 = vmax.f32 %v476, 0.0
      %v541 = vmax.f32 %v477, 0.0
      %v542 = vmax.f32 %v478, 0.0
      %v543 = vmax.f32 %v479, 0.0
      %v544 = vmax.f32 %v480, 0.0
      %v545 = vmax.f32 %v481, 0.0
      %v546 = vmax.f32 %v482, 0.0
      %v547 = vmax.f32 %v483, 0.0
      %v548 = vmax.f32 %v484, 0.0
      %v549 = vmax.f32 %v485, 0.0
      %v550 = vmax.f32 %v486, 0.0
      %v551 = vmax.f32 %v487, 0.0
      %v552 = vmax.f32 %v488, 0.0
      %v553 = vmax.f32 %v489, 0.0
      %v554 = vmax.f32 %v490, 0.0
      %v555 = vmax.f32 %v491, 0.0
      %v556 = vmax.f32 %v492, 0.0
      %v557 = vmax.f32 %v493, 0.0
      %v558 = vmax.f32 %v494, 0.0
      %v559 = vmax.f32 %v495, 0.0
      %v560 = vmax.f32 %v496, 0.0
      %v561 = vmax.f32 %v497, 0.0
      %v562 = vmax.f32 %v498, 0.0
      %v563 = vmax.f32 %v499, 0.0
      %v564 = vmax.f32 %v500, 0.0
      %v565 = vmax.f32 %v501, 0.0
      %v566 = vmax.f32 %v502, 0.0
      %v567 = vmax.f32 %v503, 0.0
      %v568 = vmax.f32 %v504, 0.0
      %v569 = vmax.f32 %v505, 0.0
      %v570 = vmax.f32 %v506, 0.0
      %v571 = vmax.f32 %v507, 0.0
      %v572 = vmax.f32 %v508, 0.0
      %v573 = vmax.f32 %v509, 0.0
      %v574 = vmax.f32 %v510, 0.0
      %v575 = vmax.f32 %v511, 0.0
      %v576 = vmax.f32 %v512, 0.0
      %v577 = vmax.f32 %v513, 0.0
      %v578 = vmax.f32 %v514, 0.0
      %v579 = vmax.f32 %v515, 0.0
      %v580 = vmax.f32 %v516, 0.0
      %v581 = vmax.f32 %v517, 0.0
      %v582 = vpack.c.bf16 %v526, %v518
      %v583 = vpack.c.bf16 %v527, %v519
      %v584 = vpack.c.bf16 %v528, %v520
      %v585 = vpack.c.bf16 %v529, %v521
      %v586 = vpack.c.bf16 %v530, %v522
      %v587 = vpack.c.bf16 %v531, %v523
      %v588 = vpack.c.bf16 %v532, %v524
      %v589 = vpack.c.bf16 %v533, %v525
      %v590 = vpack.c.bf16 %v542, %v534
      %v591 = vpack.c.bf16 %v543, %v535
      %v592 = vpack.c.bf16 %v544, %v536
      %v593 = vpack.c.bf16 %v545, %v537
      %v594 = vpack.c.bf16 %v546, %v538
      %v595 = vpack.c.bf16 %v547, %v539
      %v596 = vpack.c.bf16 %v548, %v540
      %v597 = vpack.c.bf16 %v549, %v541
      %v598 = vpack.c.bf16 %v558, %v550
      %v599 = vpack.c.bf16 %v559, %v551
      %v600 = vpack.c.bf16 %v560, %v552
      %v601 = vpack.c.bf16 %v561, %v553
      %v602 = vpack.c.bf16 %v562, %v554
      %v603 = vpack.c.bf16 %v563, %v555
      %v604 = vpack.c.bf16 %v564, %v556
      %v605 = vpack.c.bf16 %v565, %v557
      %v606 = vpack.c.bf16 %v574, %v566
      %v607 = vpack.c.bf16 %v575, %v567
      %v608 = vpack.c.bf16 %v576, %v568
      %v609 = vpack.c.bf16 %v577, %v569
      %v610 = vpack.c.bf16 %v578, %v570
      %v611 = vpack.c.bf16 %v579, %v571
      %v612 = vpack.c.bf16 %v580, %v572
      %v613 = vpack.c.bf16 %v581, %v573
      %v614 = vld [vmem:[%s290] sm:$0xf]
      %v615 = vld [vmem:[%s290 + $0x4] sm:$0xf]
      %v616 = vld [vmem:[%s290 + $0x8] sm:$0xf]
      %v617 = vld [vmem:[%s290 + $0xc] sm:$0xf]
      %v618 = vld [vmem:[%s290 + $0x10] sm:$0xf]
      %v619 = vld [vmem:[%s290 + $0x14] sm:$0xf]
      %v620 = vld [vmem:[%s290 + $0x18] sm:$0xf]
      %v621 = vld [vmem:[%s290 + $0x1c] sm:$0xf]
      %v622 = vld [vmem:[%s290 + $0x20] sm:$0xf]
      %v623 = vld [vmem:[%s290 + $0x24] sm:$0xf]
      %v624 = vld [vmem:[%s290 + $0x28] sm:$0xf]
      %v625 = vld [vmem:[%s290 + $0x2c] sm:$0xf]
      %v626 = vld [vmem:[%s290 + $0x30] sm:$0xf]
      %v627 = vld [vmem:[%s290 + $0x34] sm:$0xf]
      %v628 = vld [vmem:[%s290 + $0x38] sm:$0xf]
      %v629 = vld [vmem:[%s290 + $0x3c] sm:$0xf]
      %v630 = vld [vmem:[%s290 + $0x40] sm:$0xf]
      %v631 = vld [vmem:[%s290 + $0x44] sm:$0xf]
      %v632 = vld [vmem:[%s290 + $0x48] sm:$0xf]
      %v633 = vld [vmem:[%s290 + $0x4c] sm:$0xf]
      %v634 = vld [vmem:[%s290 + $0x50] sm:$0xf]
      %v635 = vld [vmem:[%s290 + $0x54] sm:$0xf]
      %v636 = vld [vmem:[%s290 + $0x58] sm:$0xf]
      %v637 = vld [vmem:[%s290 + $0x5c] sm:$0xf]
      %v638 = vld [vmem:[%s290 + $0x60] sm:$0xf]
      %v639 = vld [vmem:[%s290 + $0x64] sm:$0xf]
      %v640 = vld [vmem:[%s290 + $0x68] sm:$0xf]
      %v641 = vld [vmem:[%s290 + $0x6c] sm:$0xf]
      %v642 = vld [vmem:[%s290 + $0x70] sm:$0xf]
      %v643 = vld [vmem:[%s290 + $0x74] sm:$0xf]
      %v644 = vld [vmem:[%s290 + $0x78] sm:$0xf]
      %v645 = vld [vmem:[%s290 + $0x7c] sm:$0xf]
      %v646 = vld [vmem:[%s290 + $0x80] sm:$0xf]
      %v647 = vld [vmem:[%s290 + $0x84] sm:$0xf]
      %v648 = vld [vmem:[%s290 + $0x88] sm:$0xf]
      %v649 = vld [vmem:[%s290 + $0x8c] sm:$0xf]
      %v650 = vld [vmem:[%s290 + $0x90] sm:$0xf]
      %v651 = vld [vmem:[%s290 + $0x94] sm:$0xf]
      %v652 = vld [vmem:[%s290 + $0x98] sm:$0xf]
      %v653 = vld [vmem:[%s290 + $0x9c] sm:$0xf]
      %v654 = vld [vmem:[%s290 + $0xa0] sm:$0xf]
      %v655 = vld [vmem:[%s290 + $0xa4] sm:$0xf]
      %v656 = vld [vmem:[%s290 + $0xa8] sm:$0xf]
      %v657 = vld [vmem:[%s290 + $0xac] sm:$0xf]
      %v658 = vld [vmem:[%s290 + $0xb0] sm:$0xf]
      %v659 = vld [vmem:[%s290 + $0xb4] sm:$0xf]
      %v660 = vld [vmem:[%s290 + $0xb8] sm:$0xf]
      %v661 = vld [vmem:[%s290 + $0xbc] sm:$0xf]
      %v662 = vld [vmem:[%s290 + $0xc0] sm:$0xf]
      %v663 = vld [vmem:[%s290 + $0xc4] sm:$0xf]
      %v664 = vld [vmem:[%s290 + $0xc8] sm:$0xf]
      %v665 = vld [vmem:[%s290 + $0xcc] sm:$0xf]
      %v666 = vld [vmem:[%s290 + $0xd0] sm:$0xf]
      %v667 = vld [vmem:[%s290 + $0xd4] sm:$0xf]
      %v668 = vld [vmem:[%s290 + $0xd8] sm:$0xf]
      %v669 = vld [vmem:[%s290 + $0xdc] sm:$0xf]
      %v670 = vld [vmem:[%s290 + $0xe0] sm:$0xf]
      %v671 = vld [vmem:[%s290 + $0xe4] sm:$0xf]
      %v672 = vld [vmem:[%s290 + $0xe8] sm:$0xf]
      %v673 = vld [vmem:[%s290 + $0xec] sm:$0xf]
      %v674 = vld [vmem:[%s290 + $0xf0] sm:$0xf]
      %v675 = vld [vmem:[%s290 + $0xf4] sm:$0xf]
      %v676 = vld [vmem:[%s290 + $0xf8] sm:$0xf]
      %v677 = vld [vmem:[%s290 + $0xfc] sm:$0xf]
      %v678 = vld [vmem:[%s290 + $0x100] sm:$0xf]
      %v679 = vld [vmem:[%s290 + $0x104] sm:$0xf]
      %v680 = vld [vmem:[%s290 + $0x108] sm:$0xf]
      %v681 = vld [vmem:[%s290 + $0x10c] sm:$0xf]
      %v682 = vld [vmem:[%s290 + $0x110] sm:$0xf]
      %v683 = vld [vmem:[%s290 + $0x114] sm:$0xf]
      %v684 = vld [vmem:[%s290 + $0x118] sm:$0xf]
      %v685 = vld [vmem:[%s290 + $0x11c] sm:$0xf]
      %v686 = vld [vmem:[%s290 + $0x120] sm:$0xf]
      %v687 = vld [vmem:[%s290 + $0x124] sm:$0xf]
      %v688 = vld [vmem:[%s290 + $0x128] sm:$0xf]
      %v689 = vld [vmem:[%s290 + $0x12c] sm:$0xf]
      %v690 = vld [vmem:[%s290 + $0x130] sm:$0xf]
      %v691 = vld [vmem:[%s290 + $0x134] sm:$0xf]
      %v692 = vld [vmem:[%s290 + $0x138] sm:$0xf]
      %v693 = vld [vmem:[%s290 + $0x13c] sm:$0xf]
      %v694 = vld [vmem:[%s290 + $0x140] sm:$0xf]
      %v695 = vld [vmem:[%s290 + $0x144] sm:$0xf]
      %v696 = vld [vmem:[%s290 + $0x148] sm:$0xf]
      %v697 = vld [vmem:[%s290 + $0x14c] sm:$0xf]
      %v698 = vld [vmem:[%s290 + $0x150] sm:$0xf]
      %v699 = vld [vmem:[%s290 + $0x154] sm:$0xf]
      %v700 = vld [vmem:[%s290 + $0x158] sm:$0xf]
      %v701 = vld [vmem:[%s290 + $0x15c] sm:$0xf]
      %v702 = vld [vmem:[%s290 + $0x160] sm:$0xf]
      %v703 = vld [vmem:[%s290 + $0x164] sm:$0xf]
      %v704 = vld [vmem:[%s290 + $0x168] sm:$0xf]
      %v705 = vld [vmem:[%s290 + $0x16c] sm:$0xf]
      %v706 = vld [vmem:[%s290 + $0x170] sm:$0xf]
      %v707 = vld [vmem:[%s290 + $0x174] sm:$0xf]
      %v708 = vld [vmem:[%s290 + $0x178] sm:$0xf]
      %v709 = vld [vmem:[%s290 + $0x17c] sm:$0xf]
      %v710 = vld [vmem:[%s290 + $0x180] sm:$0xf]
      %v711 = vld [vmem:[%s290 + $0x184] sm:$0xf]
      %v712 = vld [vmem:[%s290 + $0x188] sm:$0xf]
      %v713 = vld [vmem:[%s290 + $0x18c] sm:$0xf]
      %v714 = vld [vmem:[%s290 + $0x190] sm:$0xf]
      %v715 = vld [vmem:[%s290 + $0x194] sm:$0xf]
      %v716 = vld [vmem:[%s290 + $0x198] sm:$0xf]
      %v717 = vld [vmem:[%s290 + $0x19c] sm:$0xf]
      %v718 = vld [vmem:[%s290 + $0x1a0] sm:$0xf]
      %v719 = vld [vmem:[%s290 + $0x1a4] sm:$0xf]
      %v720 = vld [vmem:[%s290 + $0x1a8] sm:$0xf]
      %v721 = vld [vmem:[%s290 + $0x1ac] sm:$0xf]
      %v722 = vld [vmem:[%s290 + $0x1b0] sm:$0xf]
      %v723 = vld [vmem:[%s290 + $0x1b4] sm:$0xf]
      %v724 = vld [vmem:[%s290 + $0x1b8] sm:$0xf]
      %v725 = vld [vmem:[%s290 + $0x1bc] sm:$0xf]
      %v726 = vld [vmem:[%s290 + $0x1c0] sm:$0xf]
      %v727 = vld [vmem:[%s290 + $0x1c4] sm:$0xf]
      %v728 = vld [vmem:[%s290 + $0x1c8] sm:$0xf]
      %v729 = vld [vmem:[%s290 + $0x1cc] sm:$0xf]
      %v730 = vld [vmem:[%s290 + $0x1d0] sm:$0xf]
      %v731 = vld [vmem:[%s290 + $0x1d4] sm:$0xf]
      %v732 = vld [vmem:[%s290 + $0x1d8] sm:$0xf]
      %v733 = vld [vmem:[%s290 + $0x1dc] sm:$0xf]
      %v734 = vld [vmem:[%s290 + $0x1e0] sm:$0xf]
      %v735 = vld [vmem:[%s290 + $0x1e4] sm:$0xf]
      %v736 = vld [vmem:[%s290 + $0x1e8] sm:$0xf]
      %v737 = vld [vmem:[%s290 + $0x1ec] sm:$0xf]
      %v738 = vld [vmem:[%s290 + $0x1f0] sm:$0xf]
      %v739 = vld [vmem:[%s290 + $0x1f4] sm:$0xf]
      %v740 = vld [vmem:[%s290 + $0x1f8] sm:$0xf]
      %v741 = vld [vmem:[%s290 + $0x1fc] sm:$0xf]
      %v870 = vunpack.c.l.b16 %v614
      %v871 = vunpack.c.l.b16 %v615
      %v872 = vunpack.c.l.b16 %v616
      %v873 = vunpack.c.l.b16 %v617
      %v874 = vunpack.c.l.b16 %v618
      %v875 = vunpack.c.l.b16 %v619
      %v876 = vunpack.c.l.b16 %v620
      %v877 = vunpack.c.l.b16 %v621
      %v878 = vunpack.c.l.b16 %v622
      %v879 = vunpack.c.l.b16 %v623
      %v880 = vunpack.c.l.b16 %v624
      %v881 = vunpack.c.l.b16 %v625
      %v882 = vunpack.c.l.b16 %v626
      %v883 = vunpack.c.l.b16 %v627
      %v884 = vunpack.c.l.b16 %v628
      %v885 = vunpack.c.l.b16 %v629
      %v886 = vunpack.c.l.b16 %v630
      %v887 = vunpack.c.l.b16 %v631
      %v888 = vunpack.c.l.b16 %v632
      %v889 = vunpack.c.l.b16 %v633
      %v890 = vunpack.c.l.b16 %v634
      %v891 = vunpack.c.l.b16 %v635
      %v892 = vunpack.c.l.b16 %v636
      %v893 = vunpack.c.l.b16 %v637
      %v894 = vunpack.c.l.b16 %v638
      %v895 = vunpack.c.l.b16 %v639
      %v896 = vunpack.c.l.b16 %v640
      %v897 = vunpack.c.l.b16 %v641
      %v898 = vunpack.c.l.b16 %v642
      %v899 = vunpack.c.l.b16 %v643
      %v900 = vunpack.c.l.b16 %v644
      %v901 = vunpack.c.l.b16 %v645
      %v902 = vunpack.c.l.b16 %v646
      %v903 = vunpack.c.l.b16 %v647
      %v904 = vunpack.c.l.b16 %v648
      %v905 = vunpack.c.l.b16 %v649
      %v906 = vunpack.c.l.b16 %v650
      %v907 = vunpack.c.l.b16 %v651
      %v908 = vunpack.c.l.b16 %v652
      %v909 = vunpack.c.l.b16 %v653
      %v910 = vunpack.c.l.b16 %v654
      %v911 = vunpack.c.l.b16 %v655
      %v912 = vunpack.c.l.b16 %v656
      %v913 = vunpack.c.l.b16 %v657
      %v914 = vunpack.c.l.b16 %v658
      %v915 = vunpack.c.l.b16 %v659
      %v916 = vunpack.c.l.b16 %v660
      %v917 = vunpack.c.l.b16 %v661
      %v918 = vunpack.c.l.b16 %v662
      %v919 = vunpack.c.l.b16 %v663
      %v920 = vunpack.c.l.b16 %v664
      %v921 = vunpack.c.l.b16 %v665
      %v922 = vunpack.c.l.b16 %v666
      %v923 = vunpack.c.l.b16 %v667
      %v924 = vunpack.c.l.b16 %v668
      %v925 = vunpack.c.l.b16 %v669
      %v926 = vunpack.c.l.b16 %v670
      %v927 = vunpack.c.l.b16 %v671
      %v928 = vunpack.c.l.b16 %v672
      %v929 = vunpack.c.l.b16 %v673
      %v930 = vunpack.c.l.b16 %v674
      %v931 = vunpack.c.l.b16 %v675
      %v932 = vunpack.c.l.b16 %v676
      %v933 = vunpack.c.l.b16 %v677
      %v934 = vunpack.c.l.b16 %v678
      %v935 = vunpack.c.l.b16 %v679
      %v936 = vunpack.c.l.b16 %v680
      %v937 = vunpack.c.l.b16 %v681
      %v938 = vunpack.c.l.b16 %v682
      %v939 = vunpack.c.l.b16 %v683
      %v940 = vunpack.c.l.b16 %v684
      %v941 = vunpack.c.l.b16 %v685
      %v942 = vunpack.c.l.b16 %v686
      %v943 = vunpack.c.l.b16 %v687
      %v944 = vunpack.c.l.b16 %v688
      %v945 = vunpack.c.l.b16 %v689
      %v946 = vunpack.c.l.b16 %v690
      %v947 = vunpack.c.l.b16 %v691
      %v948 = vunpack.c.l.b16 %v692
      %v949 = vunpack.c.l.b16 %v693
      %v950 = vunpack.c.l.b16 %v694
      %v951 = vunpack.c.l.b16 %v695
      %v952 = vunpack.c.l.b16 %v696
      %v953 = vunpack.c.l.b16 %v697
      %v954 = vunpack.c.l.b16 %v698
      %v955 = vunpack.c.l.b16 %v699
      %v956 = vunpack.c.l.b16 %v700
      %v957 = vunpack.c.l.b16 %v701
      %v958 = vunpack.c.l.b16 %v702
      %v959 = vunpack.c.l.b16 %v703
      %v960 = vunpack.c.l.b16 %v704
      %v961 = vunpack.c.l.b16 %v705
      %v962 = vunpack.c.l.b16 %v706
      %v963 = vunpack.c.l.b16 %v707
      %v964 = vunpack.c.l.b16 %v708
      %v965 = vunpack.c.l.b16 %v709
      %v966 = vunpack.c.l.b16 %v710
      %v967 = vunpack.c.l.b16 %v711
      %v968 = vunpack.c.l.b16 %v712
      %v969 = vunpack.c.l.b16 %v713
      %v970 = vunpack.c.l.b16 %v714
      %v971 = vunpack.c.l.b16 %v715
      %v972 = vunpack.c.l.b16 %v716
      %v973 = vunpack.c.l.b16 %v717
      %v974 = vunpack.c.l.b16 %v718
      %v975 = vunpack.c.l.b16 %v719
      %v976 = vunpack.c.l.b16 %v720
      %v977 = vunpack.c.l.b16 %v721
      %v978 = vunpack.c.l.b16 %v722
      %v979 = vunpack.c.l.b16 %v723
      %v980 = vunpack.c.l.b16 %v724
      %v981 = vunpack.c.l.b16 %v725
      %v982 = vunpack.c.l.b16 %v726
      %v983 = vunpack.c.l.b16 %v727
      %v984 = vunpack.c.l.b16 %v728
      %v985 = vunpack.c.l.b16 %v729
      %v986 = vunpack.c.l.b16 %v730
      %v987 = vunpack.c.l.b16 %v731
      %v988 = vunpack.c.l.b16 %v732
      %v989 = vunpack.c.l.b16 %v733
      %v990 = vunpack.c.l.b16 %v734
      %v991 = vunpack.c.l.b16 %v735
      %v992 = vunpack.c.l.b16 %v736
      %v993 = vunpack.c.l.b16 %v737
      %v994 = vunpack.c.l.b16 %v738
      %v995 = vunpack.c.l.b16 %v739
      %v996 = vunpack.c.l.b16 %v740
      %v997 = vunpack.c.l.b16 %v741
      %v998 = vpack.c.b16 %v871, %v870
      %v999 = vpack.c.b16 %v873, %v872
      %v1000 = vpack.c.b16 %v875, %v874
      %v1001 = vpack.c.b16 %v877, %v876
      %v1002 = vpack.c.b16 %v879, %v878
      %v1003 = vpack.c.b16 %v881, %v880
      %v1004 = vpack.c.b16 %v883, %v882
      %v1005 = vpack.c.b16 %v885, %v884
      %v1006 = vpack.c.b16 %v887, %v886
      %v1007 = vpack.c.b16 %v889, %v888
      %v1008 = vpack.c.b16 %v891, %v890
      %v1009 = vpack.c.b16 %v893, %v892
      %v1010 = vpack.c.b16 %v895, %v894
      %v1011 = vpack.c.b16 %v897, %v896
      %v1012 = vpack.c.b16 %v899, %v898
      %v1013 = vpack.c.b16 %v901, %v900
      %v1014 = vpack.c.b16 %v903, %v902
      %v1015 = vpack.c.b16 %v905, %v904
      %v1016 = vpack.c.b16 %v907, %v906
      %v1017 = vpack.c.b16 %v909, %v908
      %v1018 = vpack.c.b16 %v911, %v910
      %v1019 = vpack.c.b16 %v913, %v912
      %v1020 = vpack.c.b16 %v915, %v914
      %v1021 = vpack.c.b16 %v917, %v916
      %v1022 = vpack.c.b16 %v919, %v918
      %v1023 = vpack.c.b16 %v921, %v920
      %v1024 = vpack.c.b16 %v923, %v922
      %v1025 = vpack.c.b16 %v925, %v924
      %v1026 = vpack.c.b16 %v927, %v926
      %v1027 = vpack.c.b16 %v929, %v928
      %v1028 = vpack.c.b16 %v931, %v930
      %v1029 = vpack.c.b16 %v933, %v932
      %v1030 = vpack.c.b16 %v935, %v934
      %v1031 = vpack.c.b16 %v937, %v936
      %v1032 = vpack.c.b16 %v939, %v938
      %v1033 = vpack.c.b16 %v941, %v940
      %v1034 = vpack.c.b16 %v943, %v942
      %v1035 = vpack.c.b16 %v945, %v944
      %v1036 = vpack.c.b16 %v947, %v946
      %v1037 = vpack.c.b16 %v949, %v948
      %v1038 = vpack.c.b16 %v951, %v950
      %v1039 = vpack.c.b16 %v953, %v952
      %v1040 = vpack.c.b16 %v955, %v954
      %v1041 = vpack.c.b16 %v957, %v956
      %v1042 = vpack.c.b16 %v959, %v958
      %v1043 = vpack.c.b16 %v961, %v960
      %v1044 = vpack.c.b16 %v963, %v962
      %v1045 = vpack.c.b16 %v965, %v964
      %v1046 = vpack.c.b16 %v967, %v966
      %v1047 = vpack.c.b16 %v969, %v968
      %v1048 = vpack.c.b16 %v971, %v970
      %v1049 = vpack.c.b16 %v973, %v972
      %v1050 = vpack.c.b16 %v975, %v974
      %v1051 = vpack.c.b16 %v977, %v976
      %v1052 = vpack.c.b16 %v979, %v978
      %v1053 = vpack.c.b16 %v981, %v980
      %v1054 = vpack.c.b16 %v983, %v982
      %v1055 = vpack.c.b16 %v985, %v984
      %v1056 = vpack.c.b16 %v987, %v986
      %v1057 = vpack.c.b16 %v989, %v988
      %v1058 = vpack.c.b16 %v991, %v990
      %v1059 = vpack.c.b16 %v993, %v992
      %v1060 = vpack.c.b16 %v995, %v994
      %v1061 = vpack.c.b16 %v997, %v996
      %1126 = vmatprep.subr.bf16.mxu0 0
      %1127 = vmatpush1.bf16.msra.mxu0 %v998
      %1128 = vmatprep.subr.bf16.mxu0 0
      %1129 = vmatpush1.bf16.msra.mxu0 %v999
      %1130 = vmatprep.subr.bf16.mxu0 0
      %1131 = vmatpush1.bf16.msra.mxu0 %v1000
      %1132 = vmatprep.subr.bf16.mxu0 0
      %1133 = vmatpush1.bf16.msra.mxu0 %v1001
      %1134 = vmatprep.subr.bf16.mxu0 0
      %1135 = vmatpush1.bf16.msra.mxu0 %v1002
      %1136 = vmatprep.subr.bf16.mxu0 0
      %1137 = vmatpush1.bf16.msra.mxu0 %v1003
      %1138 = vmatprep.subr.bf16.mxu0 0
      %1139 = vmatpush1.bf16.msra.mxu0 %v1004
      %1140 = vmatprep.subr.bf16.mxu0 0
      %1141 = vmatpush1.bf16.msra.mxu0 %v1005
      %1142 = vmatprep.subr.bf16.mxu0 0
      %1143 = vmatpush1.bf16.msra.mxu0 %v1006
      %1144 = vmatprep.subr.bf16.mxu0 0
      %1145 = vmatpush1.bf16.msra.mxu0 %v1007
      %1146 = vmatprep.subr.bf16.mxu0 0
      %1147 = vmatpush1.bf16.msra.mxu0 %v1008
      %1148 = vmatprep.subr.bf16.mxu0 0
      %1149 = vmatpush1.bf16.msra.mxu0 %v1009
      %1150 = vmatprep.subr.bf16.mxu0 0
      %1151 = vmatpush1.bf16.msra.mxu0 %v1010
      %1152 = vmatprep.subr.bf16.mxu0 0
      %1153 = vmatpush1.bf16.msra.mxu0 %v1011
      %1154 = vmatprep.subr.bf16.mxu0 0
      %1155 = vmatpush1.bf16.msra.mxu0 %v1012
      %1156 = vmatprep.subr.bf16.mxu0 0
      %1157 = vmatpush1.bf16.msra.mxu0 %v1013
      %1158 = vmatprep.mubr.bf16.mxu0 %v583
      %1159 = vmatmul.mubr.bf16.gmra.mrb[0].mxu0 %v582
      %v1160 = vpop.f32.mrb[0].mxu0
      %v1161 = vadd.f32 0.0, %v1160
      %v1162 = vpop.f32.mrb[0].mxu0
      %v1163 = vpop.f32.mrb[0].mxu0
      %v1164 = vadd.f32 0.0, %v1163
      %v1165 = vpop.f32.mrb[0].mxu0
      %1166 = vmatprep.mubr.bf16.mxu0 %v591
      %1167 = vmatmul.mubr.bf16.gmra.mrb[0].mxu0 %v590
      %v1168 = vpop.f32.mrb[0].mxu0
      %v1169 = vadd.f32 0.0, %v1168
      %v1170 = vpop.f32.mrb[0].mxu0
      %v1171 = vpop.f32.mrb[0].mxu0
      %v1172 = vadd.f32 0.0, %v1171
      %v1173 = vpop.f32.mrb[0].mxu0
      %1174 = vmatprep.mubr.bf16.mxu0 %v599
      %1175 = vmatmul.mubr.bf16.gmra.mrb[0].mxu0 %v598
      %v1176 = vpop.f32.mrb[0].mxu0
      %v1177 = vadd.f32 0.0, %v1176
      %v1178 = vpop.f32.mrb[0].mxu0
      %v1179 = vpop.f32.mrb[0].mxu0
      %v1180 = vadd.f32 0.0, %v1179
      %v1181 = vpop.f32.mrb[0].mxu0
      %1182 = vmatprep.mubr.bf16.mxu0 %v607
      %1183 = vmatmul.mubr.bf16.gmra.mrb[0].mxu0 %v606
      %v1184 = vpop.f32.mrb[0].mxu0
      %v1185 = vadd.f32 0.0, %v1184
      %v1186 = vpop.f32.mrb[0].mxu0
      %v1187 = vpop.f32.mrb[0].mxu0
      %v1188 = vadd.f32 0.0, %v1187
      %v1189 = vpop.f32.mrb[0].mxu0
      %1190 = vdwg.mxu0
      %1191 = vmatprep.subr.bf16.mxu0 0
      %1192 = vmatpush1.bf16.msra.mxu0 %v1014
      %1193 = vmatprep.subr.bf16.mxu0 0
      %1194 = vmatpush1.bf16.msra.mxu0 %v1015
      %1195 = vmatprep.subr.bf16.mxu0 0
      %1196 = vmatpush1.bf16.msra.mxu0 %v1016
      %1197 = vmatprep.subr.bf16.mxu0 0
      %1198 = vmatpush1.bf16.msra.mxu0 %v1017
      %1199 = vmatprep.subr.bf16.mxu0 0
      %1200 = vmatpush1.bf16.msra.mxu0 %v1018
      %1201 = vmatprep.subr.bf16.mxu0 0
      %1202 = vmatpush1.bf16.msra.mxu0 %v1019
      %1203 = vmatprep.subr.bf16.mxu0 0
      %1204 = vmatpush1.bf16.msra.mxu0 %v1020
      %1205 = vmatprep.subr.bf16.mxu0 0
      %1206 = vmatpush1.bf16.msra.mxu0 %v1021
      %1207 = vmatprep.subr.bf16.mxu0 0
      %1208 = vmatpush1.bf16.msra.mxu0 %v1022
      %1209 = vmatprep.subr.bf16.mxu0 0
      %1210 = vmatpush1.bf16.msra.mxu0 %v1023
      %1211 = vmatprep.subr.bf16.mxu0 0
      %1212 = vmatpush1.bf16.msra.mxu0 %v1024
      %1213 = vmatprep.subr.bf16.mxu0 0
      %1214 = vmatpush1.bf16.msra.mxu0 %v1025
      %1215 = vmatprep.subr.bf16.mxu0 0
      %1216 = vmatpush1.bf16.msra.mxu0 %v1026
      %1217 = vmatprep.subr.bf16.mxu0 0
      %1218 = vmatpush1.bf16.msra.mxu0 %v1027
      %1219 = vmatprep.subr.bf16.mxu0 0
      %1220 = vmatpush1.bf16.msra.mxu0 %v1028
      %1221 = vmatprep.subr.bf16.mxu0 0
      %1222 = vmatpush1.bf16.msra.mxu0 %v1029
      %1223 = vmatprep.mubr.bf16.mxu0 %v585
      %1224 = vmatmul.mubr.bf16.gmra.mrb[0].mxu0 %v584
      %v1225 = vpop.f32.mrb[0].mxu0
      %v1226 = vadd.f32 %v1161, %v1225
      %v1227 = vpop.f32.mrb[0].mxu0
      %v1228 = vpop.f32.mrb[0].mxu0
      %v1229 = vadd.f32 %v1164, %v1228
      %v1230 = vpop.f32.mrb[0].mxu0
      %1231 = vmatprep.mubr.bf16.mxu0 %v593
      %1232 = vmatmul.mubr.bf16.gmra.mrb[0].mxu0 %v592
      %v1233 = vpop.f32.mrb[0].mxu0
      %v1234 = vadd.f32 %v1169, %v1233
      %v1235 = vpop.f32.mrb[0].mxu0
      %v1236 = vpop.f32.mrb[0].mxu0
      %v1237 = vadd.f32 %v1172, %v1236
      %v1238 = vpop.f32.mrb[0].mxu0
      %1239 = vmatprep.mubr.bf16.mxu0 %v601
      %1240 = vmatmul.mubr.bf16.gmra.mrb[0].mxu0 %v600
      %v1241 = vpop.f32.mrb[0].mxu0
      %v1242 = vadd.f32 %v1177, %v1241
      %v1243 = vpop.f32.mrb[0].mxu0
      %v1244 = vpop.f32.mrb[0].mxu0
      %v1245 = vadd.f32 %v1180, %v1244
      %v1246 = vpop.f32.mrb[0].mxu0
      %1247 = vmatprep.mubr.bf16.mxu0 %v609
      %1248 = vmatmul.mubr.bf16.gmra.mrb[0].mxu0 %v608
      %v1249 = vpop.f32.mrb[0].mxu0
      %v1250 = vadd.f32 %v1185, %v1249
      %v1251 = vpop.f32.mrb[0].mxu0
      %v1252 = vpop.f32.mrb[0].mxu0
      %v1253 = vadd.f32 %v1188, %v1252
      %v1254 = vpop.f32.mrb[0].mxu0
      %1255 = vdwg.mxu0
      %1256 = vmatprep.subr.bf16.mxu0 0
      %1257 = vmatpush1.bf16.msra.mxu0 %v1030
      %1258 = vmatprep.subr.bf16.mxu0 0
      %1259 = vmatpush1.bf16.msra.mxu0 %v1031
      %1260 = vmatprep.subr.bf16.mxu0 0
      %1261 = vmatpush1.bf16.msra.mxu0 %v1032
      %1262 = vmatprep.subr.bf16.mxu0 0
      %1263 = vmatpush1.bf16.msra.mxu0 %v1033
      %1264 = vmatprep.subr.bf16.mxu0 0
      %1265 = vmatpush1.bf16.msra.mxu0 %v1034
      %1266 = vmatprep.subr.bf16.mxu0 0
      %1267 = vmatpush1.bf16.msra.mxu0 %v1035
      %1268 = vmatprep.subr.bf16.mxu0 0
      %1269 = vmatpush1.bf16.msra.mxu0 %v1036
      %1270 = vmatprep.subr.bf16.mxu0 0
      %1271 = vmatpush1.bf16.msra.mxu0 %v1037
      %1272 = vmatprep.subr.bf16.mxu0 0
      %1273 = vmatpush1.bf16.msra.mxu0 %v1038
      %1274 = vmatprep.subr.bf16.mxu0 0
      %1275 = vmatpush1.bf16.msra.mxu0 %v1039
      %1276 = vmatprep.subr.bf16.mxu0 0
      %1277 = vmatpush1.bf16.msra.mxu0 %v1040
      %1278 = vmatprep.subr.bf16.mxu0 0
      %1279 = vmatpush1.bf16.msra.mxu0 %v1041
      %1280 = vmatprep.subr.bf16.mxu0 0
      %1281 = vmatpush1.bf16.msra.mxu0 %v1042
      %1282 = vmatprep.subr.bf16.mxu0 0
      %1283 = vmatpush1.bf16.msra.mxu0 %v1043
      %1284 = vmatprep.subr.bf16.mxu0 0
      %1285 = vmatpush1.bf16.msra.mxu0 %v1044
      %1286 = vmatprep.subr.bf16.mxu0 0
      %1287 = vmatpush1.bf16.msra.mxu0 %v1045
      %1288 = vmatprep.mubr.bf16.mxu0 %v587
      %1289 = vmatmul.mubr.bf16.gmra.mrb[0].mxu0 %v586
      %v1290 = vpop.f32.mrb[0].mxu0
      %v1291 = vadd.f32 %v1226, %v1290
      %v1292 = vpop.f32.mrb[0].mxu0
      %v1293 = vpop.f32.mrb[0].mxu0
      %v1294 = vadd.f32 %v1229, %v1293
      %v1295 = vpop.f32.mrb[0].mxu0
      %1296 = vmatprep.mubr.bf16.mxu0 %v595
      %1297 = vmatmul.mubr.bf16.gmra.mrb[0].mxu0 %v594
      %v1298 = vpop.f32.mrb[0].mxu0
      %v1299 = vadd.f32 %v1234, %v1298
      %v1300 = vpop.f32.mrb[0].mxu0
      %v1301 = vpop.f32.mrb[0].mxu0
      %v1302 = vadd.f32 %v1237, %v1301
      %v1303 = vpop.f32.mrb[0].mxu0
      %1304 = vmatprep.mubr.bf16.mxu0 %v603
      %1305 = vmatmul.mubr.bf16.gmra.mrb[0].mxu0 %v602
      %v1306 = vpop.f32.mrb[0].mxu0
      %v1307 = vadd.f32 %v1242, %v1306
      %v1308 = vpop.f32.mrb[0].mxu0
      %v1309 = vpop.f32.mrb[0].mxu0
      %v1310 = vadd.f32 %v1245, %v1309
      %v1311 = vpop.f32.mrb[0].mxu0
      %1312 = vmatprep.mubr.bf16.mxu0 %v611
      %1313 = vmatmul.mubr.bf16.gmra.mrb[0].mxu0 %v610
      %v1314 = vpop.f32.mrb[0].mxu0
      %v1315 = vadd.f32 %v1250, %v1314
      %v1316 = vpop.f32.mrb[0].mxu0
      %v1317 = vpop.f32.mrb[0].mxu0
      %v1318 = vadd.f32 %v1253, %v1317
      %v1319 = vpop.f32.mrb[0].mxu0
      %1320 = vdwg.mxu0
      %1321 = vmatprep.subr.bf16.mxu0 0
      %1322 = vmatpush1.bf16.msra.mxu0 %v1046
      %1323 = vmatprep.subr.bf16.mxu0 0
      %1324 = vmatpush1.bf16.msra.mxu0 %v1047
      %1325 = vmatprep.subr.bf16.mxu0 0
      %1326 = vmatpush1.bf16.msra.mxu0 %v1048
      %1327 = vmatprep.subr.bf16.mxu0 0
      %1328 = vmatpush1.bf16.msra.mxu0 %v1049
      %1329 = vmatprep.subr.bf16.mxu0 0
      %1330 = vmatpush1.bf16.msra.mxu0 %v1050
      %1331 = vmatprep.subr.bf16.mxu0 0
      %1332 = vmatpush1.bf16.msra.mxu0 %v1051
      %1333 = vmatprep.subr.bf16.mxu0 0
      %1334 = vmatpush1.bf16.msra.mxu0 %v1052
      %1335 = vmatprep.subr.bf16.mxu0 0
      %1336 = vmatpush1.bf16.msra.mxu0 %v1053
      %1337 = vmatprep.subr.bf16.mxu0 0
      %1338 = vmatpush1.bf16.msra.mxu0 %v1054
      %1339 = vmatprep.subr.bf16.mxu0 0
      %1340 = vmatpush1.bf16.msra.mxu0 %v1055
      %1341 = vmatprep.subr.bf16.mxu0 0
      %1342 = vmatpush1.bf16.msra.mxu0 %v1056
      %1343 = vmatprep.subr.bf16.mxu0 0
      %1344 = vmatpush1.bf16.msra.mxu0 %v1057
      %1345 = vmatprep.subr.bf16.mxu0 0
      %1346 = vmatpush1.bf16.msra.mxu0 %v1058
      %1347 = vmatprep.subr.bf16.mxu0 0
      %1348 = vmatpush1.bf16.msra.mxu0 %v1059
      %1349 = vmatprep.subr.bf16.mxu0 0
      %1350 = vmatpush1.bf16.msra.mxu0 %v1060
      %1351 = vmatprep.subr.bf16.mxu0 0
      %1352 = vmatpush1.bf16.msra.mxu0 %v1061
      %1353 = vmatprep.mubr.bf16.mxu0 %v589
      %1354 = vmatmul.mubr.bf16.gmra.mrb[0].mxu0 %v588
      %v1355 = vpop.f32.mrb[0].mxu0
      %v1356 = vadd.f32 %v1291, %v1355
      %v1357 = vpop.f32.mrb[0].mxu0
      %v1358 = vpop.f32.mrb[0].mxu0
      %v1359 = vadd.f32 %v1294, %v1358
      %v1360 = vpop.f32.mrb[0].mxu0
      %1361 = vmatprep.mubr.bf16.mxu0 %v597
      %1362 = vmatmul.mubr.bf16.gmra.mrb[0].mxu0 %v596
      %v1363 = vpop.f32.mrb[0].mxu0
      %v1364 = vadd.f32 %v1299, %v1363
      %v1365 = vpop.f32.mrb[0].mxu0
      %v1366 = vpop.f32.mrb[0].mxu0
      %v1367 = vadd.f32 %v1302, %v1366
      %v1368 = vpop.f32.mrb[0].mxu0
      %1369 = vmatprep.mubr.bf16.mxu0 %v605
      %1370 = vmatmul.mubr.bf16.gmra.mrb[0].mxu0 %v604
      %v1371 = vpop.f32.mrb[0].mxu0
      %v1372 = vadd.f32 %v1307, %v1371
      %v1373 = vpop.f32.mrb[0].mxu0
      %v1374 = vpop.f32.mrb[0].mxu0
      %v1375 = vadd.f32 %v1310, %v1374
      %v1376 = vpop.f32.mrb[0].mxu0
      %1377 = vmatprep.mubr.bf16.mxu0 %v613
      %1378 = vmatmul.mubr.bf16.gmra.mrb[0].mxu0 %v612
      %v1379 = vpop.f32.mrb[0].mxu0
      %v1380 = vadd.f32 %v1315, %v1379
      %v1381 = vpop.f32.mrb[0].mxu0
      %v1382 = vpop.f32.mrb[0].mxu0
      %v1383 = vadd.f32 %v1318, %v1382
      %v1384 = vpop.f32.mrb[0].mxu0
      %1385 = vdwg.mxu0
      %v1386 = vpack.c.bf16 %v1359, %v1356
      %v1387 = vpack.c.bf16 %v1367, %v1364
      %v1388 = vpack.c.bf16 %v1375, %v1372
      %v1389 = vpack.c.bf16 %v1383, %v1380
      %v1394 = vunpack.c.l.b16 %v1386
      %v1395 = vunpack.c.h.b16 %v1386
      %v1396 = vunpack.c.l.b16 %v1387
      %v1397 = vunpack.c.h.b16 %v1387
      %v1398 = vunpack.c.l.b16 %v1388
      %v1399 = vunpack.c.h.b16 %v1388
      %v1400 = vunpack.c.l.b16 %v1389
      %v1401 = vunpack.c.h.b16 %v1389
      %v1402 = vpack.c.b16 %v1394, %v1394
      %v1403 = vpack.c.b16 %v1395, %v1395
      %v1404 = vpack.c.b16 %v1396, %v1396
      %v1405 = vpack.c.b16 %v1397, %v1397
      %v1406 = vpack.c.b16 %v1398, %v1398
      %v1407 = vpack.c.b16 %v1399, %v1399
      %v1408 = vpack.c.b16 %v1400, %v1400
      %v1409 = vpack.c.b16 %v1401, %v1401
      %1418 = vst [vmem:[%s302] sm:$0xf] %v1402
      %1419 = vst [vmem:[%s302 + $0x4] sm:$0xf] %v1403
      %1420 = vst [vmem:[%s302 + $0x8] sm:$0xf] %v1404
      %1421 = vst [vmem:[%s302 + $0xc] sm:$0xf] %v1405
      %1422 = vst [vmem:[%s302 + $0x10] sm:$0xf] %v1406
      %1423 = vst [vmem:[%s302 + $0x14] sm:$0xf] %v1407
      %1424 = vst [vmem:[%s302 + $0x18] sm:$0xf] %v1408
      %1425 = vst [vmem:[%s302 + $0x1c] sm:$0xf] %v1409
      %v1426 = vadd.f32 %v1356, %v1359
      %v1427 = vadd.f32 %v1426, %v1364
      %v1428 = vadd.f32 %v1427, %v1367
      %v1429 = vadd.f32 %v1428, %v1372
      %v1430 = vadd.f32 %v1429, %v1375
      %v1431 = vadd.f32 %v1430, %v1380
      %v1432 = vadd.f32 %v1431, %v1383
      %v1433 = vrot.slane %v1432, 4
      %v1434 = vadd.f32 %v1432, %v1433
      %v1435 = vrot.slane %v1434, 2
      %v1436 = vadd.f32 %v1434, %v1435
      %v1437 = vrot.slane %v1436, 1
      %v1438 = vadd.f32 %v1436, %v1437
      %v1439 = vmul.f32 %v1356, %v1356
      %v1440 = vmul.f32 %v1359, %v1359
      %v1441 = vmul.f32 %v1364, %v1364
      %v1442 = vmul.f32 %v1367, %v1367
      %v1443 = vmul.f32 %v1372, %v1372
      %v1444 = vmul.f32 %v1375, %v1375
      %v1445 = vmul.f32 %v1380, %v1380
      %v1446 = vmul.f32 %v1383, %v1383
      %v1447 = vadd.f32 %v1439, %v1440
      %v1448 = vadd.f32 %v1447, %v1441
      %v1449 = vadd.f32 %v1448, %v1442
      %v1450 = vadd.f32 %v1449, %v1443
      %v1451 = vadd.f32 %v1450, %v1444
      %v1452 = vadd.f32 %v1451, %v1445
      %v1453 = vadd.f32 %v1452, %v1446
      %v1454 = vrot.slane %v1453, 4
      %v1455 = vadd.f32 %v1453, %v1454
      %v1456 = vrot.slane %v1455, 2
      %v1457 = vadd.f32 %v1455, %v1456
      %v1458 = vrot.slane %v1457, 1
      %v1459 = vadd.f32 %v1457, %v1458
      %vm1460 = vcmask 1040384
      %v1461 = vsel %vm1460, %v1438, %v1459
      %1462 = vst [vmem:[%s314] sm:$0x3] %v1461
      %s1463 = smul.u32 8, %s22
      %p1464 = scmp.lt.s32.totalorder %s21, 3
      %s1465 = scalar_select %p1464, %s21, 3
      %p1466 = scmp.lt.s32.totalorder %s1463, 15
      %s1467 = scalar_select %p1466, %s1463, 15
      %p1468 = scmp.lt.s32.totalorder %s23, 0
      %s1469 = scalar_select %p1468, %s23, 0
      %s1470 = sadd.s32 %s1469, %s1467
      %s1471 = smul.addr %s1465, 16
      %s1472 = sadd.s32 %s1470, %s1471
      %s1473 = smul.addr %s1472, 4
      %s1474 = scalar_lea.vmem %s3, %s1473
      %p1475 = scmp.lt.s32.totalorder %s21, 3
      %s1476 = scalar_select %p1475, %s21, 3
      %p1477 = scmp.lt.s32.totalorder %s22, 1
      %s1478 = scalar_select %p1477, %s22, 1
      %p1479 = scmp.lt.s32.totalorder %s23, 0
      %s1480 = scalar_select %p1479, %s23, 0
      %s1481 = sadd.s32 %s1480, %s1478
      %s1482 = smul.addr %s1476, 2
      %s1483 = sadd.s32 %s1481, %s1482
      %s1484 = smul.addr %s1483, 2
      %s1485 = scalar_lea.vmem %s4, %s1484
      // Predicated region
      $region33: #{generator_forward.7} parent=31 // pred_check
        %p1486 = pneg %p134
      $region34: #{generator_forward.7} parent=31 // pred_check_branch
        %1488 = sbr.rel (%p1486) target = $region36
      $region35: #{generator_forward.7} parent=31 // pred_region
        %s1489 = smul.u32 8, %s22
      $region36: #{generator_forward.7} parent=31 // pred_fallthru
        _
      // Predicated region
      $region37: #{generator_forward.7} parent=31 // pred_check
        %p1490 = pneg %p164
      $region38: #{generator_forward.7} parent=31 // pred_check_branch
        %1492 = sbr.rel (%p1490) target = $region40
      $region39: #{generator_forward.7} parent=31 // pred_region
        _
      $region40: #{generator_forward.7} parent=31 // pred_fallthru
        _
    $region32: #{generator_forward.7} parent=5 // pred_fallthru
      _
    %p1493 = scmp.le.s32.totalorder 2, %s11
    // Predicated region
    $region41: #{generator_forward.7} parent=5 // pred_check
      %p1494 = pneg %p1493
    $region42: #{generator_forward.7} parent=5 // pred_check_branch
      %1496 = sbr.rel (%p1494) target = $region44
    $region43: #{generator_forward.7} parent=5 // pred_region
      %s1497 = ssub.s32 %s11, 2
      // Predicated region
      $region45: #{generator_forward.7} parent=43 // pred_check
        %p1498 = pneg %p140
      $region46: #{generator_forward.7} parent=43 // pred_check_branch
        %1500 = sbr.rel (%p1498) target = $region48
      $region47: #{generator_forward.7} parent=43 // pred_region
        %s1501 = smul.u32 8, %s25
        %p1502 = scmp.lt.s32.totalorder %s24, 3
        %s1503 = scalar_select %p1502, %s24, 3
        %p1504 = scmp.lt.s32.totalorder %s1501, 15
        %s1505 = scalar_select %p1504, %s1501, 15
        %p1506 = scmp.lt.s32.totalorder %s26, 0
        %s1507 = scalar_select %p1506, %s26, 0
        %s1508 = sadd.s32 %s1507, %s1505
        %s1509 = smul.addr %s1503, 16
        %s1510 = sadd.s32 %s1508, %s1509
        %s1511 = smul.addr %s1510, 4
        %s1512 = scalar_lea.vmem %s3, %s1511
      $region48: #{generator_forward.7} parent=43 // pred_fallthru
        _
      // Predicated region
      $region49: #{generator_forward.7} parent=43 // pred_check
        %p1513 = pneg %p170
      $region50: #{generator_forward.7} parent=43 // pred_check_branch
        %1515 = sbr.rel (%p1513) target = $region52
      $region51: #{generator_forward.7} parent=43 // pred_region
        %p1516 = scmp.lt.s32.totalorder %s24, 3
        %s1517 = scalar_select %p1516, %s24, 3
        %p1518 = scmp.lt.s32.totalorder %s25, 1
        %s1519 = scalar_select %p1518, %s25, 1
        %p1520 = scmp.lt.s32.totalorder %s26, 0
        %s1521 = scalar_select %p1520, %s26, 0
        %s1522 = sadd.s32 %s1521, %s1519
        %s1523 = smul.addr %s1517, 2
        %s1524 = sadd.s32 %s1522, %s1523
        %s1525 = smul.addr %s1524, 2
        %s1526 = scalar_lea.vmem %s4, %s1525
      $region52: #{generator_forward.7} parent=43 // pred_fallthru
        _
    $region44: #{generator_forward.7} parent=5 // pred_fallthru
      _
  $region6: #{generator_forward.7} parent=0 // loop_footer
    %s15 = sadd.s32 1, %s11
  $region7: #{generator_forward.7} parent=0 // loop_footer_branch
    %10 = sbr.rel target = $region3
  $region8: #{generator_forward.7} parent=0 // loop_exit
    _

// kernel: tile.33
$region0: #{tile.33}
  #allocation0 [shape = 's32[1]{0}', space=sflag, size = 0x4, scoped, tag = 'scoped memory for tile.33']
  %s0 = inlined_call_operand.vmem [shape: f32[128], index: 0, kind: input, shape index: {}]
  %s1 = inlined_call_operand.vmem [shape: f32[4,128], index: 1, kind: output, shape index: {}]
  // Predicated region
  $region2: #{tile.33} parent=0 // pred_check
    _
  $region3: #{tile.33} parent=0 // pred_check_branch
    %3 = sbr.rel (0) target = $region5
  $region4: #{tile.33} parent=0 // pred_region
    _
  $region5: #{tile.33} parent=0 // pred_fallthru
    _
  %v4 = vld [vmem:[%s0] ss:$0 sm:$0xff]
  %5 = vst [vmem:[%s1] sm:$0xf] %v4

// kernel: generator_forward.8
$region0: #{generator_forward.8}
  #allocation0 [shape = 'u32[]', space=smem, size = 0x4, offset = 0x4, fixed_abs, tag = 'smem constant byte address 0x4 - core index']
  #allocation1 [shape = 'u32[144,128]{1,0:T(1,128)}', space=vmem, size = 0x12000, scoped, tag = 'internal scratch']
  %s0 = inlined_call_operand.vmem [shape: f32[1,512], index: 0, kind: input, shape index: {}]
  %s1 = inlined_call_operand.vmem [shape: bf16[4,512,512], index: 1, kind: input, shape index: {}]
  %s2 = inlined_call_operand.vmem [shape: bf16[4,512,128], index: 2, kind: input, shape index: {}]
  %s3 = inlined_call_operand.vmem [shape: bf16[4,512,128], index: 3, kind: output, shape index: {0}]
  %s4 = inlined_call_operand.vmem [shape: f32[4,2,2,128], index: 4, kind: output, shape index: {1}]
  %5 = xla_tuple %s3, %s4
  %s6 = sld [smem:[#allocation0]]
  $region53: #{generator_forward.8} parent=0
    _
  %s8 = ssub.s32 1, %s6
  %s9 = scalar_select 0, %s8, %s6
  loop: start=0, step=1, limit=10
  $region2: #{generator_forward.8} parent=0 // loop_pre_header
    _
  $region3: #{generator_forward.8} parent=0 // loop_header
    %s11 = sphi 0, %s15
    %p12 = scmp.ge.s32.totalorder %s11, 10
    %s18 = sphi 0, %s37
    %s19 = sphi 0, %s33
    %s20 = sphi 0, %s29
    %s21 = sphi 0, %s18
    %s22 = sphi 0, %s19
    %s23 = sphi 0, %s20
    %s24 = sphi 0, %s21
    %s25 = sphi 0, %s22
    %s26 = sphi 0, %s23
    %s38 = sphi 0, %s38
    %s40 = sphi 0, %s38
    %s41 = sphi 0, %s40
    %s55 = sphi 0, %s41
    %s63 = sphi 0, %s65
    %s66 = sphi 0, %s63
    %s67 = sphi 0, %s66
    %s83 = sphi 0, %s67
    %s91 = sphi 0, %s93
    %s94 = sphi 0, %s91
    %s95 = sphi 0, %s94
    %s111 = sphi 0, %s95
    %s121 = sphi 0, %s123
    %s124 = sphi 0, %s121
    %s125 = sphi 0, %s124
    %s141 = sphi 0, %s125
    %s151 = sphi 0, %s153
    %s154 = sphi 0, %s151
    %s155 = sphi 0, %s154
    %s171 = sphi 0, %s155
  $region4: #{generator_forward.8} parent=0 // loop_header_branch
    %14 = sbr.rel (%p12) target = $region8
  $region5: #{generator_forward.8} parent=0 // loop_body
    %s16 = ssub.s32 %s11, 1
    %s17 = ssub.s32 %s11, 2
    %s27 = sadd.s32 1, %s20
    %p28 = scmp.ge.s32.totalorder %s27, 1
    %s29 = scalar_select %p28, 0, %s27
    %s30 = sadd.s32 1, %s19
    %s31 = scalar_select %p28, %s30, %s19
    %p32 = scmp.ge.s32.totalorder %s31, 2
    %s33 = scalar_select %p32, 0, %s31
    %s34 = sadd.s32 1, %s18
    %s35 = scalar_select %p32, %s34, %s18
    %p36 = scmp.ge.s32.totalorder %s35, 4
    %s37 = scalar_select %p36, 0, %s35
    %s39 = sadd.s32 %s38, 1
    %p42 = scmp.eq.s32.totalorder %s11, 7
    %p43 = scmp.ne.s32.totalorder %s38, %s40
    %p44 = scmp.eq.s32.totalorder %s11, 0
    %p45 = por %p43, %p44
    %p46 = scmp.ne.s32.totalorder %s38, %s40
    %p47 = scmp.eq.s32.totalorder %s16, 7
    %p48 = por %p46, %p47
    %p49 = scmp.ne.s32.totalorder %s40, %s41
    %p50 = scmp.eq.s32.totalorder %s16, 0
    %p51 = por %p49, %p50
    %p52 = scmp.ne.s32.totalorder %s40, %s41
    %p53 = scmp.eq.s32.totalorder %s17, 7
    %p54 = por %p52, %p53
    %p56 = scmp.ne.s32.totalorder %s41, %s55
    %p57 = scmp.eq.s32.totalorder %s17, 0
    %p58 = por %p56, %p57
    %s59 = ssub.s32 %s18, %s37
    %s60 = ssub.s32 %s19, %s33
    %s61 = sor.u32 %s59, %s60
    %p62 = scmp.eq.s32.totalorder %s61, 0
    %s64 = sadd.s32 %s63, 1
    %s65 = scalar_select %p62, %s63, %s64
    %p68 = pneg %p62
    %p69 = scmp.eq.s32.totalorder %s11, 7
    %p70 = por %p68, %p69
    %p71 = scmp.ne.s32.totalorder %s63, %s66
    %p72 = scmp.eq.s32.totalorder %s11, 0
    %p73 = por %p71, %p72
    %p74 = scmp.ne.s32.totalorder %s63, %s66
    %p75 = scmp.eq.s32.totalorder %s16, 7
    %p76 = por %p74, %p75
    %p77 = scmp.ne.s32.totalorder %s66, %s67
    %p78 = scmp.eq.s32.totalorder %s16, 0
    %p79 = por %p77, %p78
    %p80 = scmp.ne.s32.totalorder %s66, %s67
    %p81 = scmp.eq.s32.totalorder %s17, 7
    %p82 = por %p80, %p81
    %p84 = scmp.ne.s32.totalorder %s67, %s83
    %p85 = scmp.eq.s32.totalorder %s17, 0
    %p86 = por %p84, %p85
    %s87 = ssub.s32 %s18, %s37
    %s88 = ssub.s32 %s20, %s29
    %s89 = sor.u32 %s87, %s88
    %p90 = scmp.eq.s32.totalorder %s89, 0
    %s92 = sadd.s32 %s91, 1
    %s93 = scalar_select %p90, %s91, %s92
    %p96 = pneg %p90
    %p97 = scmp.eq.s32.totalorder %s11, 7
    %p98 = por %p96, %p97
    %p99 = scmp.ne.s32.totalorder %s91, %s94
    %p100 = scmp.eq.s32.totalorder %s11, 0
    %p101 = por %p99, %p100
    %p102 = scmp.ne.s32.totalorder %s91, %s94
    %p103 = scmp.eq.s32.totalorder %s16, 7
    %p104 = por %p102, %p103
    %p105 = scmp.ne.s32.totalorder %s94, %s95
    %p106 = scmp.eq.s32.totalorder %s16, 0
    %p107 = por %p105, %p106
    %p108 = scmp.ne.s32.totalorder %s94, %s95
    %p109 = scmp.eq.s32.totalorder %s17, 7
    %p110 = por %p108, %p109
    %p112 = scmp.ne.s32.totalorder %s95, %s111
    %p113 = scmp.eq.s32.totalorder %s17, 0
    %p114 = por %p112, %p113
    %s115 = ssub.s32 %s18, %s37
    %s116 = ssub.s32 %s19, %s33
    %s117 = sor.u32 %s115, %s116
    %s118 = ssub.s32 %s20, %s29
    %s119 = sor.u32 %s117, %s118
    %p120 = scmp.eq.s32.totalorder %s119, 0
    %s122 = sadd.s32 %s121, 1
    %s123 = scalar_select %p120, %s121, %s122
    %p126 = pneg %p120
    %p127 = scmp.eq.s32.totalorder %s11, 7
    %p128 = por %p126, %p127
    %p129 = scmp.ne.s32.totalorder %s121, %s124
    %p130 = scmp.eq.s32.totalorder %s11, 0
    %p131 = por %p129, %p130
    %p132 = scmp.ne.s32.totalorder %s121, %s124
    %p133 = scmp.eq.s32.totalorder %s16, 7
    %p134 = por %p132, %p133
    %p135 = scmp.ne.s32.totalorder %s124, %s125
    %p136 = scmp.eq.s32.totalorder %s16, 0
    %p137 = por %p135, %p136
    %p138 = scmp.ne.s32.totalorder %s124, %s125
    %p139 = scmp.eq.s32.totalorder %s17, 7
    %p140 = por %p138, %p139
    %p142 = scmp.ne.s32.totalorder %s125, %s141
    %p143 = scmp.eq.s32.totalorder %s17, 0
    %p144 = por %p142, %p143
    %s145 = ssub.s32 %s18, %s37
    %s146 = ssub.s32 %s19, %s33
    %s147 = sor.u32 %s145, %s146
    %s148 = ssub.s32 %s20, %s29
    %s149 = sor.u32 %s147, %s148
    %p150 = scmp.eq.s32.totalorder %s149, 0
    %s152 = sadd.s32 %s151, 1
    %s153 = scalar_select %p150, %s151, %s152
    %p156 = pneg %p150
    %p157 = scmp.eq.s32.totalorder %s11, 7
    %p158 = por %p156, %p157
    %p159 = scmp.ne.s32.totalorder %s151, %s154
    %p160 = scmp.eq.s32.totalorder %s11, 0
    %p161 = por %p159, %p160
    %p162 = scmp.ne.s32.totalorder %s151, %s154
    %p163 = scmp.eq.s32.totalorder %s16, 7
    %p164 = por %p162, %p163
    %p165 = scmp.ne.s32.totalorder %s154, %s155
    %p166 = scmp.eq.s32.totalorder %s16, 0
    %p167 = por %p165, %p166
    %p168 = scmp.ne.s32.totalorder %s154, %s155
    %p169 = scmp.eq.s32.totalorder %s17, 7
    %p170 = por %p168, %p169
    %p172 = scmp.ne.s32.totalorder %s155, %s171
    %p173 = scmp.eq.s32.totalorder %s17, 0
    %p174 = por %p172, %p173
    %p175 = scmp.le.s32.totalorder 1, %s11
    %p176 = scmp.lt.s32.totalorder %s11, 9
    %p177 = pnand %p175, %p176
    %p178 = pneg %p177
    // Predicated region
    $region9: #{generator_forward.8} parent=5 // pred_check
      _
    $region10: #{generator_forward.8} parent=5 // pred_check_branch
      %180 = sbr.rel (%p177) target = $region12
    $region11: #{generator_forward.8} parent=5 // pred_region
      %s181 = ssub.s32 %s11, 1
      // Predicated region
      $region13: #{generator_forward.8} parent=11 // pred_check
        %p182 = pneg %p51
      $region14: #{generator_forward.8} parent=11 // pred_check_branch
        %184 = sbr.rel (%p182) target = $region16
      $region15: #{generator_forward.8} parent=11 // pred_region
        _
      $region16: #{generator_forward.8} parent=11 // pred_fallthru
        _
    $region12: #{generator_forward.8} parent=5 // pred_fallthru
      _
    %p185 = scmp.lt.s32.totalorder %s11, 8
    // Predicated region
    $region17: #{generator_forward.8} parent=5 // pred_check
      %p186 = pneg %p185
    $region18: #{generator_forward.8} parent=5 // pred_check_branch
      %188 = sbr.rel (%p186) target = $region20
    $region19: #{generator_forward.8} parent=5 // pred_region
      // Predicated region
      $region21: #{generator_forward.8} parent=19 // pred_check
        %p189 = pneg %p73
      $region22: #{generator_forward.8} parent=19 // pred_check_branch
        %191 = sbr.rel (%p189) target = $region24
      $region23: #{generator_forward.8} parent=19 // pred_region
        %s192 = smul.u32 32, %s19
        %p193 = scmp.lt.s32.totalorder %s18, 3
        %s194 = scalar_select %p193, %s18, 3
        %p195 = scmp.lt.s32.totalorder %s192, 63
        %s196 = scalar_select %p195, %s192, 63
        %s197 = smul.addr %s196, 4
        %s198 = smul.addr %s194, 256
        %s199 = sadd.s32 %s197, %s198
        %s200 = smul.addr %s199, 4
        %s201 = scalar_lea.vmem %s1, %s200
        %s202 = smul.u32 32, %s19
      $region24: #{generator_forward.8} parent=19 // pred_fallthru
        _
      // Predicated region
      $region25: #{generator_forward.8} parent=19 // pred_check
        %p203 = pneg %p101
      $region26: #{generator_forward.8} parent=19 // pred_check_branch
        %205 = sbr.rel (%p203) target = $region28
      $region27: #{generator_forward.8} parent=19 // pred_region
        %p206 = scmp.lt.s32.totalorder %s18, 3
        %s207 = scalar_select %p206, %s18, 3
        %p208 = scmp.lt.s32.totalorder %s20, 0
        %s209 = scalar_select %p208, %s20, 0
        %s210 = smul.addr %s207, 64
        %s211 = sadd.s32 %s209, %s210
        %s212 = smul.addr %s211, 4
        %s213 = scalar_lea.vmem %s2, %s212
      $region28: #{generator_forward.8} parent=19 // pred_fallthru
        _
    $region20: #{generator_forward.8} parent=5 // pred_fallthru
      _
    %p214 = scmp.le.s32.totalorder 1, %s11
    %p215 = scmp.lt.s32.totalorder %s11, 9
    %p216 = pnand %p214, %p215
    %p217 = pneg %p216
    // Predicated region
    $region29: #{generator_forward.8} parent=5 // pred_check
      _
    $region30: #{generator_forward.8} parent=5 // pred_check_branch
      %219 = sbr.rel (%p216) target = $region32
    $region31: #{generator_forward.8} parent=5 // pred_region
      %s220 = ssub.s32 %s11, 1
      %p221 = pneg %p51
      %p222 = pneg %p48
      %s223 = smul.u32 32, %s22
      %p224 = scmp.lt.s32.totalorder %s21, 3
      %s225 = scalar_select %p224, %s21, 3
      %p226 = scmp.lt.s32.totalorder %s223, 63
      %s227 = scalar_select %p226, %s223, 63
      %s228 = smul.addr %s227, 4
      %s229 = smul.addr %s225, 256
      %s230 = sadd.s32 %s228, %s229
      %s231 = smul.addr %s230, 4
      %s232 = scalar_lea.vmem %s1, %s231
      %p233 = pneg %p79
      %p234 = pneg %p76
      %p235 = scmp.lt.s32.totalorder %s21, 3
      %s236 = scalar_select %p235, %s21, 3
      %p237 = scmp.lt.s32.totalorder %s23, 0
      %s238 = scalar_select %p237, %s23, 0
      %s239 = smul.addr %s236, 64
      %s240 = sadd.s32 %s238, %s239
      %s241 = smul.addr %s240, 4
      %s242 = scalar_lea.vmem %s2, %s241
      %p243 = pneg %p107
      %p244 = pneg %p104
      %p245 = pneg %p137
      %p246 = pneg %p134
      %s247 = smul.u32 32, %s22
      %p248 = scmp.lt.s32.totalorder %s21, 3
      %s249 = scalar_select %p248, %s21, 3
      %p250 = scmp.lt.s32.totalorder %s247, 63
      %s251 = scalar_select %p250, %s247, 63
      %p252 = scmp.lt.s32.totalorder %s23, 0
      %s253 = scalar_select %p252, %s23, 0
      %s254 = sadd.s32 %s253, %s251
      %s255 = smul.addr %s249, 64
      %s256 = sadd.s32 %s254, %s255
      %s257 = smul.addr %s256, 4
      %s258 = scalar_lea.vmem %s3, %s257
      %p259 = pneg %p167
      %p260 = pneg %p164
      %p261 = scmp.lt.s32.totalorder %s21, 3
      %s262 = scalar_select %p261, %s21, 3
      %p263 = scmp.lt.s32.totalorder %s22, 1
      %s264 = scalar_select %p263, %s22, 1
      %p265 = scmp.lt.s32.totalorder %s23, 0
      %s266 = scalar_select %p265, %s23, 0
      %s267 = sadd.s32 %s266, %s264
      %s268 = smul.addr %s262, 2
      %s269 = sadd.s32 %s267, %s268
      %s270 = smul.addr %s269, 2
      %s271 = scalar_lea.vmem %s4, %s270
      %s272 = smul.u32 32, %s22
      %p273 = scmp.lt.s32.totalorder %s21, 3
      %s274 = scalar_select %p273, %s21, 3
      %p275 = scmp.lt.s32.totalorder %s272, 63
      %s276 = scalar_select %p275, %s272, 63
      %s277 = smul.addr %s276, 4
      %s278 = smul.addr %s274, 256
      %s279 = sadd.s32 %s277, %s278
      %s280 = smul.addr %s279, 4
      %s281 = scalar_lea.vmem %s1, %s280
      %s282 = smul.u32 32, %s22
      %p283 = scmp.lt.s32.totalorder %s21, 3
      %s284 = scalar_select %p283, %s21, 3
      %p285 = scmp.lt.s32.totalorder %s23, 0
      %s286 = scalar_select %p285, %s23, 0
      %s287 = smul.addr %s284, 64
      %s288 = sadd.s32 %s286, %s287
      %s289 = smul.addr %s288, 4
      %s290 = scalar_lea.vmem %s2, %s289
      %s291 = smul.u32 32, %s22
      %p292 = scmp.lt.s32.totalorder %s21, 3
      %s293 = scalar_select %p292, %s21, 3
      %p294 = scmp.lt.s32.totalorder %s291, 63
      %s295 = scalar_select %p294, %s291, 63
      %p296 = scmp.lt.s32.totalorder %s23, 0
      %s297 = scalar_select %p296, %s23, 0
      %s298 = sadd.s32 %s297, %s295
      %s299 = smul.addr %s293, 64
      %s300 = sadd.s32 %s298, %s299
      %s301 = smul.addr %s300, 4
      %s302 = scalar_lea.vmem %s3, %s301
      %s303 = smul.u32 32, %s22
      %p304 = scmp.lt.s32.totalorder %s21, 3
      %s305 = scalar_select %p304, %s21, 3
      %p306 = scmp.lt.s32.totalorder %s22, 1
      %s307 = scalar_select %p306, %s22, 1
      %p308 = scmp.lt.s32.totalorder %s23, 0
      %s309 = scalar_select %p308, %s23, 0
      %s310 = sadd.s32 %s309, %s307
      %s311 = smul.addr %s305, 2
      %s312 = sadd.s32 %s310, %s311
      %s313 = smul.addr %s312, 2
      %s314 = scalar_lea.vmem %s4, %s313
      %v316 = vld [vmem:[%s281] sm:$0xff]
      %v317 = vld [vmem:[%s281 + $0x8] sm:$0xff]
      %v318 = vld [vmem:[%s281 + $0x10] sm:$0xff]
      %v319 = vld [vmem:[%s281 + $0x18] sm:$0xff]
      %v320 = vld [vmem:[%s281 + $0x20] sm:$0xff]
      %v321 = vld [vmem:[%s281 + $0x28] sm:$0xff]
      %v322 = vld [vmem:[%s281 + $0x30] sm:$0xff]
      %v323 = vld [vmem:[%s281 + $0x38] sm:$0xff]
      %v324 = vld [vmem:[%s281 + $0x40] sm:$0xff]
      %v325 = vld [vmem:[%s281 + $0x48] sm:$0xff]
      %v326 = vld [vmem:[%s281 + $0x50] sm:$0xff]
      %v327 = vld [vmem:[%s281 + $0x58] sm:$0xff]
      %v328 = vld [vmem:[%s281 + $0x60] sm:$0xff]
      %v329 = vld [vmem:[%s281 + $0x68] sm:$0xff]
      %v330 = vld [vmem:[%s281 + $0x70] sm:$0xff]
      %v331 = vld [vmem:[%s281 + $0x78] sm:$0xff]
      %v332 = vld [vmem:[%s281 + $0x80] sm:$0xff]
      %v333 = vld [vmem:[%s281 + $0x88] sm:$0xff]
      %v334 = vld [vmem:[%s281 + $0x90] sm:$0xff]
      %v335 = vld [vmem:[%s281 + $0x98] sm:$0xff]
      %v336 = vld [vmem:[%s281 + $0xa0] sm:$0xff]
      %v337 = vld [vmem:[%s281 + $0xa8] sm:$0xff]
      %v338 = vld [vmem:[%s281 + $0xb0] sm:$0xff]
      %v339 = vld [vmem:[%s281 + $0xb8] sm:$0xff]
      %v340 = vld [vmem:[%s281 + $0xc0] sm:$0xff]
      %v341 = vld [vmem:[%s281 + $0xc8] sm:$0xff]
      %v342 = vld [vmem:[%s281 + $0xd0] sm:$0xff]
      %v343 = vld [vmem:[%s281 + $0xd8] sm:$0xff]
      %v344 = vld [vmem:[%s281 + $0xe0] sm:$0xff]
      %v345 = vld [vmem:[%s281 + $0xe8] sm:$0xff]
      %v346 = vld [vmem:[%s281 + $0xf0] sm:$0xff]
      %v347 = vld [vmem:[%s281 + $0xf8] sm:$0xff]
      %v348 = vld [vmem:[%s281 + $0x100] sm:$0xff]
      %v349 = vld [vmem:[%s281 + $0x108] sm:$0xff]
      %v350 = vld [vmem:[%s281 + $0x110] sm:$0xff]
      %v351 = vld [vmem:[%s281 + $0x118] sm:$0xff]
      %v352 = vld [vmem:[%s281 + $0x120] sm:$0xff]
      %v353 = vld [vmem:[%s281 + $0x128] sm:$0xff]
      %v354 = vld [vmem:[%s281 + $0x130] sm:$0xff]
      %v355 = vld [vmem:[%s281 + $0x138] sm:$0xff]
      %v356 = vld [vmem:[%s281 + $0x140] sm:$0xff]
      %v357 = vld [vmem:[%s281 + $0x148] sm:$0xff]
      %v358 = vld [vmem:[%s281 + $0x150] sm:$0xff]
      %v359 = vld [vmem:[%s281 + $0x158] sm:$0xff]
      %v360 = vld [vmem:[%s281 + $0x160] sm:$0xff]
      %v361 = vld [vmem:[%s281 + $0x168] sm:$0xff]
      %v362 = vld [vmem:[%s281 + $0x170] sm:$0xff]
      %v363 = vld [vmem:[%s281 + $0x178] sm:$0xff]
      %v364 = vld [vmem:[%s281 + $0x180] sm:$0xff]
      %v365 = vld [vmem:[%s281 + $0x188] sm:$0xff]
      %v366 = vld [vmem:[%s281 + $0x190] sm:$0xff]
      %v367 = vld [vmem:[%s281 + $0x198] sm:$0xff]
      %v368 = vld [vmem:[%s281 + $0x1a0] sm:$0xff]
      %v369 = vld [vmem:[%s281 + $0x1a8] sm:$0xff]
      %v370 = vld [vmem:[%s281 + $0x1b0] sm:$0xff]
      %v371 = vld [vmem:[%s281 + $0x1b8] sm:$0xff]
      %v372 = vld [vmem:[%s281 + $0x1c0] sm:$0xff]
      %v373 = vld [vmem:[%s281 + $0x1c8] sm:$0xff]
      %v374 = vld [vmem:[%s281 + $0x1d0] sm:$0xff]
      %v375 = vld [vmem:[%s281 + $0x1d8] sm:$0xff]
      %v376 = vld [vmem:[%s281 + $0x1e0] sm:$0xff]
      %v377 = vld [vmem:[%s281 + $0x1e8] sm:$0xff]
      %v378 = vld [vmem:[%s281 + $0x1f0] sm:$0xff]
      %v379 = vld [vmem:[%s281 + $0x1f8] sm:$0xff]
      %v380 = vunpack.c.l.bf16 %v316
      %v381 = vunpack.c.h.bf16 %v316
      %v382 = vunpack.c.l.bf16 %v317
      %v383 = vunpack.c.h.bf16 %v317
      %v384 = vunpack.c.l.bf16 %v318
      %v385 = vunpack.c.h.bf16 %v318
      %v386 = vunpack.c.l.bf16 %v319
      %v387 = vunpack.c.h.bf16 %v319
      %v388 = vunpack.c.l.bf16 %v320
      %v389 = vunpack.c.h.bf16 %v320
      %v390 = vunpack.c.l.bf16 %v321
      %v391 = vunpack.c.h.bf16 %v321
      %v392 = vunpack.c.l.bf16 %v322
      %v393 = vunpack.c.h.bf16 %v322
      %v394 = vunpack.c.l.bf16 %v323
      %v395 = vunpack.c.h.bf16 %v323
      %v396 = vunpack.c.l.bf16 %v324
      %v397 = vunpack.c.h.bf16 %v324
      %v398 = vunpack.c.l.bf16 %v325
      %v399 = vunpack.c.h.bf16 %v325
      %v400 = vunpack.c.l.bf16 %v326
      %v401 = vunpack.c.h.bf16 %v326
      %v402 = vunpack.c.l.bf16 %v327
      %v403 = vunpack.c.h.bf16 %v327
      %v404 = vunpack.c.l.bf16 %v328
      %v405 = vunpack.c.h.bf16 %v328
      %v406 = vunpack.c.l.bf16 %v329
      %v407 = vunpack.c.h.bf16 %v329
      %v408 = vunpack.c.l.bf16 %v330
      %v409 = vunpack.c.h.bf16 %v330
      %v410 = vunpack.c.l.bf16 %v331
      %v411 = vunpack.c.h.bf16 %v331
      %v412 = vunpack.c.l.bf16 %v332
      %v413 = vunpack.c.h.bf16 %v332
      %v414 = vunpack.c.l.bf16 %v333
      %v415 = vunpack.c.h.bf16 %v333
      %v416 = vunpack.c.l.bf16 %v334
      %v417 = vunpack.c.h.bf16 %v334
      %v418 = vunpack.c.l.bf16 %v335
      %v419 = vunpack.c.h.bf16 %v335
      %v420 = vunpack.c.l.bf16 %v336
      %v421 = vunpack.c.h.bf16 %v336
      %v422 = vunpack.c.l.bf16 %v337
      %v423 = vunpack.c.h.bf16 %v337
      %v424 = vunpack.c.l.bf16 %v338
      %v425 = vunpack.c.h.bf16 %v338
      %v426 = vunpack.c.l.bf16 %v339
      %v427 = vunpack.c.h.bf16 %v339
      %v428 = vunpack.c.l.bf16 %v340
      %v429 = vunpack.c.h.bf16 %v340
      %v430 = vunpack.c.l.bf16 %v341
      %v431 = vunpack.c.h.bf16 %v341
      %v432 = vunpack.c.l.bf16 %v342
      %v433 = vunpack.c.h.bf16 %v342
      %v434 = vunpack.c.l.bf16 %v343
      %v435 = vunpack.c.h.bf16 %v343
      %v436 = vunpack.c.l.bf16 %v344
      %v437 = vunpack.c.h.bf16 %v344
      %v438 = vunpack.c.l.bf16 %v345
      %v439 = vunpack.c.h.bf16 %v345
      %v440 = vunpack.c.l.bf16 %v346
      %v441 = vunpack.c.h.bf16 %v346
      %v442 = vunpack.c.l.bf16 %v347
      %v443 = vunpack.c.h.bf16 %v347
      %v444 = vunpack.c.l.bf16 %v348
      %v445 = vunpack.c.h.bf16 %v348
      %v446 = vunpack.c.l.bf16 %v349
      %v447 = vunpack.c.h.bf16 %v349
      %v448 = vunpack.c.l.bf16 %v350
      %v449 = vunpack.c.h.bf16 %v350
      %v450 = vunpack.c.l.bf16 %v351
      %v451 = vunpack.c.h.bf16 %v351
      %v452 = vunpack.c.l.bf16 %v352
      %v453 = vunpack.c.h.bf16 %v352
      %v454 = vunpack.c.l.bf16 %v353
      %v455 = vunpack.c.h.bf16 %v353
      %v456 = vunpack.c.l.bf16 %v354
      %v457 = vunpack.c.h.bf16 %v354
      %v458 = vunpack.c.l.bf16 %v355
      %v459 = vunpack.c.h.bf16 %v355
      %v460 = vunpack.c.l.bf16 %v356
      %v461 = vunpack.c.h.bf16 %v356
      %v462 = vunpack.c.l.bf16 %v357
      %v463 = vunpack.c.h.bf16 %v357
      %v464 = vunpack.c.l.bf16 %v358
      %v465 = vunpack.c.h.bf16 %v358
      %v466 = vunpack.c.l.bf16 %v359
      %v467 = vunpack.c.h.bf16 %v359
      %v468 = vunpack.c.l.bf16 %v360
      %v469 = vunpack.c.h.bf16 %v360
      %v470 = vunpack.c.l.bf16 %v361
      %v471 = vunpack.c.h.bf16 %v361
      %v472 = vunpack.c.l.bf16 %v362
      %v473 = vunpack.c.h.bf16 %v362
      %v474 = vunpack.c.l.bf16 %v363
      %v475 = vunpack.c.h.bf16 %v363
      %v476 = vunpack.c.l.bf16 %v364
      %v477 = vunpack.c.h.bf16 %v364
      %v478 = vunpack.c.l.bf16 %v365
      %v479 = vunpack.c.h.bf16 %v365
      %v480 = vunpack.c.l.bf16 %v366
      %v481 = vunpack.c.h.bf16 %v366
      %v482 = vunpack.c.l.bf16 %v367
      %v483 = vunpack.c.h.bf16 %v367
      %v484 = vunpack.c.l.bf16 %v368
      %v485 = vunpack.c.h.bf16 %v368
      %v486 = vunpack.c.l.bf16 %v369
      %v487 = vunpack.c.h.bf16 %v369
      %v488 = vunpack.c.l.bf16 %v370
      %v489 = vunpack.c.h.bf16 %v370
      %v490 = vunpack.c.l.bf16 %v371
      %v491 = vunpack.c.h.bf16 %v371
      %v492 = vunpack.c.l.bf16 %v372
      %v493 = vunpack.c.h.bf16 %v372
      %v494 = vunpack.c.l.bf16 %v373
      %v495 = vunpack.c.h.bf16 %v373
      %v496 = vunpack.c.l.bf16 %v374
      %v497 = vunpack.c.h.bf16 %v374
      %v498 = vunpack.c.l.bf16 %v375
      %v499 = vunpack.c.h.bf16 %v375
      %v500 = vunpack.c.l.bf16 %v376
      %v501 = vunpack.c.h.bf16 %v376
      %v502 = vunpack.c.l.bf16 %v377
      %v503 = vunpack.c.h.bf16 %v377
      %v504 = vunpack.c.l.bf16 %v378
      %v505 = vunpack.c.h.bf16 %v378
      %v506 = vunpack.c.l.bf16 %v379
      %v507 = vunpack.c.h.bf16 %v379
      %v508 = vld [vmem:[%s0] sm:$0xf]
      %v510 = vlaneseq
      %v511 = vshrl.u32 %v510, 7
      %v512 = vsub.s32 0, %v511
      %v513 = vrot.slane %v508, %v512
      %v514 = vlaneseq
      %v515 = vshrl.u32 %v514, 7
      %v516 = vsub.s32 1, %v515
      %v517 = vrot.slane %v508, %v516
      %v518 = vlaneseq
      %v519 = vshrl.u32 %v518, 7
      %v520 = vsub.s32 2, %v519
      %v521 = vrot.slane %v508, %v520
      %v522 = vlaneseq
      %v523 = vshrl.u32 %v522, 7
      %v524 = vsub.s32 3, %v523
      %v525 = vrot.slane %v508, %v524
      %v530 = vmul.f32 %v380, %v513
      %v531 = vmul.f32 %v381, %v517
      %v532 = vmul.f32 %v382, %v521
      %v533 = vmul.f32 %v383, %v525
      %v534 = vmul.f32 %v384, %v513
      %v535 = vmul.f32 %v385, %v517
      %v536 = vmul.f32 %v386, %v521
      %v537 = vmul.f32 %v387, %v525
      %v538 = vmul.f32 %v388, %v513
      %v539 = vmul.f32 %v389, %v517
      %v540 = vmul.f32 %v390, %v521
      %v541 = vmul.f32 %v391, %v525
      %v542 = vmul.f32 %v392, %v513
      %v543 = vmul.f32 %v393, %v517
      %v544 = vmul.f32 %v394, %v521
      %v545 = vmul.f32 %v395, %v525
      %v546 = vmul.f32 %v396, %v513
      %v547 = vmul.f32 %v397, %v517
      %v548 = vmul.f32 %v398, %v521
      %v549 = vmul.f32 %v399, %v525
      %v550 = vmul.f32 %v400, %v513
      %v551 = vmul.f32 %v401, %v517
      %v552 = vmul.f32 %v402, %v521
      %v553 = vmul.f32 %v403, %v525
      %v554 = vmul.f32 %v404, %v513
      %v555 = vmul.f32 %v405, %v517
      %v556 = vmul.f32 %v406, %v521
      %v557 = vmul.f32 %v407, %v525
      %v558 = vmul.f32 %v408, %v513
      %v559 = vmul.f32 %v409, %v517
      %v560 = vmul.f32 %v410, %v521
      %v561 = vmul.f32 %v411, %v525
      %v562 = vmul.f32 %v412, %v513
      %v563 = vmul.f32 %v413, %v517
      %v564 = vmul.f32 %v414, %v521
      %v565 = vmul.f32 %v415, %v525
      %v566 = vmul.f32 %v416, %v513
      %v567 = vmul.f32 %v417, %v517
      %v568 = vmul.f32 %v418, %v521
      %v569 = vmul.f32 %v419, %v525
      %v570 = vmul.f32 %v420, %v513
      %v571 = vmul.f32 %v421, %v517
      %v572 = vmul.f32 %v422, %v521
      %v573 = vmul.f32 %v423, %v525
      %v574 = vmul.f32 %v424, %v513
      %v575 = vmul.f32 %v425, %v517
      %v576 = vmul.f32 %v426, %v521
      %v577 = vmul.f32 %v427, %v525
      %v578 = vmul.f32 %v428, %v513
      %v579 = vmul.f32 %v429, %v517
      %v580 = vmul.f32 %v430, %v521
      %v581 = vmul.f32 %v431, %v525
      %v582 = vmul.f32 %v432, %v513
      %v583 = vmul.f32 %v433, %v517
      %v584 = vmul.f32 %v434, %v521
      %v585 = vmul.f32 %v435, %v525
      %v586 = vmul.f32 %v436, %v513
      %v587 = vmul.f32 %v437, %v517
      %v588 = vmul.f32 %v438, %v521
      %v589 = vmul.f32 %v439, %v525
      %v590 = vmul.f32 %v440, %v513
      %v591 = vmul.f32 %v441, %v517
      %v592 = vmul.f32 %v442, %v521
      %v593 = vmul.f32 %v443, %v525
      %v594 = vmul.f32 %v444, %v513
      %v595 = vmul.f32 %v445, %v517
      %v596 = vmul.f32 %v446, %v521
      %v597 = vmul.f32 %v447, %v525
      %v598 = vmul.f32 %v448, %v513
      %v599 = vmul.f32 %v449, %v517
      %v600 = vmul.f32 %v450, %v521
      %v601 = vmul.f32 %v451, %v525
      %v602 = vmul.f32 %v452, %v513
      %v603 = vmul.f32 %v453, %v517
      %v604 = vmul.f32 %v454, %v521
      %v605 = vmul.f32 %v455, %v525
      %v606 = vmul.f32 %v456, %v513
      %v607 = vmul.f32 %v457, %v517
      %v608 = vmul.f32 %v458, %v521
      %v609 = vmul.f32 %v459, %v525
      %v610 = vmul.f32 %v460, %v513
      %v611 = vmul.f32 %v461, %v517
      %v612 = vmul.f32 %v462, %v521
      %v613 = vmul.f32 %v463, %v525
      %v614 = vmul.f32 %v464, %v513
      %v615 = vmul.f32 %v465, %v517
      %v616 = vmul.f32 %v466, %v521
      %v617 = vmul.f32 %v467, %v525
      %v618 = vmul.f32 %v468, %v513
      %v619 = vmul.f32 %v469, %v517
      %v620 = vmul.f32 %v470, %v521
      %v621 = vmul.f32 %v471, %v525
      %v622 = vmul.f32 %v472, %v513
      %v623 = vmul.f32 %v473, %v517
      %v624 = vmul.f32 %v474, %v521
      %v625 = vmul.f32 %v475, %v525
      %v626 = vmul.f32 %v476, %v513
      %v627 = vmul.f32 %v477, %v517
      %v628 = vmul.f32 %v478, %v521
      %v629 = vmul.f32 %v479, %v525
      %v630 = vmul.f32 %v480, %v513
      %v631 = vmul.f32 %v481, %v517
      %v632 = vmul.f32 %v482, %v521
      %v633 = vmul.f32 %v483, %v525
      %v634 = vmul.f32 %v484, %v513
      %v635 = vmul.f32 %v485, %v517
      %v636 = vmul.f32 %v486, %v521
      %v637 = vmul.f32 %v487, %v525
      %v638 = vmul.f32 %v488, %v513
      %v639 = vmul.f32 %v489, %v517
      %v640 = vmul.f32 %v490, %v521
      %v641 = vmul.f32 %v491, %v525
      %v642 = vmul.f32 %v492, %v513
      %v643 = vmul.f32 %v493, %v517
      %v644 = vmul.f32 %v494, %v521
      %v645 = vmul.f32 %v495, %v525
      %v646 = vmul.f32 %v496, %v513
      %v647 = vmul.f32 %v497, %v517
      %v648 = vmul.f32 %v498, %v521
      %v649 = vmul.f32 %v499, %v525
      %v650 = vmul.f32 %v500, %v513
      %v651 = vmul.f32 %v501, %v517
      %v652 = vmul.f32 %v502, %v521
      %v653 = vmul.f32 %v503, %v525
      %v654 = vmul.f32 %v504, %v513
      %v655 = vmul.f32 %v505, %v517
      %v656 = vmul.f32 %v506, %v521
      %v657 = vmul.f32 %v507, %v525
      %v658 = vmax.f32 %v530, 0.0
      %v659 = vmax.f32 %v531, 0.0
      %v660 = vmax.f32 %v532, 0.0
      %v661 = vmax.f32 %v533, 0.0
      %v662 = vmax.f32 %v534, 0.0
      %v663 = vmax.f32 %v535, 0.0
      %v664 = vmax.f32 %v536, 0.0
      %v665 = vmax.f32 %v537, 0.0
      %v666 = vmax.f32 %v538, 0.0
      %v667 = vmax.f32 %v539, 0.0
      %v668 = vmax.f32 %v540, 0.0
      %v669 = vmax.f32 %v541, 0.0
      %v670 = vmax.f32 %v542, 0.0
      %v671 = vmax.f32 %v543, 0.0
      %v672 = vmax.f32 %v544, 0.0
      %v673 = vmax.f32 %v545, 0.0
      %v674 = vmax.f32 %v546, 0.0
      %v675 = vmax.f32 %v547, 0.0
      %v676 = vmax.f32 %v548, 0.0
      %v677 = vmax.f32 %v549, 0.0
      %v678 = vmax.f32 %v550, 0.0
      %v679 = vmax.f32 %v551, 0.0
      %v680 = vmax.f32 %v552, 0.0
      %v681 = vmax.f32 %v553, 0.0
      %v682 = vmax.f32 %v554, 0.0
      %v683 = vmax.f32 %v555, 0.0
      %v684 = vmax.f32 %v556, 0.0
      %v685 = vmax.f32 %v557, 0.0
      %v686 = vmax.f32 %v558, 0.0
      %v687 = vmax.f32 %v559, 0.0
      %v688 = vmax.f32 %v560, 0.0
      %v689 = vmax.f32 %v561, 0.0
      %v690 = vmax.f32 %v562, 0.0
      %v691 = vmax.f32 %v563, 0.0
      %v692 = vmax.f32 %v564, 0.0
      %v693 = vmax.f32 %v565, 0.0
      %v694 = vmax.f32 %v566, 0.0
      %v695 = vmax.f32 %v567, 0.0
      %v696 = vmax.f32 %v568, 0.0
      %v697 = vmax.f32 %v569, 0.0
      %v698 = vmax.f32 %v570, 0.0
      %v699 = vmax.f32 %v571, 0.0
      %v700 = vmax.f32 %v572, 0.0
      %v701 = vmax.f32 %v573, 0.0
      %v702 = vmax.f32 %v574, 0.0
      %v703 = vmax.f32 %v575, 0.0
      %v704 = vmax.f32 %v576, 0.0
      %v705 = vmax.f32 %v577, 0.0
      %v706 = vmax.f32 %v578, 0.0
      %v707 = vmax.f32 %v579, 0.0
      %v708 = vmax.f32 %v580, 0.0
      %v709 = vmax.f32 %v581, 0.0
      %v710 = vmax.f32 %v582, 0.0
      %v711 = vmax.f32 %v583, 0.0
      %v712 = vmax.f32 %v584, 0.0
      %v713 = vmax.f32 %v585, 0.0
      %v714 = vmax.f32 %v586, 0.0
      %v715 = vmax.f32 %v587, 0.0
      %v716 = vmax.f32 %v588, 0.0
      %v717 = vmax.f32 %v589, 0.0
      %v718 = vmax.f32 %v590, 0.0
      %v719 = vmax.f32 %v591, 0.0
      %v720 = vmax.f32 %v592, 0.0
      %v721 = vmax.f32 %v593, 0.0
      %v722 = vmax.f32 %v594, 0.0
      %v723 = vmax.f32 %v595, 0.0
      %v724 = vmax.f32 %v596, 0.0
      %v725 = vmax.f32 %v597, 0.0
      %v726 = vmax.f32 %v598, 0.0
      %v727 = vmax.f32 %v599, 0.0
      %v728 = vmax.f32 %v600, 0.0
      %v729 = vmax.f32 %v601, 0.0
      %v730 = vmax.f32 %v602, 0.0
      %v731 = vmax.f32 %v603, 0.0
      %v732 = vmax.f32 %v604, 0.0
      %v733 = vmax.f32 %v605, 0.0
      %v734 = vmax.f32 %v606, 0.0
      %v735 = vmax.f32 %v607, 0.0
      %v736 = vmax.f32 %v608, 0.0
      %v737 = vmax.f32 %v609, 0.0
      %v738 = vmax.f32 %v610, 0.0
      %v739 = vmax.f32 %v611, 0.0
      %v740 = vmax.f32 %v612, 0.0
      %v741 = vmax.f32 %v613, 0.0
      %v742 = vmax.f32 %v614, 0.0
      %v743 = vmax.f32 %v615, 0.0
      %v744 = vmax.f32 %v616, 0.0
      %v745 = vmax.f32 %v617, 0.0
      %v746 = vmax.f32 %v618, 0.0
      %v747 = vmax.f32 %v619, 0.0
      %v748 = vmax.f32 %v620, 0.0
      %v749 = vmax.f32 %v621, 0.0
      %v750 = vmax.f32 %v622, 0.0
      %v751 = vmax.f32 %v623, 0.0
      %v752 = vmax.f32 %v624, 0.0
      %v753 = vmax.f32 %v625, 0.0
      %v754 = vmax.f32 %v626, 0.0
      %v755 = vmax.f32 %v627, 0.0
      %v756 = vmax.f32 %v628, 0.0
      %v757 = vmax.f32 %v629, 0.0
      %v758 = vmax.f32 %v630, 0.0
      %v759 = vmax.f32 %v631, 0.0
      %v760 = vmax.f32 %v632, 0.0
      %v761 = vmax.f32 %v633, 0.0
      %v762 = vmax.f32 %v634, 0.0
      %v763 = vmax.f32 %v635, 0.0
      %v764 = vmax.f32 %v636, 0.0
      %v765 = vmax.f32 %v637, 0.0
      %v766 = vmax.f32 %v638, 0.0
      %v767 = vmax.f32 %v639, 0.0
      %v768 = vmax.f32 %v640, 0.0
      %v769 = vmax.f32 %v641, 0.0
      %v770 = vmax.f32 %v642, 0.0
      %v771 = vmax.f32 %v643, 0.0
      %v772 = vmax.f32 %v644, 0.0
      %v773 = vmax.f32 %v645, 0.0
      %v774 = vmax.f32 %v646, 0.0
      %v775 = vmax.f32 %v647, 0.0
      %v776 = vmax.f32 %v648, 0.0
      %v777 = vmax.f32 %v649, 0.0
      %v778 = vmax.f32 %v650, 0.0
      %v779 = vmax.f32 %v651, 0.0
      %v780 = vmax.f32 %v652, 0.0
      %v781 = vmax.f32 %v653, 0.0
      %v782 = vmax.f32 %v654, 0.0
      %v783 = vmax.f32 %v655, 0.0
      %v784 = vmax.f32 %v656, 0.0
      %v785 = vmax.f32 %v657, 0.0
      %v786 = vpack.c.bf16 %v662, %v658
      %v787 = vpack.c.bf16 %v663, %v659
      %v788 = vpack.c.bf16 %v664, %v660
      %v789 = vpack.c.bf16 %v665, %v661
      %v790 = vpack.c.bf16 %v670, %v666
      %v791 = vpack.c.bf16 %v671, %v667
      %v792 = vpack.c.bf16 %v672, %v668
      %v793 = vpack.c.bf16 %v673, %v669
      %v794 = vpack.c.bf16 %v678, %v674
      %v795 = vpack.c.bf16 %v679, %v675
      %v796 = vpack.c.bf16 %v680, %v676
      %v797 = vpack.c.bf16 %v681, %v677
      %v798 = vpack.c.bf16 %v686, %v682
      %v799 = vpack.c.bf16 %v687, %v683
      %v800 = vpack.c.bf16 %v688, %v684
      %v801 = vpack.c.bf16 %v689, %v685
      %v802 = vpack.c.bf16 %v694, %v690
      %v803 = vpack.c.bf16 %v695, %v691
      %v804 = vpack.c.bf16 %v696, %v692
      %v805 = vpack.c.bf16 %v697, %v693
      %v806 = vpack.c.bf16 %v702, %v698
      %v807 = vpack.c.bf16 %v703, %v699
      %v808 = vpack.c.bf16 %v704, %v700
      %v809 = vpack.c.bf16 %v705, %v701
      %v810 = vpack.c.bf16 %v710, %v706
      %v811 = vpack.c.bf16 %v711, %v707
      %v812 = vpack.c.bf16 %v712, %v708
      %v813 = vpack.c.bf16 %v713, %v709
      %v814 = vpack.c.bf16 %v718, %v714
      %v815 = vpack.c.bf16 %v719, %v715
      %v816 = vpack.c.bf16 %v720, %v716
      %v817 = vpack.c.bf16 %v721, %v717
      %v818 = vpack.c.bf16 %v726, %v722
      %v819 = vpack.c.bf16 %v727, %v723
      %v820 = vpack.c.bf16 %v728, %v724
      %v821 = vpack.c.bf16 %v729, %v725
      %v822 = vpack.c.bf16 %v734, %v730
      %v823 = vpack.c.bf16 %v735, %v731
      %v824 = vpack.c.bf16 %v736, %v732
      %v825 = vpack.c.bf16 %v737, %v733
      %v826 = vpack.c.bf16 %v742, %v738
      %v827 = vpack.c.bf16 %v743, %v739
      %v828 = vpack.c.bf16 %v744, %v740
      %v829 = vpack.c.bf16 %v745, %v741
      %v830 = vpack.c.bf16 %v750, %v746
      %v831 = vpack.c.bf16 %v751, %v747
      %v832 = vpack.c.bf16 %v752, %v748
      %v833 = vpack.c.bf16 %v753, %v749
      %v834 = vpack.c.bf16 %v758, %v754
      %v835 = vpack.c.bf16 %v759, %v755
      %v836 = vpack.c.bf16 %v760, %v756
      %v837 = vpack.c.bf16 %v761, %v757
      %v838 = vpack.c.bf16 %v766, %v762
      %v839 = vpack.c.bf16 %v767, %v763
      %v840 = vpack.c.bf16 %v768, %v764
      %v841 = vpack.c.bf16 %v769, %v765
      %v842 = vpack.c.bf16 %v774, %v770
      %v843 = vpack.c.bf16 %v775, %v771
      %v844 = vpack.c.bf16 %v776, %v772
      %v845 = vpack.c.bf16 %v777, %v773
      %v846 = vpack.c.bf16 %v782, %v778
      %v847 = vpack.c.bf16 %v783, %v779
      %v848 = vpack.c.bf16 %v784, %v780
      %v849 = vpack.c.bf16 %v785, %v781
      %v850 = vld [vmem:[%s290] sm:$0xf]
      %v851 = vld [vmem:[%s290 + $0x4] sm:$0xf]
      %v852 = vld [vmem:[%s290 + $0x8] sm:$0xf]
      %v853 = vld [vmem:[%s290 + $0xc] sm:$0xf]
      %v854 = vld [vmem:[%s290 + $0x10] sm:$0xf]
      %v855 = vld [vmem:[%s290 + $0x14] sm:$0xf]
      %v856 = vld [vmem:[%s290 + $0x18] sm:$0xf]
      %v857 = vld [vmem:[%s290 + $0x1c] sm:$0xf]
      %v858 = vld [vmem:[%s290 + $0x20] sm:$0xf]
      %v859 = vld [vmem:[%s290 + $0x24] sm:$0xf]
      %v860 = vld [vmem:[%s290 + $0x28] sm:$0xf]
      %v861 = vld [vmem:[%s290 + $0x2c] sm:$0xf]
      %v862 = vld [vmem:[%s290 + $0x30] sm:$0xf]
      %v863 = vld [vmem:[%s290 + $0x34] sm:$0xf]
      %v864 = vld [vmem:[%s290 + $0x38] sm:$0xf]
      %v865 = vld [vmem:[%s290 + $0x3c] sm:$0xf]
      %v866 = vld [vmem:[%s290 + $0x40] sm:$0xf]
      %v867 = vld [vmem:[%s290 + $0x44] sm:$0xf]
      %v868 = vld [vmem:[%s290 + $0x48] sm:$0xf]
      %v869 = vld [vmem:[%s290 + $0x4c] sm:$0xf]
      %v870 = vld [vmem:[%s290 + $0x50] sm:$0xf]
      %v871 = vld [vmem:[%s290 + $0x54] sm:$0xf]
      %v872 = vld [vmem:[%s290 + $0x58] sm:$0xf]
      %v873 = vld [vmem:[%s290 + $0x5c] sm:$0xf]
      %v874 = vld [vmem:[%s290 + $0x60] sm:$0xf]
      %v875 = vld [vmem:[%s290 + $0x64] sm:$0xf]
      %v876 = vld [vmem:[%s290 + $0x68] sm:$0xf]
      %v877 = vld [vmem:[%s290 + $0x6c] sm:$0xf]
      %v878 = vld [vmem:[%s290 + $0x70] sm:$0xf]
      %v879 = vld [vmem:[%s290 + $0x74] sm:$0xf]
      %v880 = vld [vmem:[%s290 + $0x78] sm:$0xf]
      %v881 = vld [vmem:[%s290 + $0x7c] sm:$0xf]
      %v882 = vld [vmem:[%s290 + $0x80] sm:$0xf]
      %v883 = vld [vmem:[%s290 + $0x84] sm:$0xf]
      %v884 = vld [vmem:[%s290 + $0x88] sm:$0xf]
      %v885 = vld [vmem:[%s290 + $0x8c] sm:$0xf]
      %v886 = vld [vmem:[%s290 + $0x90] sm:$0xf]
      %v887 = vld [vmem:[%s290 + $0x94] sm:$0xf]
      %v888 = vld [vmem:[%s290 + $0x98] sm:$0xf]
      %v889 = vld [vmem:[%s290 + $0x9c] sm:$0xf]
      %v890 = vld [vmem:[%s290 + $0xa0] sm:$0xf]
      %v891 = vld [vmem:[%s290 + $0xa4] sm:$0xf]
      %v892 = vld [vmem:[%s290 + $0xa8] sm:$0xf]
      %v893 = vld [vmem:[%s290 + $0xac] sm:$0xf]
      %v894 = vld [vmem:[%s290 + $0xb0] sm:$0xf]
      %v895 = vld [vmem:[%s290 + $0xb4] sm:$0xf]
      %v896 = vld [vmem:[%s290 + $0xb8] sm:$0xf]
      %v897 = vld [vmem:[%s290 + $0xbc] sm:$0xf]
      %v898 = vld [vmem:[%s290 + $0xc0] sm:$0xf]
      %v899 = vld [vmem:[%s290 + $0xc4] sm:$0xf]
      %v900 = vld [vmem:[%s290 + $0xc8] sm:$0xf]
      %v901 = vld [vmem:[%s290 + $0xcc] sm:$0xf]
      %v902 = vld [vmem:[%s290 + $0xd0] sm:$0xf]
      %v903 = vld [vmem:[%s290 + $0xd4] sm:$0xf]
      %v904 = vld [vmem:[%s290 + $0xd8] sm:$0xf]
      %v905 = vld [vmem:[%s290 + $0xdc] sm:$0xf]
      %v906 = vld [vmem:[%s290 + $0xe0] sm:$0xf]
      %v907 = vld [vmem:[%s290 + $0xe4] sm:$0xf]
      %v908 = vld [vmem:[%s290 + $0xe8] sm:$0xf]
      %v909 = vld [vmem:[%s290 + $0xec] sm:$0xf]
      %v910 = vld [vmem:[%s290 + $0xf0] sm:$0xf]
      %v911 = vld [vmem:[%s290 + $0xf4] sm:$0xf]
      %v912 = vld [vmem:[%s290 + $0xf8] sm:$0xf]
      %v913 = vld [vmem:[%s290 + $0xfc] sm:$0xf]
      %v978 = vunpack.c.l.b16 %v850
      %v979 = vunpack.c.l.b16 %v851
      %v980 = vunpack.c.l.b16 %v852
      %v981 = vunpack.c.l.b16 %v853
      %v982 = vunpack.c.l.b16 %v854
      %v983 = vunpack.c.l.b16 %v855
      %v984 = vunpack.c.l.b16 %v856
      %v985 = vunpack.c.l.b16 %v857
      %v986 = vunpack.c.l.b16 %v858
      %v987 = vunpack.c.l.b16 %v859
      %v988 = vunpack.c.l.b16 %v860
      %v989 = vunpack.c.l.b16 %v861
      %v990 = vunpack.c.l.b16 %v862
      %v991 = vunpack.c.l.b16 %v863
      %v992 = vunpack.c.l.b16 %v864
      %v993 = vunpack.c.l.b16 %v865
      %v994 = vunpack.c.l.b16 %v866
      %v995 = vunpack.c.l.b16 %v867
      %v996 = vunpack.c.l.b16 %v868
      %v997 = vunpack.c.l.b16 %v869
      %v998 = vunpack.c.l.b16 %v870
      %v999 = vunpack.c.l.b16 %v871
      %v1000 = vunpack.c.l.b16 %v872
      %v1001 = vunpack.c.l.b16 %v873
      %v1002 = vunpack.c.l.b16 %v874
      %v1003 = vunpack.c.l.b16 %v875
      %v1004 = vunpack.c.l.b16 %v876
      %v1005 = vunpack.c.l.b16 %v877
      %v1006 = vunpack.c.l.b16 %v878
      %v1007 = vunpack.c.l.b16 %v879
      %v1008 = vunpack.c.l.b16 %v880
      %v1009 = vunpack.c.l.b16 %v881
      %v1010 = vunpack.c.l.b16 %v882
      %v1011 = vunpack.c.l.b16 %v883
      %v1012 = vunpack.c.l.b16 %v884
      %v1013 = vunpack.c.l.b16 %v885
      %v1014 = vunpack.c.l.b16 %v886
      %v1015 = vunpack.c.l.b16 %v887
      %v1016 = vunpack.c.l.b16 %v888
      %v1017 = vunpack.c.l.b16 %v889
      %v1018 = vunpack.c.l.b16 %v890
      %v1019 = vunpack.c.l.b16 %v891
      %v1020 = vunpack.c.l.b16 %v892
      %v1021 = vunpack.c.l.b16 %v893
      %v1022 = vunpack.c.l.b16 %v894
      %v1023 = vunpack.c.l.b16 %v895
      %v1024 = vunpack.c.l.b16 %v896
      %v1025 = vunpack.c.l.b16 %v897
      %v1026 = vunpack.c.l.b16 %v898
      %v1027 = vunpack.c.l.b16 %v899
      %v1028 = vunpack.c.l.b16 %v900
      %v1029 = vunpack.c.l.b16 %v901
      %v1030 = vunpack.c.l.b16 %v902
      %v1031 = vunpack.c.l.b16 %v903
      %v1032 = vunpack.c.l.b16 %v904
      %v1033 = vunpack.c.l.b16 %v905
      %v1034 = vunpack.c.l.b16 %v906
      %v1035 = vunpack.c.l.b16 %v907
      %v1036 = vunpack.c.l.b16 %v908
      %v1037 = vunpack.c.l.b16 %v909
      %v1038 = vunpack.c.l.b16 %v910
      %v1039 = vunpack.c.l.b16 %v911
      %v1040 = vunpack.c.l.b16 %v912
      %v1041 = vunpack.c.l.b16 %v913
      %v1042 = vpack.c.b16 %v979, %v978
      %v1043 = vpack.c.b16 %v981, %v980
      %v1044 = vpack.c.b16 %v983, %v982
      %v1045 = vpack.c.b16 %v985, %v984
      %v1046 = vpack.c.b16 %v987, %v986
      %v1047 = vpack.c.b16 %v989, %v988
      %v1048 = vpack.c.b16 %v991, %v990
      %v1049 = vpack.c.b16 %v993, %v992
      %v1050 = vpack.c.b16 %v995, %v994
      %v1051 = vpack.c.b16 %v997, %v996
      %v1052 = vpack.c.b16 %v999, %v998
      %v1053 = vpack.c.b16 %v1001, %v1000
      %v1054 = vpack.c.b16 %v1003, %v1002
      %v1055 = vpack.c.b16 %v1005, %v1004
      %v1056 = vpack.c.b16 %v1007, %v1006
      %v1057 = vpack.c.b16 %v1009, %v1008
      %v1058 = vpack.c.b16 %v1011, %v1010
      %v1059 = vpack.c.b16 %v1013, %v1012
      %v1060 = vpack.c.b16 %v1015, %v1014
      %v1061 = vpack.c.b16 %v1017, %v1016
      %v1062 = vpack.c.b16 %v1019, %v1018
      %v1063 = vpack.c.b16 %v1021, %v1020
      %v1064 = vpack.c.b16 %v1023, %v1022
      %v1065 = vpack.c.b16 %v1025, %v1024
      %v1066 = vpack.c.b16 %v1027, %v1026
      %v1067 = vpack.c.b16 %v1029, %v1028
      %v1068 = vpack.c.b16 %v1031, %v1030
      %v1069 = vpack.c.b16 %v1033, %v1032
      %v1070 = vpack.c.b16 %v1035, %v1034
      %v1071 = vpack.c.b16 %v1037, %v1036
      %v1072 = vpack.c.b16 %v1039, %v1038
      %v1073 = vpack.c.b16 %v1041, %v1040
      %1106 = vmatprep.subr.bf16.mxu0 0
      %1107 = vmatpush1.bf16.msra.mxu0 %v1042
      %1108 = vmatprep.subr.bf16.mxu0 0
      %1109 = vmatpush1.bf16.msra.mxu0 %v1043
      %1110 = vmatprep.subr.bf16.mxu0 0
      %1111 = vmatpush1.bf16.msra.mxu0 %v1044
      %1112 = vmatprep.subr.bf16.mxu0 0
      %1113 = vmatpush1.bf16.msra.mxu0 %v1045
      %1114 = vmatprep.subr.bf16.mxu0 0
      %1115 = vmatpush1.bf16.msra.mxu0 %v1046
      %1116 = vmatprep.subr.bf16.mxu0 0
      %1117 = vmatpush1.bf16.msra.mxu0 %v1047
      %1118 = vmatprep.subr.bf16.mxu0 0
      %1119 = vmatpush1.bf16.msra.mxu0 %v1048
      %1120 = vmatprep.subr.bf16.mxu0 0
      %1121 = vmatpush1.bf16.msra.mxu0 %v1049
      %1122 = vmatprep.subr.bf16.mxu0 0
      %1123 = vmatpush1.bf16.msra.mxu0 %v1050
      %1124 = vmatprep.subr.bf16.mxu0 0
      %1125 = vmatpush1.bf16.msra.mxu0 %v1051
      %1126 = vmatprep.subr.bf16.mxu0 0
      %1127 = vmatpush1.bf16.msra.mxu0 %v1052
      %1128 = vmatprep.subr.bf16.mxu0 0
      %1129 = vmatpush1.bf16.msra.mxu0 %v1053
      %1130 = vmatprep.subr.bf16.mxu0 0
      %1131 = vmatpush1.bf16.msra.mxu0 %v1054
      %1132 = vmatprep.subr.bf16.mxu0 0
      %1133 = vmatpush1.bf16.msra.mxu0 %v1055
      %1134 = vmatprep.subr.bf16.mxu0 0
      %1135 = vmatpush1.bf16.msra.mxu0 %v1056
      %1136 = vmatprep.subr.bf16.mxu0 0
      %1137 = vmatpush1.bf16.msra.mxu0 %v1057
      %1138 = vmatprep.mubr.bf16.mxu0 %v787
      %1139 = vmatmul.mubr.bf16.gmra.mrb[0].mxu0 %v786
      %v1140 = vpop.f32.mrb[0].mxu0
      %v1141 = vadd.f32 0.0, %v1140
      %v1142 = vpop.f32.mrb[0].mxu0
      %v1143 = vpop.f32.mrb[0].mxu0
      %v1144 = vadd.f32 0.0, %v1143
      %v1145 = vpop.f32.mrb[0].mxu0
      %1146 = vmatprep.mubr.bf16.mxu0 %v791
      %1147 = vmatmul.mubr.bf16.gmra.mrb[0].mxu0 %v790
      %v1148 = vpop.f32.mrb[0].mxu0
      %v1149 = vadd.f32 0.0, %v1148
      %v1150 = vpop.f32.mrb[0].mxu0
      %v1151 = vpop.f32.mrb[0].mxu0
      %v1152 = vadd.f32 0.0, %v1151
      %v1153 = vpop.f32.mrb[0].mxu0
      %1154 = vmatprep.mubr.bf16.mxu0 %v795
      %1155 = vmatmul.mubr.bf16.gmra.mrb[0].mxu0 %v794
      %v1156 = vpop.f32.mrb[0].mxu0
      %v1157 = vadd.f32 0.0, %v1156
      %v1158 = vpop.f32.mrb[0].mxu0
      %v1159 = vpop.f32.mrb[0].mxu0
      %v1160 = vadd.f32 0.0, %v1159
      %v1161 = vpop.f32.mrb[0].mxu0
      %1162 = vmatprep.mubr.bf16.mxu0 %v799
      %1163 = vmatmul.mubr.bf16.gmra.mrb[0].mxu0 %v798
      %v1164 = vpop.f32.mrb[0].mxu0
      %v1165 = vadd.f32 0.0, %v1164
      %v1166 = vpop.f32.mrb[0].mxu0
      %v1167 = vpop.f32.mrb[0].mxu0
      %v1168 = vadd.f32 0.0, %v1167
      %v1169 = vpop.f32.mrb[0].mxu0
      %1170 = vmatprep.mubr.bf16.mxu0 %v803
      %1171 = vmatmul.mubr.bf16.gmra.mrb[0].mxu0 %v802
      %v1172 = vpop.f32.mrb[0].mxu0
      %v1173 = vadd.f32 0.0, %v1172
      %v1174 = vpop.f32.mrb[0].mxu0
      %v1175 = vpop.f32.mrb[0].mxu0
      %v1176 = vadd.f32 0.0, %v1175
      %v1177 = vpop.f32.mrb[0].mxu0
      %1178 = vmatprep.mubr.bf16.mxu0 %v807
      %1179 = vmatmul.mubr.bf16.gmra.mrb[0].mxu0 %v806
      %v1180 = vpop.f32.mrb[0].mxu0
      %v1181 = vadd.f32 0.0, %v1180
      %v1182 = vpop.f32.mrb[0].mxu0
      %v1183 = vpop.f32.mrb[0].mxu0
      %v1184 = vadd.f32 0.0, %v1183
      %v1185 = vpop.f32.mrb[0].mxu0
      %1186 = vmatprep.mubr.bf16.mxu0 %v811
      %1187 = vmatmul.mubr.bf16.gmra.mrb[0].mxu0 %v810
      %v1188 = vpop.f32.mrb[0].mxu0
      %v1189 = vadd.f32 0.0, %v1188
      %v1190 = vpop.f32.mrb[0].mxu0
      %v1191 = vpop.f32.mrb[0].mxu0
      %v1192 = vadd.f32 0.0, %v1191
      %v1193 = vpop.f32.mrb[0].mxu0
      %1194 = vmatprep.mubr.bf16.mxu0 %v815
      %1195 = vmatmul.mubr.bf16.gmra.mrb[0].mxu0 %v814
      %v1196 = vpop.f32.mrb[0].mxu0
      %v1197 = vadd.f32 0.0, %v1196
      %v1198 = vpop.f32.mrb[0].mxu0
      %v1199 = vpop.f32.mrb[0].mxu0
      %v1200 = vadd.f32 0.0, %v1199
      %v1201 = vpop.f32.mrb[0].mxu0
      %1202 = vmatprep.mubr.bf16.mxu0 %v819
      %1203 = vmatmul.mubr.bf16.gmra.mrb[0].mxu0 %v818
      %v1204 = vpop.f32.mrb[0].mxu0
      %v1205 = vadd.f32 0.0, %v1204
      %v1206 = vpop.f32.mrb[0].mxu0
      %v1207 = vpop.f32.mrb[0].mxu0
      %v1208 = vadd.f32 0.0, %v1207
      %v1209 = vpop.f32.mrb[0].mxu0
      %1210 = vmatprep.mubr.bf16.mxu0 %v823
      %1211 = vmatmul.mubr.bf16.gmra.mrb[0].mxu0 %v822
      %v1212 = vpop.f32.mrb[0].mxu0
      %v1213 = vadd.f32 0.0, %v1212
      %v1214 = vpop.f32.mrb[0].mxu0
      %v1215 = vpop.f32.mrb[0].mxu0
      %v1216 = vadd.f32 0.0, %v1215
      %v1217 = vpop.f32.mrb[0].mxu0
      %1218 = vmatprep.mubr.bf16.mxu0 %v827
      %1219 = vmatmul.mubr.bf16.gmra.mrb[0].mxu0 %v826
      %v1220 = vpop.f32.mrb[0].mxu0
      %v1221 = vadd.f32 0.0, %v1220
      %v1222 = vpop.f32.mrb[0].mxu0
      %v1223 = vpop.f32.mrb[0].mxu0
      %v1224 = vadd.f32 0.0, %v1223
      %v1225 = vpop.f32.mrb[0].mxu0
      %1226 = vmatprep.mubr.bf16.mxu0 %v831
      %1227 = vmatmul.mubr.bf16.gmra.mrb[0].mxu0 %v830
      %v1228 = vpop.f32.mrb[0].mxu0
      %v1229 = vadd.f32 0.0, %v1228
      %v1230 = vpop.f32.mrb[0].mxu0
      %v1231 = vpop.f32.mrb[0].mxu0
      %v1232 = vadd.f32 0.0, %v1231
      %v1233 = vpop.f32.mrb[0].mxu0
      %1234 = vmatprep.mubr.bf16.mxu0 %v835
      %1235 = vmatmul.mubr.bf16.gmra.mrb[0].mxu0 %v834
      %v1236 = vpop.f32.mrb[0].mxu0
      %v1237 = vadd.f32 0.0, %v1236
      %v1238 = vpop.f32.mrb[0].mxu0
      %v1239 = vpop.f32.mrb[0].mxu0
      %v1240 = vadd.f32 0.0, %v1239
      %v1241 = vpop.f32.mrb[0].mxu0
      %1242 = vmatprep.mubr.bf16.mxu0 %v839
      %1243 = vmatmul.mubr.bf16.gmra.mrb[0].mxu0 %v838
      %v1244 = vpop.f32.mrb[0].mxu0
      %v1245 = vadd.f32 0.0, %v1244
      %v1246 = vpop.f32.mrb[0].mxu0
      %v1247 = vpop.f32.mrb[0].mxu0
      %v1248 = vadd.f32 0.0, %v1247
      %v1249 = vpop.f32.mrb[0].mxu0
      %1250 = vmatprep.mubr.bf16.mxu0 %v843
      %1251 = vmatmul.mubr.bf16.gmra.mrb[0].mxu0 %v842
      %v1252 = vpop.f32.mrb[0].mxu0
      %v1253 = vadd.f32 0.0, %v1252
      %v1254 = vpop.f32.mrb[0].mxu0
      %v1255 = vpop.f32.mrb[0].mxu0
      %v1256 = vadd.f32 0.0, %v1255
      %v1257 = vpop.f32.mrb[0].mxu0
      %1258 = vmatprep.mubr.bf16.mxu0 %v847
      %1259 = vmatmul.mubr.bf16.gmra.mrb[0].mxu0 %v846
      %v1260 = vpop.f32.mrb[0].mxu0
      %v1261 = vadd.f32 0.0, %v1260
      %v1262 = vpop.f32.mrb[0].mxu0
      %v1263 = vpop.f32.mrb[0].mxu0
      %v1264 = vadd.f32 0.0, %v1263
      %v1265 = vpop.f32.mrb[0].mxu0
      %1266 = vdwg.mxu0
      %1267 = vmatprep.subr.bf16.mxu0 0
      %1268 = vmatpush1.bf16.msra.mxu0 %v1058
      %1269 = vmatprep.subr.bf16.mxu0 0
      %1270 = vmatpush1.bf16.msra.mxu0 %v1059
      %1271 = vmatprep.subr.bf16.mxu0 0
      %1272 = vmatpush1.bf16.msra.mxu0 %v1060
      %1273 = vmatprep.subr.bf16.mxu0 0
      %1274 = vmatpush1.bf16.msra.mxu0 %v1061
      %1275 = vmatprep.subr.bf16.mxu0 0
      %1276 = vmatpush1.bf16.msra.mxu0 %v1062
      %1277 = vmatprep.subr.bf16.mxu0 0
      %1278 = vmatpush1.bf16.msra.mxu0 %v1063
      %1279 = vmatprep.subr.bf16.mxu0 0
      %1280 = vmatpush1.bf16.msra.mxu0 %v1064
      %1281 = vmatprep.subr.bf16.mxu0 0
      %1282 = vmatpush1.bf16.msra.mxu0 %v1065
      %1283 = vmatprep.subr.bf16.mxu0 0
      %1284 = vmatpush1.bf16.msra.mxu0 %v1066
      %1285 = vmatprep.subr.bf16.mxu0 0
      %1286 = vmatpush1.bf16.msra.mxu0 %v1067
      %1287 = vmatprep.subr.bf16.mxu0 0
      %1288 = vmatpush1.bf16.msra.mxu0 %v1068
      %1289 = vmatprep.subr.bf16.mxu0 0
      %1290 = vmatpush1.bf16.msra.mxu0 %v1069
      %1291 = vmatprep.subr.bf16.mxu0 0
      %1292 = vmatpush1.bf16.msra.mxu0 %v1070
      %1293 = vmatprep.subr.bf16.mxu0 0
      %1294 = vmatpush1.bf16.msra.mxu0 %v1071
      %1295 = vmatprep.subr.bf16.mxu0 0
      %1296 = vmatpush1.bf16.msra.mxu0 %v1072
      %1297 = vmatprep.subr.bf16.mxu0 0
      %1298 = vmatpush1.bf16.msra.mxu0 %v1073
      %1299 = vmatprep.mubr.bf16.mxu0 %v789
      %1300 = vmatmul.mubr.bf16.gmra.mrb[0].mxu0 %v788
      %v1301 = vpop.f32.mrb[0].mxu0
      %v1302 = vadd.f32 %v1141, %v1301
      %v1303 = vpop.f32.mrb[0].mxu0
      %v1304 = vpop.f32.mrb[0].mxu0
      %v1305 = vadd.f32 %v1144, %v1304
      %v1306 = vpop.f32.mrb[0].mxu0
      %1307 = vmatprep.mubr.bf16.mxu0 %v793
      %1308 = vmatmul.mubr.bf16.gmra.mrb[0].mxu0 %v792
      %v1309 = vpop.f32.mrb[0].mxu0
      %v1310 = vadd.f32 %v1149, %v1309
      %v1311 = vpop.f32.mrb[0].mxu0
      %v1312 = vpop.f32.mrb[0].mxu0
      %v1313 = vadd.f32 %v1152, %v1312
      %v1314 = vpop.f32.mrb[0].mxu0
      %1315 = vmatprep.mubr.bf16.mxu0 %v797
      %1316 = vmatmul.mubr.bf16.gmra.mrb[0].mxu0 %v796
      %v1317 = vpop.f32.mrb[0].mxu0
      %v1318 = vadd.f32 %v1157, %v1317
      %v1319 = vpop.f32.mrb[0].mxu0
      %v1320 = vpop.f32.mrb[0].mxu0
      %v1321 = vadd.f32 %v1160, %v1320
      %v1322 = vpop.f32.mrb[0].mxu0
      %1323 = vmatprep.mubr.bf16.mxu0 %v801
      %1324 = vmatmul.mubr.bf16.gmra.mrb[0].mxu0 %v800
      %v1325 = vpop.f32.mrb[0].mxu0
      %v1326 = vadd.f32 %v1165, %v1325
      %v1327 = vpop.f32.mrb[0].mxu0
      %v1328 = vpop.f32.mrb[0].mxu0
      %v1329 = vadd.f32 %v1168, %v1328
      %v1330 = vpop.f32.mrb[0].mxu0
      %1331 = vmatprep.mubr.bf16.mxu0 %v805
      %1332 = vmatmul.mubr.bf16.gmra.mrb[0].mxu0 %v804
      %v1333 = vpop.f32.mrb[0].mxu0
      %v1334 = vadd.f32 %v1173, %v1333
      %v1335 = vpop.f32.mrb[0].mxu0
      %v1336 = vpop.f32.mrb[0].mxu0
      %v1337 = vadd.f32 %v1176, %v1336
      %v1338 = vpop.f32.mrb[0].mxu0
      %1339 = vmatprep.mubr.bf16.mxu0 %v809
      %1340 = vmatmul.mubr.bf16.gmra.mrb[0].mxu0 %v808
      %v1341 = vpop.f32.mrb[0].mxu0
      %v1342 = vadd.f32 %v1181, %v1341
      %v1343 = vpop.f32.mrb[0].mxu0
      %v1344 = vpop.f32.mrb[0].mxu0
      %v1345 = vadd.f32 %v1184, %v1344
      %v1346 = vpop.f32.mrb[0].mxu0
      %1347 = vmatprep.mubr.bf16.mxu0 %v813
      %1348 = vmatmul.mubr.bf16.gmra.mrb[0].mxu0 %v812
      %v1349 = vpop.f32.mrb[0].mxu0
      %v1350 = vadd.f32 %v1189, %v1349
      %v1351 = vpop.f32.mrb[0].mxu0
      %v1352 = vpop.f32.mrb[0].mxu0
      %v1353 = vadd.f32 %v1192, %v1352
      %v1354 = vpop.f32.mrb[0].mxu0
      %1355 = vmatprep.mubr.bf16.mxu0 %v817
      %1356 = vmatmul.mubr.bf16.gmra.mrb[0].mxu0 %v816
      %v1357 = vpop.f32.mrb[0].mxu0
      %v1358 = vadd.f32 %v1197, %v1357
      %v1359 = vpop.f32.mrb[0].mxu0
      %v1360 = vpop.f32.mrb[0].mxu0
      %v1361 = vadd.f32 %v1200, %v1360
      %v1362 = vpop.f32.mrb[0].mxu0
      %1363 = vmatprep.mubr.bf16.mxu0 %v821
      %1364 = vmatmul.mubr.bf16.gmra.mrb[0].mxu0 %v820
      %v1365 = vpop.f32.mrb[0].mxu0
      %v1366 = vadd.f32 %v1205, %v1365
      %v1367 = vpop.f32.mrb[0].mxu0
      %v1368 = vpop.f32.mrb[0].mxu0
      %v1369 = vadd.f32 %v1208, %v1368
      %v1370 = vpop.f32.mrb[0].mxu0
      %1371 = vmatprep.mubr.bf16.mxu0 %v825
      %1372 = vmatmul.mubr.bf16.gmra.mrb[0].mxu0 %v824
      %v1373 = vpop.f32.mrb[0].mxu0
      %v1374 = vadd.f32 %v1213, %v1373
      %v1375 = vpop.f32.mrb[0].mxu0
      %v1376 = vpop.f32.mrb[0].mxu0
      %v1377 = vadd.f32 %v1216, %v1376
      %v1378 = vpop.f32.mrb[0].mxu0
      %1379 = vmatprep.mubr.bf16.mxu0 %v829
      %1380 = vmatmul.mubr.bf16.gmra.mrb[0].mxu0 %v828
      %v1381 = vpop.f32.mrb[0].mxu0
      %v1382 = vadd.f32 %v1221, %v1381
      %v1383 = vpop.f32.mrb[0].mxu0
      %v1384 = vpop.f32.mrb[0].mxu0
      %v1385 = vadd.f32 %v1224, %v1384
      %v1386 = vpop.f32.mrb[0].mxu0
      %1387 = vmatprep.mubr.bf16.mxu0 %v833
      %1388 = vmatmul.mubr.bf16.gmra.mrb[0].mxu0 %v832
      %v1389 = vpop.f32.mrb[0].mxu0
      %v1390 = vadd.f32 %v1229, %v1389
      %v1391 = vpop.f32.mrb[0].mxu0
      %v1392 = vpop.f32.mrb[0].mxu0
      %v1393 = vadd.f32 %v1232, %v1392
      %v1394 = vpop.f32.mrb[0].mxu0
      %1395 = vmatprep.mubr.bf16.mxu0 %v837
      %1396 = vmatmul.mubr.bf16.gmra.mrb[0].mxu0 %v836
      %v1397 = vpop.f32.mrb[0].mxu0
      %v1398 = vadd.f32 %v1237, %v1397
      %v1399 = vpop.f32.mrb[0].mxu0
      %v1400 = vpop.f32.mrb[0].mxu0
      %v1401 = vadd.f32 %v1240, %v1400
      %v1402 = vpop.f32.mrb[0].mxu0
      %1403 = vmatprep.mubr.bf16.mxu0 %v841
      %1404 = vmatmul.mubr.bf16.gmra.mrb[0].mxu0 %v840
      %v1405 = vpop.f32.mrb[0].mxu0
      %v1406 = vadd.f32 %v1245, %v1405
      %v1407 = vpop.f32.mrb[0].mxu0
      %v1408 = vpop.f32.mrb[0].mxu0
      %v1409 = vadd.f32 %v1248, %v1408
      %v1410 = vpop.f32.mrb[0].mxu0
      %1411 = vmatprep.mubr.bf16.mxu0 %v845
      %1412 = vmatmul.mubr.bf16.gmra.mrb[0].mxu0 %v844
      %v1413 = vpop.f32.mrb[0].mxu0
      %v1414 = vadd.f32 %v1253, %v1413
      %v1415 = vpop.f32.mrb[0].mxu0
      %v1416 = vpop.f32.mrb[0].mxu0
      %v1417 = vadd.f32 %v1256, %v1416
      %v1418 = vpop.f32.mrb[0].mxu0
      %1419 = vmatprep.mubr.bf16.mxu0 %v849
      %1420 = vmatmul.mubr.bf16.gmra.mrb[0].mxu0 %v848
      %v1421 = vpop.f32.mrb[0].mxu0
      %v1422 = vadd.f32 %v1261, %v1421
      %v1423 = vpop.f32.mrb[0].mxu0
      %v1424 = vpop.f32.mrb[0].mxu0
      %v1425 = vadd.f32 %v1264, %v1424
      %v1426 = vpop.f32.mrb[0].mxu0
      %1427 = vdwg.mxu0
      %v1428 = vpack.c.bf16 %v1305, %v1302
      %v1429 = vpack.c.bf16 %v1313, %v1310
      %v1430 = vpack.c.bf16 %v1321, %v1318
      %v1431 = vpack.c.bf16 %v1329, %v1326
      %v1432 = vpack.c.bf16 %v1337, %v1334
      %v1433 = vpack.c.bf16 %v1345, %v1342
      %v1434 = vpack.c.bf16 %v1353, %v1350
      %v1435 = vpack.c.bf16 %v1361, %v1358
      %v1436 = vpack.c.bf16 %v1369, %v1366
      %v1437 = vpack.c.bf16 %v1377, %v1374
      %v1438 = vpack.c.bf16 %v1385, %v1382
      %v1439 = vpack.c.bf16 %v1393, %v1390
      %v1440 = vpack.c.bf16 %v1401, %v1398
      %v1441 = vpack.c.bf16 %v1409, %v1406
      %v1442 = vpack.c.bf16 %v1417, %v1414
      %v1443 = vpack.c.bf16 %v1425, %v1422
      %v1460 = vunpack.c.l.b16 %v1428
      %v1461 = vunpack.c.h.b16 %v1428
      %v1462 = vunpack.c.l.b16 %v1429
      %v1463 = vunpack.c.h.b16 %v1429
      %v1464 = vunpack.c.l.b16 %v1430
      %v1465 = vunpack.c.h.b16 %v1430
      %v1466 = vunpack.c.l.b16 %v1431
      %v1467 = vunpack.c.h.b16 %v1431
      %v1468 = vunpack.c.l.b16 %v1432
      %v1469 = vunpack.c.h.b16 %v1432
      %v1470 = vunpack.c.l.b16 %v1433
      %v1471 = vunpack.c.h.b16 %v1433
      %v1472 = vunpack.c.l.b16 %v1434
      %v1473 = vunpack.c.h.b16 %v1434
      %v1474 = vunpack.c.l.b16 %v1435
      %v1475 = vunpack.c.h.b16 %v1435
      %v1476 = vunpack.c.l.b16 %v1436
      %v1477 = vunpack.c.h.b16 %v1436
      %v1478 = vunpack.c.l.b16 %v1437
      %v1479 = vunpack.c.h.b16 %v1437
      %v1480 = vunpack.c.l.b16 %v1438
      %v1481 = vunpack.c.h.b16 %v1438
      %v1482 = vunpack.c.l.b16 %v1439
      %v1483 = vunpack.c.h.b16 %v1439
      %v1484 = vunpack.c.l.b16 %v1440
      %v1485 = vunpack.c.h.b16 %v1440
      %v1486 = vunpack.c.l.b16 %v1441
      %v1487 = vunpack.c.h.b16 %v1441
      %v1488 = vunpack.c.l.b16 %v1442
      %v1489 = vunpack.c.h.b16 %v1442
      %v1490 = vunpack.c.l.b16 %v1443
      %v1491 = vunpack.c.h.b16 %v1443
      %v1492 = vpack.c.b16 %v1460, %v1460
      %v1493 = vpack.c.b16 %v1461, %v1461
      %v1494 = vpack.c.b16 %v1462, %v1462
      %v1495 = vpack.c.b16 %v1463, %v1463
      %v1496 = vpack.c.b16 %v1464, %v1464
      %v1497 = vpack.c.b16 %v1465, %v1465
      %v1498 = vpack.c.b16 %v1466, %v1466
      %v1499 = vpack.c.b16 %v1467, %v1467
      %v1500 = vpack.c.b16 %v1468, %v1468
      %v1501 = vpack.c.b16 %v1469, %v1469
      %v1502 = vpack.c.b16 %v1470, %v1470
      %v1503 = vpack.c.b16 %v1471, %v1471
      %v1504 = vpack.c.b16 %v1472, %v1472
      %v1505 = vpack.c.b16 %v1473, %v1473
      %v1506 = vpack.c.b16 %v1474, %v1474
      %v1507 = vpack.c.b16 %v1475, %v1475
      %v1508 = vpack.c.b16 %v1476, %v1476
      %v1509 = vpack.c.b16 %v1477, %v1477
      %v1510 = vpack.c.b16 %v1478, %v1478
      %v1511 = vpack.c.b16 %v1479, %v1479
      %v1512 = vpack.c.b16 %v1480, %v1480
      %v1513 = vpack.c.b16 %v1481, %v1481
      %v1514 = vpack.c.b16 %v1482, %v1482
      %v1515 = vpack.c.b16 %v1483, %v1483
      %v1516 = vpack.c.b16 %v1484, %v1484
      %v1517 = vpack.c.b16 %v1485, %v1485
      %v1518 = vpack.c.b16 %v1486, %v1486
      %v1519 = vpack.c.b16 %v1487, %v1487
      %v1520 = vpack.c.b16 %v1488, %v1488
      %v1521 = vpack.c.b16 %v1489, %v1489
      %v1522 = vpack.c.b16 %v1490, %v1490
      %v1523 = vpack.c.b16 %v1491, %v1491
      %1556 = vst [vmem:[%s302] sm:$0xf] %v1492
      %1557 = vst [vmem:[%s302 + $0x4] sm:$0xf] %v1493
      %1558 = vst [vmem:[%s302 + $0x8] sm:$0xf] %v1494
      %1559 = vst [vmem:[%s302 + $0xc] sm:$0xf] %v1495
      %1560 = vst [vmem:[%s302 + $0x10] sm:$0xf] %v1496
      %1561 = vst [vmem:[%s302 + $0x14] sm:$0xf] %v1497
      %1562 = vst [vmem:[%s302 + $0x18] sm:$0xf] %v1498
      %1563 = vst [vmem:[%s302 + $0x1c] sm:$0xf] %v1499
      %1564 = vst [vmem:[%s302 + $0x20] sm:$0xf] %v1500
      %1565 = vst [vmem:[%s302 + $0x24] sm:$0xf] %v1501
      %1566 = vst [vmem:[%s302 + $0x28] sm:$0xf] %v1502
      %1567 = vst [vmem:[%s302 + $0x2c] sm:$0xf] %v1503
      %1568 = vst [vmem:[%s302 + $0x30] sm:$0xf] %v1504
      %1569 = vst [vmem:[%s302 + $0x34] sm:$0xf] %v1505
      %1570 = vst [vmem:[%s302 + $0x38] sm:$0xf] %v1506
      %1571 = vst [vmem:[%s302 + $0x3c] sm:$0xf] %v1507
      %1572 = vst [vmem:[%s302 + $0x40] sm:$0xf] %v1508
      %1573 = vst [vmem:[%s302 + $0x44] sm:$0xf] %v1509
      %1574 = vst [vmem:[%s302 + $0x48] sm:$0xf] %v1510
      %1575 = vst [vmem:[%s302 + $0x4c] sm:$0xf] %v1511
      %1576 = vst [vmem:[%s302 + $0x50] sm:$0xf] %v1512
      %1577 = vst [vmem:[%s302 + $0x54] sm:$0xf] %v1513
      %1578 = vst [vmem:[%s302 + $0x58] sm:$0xf] %v1514
      %1579 = vst [vmem:[%s302 + $0x5c] sm:$0xf] %v1515
      %1580 = vst [vmem:[%s302 + $0x60] sm:$0xf] %v1516
      %1581 = vst [vmem:[%s302 + $0x64] sm:$0xf] %v1517
      %1582 = vst [vmem:[%s302 + $0x68] sm:$0xf] %v1518
      %1583 = vst [vmem:[%s302 + $0x6c] sm:$0xf] %v1519
      %1584 = vst [vmem:[%s302 + $0x70] sm:$0xf] %v1520
      %1585 = vst [vmem:[%s302 + $0x74] sm:$0xf] %v1521
      %1586 = vst [vmem:[%s302 + $0x78] sm:$0xf] %v1522
      %1587 = vst [vmem:[%s302 + $0x7c] sm:$0xf] %v1523
      %v1588 = vadd.f32 %v1302, %v1305
      %v1589 = vadd.f32 %v1588, %v1310
      %v1590 = vadd.f32 %v1589, %v1313
      %v1591 = vadd.f32 %v1590, %v1318
      %v1592 = vadd.f32 %v1591, %v1321
      %v1593 = vadd.f32 %v1592, %v1326
      %v1594 = vadd.f32 %v1593, %v1329
      %v1595 = vadd.f32 %v1594, %v1334
      %v1596 = vadd.f32 %v1595, %v1337
      %v1597 = vadd.f32 %v1596, %v1342
      %v1598 = vadd.f32 %v1597, %v1345
      %v1599 = vadd.f32 %v1598, %v1350
      %v1600 = vadd.f32 %v1599, %v1353
      %v1601 = vadd.f32 %v1600, %v1358
      %v1602 = vadd.f32 %v1601, %v1361
      %v1603 = vadd.f32 %v1602, %v1366
      %v1604 = vadd.f32 %v1603, %v1369
      %v1605 = vadd.f32 %v1604, %v1374
      %v1606 = vadd.f32 %v1605, %v1377
      %v1607 = vadd.f32 %v1606, %v1382
      %v1608 = vadd.f32 %v1607, %v1385
      %v1609 = vadd.f32 %v1608, %v1390
      %v1610 = vadd.f32 %v1609, %v1393
      %v1611 = vadd.f32 %v1610, %v1398
      %v1612 = vadd.f32 %v1611, %v1401
      %v1613 = vadd.f32 %v1612, %v1406
      %v1614 = vadd.f32 %v1613, %v1409
      %v1615 = vadd.f32 %v1614, %v1414
      %v1616 = vadd.f32 %v1615, %v1417
      %v1617 = vadd.f32 %v1616, %v1422
      %v1618 = vadd.f32 %v1617, %v1425
      %v1619 = vrot.slane %v1618, 4
      %v1620 = vadd.f32 %v1618, %v1619
      %v1621 = vrot.slane %v1620, 2
      %v1622 = vadd.f32 %v1620, %v1621
      %v1623 = vrot.slane %v1622, 1
      %v1624 = vadd.f32 %v1622, %v1623
      %v1625 = vmul.f32 %v1302, %v1302
      %v1626 = vmul.f32 %v1305, %v1305
      %v1627 = vmul.f32 %v1310, %v1310
      %v1628 = vmul.f32 %v1313, %v1313
      %v1629 = vmul.f32 %v1318, %v1318
      %v1630 = vmul.f32 %v1321, %v1321
      %v1631 = vmul.f32 %v1326, %v1326
      %v1632 = vmul.f32 %v1329, %v1329
      %v1633 = vmul.f32 %v1334, %v1334
      %v1634 = vmul.f32 %v1337, %v1337
      %v1635 = vmul.f32 %v1342, %v1342
      %v1636 = vmul.f32 %v1345, %v1345
      %v1637 = vmul.f32 %v1350, %v1350
      %v1638 = vmul.f32 %v1353, %v1353
      %v1639 = vmul.f32 %v1358, %v1358
      %v1640 = vmul.f32 %v1361, %v1361
      %v1641 = vmul.f32 %v1366, %v1366
      %v1642 = vmul.f32 %v1369, %v1369
      %v1643 = vmul.f32 %v1374, %v1374
      %v1644 = vmul.f32 %v1377, %v1377
      %v1645 = vmul.f32 %v1382, %v1382
      %v1646 = vmul.f32 %v1385, %v1385
      %v1647 = vmul.f32 %v1390, %v1390
      %v1648 = vmul.f32 %v1393, %v1393
      %v1649 = vmul.f32 %v1398, %v1398
      %v1650 = vmul.f32 %v1401, %v1401
      %v1651 = vmul.f32 %v1406, %v1406
      %v1652 = vmul.f32 %v1409, %v1409
      %v1653 = vmul.f32 %v1414, %v1414
      %v1654 = vmul.f32 %v1417, %v1417
      %v1655 = vmul.f32 %v1422, %v1422
      %v1656 = vmul.f32 %v1425, %v1425
      %v1657 = vadd.f32 %v1625, %v1626
      %v1658 = vadd.f32 %v1657, %v1627
      %v1659 = vadd.f32 %v1658, %v1628
      %v1660 = vadd.f32 %v1659, %v1629
      %v1661 = vadd.f32 %v1660, %v1630
      %v1662 = vadd.f32 %v1661, %v1631
      %v1663 = vadd.f32 %v1662, %v1632
      %v1664 = vadd.f32 %v1663, %v1633
      %v1665 = vadd.f32 %v1664, %v1634
      %v1666 = vadd.f32 %v1665, %v1635
      %v1667 = vadd.f32 %v1666, %v1636
      %v1668 = vadd.f32 %v1667, %v1637
      %v1669 = vadd.f32 %v1668, %v1638
      %v1670 = vadd.f32 %v1669, %v1639
      %v1671 = vadd.f32 %v1670, %v1640
      %v1672 = vadd.f32 %v1671, %v1641
      %v1673 = vadd.f32 %v1672, %v1642
      %v1674 = vadd.f32 %v1673, %v1643
      %v1675 = vadd.f32 %v1674, %v1644
      %v1676 = vadd.f32 %v1675, %v1645
      %v1677 = vadd.f32 %v1676, %v1646
      %v1678 = vadd.f32 %v1677, %v1647
      %v1679 = vadd.f32 %v1678, %v1648
      %v1680 = vadd.f32 %v1679, %v1649
      %v1681 = vadd.f32 %v1680, %v1650
      %v1682 = vadd.f32 %v1681, %v1651
      %v1683 = vadd.f32 %v1682, %v1652
      %v1684 = vadd.f32 %v1683, %v1653
      %v1685 = vadd.f32 %v1684, %v1654
      %v1686 = vadd.f32 %v1685, %v1655
      %v1687 = vadd.f32 %v1686, %v1656
      %v1688 = vrot.slane %v1687, 4
      %v1689 = vadd.f32 %v1687, %v1688
      %v1690 = vrot.slane %v1689, 2
      %v1691 = vadd.f32 %v1689, %v1690
      %v1692 = vrot.slane %v1691, 1
      %v1693 = vadd.f32 %v1691, %v1692
      %vm1694 = vcmask 1040384
      %v1695 = vsel %vm1694, %v1624, %v1693
      %1696 = vst [vmem:[%s314] sm:$0x3] %v1695
      %s1697 = smul.u32 32, %s22
      %p1698 = scmp.lt.s32.totalorder %s21, 3
      %s1699 = scalar_select %p1698, %s21, 3
      %p1700 = scmp.lt.s32.totalorder %s1697, 63
      %s1701 = scalar_select %p1700, %s1697, 63
      %p1702 = scmp.lt.s32.totalorder %s23, 0
      %s1703 = scalar_select %p1702, %s23, 0
      %s1704 = sadd.s32 %s1703, %s1701
      %s1705 = smul.addr %s1699, 64
      %s1706 = sadd.s32 %s1704, %s1705
      %s1707 = smul.addr %s1706, 4
      %s1708 = scalar_lea.vmem %s3, %s1707
      %p1709 = scmp.lt.s32.totalorder %s21, 3
      %s1710 = scalar_select %p1709, %s21, 3
      %p1711 = scmp.lt.s32.totalorder %s22, 1
      %s1712 = scalar_select %p1711, %s22, 1
      %p1713 = scmp.lt.s32.totalorder %s23, 0
      %s1714 = scalar_select %p1713, %s23, 0
      %s1715 = sadd.s32 %s1714, %s1712
      %s1716 = smul.addr %s1710, 2
      %s1717 = sadd.s32 %s1715, %s1716
      %s1718 = smul.addr %s1717, 2
      %s1719 = scalar_lea.vmem %s4, %s1718
      // Predicated region
      $region33: #{generator_forward.8} parent=31 // pred_check
        %p1720 = pneg %p134
      $region34: #{generator_forward.8} parent=31 // pred_check_branch
        %1722 = sbr.rel (%p1720) target = $region36
      $region35: #{generator_forward.8} parent=31 // pred_region
        %s1723 = smul.u32 32, %s22
      $region36: #{generator_forward.8} parent=31 // pred_fallthru
        _
      // Predicated region
      $region37: #{generator_forward.8} parent=31 // pred_check
        %p1724 = pneg %p164
      $region38: #{generator_forward.8} parent=31 // pred_check_branch
        %1726 = sbr.rel (%p1724) target = $region40
      $region39: #{generator_forward.8} parent=31 // pred_region
        _
      $region40: #{generator_forward.8} parent=31 // pred_fallthru
        _
    $region32: #{generator_forward.8} parent=5 // pred_fallthru
      _
    %p1727 = scmp.le.s32.totalorder 2, %s11
    // Predicated region
    $region41: #{generator_forward.8} parent=5 // pred_check
      %p1728 = pneg %p1727
    $region42: #{generator_forward.8} parent=5 // pred_check_branch
      %1730 = sbr.rel (%p1728) target = $region44
    $region43: #{generator_forward.8} parent=5 // pred_region
      %s1731 = ssub.s32 %s11, 2
      // Predicated region
      $region45: #{generator_forward.8} parent=43 // pred_check
        %p1732 = pneg %p140
      $region46: #{generator_forward.8} parent=43 // pred_check_branch
        %1734 = sbr.rel (%p1732) target = $region48
      $region47: #{generator_forward.8} parent=43 // pred_region
        %s1735 = smul.u32 32, %s25
        %p1736 = scmp.lt.s32.totalorder %s24, 3
        %s1737 = scalar_select %p1736, %s24, 3
        %p1738 = scmp.lt.s32.totalorder %s1735, 63
        %s1739 = scalar_select %p1738, %s1735, 63
        %p1740 = scmp.lt.s32.totalorder %s26, 0
        %s1741 = scalar_select %p1740, %s26, 0
        %s1742 = sadd.s32 %s1741, %s1739
        %s1743 = smul.addr %s1737, 64
        %s1744 = sadd.s32 %s1742, %s1743
        %s1745 = smul.addr %s1744, 4
        %s1746 = scalar_lea.vmem %s3, %s1745
      $region48: #{generator_forward.8} parent=43 // pred_fallthru
        _
      // Predicated region
      $region49: #{generator_forward.8} parent=43 // pred_check
        %p1747 = pneg %p170
      $region50: #{generator_forward.8} parent=43 // pred_check_branch
        %1749 = sbr.rel (%p1747) target = $region52
      $region51: #{generator_forward.8} parent=43 // pred_region
        %p1750 = scmp.lt.s32.totalorder %s24, 3
        %s1751 = scalar_select %p1750, %s24, 3
        %p1752 = scmp.lt.s32.totalorder %s25, 1
        %s1753 = scalar_select %p1752, %s25, 1
        %p1754 = scmp.lt.s32.totalorder %s26, 0
        %s1755 = scalar_select %p1754, %s26, 0
        %s1756 = sadd.s32 %s1755, %s1753
        %s1757 = smul.addr %s1751, 2
        %s1758 = sadd.s32 %s1756, %s1757
        %s1759 = smul.addr %s1758, 2
        %s1760 = scalar_lea.vmem %s4, %s1759
      $region52: #{generator_forward.8} parent=43 // pred_fallthru
        _
    $region44: #{generator_forward.8} parent=5 // pred_fallthru
      _
  $region6: #{generator_forward.8} parent=0 // loop_footer
    %s15 = sadd.s32 1, %s11
  $region7: #{generator_forward.8} parent=0 // loop_footer_branch
    %10 = sbr.rel target = $region3
  $region8: #{generator_forward.8} parent=0 // loop_exit
    _

// kernel: tile.38
$region0: #{tile.38}
  #allocation0 [shape = 's32[1]{0}', space=sflag, size = 0x4, scoped, tag = 'scoped memory for tile.38']
  %s0 = inlined_call_operand.vmem [shape: f32[64], index: 0, kind: input, shape index: {}]
  %s1 = inlined_call_operand.vmem [shape: f32[4,64], index: 1, kind: output, shape index: {}]
  // Predicated region
  $region2: #{tile.38} parent=0 // pred_check
    _
  $region3: #{tile.38} parent=0 // pred_check_branch
    %3 = sbr.rel (0) target = $region5
  $region4: #{tile.38} parent=0 // pred_region
    _
  $region5: #{tile.38} parent=0 // pred_fallthru
    _
  %v4 = vld [vmem:[%s0] ss:$0 sm:$0xff]
  %5 = vst [vmem:[%s1] sm:$0xf] %v4

// kernel: tile.39
$region0: #{tile.39}
  %s0 = inlined_call_operand.vmem [shape: f32[4,64], index: 0, kind: input, shape index: {}]
  %s1 = inlined_call_operand.vmem [shape: f32[1,256], index: 1, kind: output, shape index: {}]
  $region1: #{tile.39} parent=0
    #allocation0 [shape = 'u8[8192]{0}', space=vmem, size = 0x2000, scoped, tag = 'scoped mem for output reshape']
    #allocation1 [shape = 'u8[4096]{0}', space=vmem, size = 0x1000, scoped, tag = 'scoped mem for input reshape']
    %s3 = sshllo.u32 0, 4
    %v4 = vld [vmem:[%s0] sm:%s3]
    %5 = vst [vmem:[#allocation1] sm:%s3] %v4
    %s6 = smov 3
    %v7 = vld [vmem:[#allocation1] ss:$2 sm:%s6]
    %vm8 = vcmask 523264
    %9 = vst.msk [vmem:[#allocation0] ss:$8 sm:$0x3] %vm8, %v7
    %s10 = scalar_lea.vmem [#allocation1], 1
    %s11 = smov 3
    %v12 = vld [vmem:[%s10] ss:$2 sm:%s11]
    %13 = vrot.lane.b32.xlu0 %v12, 64
    %v14 = vpop.permute.xlu0 %13
    %vm15 = vcmask 1048064
    %16 = vst.msk [vmem:[#allocation0] ss:$8 sm:$0x3] %vm15, %v14
    %s18 = sshllo.u32 0, 1
    %v20 = vld [vmem:[#allocation0] sm:%s18]
    %s21 = sshllo.u32 0, 1
    %22 = vst [vmem:[%s1] sm:%s21] %v20
    %s23 = scalar_lea.vmem [#allocation0], 8
    %v24 = vld [vmem:[%s23] sm:%s18]
    %s25 = sshllo.u32 0, 1
    %s26 = scalar_lea.vmem %s1, 1
    %27 = vst [vmem:[%s26] sm:%s25] %v24

// kernel: generator_forward.9
$region0: #{generator_forward.9}
  #allocation0 [shape = 'u32[]', space=smem, size = 0x4, offset = 0x4, fixed_abs, tag = 'smem constant byte address 0x4 - core index']
  #allocation1 [shape = 'u32[144,128]{1,0:T(1,128)}', space=vmem, size = 0x12000, scoped, tag = 'internal scratch']
  %s0 = inlined_call_operand.vmem [shape: f32[1,256], index: 0, kind: input, shape index: {}]
  %s1 = inlined_call_operand.vmem [shape: bf16[4,2048,256], index: 1, kind: input, shape index: {}]
  %s2 = inlined_call_operand.vmem [shape: bf16[4,256,128], index: 2, kind: input, shape index: {}]
  %s3 = inlined_call_operand.vmem [shape: f32[4,2048,128], index: 3, kind: output, shape index: {}]
  %s4 = sld [smem:[#allocation0]]
  $region45: #{generator_forward.9} parent=0
    _
  %s6 = ssub.s32 1, %s4
  %s7 = scalar_select 0, %s6, %s4
  loop: start=0, step=1, limit=34
  $region2: #{generator_forward.9} parent=0 // loop_pre_header
    _
  $region3: #{generator_forward.9} parent=0 // loop_header
    %s9 = sphi 0, %s13
    %p10 = scmp.ge.s32.totalorder %s9, 34
    %s16 = sphi 0, %s35
    %s17 = sphi 0, %s31
    %s18 = sphi 0, %s27
    %s19 = sphi 0, %s16
    %s20 = sphi 0, %s17
    %s21 = sphi 0, %s18
    %s22 = sphi 0, %s19
    %s23 = sphi 0, %s20
    %s24 = sphi 0, %s21
    %s36 = sphi 0, %s36
    %s38 = sphi 0, %s36
    %s39 = sphi 0, %s38
    %s53 = sphi 0, %s39
    %s61 = sphi 0, %s63
    %s64 = sphi 0, %s61
    %s65 = sphi 0, %s64
    %s81 = sphi 0, %s65
    %s89 = sphi 0, %s91
    %s92 = sphi 0, %s89
    %s93 = sphi 0, %s92
    %s109 = sphi 0, %s93
    %s119 = sphi 0, %s121
    %s122 = sphi 0, %s119
    %s123 = sphi 0, %s122
    %s139 = sphi 0, %s123
  $region4: #{generator_forward.9} parent=0 // loop_header_branch
    %12 = sbr.rel (%p10) target = $region8
  $region5: #{generator_forward.9} parent=0 // loop_body
    %s14 = ssub.s32 %s9, 1
    %s15 = ssub.s32 %s9, 2
    %s25 = sadd.s32 1, %s18
    %p26 = scmp.ge.s32.totalorder %s25, 1
    %s27 = scalar_select %p26, 0, %s25
    %s28 = sadd.s32 1, %s17
    %s29 = scalar_select %p26, %s28, %s17
    %p30 = scmp.ge.s32.totalorder %s29, 8
    %s31 = scalar_select %p30, 0, %s29
    %s32 = sadd.s32 1, %s16
    %s33 = scalar_select %p30, %s32, %s16
    %p34 = scmp.ge.s32.totalorder %s33, 4
    %s35 = scalar_select %p34, 0, %s33
    %s37 = sadd.s32 %s36, 1
    %p40 = scmp.eq.s32.totalorder %s9, 31
    %p41 = scmp.ne.s32.totalorder %s36, %s38
    %p42 = scmp.eq.s32.totalorder %s9, 0
    %p43 = por %p41, %p42
    %p44 = scmp.ne.s32.totalorder %s36, %s38
    %p45 = scmp.eq.s32.totalorder %s14, 31
    %p46 = por %p44, %p45
    %p47 = scmp.ne.s32.totalorder %s38, %s39
    %p48 = scmp.eq.s32.totalorder %s14, 0
    %p49 = por %p47, %p48
    %p50 = scmp.ne.s32.totalorder %s38, %s39
    %p51 = scmp.eq.s32.totalorder %s15, 31
    %p52 = por %p50, %p51
    %p54 = scmp.ne.s32.totalorder %s39, %s53
    %p55 = scmp.eq.s32.totalorder %s15, 0
    %p56 = por %p54, %p55
    %s57 = ssub.s32 %s16, %s35
    %s58 = ssub.s32 %s17, %s31
    %s59 = sor.u32 %s57, %s58
    %p60 = scmp.eq.s32.totalorder %s59, 0
    %s62 = sadd.s32 %s61, 1
    %s63 = scalar_select %p60, %s61, %s62
    %p66 = pneg %p60
    %p67 = scmp.eq.s32.totalorder %s9, 31
    %p68 = por %p66, %p67
    %p69 = scmp.ne.s32.totalorder %s61, %s64
    %p70 = scmp.eq.s32.totalorder %s9, 0
    %p71 = por %p69, %p70
    %p72 = scmp.ne.s32.totalorder %s61, %s64
    %p73 = scmp.eq.s32.totalorder %s14, 31
    %p74 = por %p72, %p73
    %p75 = scmp.ne.s32.totalorder %s64, %s65
    %p76 = scmp.eq.s32.totalorder %s14, 0
    %p77 = por %p75, %p76
    %p78 = scmp.ne.s32.totalorder %s64, %s65
    %p79 = scmp.eq.s32.totalorder %s15, 31
    %p80 = por %p78, %p79
    %p82 = scmp.ne.s32.totalorder %s65, %s81
    %p83 = scmp.eq.s32.totalorder %s15, 0
    %p84 = por %p82, %p83
    %s85 = ssub.s32 %s16, %s35
    %s86 = ssub.s32 %s18, %s27
    %s87 = sor.u32 %s85, %s86
    %p88 = scmp.eq.s32.totalorder %s87, 0
    %s90 = sadd.s32 %s89, 1
    %s91 = scalar_select %p88, %s89, %s90
    %p94 = pneg %p88
    %p95 = scmp.eq.s32.totalorder %s9, 31
    %p96 = por %p94, %p95
    %p97 = scmp.ne.s32.totalorder %s89, %s92
    %p98 = scmp.eq.s32.totalorder %s9, 0
    %p99 = por %p97, %p98
    %p100 = scmp.ne.s32.totalorder %s89, %s92
    %p101 = scmp.eq.s32.totalorder %s14, 31
    %p102 = por %p100, %p101
    %p103 = scmp.ne.s32.totalorder %s92, %s93
    %p104 = scmp.eq.s32.totalorder %s14, 0
    %p105 = por %p103, %p104
    %p106 = scmp.ne.s32.totalorder %s92, %s93
    %p107 = scmp.eq.s32.totalorder %s15, 31
    %p108 = por %p106, %p107
    %p110 = scmp.ne.s32.totalorder %s93, %s109
    %p111 = scmp.eq.s32.totalorder %s15, 0
    %p112 = por %p110, %p111
    %s113 = ssub.s32 %s16, %s35
    %s114 = ssub.s32 %s17, %s31
    %s115 = sor.u32 %s113, %s114
    %s116 = ssub.s32 %s18, %s27
    %s117 = sor.u32 %s115, %s116
    %p118 = scmp.eq.s32.totalorder %s117, 0
    %s120 = sadd.s32 %s119, 1
    %s121 = scalar_select %p118, %s119, %s120
    %p124 = pneg %p118
    %p125 = scmp.eq.s32.totalorder %s9, 31
    %p126 = por %p124, %p125
    %p127 = scmp.ne.s32.totalorder %s119, %s122
    %p128 = scmp.eq.s32.totalorder %s9, 0
    %p129 = por %p127, %p128
    %p130 = scmp.ne.s32.totalorder %s119, %s122
    %p131 = scmp.eq.s32.totalorder %s14, 31
    %p132 = por %p130, %p131
    %p133 = scmp.ne.s32.totalorder %s122, %s123
    %p134 = scmp.eq.s32.totalorder %s14, 0
    %p135 = por %p133, %p134
    %p136 = scmp.ne.s32.totalorder %s122, %s123
    %p137 = scmp.eq.s32.totalorder %s15, 31
    %p138 = por %p136, %p137
    %p140 = scmp.ne.s32.totalorder %s123, %s139
    %p141 = scmp.eq.s32.totalorder %s15, 0
    %p142 = por %p140, %p141
    %p143 = scmp.le.s32.totalorder 1, %s9
    %p144 = scmp.lt.s32.totalorder %s9, 33
    %p145 = pnand %p143, %p144
    %p146 = pneg %p145
    // Predicated region
    $region9: #{generator_forward.9} parent=5 // pred_check
      _
    $region10: #{generator_forward.9} parent=5 // pred_check_branch
      %148 = sbr.rel (%p145) target = $region12
    $region11: #{generator_forward.9} parent=5 // pred_region
      %s149 = ssub.s32 %s9, 1
      // Predicated region
      $region13: #{generator_forward.9} parent=11 // pred_check
        %p150 = pneg %p49
      $region14: #{generator_forward.9} parent=11 // pred_check_branch
        %152 = sbr.rel (%p150) target = $region16
      $region15: #{generator_forward.9} parent=11 // pred_region
        _
      $region16: #{generator_forward.9} parent=11 // pred_fallthru
        _
    $region12: #{generator_forward.9} parent=5 // pred_fallthru
      _
    %p153 = scmp.lt.s32.totalorder %s9, 32
    // Predicated region
    $region17: #{generator_forward.9} parent=5 // pred_check
      %p154 = pneg %p153
    $region18: #{generator_forward.9} parent=5 // pred_check_branch
      %156 = sbr.rel (%p154) target = $region20
    $region19: #{generator_forward.9} parent=5 // pred_region
      // Predicated region
      $region21: #{generator_forward.9} parent=19 // pred_check
        %p157 = pneg %p71
      $region22: #{generator_forward.9} parent=19 // pred_check_branch
        %159 = sbr.rel (%p157) target = $region24
      $region23: #{generator_forward.9} parent=19 // pred_region
        %s160 = smul.u32 32, %s17
        %p161 = scmp.lt.s32.totalorder %s16, 3
        %s162 = scalar_select %p161, %s16, 3
        %p163 = scmp.lt.s32.totalorder %s160, 255
        %s164 = scalar_select %p163, %s160, 255
        %s165 = smul.addr %s164, 2
        %s166 = smul.addr %s162, 512
        %s167 = sadd.s32 %s165, %s166
        %s168 = smul.addr %s167, 4
        %s169 = scalar_lea.vmem %s1, %s168
        %s170 = smul.u32 32, %s17
      $region24: #{generator_forward.9} parent=19 // pred_fallthru
        _
      // Predicated region
      $region25: #{generator_forward.9} parent=19 // pred_check
        %p171 = pneg %p99
      $region26: #{generator_forward.9} parent=19 // pred_check_branch
        %173 = sbr.rel (%p171) target = $region28
      $region27: #{generator_forward.9} parent=19 // pred_region
        %p174 = scmp.lt.s32.totalorder %s16, 3
        %s175 = scalar_select %p174, %s16, 3
        %p176 = scmp.lt.s32.totalorder %s18, 0
        %s177 = scalar_select %p176, %s18, 0
        %s178 = smul.addr %s175, 32
        %s179 = sadd.s32 %s177, %s178
        %s180 = smul.addr %s179, 4
        %s181 = scalar_lea.vmem %s2, %s180
      $region28: #{generator_forward.9} parent=19 // pred_fallthru
        _
    $region20: #{generator_forward.9} parent=5 // pred_fallthru
      _
    %p182 = scmp.le.s32.totalorder 1, %s9
    %p183 = scmp.lt.s32.totalorder %s9, 33
    %p184 = pnand %p182, %p183
    %p185 = pneg %p184
    // Predicated region
    $region29: #{generator_forward.9} parent=5 // pred_check
      _
    $region30: #{generator_forward.9} parent=5 // pred_check_branch
      %187 = sbr.rel (%p184) target = $region32
    $region31: #{generator_forward.9} parent=5 // pred_region
      %s188 = ssub.s32 %s9, 1
      %p189 = pneg %p49
      %p190 = pneg %p46
      %s191 = smul.u32 32, %s20
      %p192 = scmp.lt.s32.totalorder %s19, 3
      %s193 = scalar_select %p192, %s19, 3
      %p194 = scmp.lt.s32.totalorder %s191, 255
      %s195 = scalar_select %p194, %s191, 255
      %s196 = smul.addr %s195, 2
      %s197 = smul.addr %s193, 512
      %s198 = sadd.s32 %s196, %s197
      %s199 = smul.addr %s198, 4
      %s200 = scalar_lea.vmem %s1, %s199
      %p201 = pneg %p77
      %p202 = pneg %p74
      %p203 = scmp.lt.s32.totalorder %s19, 3
      %s204 = scalar_select %p203, %s19, 3
      %p205 = scmp.lt.s32.totalorder %s21, 0
      %s206 = scalar_select %p205, %s21, 0
      %s207 = smul.addr %s204, 32
      %s208 = sadd.s32 %s206, %s207
      %s209 = smul.addr %s208, 4
      %s210 = scalar_lea.vmem %s2, %s209
      %p211 = pneg %p105
      %p212 = pneg %p102
      %p213 = pneg %p135
      %p214 = pneg %p132
      %s215 = smul.u32 32, %s20
      %p216 = scmp.lt.s32.totalorder %s19, 3
      %s217 = scalar_select %p216, %s19, 3
      %p218 = scmp.lt.s32.totalorder %s215, 255
      %s219 = scalar_select %p218, %s215, 255
      %p220 = scmp.lt.s32.totalorder %s21, 0
      %s221 = scalar_select %p220, %s21, 0
      %s222 = sadd.s32 %s221, %s219
      %s223 = smul.addr %s217, 256
      %s224 = sadd.s32 %s222, %s223
      %s225 = smul.addr %s224, 8
      %s226 = scalar_lea.vmem %s3, %s225
      %s227 = smul.u32 32, %s20
      %p228 = scmp.lt.s32.totalorder %s19, 3
      %s229 = scalar_select %p228, %s19, 3
      %p230 = scmp.lt.s32.totalorder %s227, 255
      %s231 = scalar_select %p230, %s227, 255
      %s232 = smul.addr %s231, 2
      %s233 = smul.addr %s229, 512
      %s234 = sadd.s32 %s232, %s233
      %s235 = smul.addr %s234, 4
      %s236 = scalar_lea.vmem %s1, %s235
      %s237 = smul.u32 32, %s20
      %p238 = scmp.lt.s32.totalorder %s19, 3
      %s239 = scalar_select %p238, %s19, 3
      %p240 = scmp.lt.s32.totalorder %s21, 0
      %s241 = scalar_select %p240, %s21, 0
      %s242 = smul.addr %s239, 32
      %s243 = sadd.s32 %s241, %s242
      %s244 = smul.addr %s243, 4
      %s245 = scalar_lea.vmem %s2, %s244
      %s246 = smul.u32 32, %s20
      %p247 = scmp.lt.s32.totalorder %s19, 3
      %s248 = scalar_select %p247, %s19, 3
      %p249 = scmp.lt.s32.totalorder %s246, 255
      %s250 = scalar_select %p249, %s246, 255
      %p251 = scmp.lt.s32.totalorder %s21, 0
      %s252 = scalar_select %p251, %s21, 0
      %s253 = sadd.s32 %s252, %s250
      %s254 = smul.addr %s248, 256
      %s255 = sadd.s32 %s253, %s254
      %s256 = smul.addr %s255, 8
      %s257 = scalar_lea.vmem %s3, %s256
      %s258 = smul.u32 32, %s20
      %v260 = vld [vmem:[%s236] sm:$0xff]
      %v261 = vld [vmem:[%s236 + $0x8] sm:$0xff]
      %v262 = vld [vmem:[%s236 + $0x10] sm:$0xff]
      %v263 = vld [vmem:[%s236 + $0x18] sm:$0xff]
      %v264 = vld [vmem:[%s236 + $0x20] sm:$0xff]
      %v265 = vld [vmem:[%s236 + $0x28] sm:$0xff]
      %v266 = vld [vmem:[%s236 + $0x30] sm:$0xff]
      %v267 = vld [vmem:[%s236 + $0x38] sm:$0xff]
      %v268 = vld [vmem:[%s236 + $0x40] sm:$0xff]
      %v269 = vld [vmem:[%s236 + $0x48] sm:$0xff]
      %v270 = vld [vmem:[%s236 + $0x50] sm:$0xff]
      %v271 = vld [vmem:[%s236 + $0x58] sm:$0xff]
      %v272 = vld [vmem:[%s236 + $0x60] sm:$0xff]
      %v273 = vld [vmem:[%s236 + $0x68] sm:$0xff]
      %v274 = vld [vmem:[%s236 + $0x70] sm:$0xff]
      %v275 = vld [vmem:[%s236 + $0x78] sm:$0xff]
      %v276 = vld [vmem:[%s236 + $0x80] sm:$0xff]
      %v277 = vld [vmem:[%s236 + $0x88] sm:$0xff]
      %v278 = vld [vmem:[%s236 + $0x90] sm:$0xff]
      %v279 = vld [vmem:[%s236 + $0x98] sm:$0xff]
      %v280 = vld [vmem:[%s236 + $0xa0] sm:$0xff]
      %v281 = vld [vmem:[%s236 + $0xa8] sm:$0xff]
      %v282 = vld [vmem:[%s236 + $0xb0] sm:$0xff]
      %v283 = vld [vmem:[%s236 + $0xb8] sm:$0xff]
      %v284 = vld [vmem:[%s236 + $0xc0] sm:$0xff]
      %v285 = vld [vmem:[%s236 + $0xc8] sm:$0xff]
      %v286 = vld [vmem:[%s236 + $0xd0] sm:$0xff]
      %v287 = vld [vmem:[%s236 + $0xd8] sm:$0xff]
      %v288 = vld [vmem:[%s236 + $0xe0] sm:$0xff]
      %v289 = vld [vmem:[%s236 + $0xe8] sm:$0xff]
      %v290 = vld [vmem:[%s236 + $0xf0] sm:$0xff]
      %v291 = vld [vmem:[%s236 + $0xf8] sm:$0xff]
      %v292 = vunpack.c.l.bf16 %v260
      %v293 = vunpack.c.h.bf16 %v260
      %v294 = vunpack.c.l.bf16 %v261
      %v295 = vunpack.c.h.bf16 %v261
      %v296 = vunpack.c.l.bf16 %v262
      %v297 = vunpack.c.h.bf16 %v262
      %v298 = vunpack.c.l.bf16 %v263
      %v299 = vunpack.c.h.bf16 %v263
      %v300 = vunpack.c.l.bf16 %v264
      %v301 = vunpack.c.h.bf16 %v264
      %v302 = vunpack.c.l.bf16 %v265
      %v303 = vunpack.c.h.bf16 %v265
      %v304 = vunpack.c.l.bf16 %v266
      %v305 = vunpack.c.h.bf16 %v266
      %v306 = vunpack.c.l.bf16 %v267
      %v307 = vunpack.c.h.bf16 %v267
      %v308 = vunpack.c.l.bf16 %v268
      %v309 = vunpack.c.h.bf16 %v268
      %v310 = vunpack.c.l.bf16 %v269
      %v311 = vunpack.c.h.bf16 %v269
      %v312 = vunpack.c.l.bf16 %v270
      %v313 = vunpack.c.h.bf16 %v270
      %v314 = vunpack.c.l.bf16 %v271
      %v315 = vunpack.c.h.bf16 %v271
      %v316 = vunpack.c.l.bf16 %v272
      %v317 = vunpack.c.h.bf16 %v272
      %v318 = vunpack.c.l.bf16 %v273
      %v319 = vunpack.c.h.bf16 %v273
      %v320 = vunpack.c.l.bf16 %v274
      %v321 = vunpack.c.h.bf16 %v274
      %v322 = vunpack.c.l.bf16 %v275
      %v323 = vunpack.c.h.bf16 %v275
      %v324 = vunpack.c.l.bf16 %v276
      %v325 = vunpack.c.h.bf16 %v276
      %v326 = vunpack.c.l.bf16 %v277
      %v327 = vunpack.c.h.bf16 %v277
      %v328 = vunpack.c.l.bf16 %v278
      %v329 = vunpack.c.h.bf16 %v278
      %v330 = vunpack.c.l.bf16 %v279
      %v331 = vunpack.c.h.bf16 %v279
      %v332 = vunpack.c.l.bf16 %v280
      %v333 = vunpack.c.h.bf16 %v280
      %v334 = vunpack.c.l.bf16 %v281
      %v335 = vunpack.c.h.bf16 %v281
      %v336 = vunpack.c.l.bf16 %v282
      %v337 = vunpack.c.h.bf16 %v282
      %v338 = vunpack.c.l.bf16 %v283
      %v339 = vunpack.c.h.bf16 %v283
      %v340 = vunpack.c.l.bf16 %v284
      %v341 = vunpack.c.h.bf16 %v284
      %v342 = vunpack.c.l.bf16 %v285
      %v343 = vunpack.c.h.bf16 %v285
      %v344 = vunpack.c.l.bf16 %v286
      %v345 = vunpack.c.h.bf16 %v286
      %v346 = vunpack.c.l.bf16 %v287
      %v347 = vunpack.c.h.bf16 %v287
      %v348 = vunpack.c.l.bf16 %v288
      %v349 = vunpack.c.h.bf16 %v288
      %v350 = vunpack.c.l.bf16 %v289
      %v351 = vunpack.c.h.bf16 %v289
      %v352 = vunpack.c.l.bf16 %v290
      %v353 = vunpack.c.h.bf16 %v290
      %v354 = vunpack.c.l.bf16 %v291
      %v355 = vunpack.c.h.bf16 %v291
      %v356 = vld [vmem:[%s0] sm:$0x3]
      %v358 = vlaneseq
      %v359 = vshrl.u32 %v358, 7
      %v360 = vsub.s32 0, %v359
      %v361 = vrot.slane %v356, %v360
      %v362 = vlaneseq
      %v363 = vshrl.u32 %v362, 7
      %v364 = vsub.s32 1, %v363
      %v365 = vrot.slane %v356, %v364
      %v368 = vmul.f32 %v292, %v361
      %v369 = vmul.f32 %v293, %v365
      %v370 = vmul.f32 %v294, %v361
      %v371 = vmul.f32 %v295, %v365
      %v372 = vmul.f32 %v296, %v361
      %v373 = vmul.f32 %v297, %v365
      %v374 = vmul.f32 %v298, %v361
      %v375 = vmul.f32 %v299, %v365
      %v376 = vmul.f32 %v300, %v361
      %v377 = vmul.f32 %v301, %v365
      %v378 = vmul.f32 %v302, %v361
      %v379 = vmul.f32 %v303, %v365
      %v380 = vmul.f32 %v304, %v361
      %v381 = vmul.f32 %v305, %v365
      %v382 = vmul.f32 %v306, %v361
      %v383 = vmul.f32 %v307, %v365
      %v384 = vmul.f32 %v308, %v361
      %v385 = vmul.f32 %v309, %v365
      %v386 = vmul.f32 %v310, %v361
      %v387 = vmul.f32 %v311, %v365
      %v388 = vmul.f32 %v312, %v361
      %v389 = vmul.f32 %v313, %v365
      %v390 = vmul.f32 %v314, %v361
      %v391 = vmul.f32 %v315, %v365
      %v392 = vmul.f32 %v316, %v361
      %v393 = vmul.f32 %v317, %v365
      %v394 = vmul.f32 %v318, %v361
      %v395 = vmul.f32 %v319, %v365
      %v396 = vmul.f32 %v320, %v361
      %v397 = vmul.f32 %v321, %v365
      %v398 = vmul.f32 %v322, %v361
      %v399 = vmul.f32 %v323, %v365
      %v400 = vmul.f32 %v324, %v361
      %v401 = vmul.f32 %v325, %v365
      %v402 = vmul.f32 %v326, %v361
      %v403 = vmul.f32 %v327, %v365
      %v404 = vmul.f32 %v328, %v361
      %v405 = vmul.f32 %v329, %v365
      %v406 = vmul.f32 %v330, %v361
      %v407 = vmul.f32 %v331, %v365
      %v408 = vmul.f32 %v332, %v361
      %v409 = vmul.f32 %v333, %v365
      %v410 = vmul.f32 %v334, %v361
      %v411 = vmul.f32 %v335, %v365
      %v412 = vmul.f32 %v336, %v361
      %v413 = vmul.f32 %v337, %v365
      %v414 = vmul.f32 %v338, %v361
      %v415 = vmul.f32 %v339, %v365
      %v416 = vmul.f32 %v340, %v361
      %v417 = vmul.f32 %v341, %v365
      %v418 = vmul.f32 %v342, %v361
      %v419 = vmul.f32 %v343, %v365
      %v420 = vmul.f32 %v344, %v361
      %v421 = vmul.f32 %v345, %v365
      %v422 = vmul.f32 %v346, %v361
      %v423 = vmul.f32 %v347, %v365
      %v424 = vmul.f32 %v348, %v361
      %v425 = vmul.f32 %v349, %v365
      %v426 = vmul.f32 %v350, %v361
      %v427 = vmul.f32 %v351, %v365
      %v428 = vmul.f32 %v352, %v361
      %v429 = vmul.f32 %v353, %v365
      %v430 = vmul.f32 %v354, %v361
      %v431 = vmul.f32 %v355, %v365
      %v432 = vmax.f32 %v368, 0.0
      %v433 = vmax.f32 %v369, 0.0
      %v434 = vmax.f32 %v370, 0.0
      %v435 = vmax.f32 %v371, 0.0
      %v436 = vmax.f32 %v372, 0.0
      %v437 = vmax.f32 %v373, 0.0
      %v438 = vmax.f32 %v374, 0.0
      %v439 = vmax.f32 %v375, 0.0
      %v440 = vmax.f32 %v376, 0.0
      %v441 = vmax.f32 %v377, 0.0
      %v442 = vmax.f32 %v378, 0.0
      %v443 = vmax.f32 %v379, 0.0
      %v444 = vmax.f32 %v380, 0.0
      %v445 = vmax.f32 %v381, 0.0
      %v446 = vmax.f32 %v382, 0.0
      %v447 = vmax.f32 %v383, 0.0
      %v448 = vmax.f32 %v384, 0.0
      %v449 = vmax.f32 %v385, 0.0
      %v450 = vmax.f32 %v386, 0.0
      %v451 = vmax.f32 %v387, 0.0
      %v452 = vmax.f32 %v388, 0.0
      %v453 = vmax.f32 %v389, 0.0
      %v454 = vmax.f32 %v390, 0.0
      %v455 = vmax.f32 %v391, 0.0
      %v456 = vmax.f32 %v392, 0.0
      %v457 = vmax.f32 %v393, 0.0
      %v458 = vmax.f32 %v394, 0.0
      %v459 = vmax.f32 %v395, 0.0
      %v460 = vmax.f32 %v396, 0.0
      %v461 = vmax.f32 %v397, 0.0
      %v462 = vmax.f32 %v398, 0.0
      %v463 = vmax.f32 %v399, 0.0
      %v464 = vmax.f32 %v400, 0.0
      %v465 = vmax.f32 %v401, 0.0
      %v466 = vmax.f32 %v402, 0.0
      %v467 = vmax.f32 %v403, 0.0
      %v468 = vmax.f32 %v404, 0.0
      %v469 = vmax.f32 %v405, 0.0
      %v470 = vmax.f32 %v406, 0.0
      %v471 = vmax.f32 %v407, 0.0
      %v472 = vmax.f32 %v408, 0.0
      %v473 = vmax.f32 %v409, 0.0
      %v474 = vmax.f32 %v410, 0.0
      %v475 = vmax.f32 %v411, 0.0
      %v476 = vmax.f32 %v412, 0.0
      %v477 = vmax.f32 %v413, 0.0
      %v478 = vmax.f32 %v414, 0.0
      %v479 = vmax.f32 %v415, 0.0
      %v480 = vmax.f32 %v416, 0.0
      %v481 = vmax.f32 %v417, 0.0
      %v482 = vmax.f32 %v418, 0.0
      %v483 = vmax.f32 %v419, 0.0
      %v484 = vmax.f32 %v420, 0.0
      %v485 = vmax.f32 %v421, 0.0
      %v486 = vmax.f32 %v422, 0.0
      %v487 = vmax.f32 %v423, 0.0
      %v488 = vmax.f32 %v424, 0.0
      %v489 = vmax.f32 %v425, 0.0
      %v490 = vmax.f32 %v426, 0.0
      %v491 = vmax.f32 %v427, 0.0
      %v492 = vmax.f32 %v428, 0.0
      %v493 = vmax.f32 %v429, 0.0
      %v494 = vmax.f32 %v430, 0.0
      %v495 = vmax.f32 %v431, 0.0
      %v496 = vpack.c.bf16 %v434, %v432
      %v497 = vpack.c.bf16 %v435, %v433
      %v498 = vpack.c.bf16 %v438, %v436
      %v499 = vpack.c.bf16 %v439, %v437
      %v500 = vpack.c.bf16 %v442, %v440
      %v501 = vpack.c.bf16 %v443, %v441
      %v502 = vpack.c.bf16 %v446, %v444
      %v503 = vpack.c.bf16 %v447, %v445
      %v504 = vpack.c.bf16 %v450, %v448
      %v505 = vpack.c.bf16 %v451, %v449
      %v506 = vpack.c.bf16 %v454, %v452
      %v507 = vpack.c.bf16 %v455, %v453
      %v508 = vpack.c.bf16 %v458, %v456
      %v509 = vpack.c.bf16 %v459, %v457
      %v510 = vpack.c.bf16 %v462, %v460
      %v511 = vpack.c.bf16 %v463, %v461
      %v512 = vpack.c.bf16 %v466, %v464
      %v513 = vpack.c.bf16 %v467, %v465
      %v514 = vpack.c.bf16 %v470, %v468
      %v515 = vpack.c.bf16 %v471, %v469
      %v516 = vpack.c.bf16 %v474, %v472
      %v517 = vpack.c.bf16 %v475, %v473
      %v518 = vpack.c.bf16 %v478, %v476
      %v519 = vpack.c.bf16 %v479, %v477
      %v520 = vpack.c.bf16 %v482, %v480
      %v521 = vpack.c.bf16 %v483, %v481
      %v522 = vpack.c.bf16 %v486, %v484
      %v523 = vpack.c.bf16 %v487, %v485
      %v524 = vpack.c.bf16 %v490, %v488
      %v525 = vpack.c.bf16 %v491, %v489
      %v526 = vpack.c.bf16 %v494, %v492
      %v527 = vpack.c.bf16 %v495, %v493
      %v528 = vld [vmem:[%s245] sm:$0xf]
      %v529 = vld [vmem:[%s245 + $0x4] sm:$0xf]
      %v530 = vld [vmem:[%s245 + $0x8] sm:$0xf]
      %v531 = vld [vmem:[%s245 + $0xc] sm:$0xf]
      %v532 = vld [vmem:[%s245 + $0x10] sm:$0xf]
      %v533 = vld [vmem:[%s245 + $0x14] sm:$0xf]
      %v534 = vld [vmem:[%s245 + $0x18] sm:$0xf]
      %v535 = vld [vmem:[%s245 + $0x1c] sm:$0xf]
      %v536 = vld [vmem:[%s245 + $0x20] sm:$0xf]
      %v537 = vld [vmem:[%s245 + $0x24] sm:$0xf]
      %v538 = vld [vmem:[%s245 + $0x28] sm:$0xf]
      %v539 = vld [vmem:[%s245 + $0x2c] sm:$0xf]
      %v540 = vld [vmem:[%s245 + $0x30] sm:$0xf]
      %v541 = vld [vmem:[%s245 + $0x34] sm:$0xf]
      %v542 = vld [vmem:[%s245 + $0x38] sm:$0xf]
      %v543 = vld [vmem:[%s245 + $0x3c] sm:$0xf]
      %v544 = vld [vmem:[%s245 + $0x40] sm:$0xf]
      %v545 = vld [vmem:[%s245 + $0x44] sm:$0xf]
      %v546 = vld [vmem:[%s245 + $0x48] sm:$0xf]
      %v547 = vld [vmem:[%s245 + $0x4c] sm:$0xf]
      %v548 = vld [vmem:[%s245 + $0x50] sm:$0xf]
      %v549 = vld [vmem:[%s245 + $0x54] sm:$0xf]
      %v550 = vld [vmem:[%s245 + $0x58] sm:$0xf]
      %v551 = vld [vmem:[%s245 + $0x5c] sm:$0xf]
      %v552 = vld [vmem:[%s245 + $0x60] sm:$0xf]
      %v553 = vld [vmem:[%s245 + $0x64] sm:$0xf]
      %v554 = vld [vmem:[%s245 + $0x68] sm:$0xf]
      %v555 = vld [vmem:[%s245 + $0x6c] sm:$0xf]
      %v556 = vld [vmem:[%s245 + $0x70] sm:$0xf]
      %v557 = vld [vmem:[%s245 + $0x74] sm:$0xf]
      %v558 = vld [vmem:[%s245 + $0x78] sm:$0xf]
      %v559 = vld [vmem:[%s245 + $0x7c] sm:$0xf]
      %v592 = vunpack.c.l.b16 %v528
      %v593 = vunpack.c.l.b16 %v529
      %v594 = vunpack.c.l.b16 %v530
      %v595 = vunpack.c.l.b16 %v531
      %v596 = vunpack.c.l.b16 %v532
      %v597 = vunpack.c.l.b16 %v533
      %v598 = vunpack.c.l.b16 %v534
      %v599 = vunpack.c.l.b16 %v535
      %v600 = vunpack.c.l.b16 %v536
      %v601 = vunpack.c.l.b16 %v537
      %v602 = vunpack.c.l.b16 %v538
      %v603 = vunpack.c.l.b16 %v539
      %v604 = vunpack.c.l.b16 %v540
      %v605 = vunpack.c.l.b16 %v541
      %v606 = vunpack.c.l.b16 %v542
      %v607 = vunpack.c.l.b16 %v543
      %v608 = vunpack.c.l.b16 %v544
      %v609 = vunpack.c.l.b16 %v545
      %v610 = vunpack.c.l.b16 %v546
      %v611 = vunpack.c.l.b16 %v547
      %v612 = vunpack.c.l.b16 %v548
      %v613 = vunpack.c.l.b16 %v549
      %v614 = vunpack.c.l.b16 %v550
      %v615 = vunpack.c.l.b16 %v551
      %v616 = vunpack.c.l.b16 %v552
      %v617 = vunpack.c.l.b16 %v553
      %v618 = vunpack.c.l.b16 %v554
      %v619 = vunpack.c.l.b16 %v555
      %v620 = vunpack.c.l.b16 %v556
      %v621 = vunpack.c.l.b16 %v557
      %v622 = vunpack.c.l.b16 %v558
      %v623 = vunpack.c.l.b16 %v559
      %v624 = vpack.c.b16 %v593, %v592
      %v625 = vpack.c.b16 %v595, %v594
      %v626 = vpack.c.b16 %v597, %v596
      %v627 = vpack.c.b16 %v599, %v598
      %v628 = vpack.c.b16 %v601, %v600
      %v629 = vpack.c.b16 %v603, %v602
      %v630 = vpack.c.b16 %v605, %v604
      %v631 = vpack.c.b16 %v607, %v606
      %v632 = vpack.c.b16 %v609, %v608
      %v633 = vpack.c.b16 %v611, %v610
      %v634 = vpack.c.b16 %v613, %v612
      %v635 = vpack.c.b16 %v615, %v614
      %v636 = vpack.c.b16 %v617, %v616
      %v637 = vpack.c.b16 %v619, %v618
      %v638 = vpack.c.b16 %v621, %v620
      %v639 = vpack.c.b16 %v623, %v622
      %656 = vmatprep.subr.bf16.mxu0 0
      %657 = vmatpush1.bf16.msra.mxu0 %v624
      %658 = vmatprep.subr.bf16.mxu0 0
      %659 = vmatpush1.bf16.msra.mxu0 %v625
      %660 = vmatprep.subr.bf16.mxu0 0
      %661 = vmatpush1.bf16.msra.mxu0 %v626
      %662 = vmatprep.subr.bf16.mxu0 0
      %663 = vmatpush1.bf16.msra.mxu0 %v627
      %664 = vmatprep.subr.bf16.mxu0 0
      %665 = vmatpush1.bf16.msra.mxu0 %v628
      %666 = vmatprep.subr.bf16.mxu0 0
      %667 = vmatpush1.bf16.msra.mxu0 %v629
      %668 = vmatprep.subr.bf16.mxu0 0
      %669 = vmatpush1.bf16.msra.mxu0 %v630
      %670 = vmatprep.subr.bf16.mxu0 0
      %671 = vmatpush1.bf16.msra.mxu0 %v631
      %672 = vmatprep.subr.bf16.mxu0 0
      %673 = vmatpush1.bf16.msra.mxu0 %v632
      %674 = vmatprep.subr.bf16.mxu0 0
      %675 = vmatpush1.bf16.msra.mxu0 %v633
      %676 = vmatprep.subr.bf16.mxu0 0
      %677 = vmatpush1.bf16.msra.mxu0 %v634
      %678 = vmatprep.subr.bf16.mxu0 0
      %679 = vmatpush1.bf16.msra.mxu0 %v635
      %680 = vmatprep.subr.bf16.mxu0 0
      %681 = vmatpush1.bf16.msra.mxu0 %v636
      %682 = vmatprep.subr.bf16.mxu0 0
      %683 = vmatpush1.bf16.msra.mxu0 %v637
      %684 = vmatprep.subr.bf16.mxu0 0
      %685 = vmatpush1.bf16.msra.mxu0 %v638
      %686 = vmatprep.subr.bf16.mxu0 0
      %687 = vmatpush1.bf16.msra.mxu0 %v639
      %688 = vmatprep.mubr.bf16.mxu0 %v497
      %689 = vmatmul.mubr.bf16.gmra.mrb[0].mxu0 %v496
      %v690 = vpop.f32.mrb[0].mxu0
      %v691 = vadd.f32 0.0, %v690
      %v692 = vpop.f32.mrb[0].mxu0
      %v693 = vpop.f32.mrb[0].mxu0
      %v694 = vadd.f32 0.0, %v693
      %v695 = vpop.f32.mrb[0].mxu0
      %696 = vmatprep.mubr.bf16.mxu0 %v499
      %697 = vmatmul.mubr.bf16.gmra.mrb[0].mxu0 %v498
      %v698 = vpop.f32.mrb[0].mxu0
      %v699 = vadd.f32 0.0, %v698
      %v700 = vpop.f32.mrb[0].mxu0
      %v701 = vpop.f32.mrb[0].mxu0
      %v702 = vadd.f32 0.0, %v701
      %v703 = vpop.f32.mrb[0].mxu0
      %704 = vmatprep.mubr.bf16.mxu0 %v501
      %705 = vmatmul.mubr.bf16.gmra.mrb[0].mxu0 %v500
      %v706 = vpop.f32.mrb[0].mxu0
      %v707 = vadd.f32 0.0, %v706
      %v708 = vpop.f32.mrb[0].mxu0
      %v709 = vpop.f32.mrb[0].mxu0
      %v710 = vadd.f32 0.0, %v709
      %v711 = vpop.f32.mrb[0].mxu0
      %712 = vmatprep.mubr.bf16.mxu0 %v503
      %713 = vmatmul.mubr.bf16.gmra.mrb[0].mxu0 %v502
      %v714 = vpop.f32.mrb[0].mxu0
      %v715 = vadd.f32 0.0, %v714
      %v716 = vpop.f32.mrb[0].mxu0
      %v717 = vpop.f32.mrb[0].mxu0
      %v718 = vadd.f32 0.0, %v717
      %v719 = vpop.f32.mrb[0].mxu0
      %720 = vmatprep.mubr.bf16.mxu0 %v505
      %721 = vmatmul.mubr.bf16.gmra.mrb[0].mxu0 %v504
      %v722 = vpop.f32.mrb[0].mxu0
      %v723 = vadd.f32 0.0, %v722
      %v724 = vpop.f32.mrb[0].mxu0
      %v725 = vpop.f32.mrb[0].mxu0
      %v726 = vadd.f32 0.0, %v725
      %v727 = vpop.f32.mrb[0].mxu0
      %728 = vmatprep.mubr.bf16.mxu0 %v507
      %729 = vmatmul.mubr.bf16.gmra.mrb[0].mxu0 %v506
      %v730 = vpop.f32.mrb[0].mxu0
      %v731 = vadd.f32 0.0, %v730
      %v732 = vpop.f32.mrb[0].mxu0
      %v733 = vpop.f32.mrb[0].mxu0
      %v734 = vadd.f32 0.0, %v733
      %v735 = vpop.f32.mrb[0].mxu0
      %736 = vmatprep.mubr.bf16.mxu0 %v509
      %737 = vmatmul.mubr.bf16.gmra.mrb[0].mxu0 %v508
      %v738 = vpop.f32.mrb[0].mxu0
      %v739 = vadd.f32 0.0, %v738
      %v740 = vpop.f32.mrb[0].mxu0
      %v741 = vpop.f32.mrb[0].mxu0
      %v742 = vadd.f32 0.0, %v741
      %v743 = vpop.f32.mrb[0].mxu0
      %744 = vmatprep.mubr.bf16.mxu0 %v511
      %745 = vmatmul.mubr.bf16.gmra.mrb[0].mxu0 %v510
      %v746 = vpop.f32.mrb[0].mxu0
      %v747 = vadd.f32 0.0, %v746
      %v748 = vpop.f32.mrb[0].mxu0
      %v749 = vpop.f32.mrb[0].mxu0
      %v750 = vadd.f32 0.0, %v749
      %v751 = vpop.f32.mrb[0].mxu0
      %752 = vmatprep.mubr.bf16.mxu0 %v513
      %753 = vmatmul.mubr.bf16.gmra.mrb[0].mxu0 %v512
      %v754 = vpop.f32.mrb[0].mxu0
      %v755 = vadd.f32 0.0, %v754
      %v756 = vpop.f32.mrb[0].mxu0
      %v757 = vpop.f32.mrb[0].mxu0
      %v758 = vadd.f32 0.0, %v757
      %v759 = vpop.f32.mrb[0].mxu0
      %760 = vmatprep.mubr.bf16.mxu0 %v515
      %761 = vmatmul.mubr.bf16.gmra.mrb[0].mxu0 %v514
      %v762 = vpop.f32.mrb[0].mxu0
      %v763 = vadd.f32 0.0, %v762
      %v764 = vpop.f32.mrb[0].mxu0
      %v765 = vpop.f32.mrb[0].mxu0
      %v766 = vadd.f32 0.0, %v765
      %v767 = vpop.f32.mrb[0].mxu0
      %768 = vmatprep.mubr.bf16.mxu0 %v517
      %769 = vmatmul.mubr.bf16.gmra.mrb[0].mxu0 %v516
      %v770 = vpop.f32.mrb[0].mxu0
      %v771 = vadd.f32 0.0, %v770
      %v772 = vpop.f32.mrb[0].mxu0
      %v773 = vpop.f32.mrb[0].mxu0
      %v774 = vadd.f32 0.0, %v773
      %v775 = vpop.f32.mrb[0].mxu0
      %776 = vmatprep.mubr.bf16.mxu0 %v519
      %777 = vmatmul.mubr.bf16.gmra.mrb[0].mxu0 %v518
      %v778 = vpop.f32.mrb[0].mxu0
      %v779 = vadd.f32 0.0, %v778
      %v780 = vpop.f32.mrb[0].mxu0
      %v781 = vpop.f32.mrb[0].mxu0
      %v782 = vadd.f32 0.0, %v781
      %v783 = vpop.f32.mrb[0].mxu0
      %784 = vmatprep.mubr.bf16.mxu0 %v521
      %785 = vmatmul.mubr.bf16.gmra.mrb[0].mxu0 %v520
      %v786 = vpop.f32.mrb[0].mxu0
      %v787 = vadd.f32 0.0, %v786
      %v788 = vpop.f32.mrb[0].mxu0
      %v789 = vpop.f32.mrb[0].mxu0
      %v790 = vadd.f32 0.0, %v789
      %v791 = vpop.f32.mrb[0].mxu0
      %792 = vmatprep.mubr.bf16.mxu0 %v523
      %793 = vmatmul.mubr.bf16.gmra.mrb[0].mxu0 %v522
      %v794 = vpop.f32.mrb[0].mxu0
      %v795 = vadd.f32 0.0, %v794
      %v796 = vpop.f32.mrb[0].mxu0
      %v797 = vpop.f32.mrb[0].mxu0
      %v798 = vadd.f32 0.0, %v797
      %v799 = vpop.f32.mrb[0].mxu0
      %800 = vmatprep.mubr.bf16.mxu0 %v525
      %801 = vmatmul.mubr.bf16.gmra.mrb[0].mxu0 %v524
      %v802 = vpop.f32.mrb[0].mxu0
      %v803 = vadd.f32 0.0, %v802
      %v804 = vpop.f32.mrb[0].mxu0
      %v805 = vpop.f32.mrb[0].mxu0
      %v806 = vadd.f32 0.0, %v805
      %v807 = vpop.f32.mrb[0].mxu0
      %808 = vmatprep.mubr.bf16.mxu0 %v527
      %809 = vmatmul.mubr.bf16.gmra.mrb[0].mxu0 %v526
      %v810 = vpop.f32.mrb[0].mxu0
      %v811 = vadd.f32 0.0, %v810
      %v812 = vpop.f32.mrb[0].mxu0
      %v813 = vpop.f32.mrb[0].mxu0
      %v814 = vadd.f32 0.0, %v813
      %v815 = vpop.f32.mrb[0].mxu0
      %816 = vdwg.mxu0
      %v817 = vtanh.pop %v691
      %v818 = vtanh.pop %v694
      %v819 = vtanh.pop %v699
      %v820 = vtanh.pop %v702
      %v821 = vtanh.pop %v707
      %v822 = vtanh.pop %v710
      %v823 = vtanh.pop %v715
      %v824 = vtanh.pop %v718
      %v825 = vtanh.pop %v723
      %v826 = vtanh.pop %v726
      %v827 = vtanh.pop %v731
      %v828 = vtanh.pop %v734
      %v829 = vtanh.pop %v739
      %v830 = vtanh.pop %v742
      %v831 = vtanh.pop %v747
      %v832 = vtanh.pop %v750
      %v833 = vtanh.pop %v755
      %v834 = vtanh.pop %v758
      %v835 = vtanh.pop %v763
      %v836 = vtanh.pop %v766
      %v837 = vtanh.pop %v771
      %v838 = vtanh.pop %v774
      %v839 = vtanh.pop %v779
      %v840 = vtanh.pop %v782
      %v841 = vtanh.pop %v787
      %v842 = vtanh.pop %v790
      %v843 = vtanh.pop %v795
      %v844 = vtanh.pop %v798
      %v845 = vtanh.pop %v803
      %v846 = vtanh.pop %v806
      %v847 = vtanh.pop %v811
      %v848 = vtanh.pop %v814
      %849 = vst [vmem:[%s257] sm:$0xff] %v817
      %850 = vst [vmem:[%s257 + $0x8] sm:$0xff] %v818
      %851 = vst [vmem:[%s257 + $0x10] sm:$0xff] %v819
      %852 = vst [vmem:[%s257 + $0x18] sm:$0xff] %v820
      %853 = vst [vmem:[%s257 + $0x20] sm:$0xff] %v821
      %854 = vst [vmem:[%s257 + $0x28] sm:$0xff] %v822
      %855 = vst [vmem:[%s257 + $0x30] sm:$0xff] %v823
      %856 = vst [vmem:[%s257 + $0x38] sm:$0xff] %v824
      %857 = vst [vmem:[%s257 + $0x40] sm:$0xff] %v825
      %858 = vst [vmem:[%s257 + $0x48] sm:$0xff] %v826
      %859 = vst [vmem:[%s257 + $0x50] sm:$0xff] %v827
      %860 = vst [vmem:[%s257 + $0x58] sm:$0xff] %v828
      %861 = vst [vmem:[%s257 + $0x60] sm:$0xff] %v829
      %862 = vst [vmem:[%s257 + $0x68] sm:$0xff] %v830
      %863 = vst [vmem:[%s257 + $0x70] sm:$0xff] %v831
      %864 = vst [vmem:[%s257 + $0x78] sm:$0xff] %v832
      %865 = vst [vmem:[%s257 + $0x80] sm:$0xff] %v833
      %866 = vst [vmem:[%s257 + $0x88] sm:$0xff] %v834
      %867 = vst [vmem:[%s257 + $0x90] sm:$0xff] %v835
      %868 = vst [vmem:[%s257 + $0x98] sm:$0xff] %v836
      %869 = vst [vmem:[%s257 + $0xa0] sm:$0xff] %v837
      %870 = vst [vmem:[%s257 + $0xa8] sm:$0xff] %v838
      %871 = vst [vmem:[%s257 + $0xb0] sm:$0xff] %v839
      %872 = vst [vmem:[%s257 + $0xb8] sm:$0xff] %v840
      %873 = vst [vmem:[%s257 + $0xc0] sm:$0xff] %v841
      %874 = vst [vmem:[%s257 + $0xc8] sm:$0xff] %v842
      %875 = vst [vmem:[%s257 + $0xd0] sm:$0xff] %v843
      %876 = vst [vmem:[%s257 + $0xd8] sm:$0xff] %v844
      %877 = vst [vmem:[%s257 + $0xe0] sm:$0xff] %v845
      %878 = vst [vmem:[%s257 + $0xe8] sm:$0xff] %v846
      %879 = vst [vmem:[%s257 + $0xf0] sm:$0xff] %v847
      %880 = vst [vmem:[%s257 + $0xf8] sm:$0xff] %v848
      %s881 = smul.u32 32, %s20
      %p882 = scmp.lt.s32.totalorder %s19, 3
      %s883 = scalar_select %p882, %s19, 3
      %p884 = scmp.lt.s32.totalorder %s881, 255
      %s885 = scalar_select %p884, %s881, 255
      %p886 = scmp.lt.s32.totalorder %s21, 0
      %s887 = scalar_select %p886, %s21, 0
      %s888 = sadd.s32 %s887, %s885
      %s889 = smul.addr %s883, 256
      %s890 = sadd.s32 %s888, %s889
      %s891 = smul.addr %s890, 8
      %s892 = scalar_lea.vmem %s3, %s891
      // Predicated region
      $region33: #{generator_forward.9} parent=31 // pred_check
        %p893 = pneg %p132
      $region34: #{generator_forward.9} parent=31 // pred_check_branch
        %895 = sbr.rel (%p893) target = $region36
      $region35: #{generator_forward.9} parent=31 // pred_region
        %s896 = smul.u32 32, %s20
      $region36: #{generator_forward.9} parent=31 // pred_fallthru
        _
    $region32: #{generator_forward.9} parent=5 // pred_fallthru
      _
    %p897 = scmp.le.s32.totalorder 2, %s9
    // Predicated region
    $region37: #{generator_forward.9} parent=5 // pred_check
      %p898 = pneg %p897
    $region38: #{generator_forward.9} parent=5 // pred_check_branch
      %900 = sbr.rel (%p898) target = $region40
    $region39: #{generator_forward.9} parent=5 // pred_region
      %s901 = ssub.s32 %s9, 2
      // Predicated region
      $region41: #{generator_forward.9} parent=39 // pred_check
        %p902 = pneg %p138
      $region42: #{generator_forward.9} parent=39 // pred_check_branch
        %904 = sbr.rel (%p902) target = $region44
      $region43: #{generator_forward.9} parent=39 // pred_region
        %s905 = smul.u32 32, %s23
        %p906 = scmp.lt.s32.totalorder %s22, 3
        %s907 = scalar_select %p906, %s22, 3
        %p908 = scmp.lt.s32.totalorder %s905, 255
        %s909 = scalar_select %p908, %s905, 255
        %p910 = scmp.lt.s32.totalorder %s24, 0
        %s911 = scalar_select %p910, %s24, 0
        %s912 = sadd.s32 %s911, %s909
        %s913 = smul.addr %s907, 256
        %s914 = sadd.s32 %s912, %s913
        %s915 = smul.addr %s914, 8
        %s916 = scalar_lea.vmem %s3, %s915
      $region44: #{generator_forward.9} parent=39 // pred_fallthru
        _
    $region40: #{generator_forward.9} parent=5 // pred_fallthru
      _
  $region6: #{generator_forward.9} parent=0 // loop_footer
    %s13 = sadd.s32 1, %s9
  $region7: #{generator_forward.9} parent=0 // loop_footer_branch
    %8 = sbr.rel target = $region3
  $region8: #{generator_forward.9} parent=0 // loop_exit
    _

</llo_original>
